<compile_context>
chip_gen: v6e
topology: v6e:2x2x1
jax: 0.10.0
libtpu: 0.0.40
codegen_flags: <defaults>
</compile_context>

<pallas_src>
import math
import functools

import jax
import jax.numpy as jnp
from jax.experimental import pallas as pl
from jax.experimental.pallas import tpu as pltpu


def _cab_kernel(x_ref, w1_ref, b1_ref, w2_ref, b2_ref,
                w3_ref, b3_ref, w4_ref, b4_ref, o_ref, hpad_ref):
    _, H, W, Cp = o_ref.shape          # padded num_feat on lanes
    Cm = w1_ref.shape[3]               # padded compressed channels
    HW = H * W
    inv_sqrt2 = 1.0 / math.sqrt(2.0)

    # ---- conv1: 3x3, spatial zero padding already applied in the wrapper ----
    acc1 = jnp.zeros((HW, Cm), jnp.float32)
    for dy in range(3):
        for dx in range(3):
            patch = x_ref[0, pl.ds(dy, H), pl.ds(dx, W), :].reshape(HW, Cp)
            acc1 = acc1 + jnp.dot(patch, w1_ref[dy, dx],
                                  preferred_element_type=jnp.float32)
    h = acc1 + b1_ref[...]
    # exact (erf-based) GELU -- matches torch.nn.GELU() default; keep fp32 math.
    h = 0.5 * h * (1.0 + jax.lax.erf(h * inv_sqrt2))

    # ---- zero-padded intermediate (halo ring) for conv2 ----
    hpad_ref[...] = jnp.zeros_like(hpad_ref)
    hpad_ref[pl.ds(1, H), pl.ds(1, W), :] = (
        h.reshape(H, W, Cm).astype(hpad_ref.dtype))

    # ---- conv2: 3x3 ----
    acc2 = jnp.zeros((HW, Cp), jnp.float32)
    for dy in range(3):
        for dx in range(3):
            patch = hpad_ref[pl.ds(dy, H), pl.ds(dx, W), :].reshape(HW, Cm)
            acc2 = acc2 + jnp.dot(patch, w2_ref[dy, dx],
                                  preferred_element_type=jnp.float32)
    v = acc2 + b2_ref[...]                          # (HW, Cp), fp32

    # ---- channel attention (RCAN-style) ----
    pooled = jnp.mean(v, axis=0, keepdims=True)     # AdaptiveAvgPool2d(1) -> (1, Cp)
    a = jnp.dot(pooled.astype(w3_ref.dtype), w3_ref[...],
                preferred_element_type=jnp.float32) + b3_ref[...]
    a = jnp.maximum(a, 0.0)                         # ReLU
    y = jnp.dot(a.astype(w4_ref.dtype), w4_ref[...],
                preferred_element_type=jnp.float32) + b4_ref[...]
    y = 1.0 / (1.0 + jnp.exp(-y))                   # Sigmoid, (1, Cp)

    out = v * y                                     # channel re-weighting
    o_ref[0] = out.reshape(H, W, Cp).astype(o_ref.dtype)


def _round_up(n, m):
    return ((n + m - 1) // m) * m


@jax.jit
def cab_pallas(x, w1, b1, w2, b2, w3, b3, w4, b4):
    """CAB forward.

    x : (B, C, H, W)            NCHW, PyTorch layout
    w1: (Cmid, C, 3, 3), b1: (Cmid,)   # conv1
    w2: (C, Cmid, 3, 3), b2: (C,)      # conv2
    w3: (Csq, C, 1, 1),  b3: (Csq,)    # channel-attention squeeze 1x1
    w4: (C, Csq, 1, 1),  b4: (C,)      # channel-attention expand 1x1
    returns (B, C, H, W)
    """
    B, C, H, W = x.shape
    Cmid = w1.shape[0]
    Csq = w3.shape[0]
    dt = x.dtype

    LANE = 128
    Cp = _round_up(C, LANE)
    Cmp = _round_up(Cmid, LANE)
    Csp = _round_up(Csq, LANE)

    # NCHW -> NHWC, spatial halo of 1 (conv1 zero padding), channels -> lane multiple.
    x_nhwc = jnp.transpose(x, (0, 2, 3, 1))
    x_pad = jnp.pad(x_nhwc, ((0, 0), (1, 1), (1, 1), (0, Cp - C)))

    # Conv weights: OIHW -> HWIO, zero-pad in/out channel dims (exact no-op).
    w1_hwio = jnp.pad(jnp.transpose(w1, (2, 3, 1, 0)),
                      ((0, 0), (0, 0), (0, Cp - C), (0, Cmp - Cmid)))
    w2_hwio = jnp.pad(jnp.transpose(w2, (2, 3, 1, 0)),
                      ((0, 0), (0, 0), (0, Cmp - Cmid), (0, Cp - C)))
    b1_p = jnp.pad(b1, (0, Cmp - Cmid)).reshape(1, Cmp)
    b2_p = jnp.pad(b2, (0, Cp - C)).reshape(1, Cp)

    # 1x1 convs of the channel attention as (in, out) matrices.
    w3_m = jnp.pad(jnp.transpose(w3[:, :, 0, 0], (1, 0)),
                   ((0, Cp - C), (0, Csp - Csq)))
    w4_m = jnp.pad(jnp.transpose(w4[:, :, 0, 0], (1, 0)),
                   ((0, Csp - Csq), (0, Cp - C)))
    b3_p = jnp.pad(b3, (0, Csp - Csq)).reshape(1, Csp)
    b4_p = jnp.pad(b4, (0, Cp - C)).reshape(1, Cp)

    out = pl.pallas_call(
        _cab_kernel,
        out_shape=jax.ShapeDtypeStruct((B, H, W, Cp), dt),
        grid_spec=pltpu.PrefetchScalarGridSpec(
            num_scalar_prefetch=0,
            grid=(B,),
            in_specs=[
                pl.BlockSpec((1, H + 2, W + 2, Cp), lambda b: (b, 0, 0, 0)),
                pl.BlockSpec((3, 3, Cp, Cmp), lambda b: (0, 0, 0, 0)),
                pl.BlockSpec((1, Cmp), lambda b: (0, 0)),
                pl.BlockSpec((3, 3, Cmp, Cp), lambda b: (0, 0, 0, 0)),
                pl.BlockSpec((1, Cp), lambda b: (0, 0)),
                pl.BlockSpec((Cp, Csp), lambda b: (0, 0)),
                pl.BlockSpec((1, Csp), lambda b: (0, 0)),
                pl.BlockSpec((Csp, Cp), lambda b: (0, 0)),
                pl.BlockSpec((1, Cp), lambda b: (0, 0)),
            ],
            out_specs=pl.BlockSpec((1, H, W, Cp), lambda b: (b, 0, 0, 0)),
            scratch_shapes=[pltpu.VMEM((H + 2, W + 2, Cmp), dt)],
        ),
        compiler_params=pltpu.CompilerParams(
            dimension_semantics=("parallel",),
        ),
    )(x_pad, w1_hwio, b1_p, w2_hwio, b2_p, w3_m, b3_p, w4_m, b4_p)

    out = out[..., :C]                       # drop channel padding
    return jnp.transpose(out, (0, 3, 1, 2))  # back to NCHW


def _reference_cab(x, w1, b1, w2, b2, w3, b3, w4, b4):
    """Pure-JAX reference matching the PyTorch CAB forward."""
    dn = ('NCHW', 'OIHW', 'NCHW')
    h = jax.lax.conv_general_dilated(x, w1, (1, 1), ((1, 1), (1, 1)),
                                     dimension_numbers=dn)
    h = h + b1[None, :, None, None]
    h = 0.5 * h * (1.0 + jax.lax.erf(h / math.sqrt(2.0)))
    v = jax.lax.conv_general_dilated(h, w2, (1, 1), ((1, 1), (1, 1)),
                                     dimension_numbers=dn)
    v = v + b2[None, :, None, None]
    pooled = jnp.mean(v, axis=(2, 3), keepdims=True)                 # (B,C,1,1)
    a = jnp.einsum('bcij,oc->boij', pooled, w3[:, :, 0, 0]) + b3[None, :, None, None]
    a = jnp.maximum(a, 0.0)
    y = jnp.einsum('bcij,oc->boij', a, w4[:, :, 0, 0]) + b4[None, :, None, None]
    y = 1.0 / (1.0 + jnp.exp(-y))
    return v * y


if __name__ == "__main__":
    # Small shapes consistent with the module: num_feat must be divisible by
    # compress_ratio=3 and squeeze_factor=30 -> num_feat=60, 16x16 images.
    B, C, H, W = 2, 60, 16, 16
    compress_ratio, squeeze_factor = 3, 30
    Cmid = C // compress_ratio      # 20
    Csq = C // squeeze_factor       # 2

    key = jax.random.PRNGKey(0)
    ks = jax.random.split(key, 9)
    x = jax.random.normal(ks[0], (B, C, H, W), jnp.float32)

    def _init(k, shape, fan_in):
        bound = 1.0 / math.sqrt(fan_in)
        return jax.random.uniform(k, shape, jnp.float32, -bound, bound)

    w1 = _init(ks[1], (Cmid, C, 3, 3), C * 9)
    b1 = _init(ks[2], (Cmid,), C * 9)
    w2 = _init(ks[3], (C, Cmid, 3, 3), Cmid * 9)
    b2 = _init(ks[4], (C,), Cmid * 9)
    w3 = _init(ks[5], (Csq, C, 1, 1), C)
    b3 = _init(ks[6], (Csq,), C)
    w4 = _init(ks[7], (C, Csq, 1, 1), Csq)
    b4 = _init(ks[8], (C,), Csq)

    out = cab_pallas(x, w1, b1, w2, b2, w3, b3, w4, b4)
    out = jax.block_until_ready(out)

    ref = _reference_cab(x, w1, b1, w2, b2, w3, b3, w4, b4)
    assert out.shape == (B, C, H, W)
    assert jnp.allclose(out, ref, atol=1e-4, rtol=1e-4), \
        float(jnp.max(jnp.abs(out - ref)))

    print("KERNEL_OK")
</pallas_src>

<mosaic_0001>
module attributes {stable_mosaic.version = 11 : i64} {
  func.func @_cab_kernel(%arg0: i32, %arg1: memref<1x18x18x128xf32, #tpu.memory_space<vmem>>, %arg2: memref<3x3x128x128xf32, #tpu.memory_space<vmem>>, %arg3: memref<1x128xf32, #tpu.memory_space<vmem>>, %arg4: memref<3x3x128x128xf32, #tpu.memory_space<vmem>>, %arg5: memref<1x128xf32, #tpu.memory_space<vmem>>, %arg6: memref<128x128xf32, #tpu.memory_space<vmem>>, %arg7: memref<1x128xf32, #tpu.memory_space<vmem>>, %arg8: memref<128x128xf32, #tpu.memory_space<vmem>>, %arg9: memref<1x128xf32, #tpu.memory_space<vmem>>, %arg10: memref<1x16x16x128xf32, #tpu.memory_space<vmem>>, %arg11: memref<18x18x128xf32, #tpu.memory_space<vmem>>) attributes {dimension_semantics = [#tpu.dimension_semantics<parallel>], iteration_bounds = array<i64: 2>, scalar_prefetch = 0 : i64, scratch_operands = 1 : i64, tpu.core_type = #tpu.core_type<tc>, window_params = [{transform_indices = @transform_0, window_bounds = array<i64: 1, 18, 18, 128>}, {pipeline_mode = #tpu.pipeline_mode<synchronous>, transform_indices = @transform_1, window_bounds = array<i64: 3, 3, 128, 128>}, {pipeline_mode = #tpu.pipeline_mode<synchronous>, transform_indices = @transform_2, window_bounds = array<i64: 1, 128>}, {pipeline_mode = #tpu.pipeline_mode<synchronous>, transform_indices = @transform_3, window_bounds = array<i64: 3, 3, 128, 128>}, {pipeline_mode = #tpu.pipeline_mode<synchronous>, transform_indices = @transform_4, window_bounds = array<i64: 1, 128>}, {pipeline_mode = #tpu.pipeline_mode<synchronous>, transform_indices = @transform_5, window_bounds = array<i64: 128, 128>}, {pipeline_mode = #tpu.pipeline_mode<synchronous>, transform_indices = @transform_6, window_bounds = array<i64: 1, 128>}, {pipeline_mode = #tpu.pipeline_mode<synchronous>, transform_indices = @transform_7, window_bounds = array<i64: 128, 128>}, {pipeline_mode = #tpu.pipeline_mode<synchronous>, transform_indices = @transform_8, window_bounds = array<i64: 1, 128>}, {transform_indices = @transform_9, window_bounds = array<i64: 1, 16, 16, 128>}]} {
    %cst = arith.constant 0.000000e+00 : f32
    %0 = vector.broadcast %cst : f32 to vector<256x128xf32>
    %c0 = arith.constant 0 : index
    %c0_0 = arith.constant 0 : index
    %c0_1 = arith.constant 0 : index
    %c0_2 = arith.constant 0 : index
    %1 = vector.load %arg1[%c0, %c0_0, %c0_1, %c0_2] : memref<1x18x18x128xf32, #tpu.memory_space<vmem>>, vector<1x16x16x128xf32>
    %2 = vector.shape_cast %1 : vector<1x16x16x128xf32> to vector<16x16x128xf32>
    %3 = vector.shape_cast %2 : vector<16x16x128xf32> to vector<256x128xf32>
    %c0_3 = arith.constant 0 : index
    %c0_4 = arith.constant 0 : index
    %c0_5 = arith.constant 0 : index
    %c0_6 = arith.constant 0 : index
    %4 = vector.load %arg2[%c0_3, %c0_4, %c0_5, %c0_6] : memref<3x3x128x128xf32, #tpu.memory_space<vmem>>, vector<1x1x128x128xf32>
    %5 = vector.shape_cast %4 : vector<1x1x128x128xf32> to vector<128x128xf32>
    %cst_7 = arith.constant dense<0.000000e+00> : vector<256x128xf32>
    %6 = tpu.matmul %3, %5, %cst_7 {dimension_numbers = #tpu.dot_dimension_numbers<[1], [0], [0], [1], [0, 0, 1, 1], [], []>} : vector<256x128xf32>, vector<128x128xf32>, vector<256x128xf32> -> vector<256x128xf32>
    %7 = arith.addf %0, %6 : vector<256x128xf32>
    %c0_8 = arith.constant 0 : index
    %c0_9 = arith.constant 0 : index
    %c1 = arith.constant 1 : index
    %c0_10 = arith.constant 0 : index
    %8 = vector.load %arg1[%c0_8, %c0_9, %c1, %c0_10] : memref<1x18x18x128xf32, #tpu.memory_space<vmem>>, vector<1x16x16x128xf32>
    %9 = vector.shape_cast %8 : vector<1x16x16x128xf32> to vector<16x16x128xf32>
    %10 = vector.shape_cast %9 : vector<16x16x128xf32> to vector<256x128xf32>
    %c0_11 = arith.constant 0 : index
    %c1_12 = arith.constant 1 : index
    %c0_13 = arith.constant 0 : index
    %c0_14 = arith.constant 0 : index
    %11 = vector.load %arg2[%c0_11, %c1_12, %c0_13, %c0_14] : memref<3x3x128x128xf32, #tpu.memory_space<vmem>>, vector<1x1x128x128xf32>
    %12 = vector.shape_cast %11 : vector<1x1x128x128xf32> to vector<128x128xf32>
    %cst_15 = arith.constant dense<0.000000e+00> : vector<256x128xf32>
    %13 = tpu.matmul %10, %12, %cst_15 {dimension_numbers = #tpu.dot_dimension_numbers<[1], [0], [0], [1], [0, 0, 1, 1], [], []>} : vector<256x128xf32>, vector<128x128xf32>, vector<256x128xf32> -> vector<256x128xf32>
    %14 = arith.addf %7, %13 : vector<256x128xf32>
    %c0_16 = arith.constant 0 : index
    %c0_17 = arith.constant 0 : index
    %c2 = arith.constant 2 : index
    %c0_18 = arith.constant 0 : index
    %15 = vector.load %arg1[%c0_16, %c0_17, %c2, %c0_18] : memref<1x18x18x128xf32, #tpu.memory_space<vmem>>, vector<1x16x16x128xf32>
    %16 = vector.shape_cast %15 : vector<1x16x16x128xf32> to vector<16x16x128xf32>
    %17 = vector.shape_cast %16 : vector<16x16x128xf32> to vector<256x128xf32>
    %c0_19 = arith.constant 0 : index
    %c2_20 = arith.constant 2 : index
    %c0_21 = arith.constant 0 : index
    %c0_22 = arith.constant 0 : index
    %18 = vector.load %arg2[%c0_19, %c2_20, %c0_21, %c0_22] : memref<3x3x128x128xf32, #tpu.memory_space<vmem>>, vector<1x1x128x128xf32>
    %19 = vector.shape_cast %18 : vector<1x1x128x128xf32> to vector<128x128xf32>
    %cst_23 = arith.constant dense<0.000000e+00> : vector<256x128xf32>
    %20 = tpu.matmul %17, %19, %cst_23 {dimension_numbers = #tpu.dot_dimension_numbers<[1], [0], [0], [1], [0, 0, 1, 1], [], []>} : vector<256x128xf32>, vector<128x128xf32>, vector<256x128xf32> -> vector<256x128xf32>
    %21 = arith.addf %14, %20 : vector<256x128xf32>
    %c0_24 = arith.constant 0 : index
    %c1_25 = arith.constant 1 : index
    %c0_26 = arith.constant 0 : index
    %c0_27 = arith.constant 0 : index
    %22 = vector.load %arg1[%c0_24, %c1_25, %c0_26, %c0_27] : memref<1x18x18x128xf32, #tpu.memory_space<vmem>>, vector<1x16x16x128xf32>
    %23 = vector.shape_cast %22 : vector<1x16x16x128xf32> to vector<16x16x128xf32>
    %24 = vector.shape_cast %23 : vector<16x16x128xf32> to vector<256x128xf32>
    %c1_28 = arith.constant 1 : index
    %c0_29 = arith.constant 0 : index
    %c0_30 = arith.constant 0 : index
    %c0_31 = arith.constant 0 : index
    %25 = vector.load %arg2[%c1_28, %c0_29, %c0_30, %c0_31] : memref<3x3x128x128xf32, #tpu.memory_space<vmem>>, vector<1x1x128x128xf32>
    %26 = vector.shape_cast %25 : vector<1x1x128x128xf32> to vector<128x128xf32>
    %cst_32 = arith.constant dense<0.000000e+00> : vector<256x128xf32>
    %27 = tpu.matmul %24, %26, %cst_32 {dimension_numbers = #tpu.dot_dimension_numbers<[1], [0], [0], [1], [0, 0, 1, 1], [], []>} : vector<256x128xf32>, vector<128x128xf32>, vector<256x128xf32> -> vector<256x128xf32>
    %28 = arith.addf %21, %27 : vector<256x128xf32>
    %c0_33 = arith.constant 0 : index
    %c1_34 = arith.constant 1 : index
    %c1_35 = arith.constant 1 : index
    %c0_36 = arith.constant 0 : index
    %29 = vector.load %arg1[%c0_33, %c1_34, %c1_35, %c0_36] : memref<1x18x18x128xf32, #tpu.memory_space<vmem>>, vector<1x16x16x128xf32>
    %30 = vector.shape_cast %29 : vector<1x16x16x128xf32> to vector<16x16x128xf32>
    %31 = vector.shape_cast %30 : vector<16x16x128xf32> to vector<256x128xf32>
    %c1_37 = arith.constant 1 : index
    %c1_38 = arith.constant 1 : index
    %c0_39 = arith.constant 0 : index
    %c0_40 = arith.constant 0 : index
    %32 = vector.load %arg2[%c1_37, %c1_38, %c0_39, %c0_40] : memref<3x3x128x128xf32, #tpu.memory_space<vmem>>, vector<1x1x128x128xf32>
    %33 = vector.shape_cast %32 : vector<1x1x128x128xf32> to vector<128x128xf32>
    %cst_41 = arith.constant dense<0.000000e+00> : vector<256x128xf32>
    %34 = tpu.matmul %31, %33, %cst_41 {dimension_numbers = #tpu.dot_dimension_numbers<[1], [0], [0], [1], [0, 0, 1, 1], [], []>} : vector<256x128xf32>, vector<128x128xf32>, vector<256x128xf32> -> vector<256x128xf32>
    %35 = arith.addf %28, %34 : vector<256x128xf32>
    %c0_42 = arith.constant 0 : index
    %c1_43 = arith.constant 1 : index
    %c2_44 = arith.constant 2 : index
    %c0_45 = arith.constant 0 : index
    %36 = vector.load %arg1[%c0_42, %c1_43, %c2_44, %c0_45] : memref<1x18x18x128xf32, #tpu.memory_space<vmem>>, vector<1x16x16x128xf32>
    %37 = vector.shape_cast %36 : vector<1x16x16x128xf32> to vector<16x16x128xf32>
    %38 = vector.shape_cast %37 : vector<16x16x128xf32> to vector<256x128xf32>
    %c1_46 = arith.constant 1 : index
    %c2_47 = arith.constant 2 : index
    %c0_48 = arith.constant 0 : index
    %c0_49 = arith.constant 0 : index
    %39 = vector.load %arg2[%c1_46, %c2_47, %c0_48, %c0_49] : memref<3x3x128x128xf32, #tpu.memory_space<vmem>>, vector<1x1x128x128xf32>
    %40 = vector.shape_cast %39 : vector<1x1x128x128xf32> to vector<128x128xf32>
    %cst_50 = arith.constant dense<0.000000e+00> : vector<256x128xf32>
    %41 = tpu.matmul %38, %40, %cst_50 {dimension_numbers = #tpu.dot_dimension_numbers<[1], [0], [0], [1], [0, 0, 1, 1], [], []>} : vector<256x128xf32>, vector<128x128xf32>, vector<256x128xf32> -> vector<256x128xf32>
    %42 = arith.addf %35, %41 : vector<256x128xf32>
    %c0_51 = arith.constant 0 : index
    %c2_52 = arith.constant 2 : index
    %c0_53 = arith.constant 0 : index
    %c0_54 = arith.constant 0 : index
    %43 = vector.load %arg1[%c0_51, %c2_52, %c0_53, %c0_54] : memref<1x18x18x128xf32, #tpu.memory_space<vmem>>, vector<1x16x16x128xf32>
    %44 = vector.shape_cast %43 : vector<1x16x16x128xf32> to vector<16x16x128xf32>
    %45 = vector.shape_cast %44 : vector<16x16x128xf32> to vector<256x128xf32>
    %c2_55 = arith.constant 2 : index
    %c0_56 = arith.constant 0 : index
    %c0_57 = arith.constant 0 : index
    %c0_58 = arith.constant 0 : index
    %46 = vector.load %arg2[%c2_55, %c0_56, %c0_57, %c0_58] : memref<3x3x128x128xf32, #tpu.memory_space<vmem>>, vector<1x1x128x128xf32>
    %47 = vector.shape_cast %46 : vector<1x1x128x128xf32> to vector<128x128xf32>
    %cst_59 = arith.constant dense<0.000000e+00> : vector<256x128xf32>
    %48 = tpu.matmul %45, %47, %cst_59 {dimension_numbers = #tpu.dot_dimension_numbers<[1], [0], [0], [1], [0, 0, 1, 1], [], []>} : vector<256x128xf32>, vector<128x128xf32>, vector<256x128xf32> -> vector<256x128xf32>
    %49 = arith.addf %42, %48 : vector<256x128xf32>
    %c0_60 = arith.constant 0 : index
    %c2_61 = arith.constant 2 : index
    %c1_62 = arith.constant 1 : index
    %c0_63 = arith.constant 0 : index
    %50 = vector.load %arg1[%c0_60, %c2_61, %c1_62, %c0_63] : memref<1x18x18x128xf32, #tpu.memory_space<vmem>>, vector<1x16x16x128xf32>
    %51 = vector.shape_cast %50 : vector<1x16x16x128xf32> to vector<16x16x128xf32>
    %52 = vector.shape_cast %51 : vector<16x16x128xf32> to vector<256x128xf32>
    %c2_64 = arith.constant 2 : index
    %c1_65 = arith.constant 1 : index
    %c0_66 = arith.constant 0 : index
    %c0_67 = arith.constant 0 : index
    %53 = vector.load %arg2[%c2_64, %c1_65, %c0_66, %c0_67] : memref<3x3x128x128xf32, #tpu.memory_space<vmem>>, vector<1x1x128x128xf32>
    %54 = vector.shape_cast %53 : vector<1x1x128x128xf32> to vector<128x128xf32>
    %cst_68 = arith.constant dense<0.000000e+00> : vector<256x128xf32>
    %55 = tpu.matmul %52, %54, %cst_68 {dimension_numbers = #tpu.dot_dimension_numbers<[1], [0], [0], [1], [0, 0, 1, 1], [], []>} : vector<256x128xf32>, vector<128x128xf32>, vector<256x128xf32> -> vector<256x128xf32>
    %56 = arith.addf %49, %55 : vector<256x128xf32>
    %c0_69 = arith.constant 0 : index
    %c2_70 = arith.constant 2 : index
    %c2_71 = arith.constant 2 : index
    %c0_72 = arith.constant 0 : index
    %57 = vector.load %arg1[%c0_69, %c2_70, %c2_71, %c0_72] : memref<1x18x18x128xf32, #tpu.memory_space<vmem>>, vector<1x16x16x128xf32>
    %58 = vector.shape_cast %57 : vector<1x16x16x128xf32> to vector<16x16x128xf32>
    %59 = vector.shape_cast %58 : vector<16x16x128xf32> to vector<256x128xf32>
    %c2_73 = arith.constant 2 : index
    %c2_74 = arith.constant 2 : index
    %c0_75 = arith.constant 0 : index
    %c0_76 = arith.constant 0 : index
    %60 = vector.load %arg2[%c2_73, %c2_74, %c0_75, %c0_76] : memref<3x3x128x128xf32, #tpu.memory_space<vmem>>, vector<1x1x128x128xf32>
    %61 = vector.shape_cast %60 : vector<1x1x128x128xf32> to vector<128x128xf32>
    %cst_77 = arith.constant dense<0.000000e+00> : vector<256x128xf32>
    %62 = tpu.matmul %59, %61, %cst_77 {dimension_numbers = #tpu.dot_dimension_numbers<[1], [0], [0], [1], [0, 0, 1, 1], [], []>} : vector<256x128xf32>, vector<128x128xf32>, vector<256x128xf32> -> vector<256x128xf32>
    %63 = arith.addf %56, %62 : vector<256x128xf32>
    %c0_78 = arith.constant 0 : index
    %c0_79 = arith.constant 0 : index
    %64 = vector.load %arg3[%c0_78, %c0_79] : memref<1x128xf32, #tpu.memory_space<vmem>>, vector<1x128xf32>
    %65 = vector.broadcast %64 : vector<1x128xf32> to vector<256x128xf32>
    %66 = arith.addf %63, %65 : vector<256x128xf32>
    %cst_80 = arith.constant 5.000000e-01 : f32
    %67 = vector.broadcast %cst_80 : f32 to vector<256x128xf32>
    %68 = arith.mulf %67, %66 : vector<256x128xf32>
    %cst_81 = arith.constant 0.707106769 : f32
    %69 = vector.broadcast %cst_81 : f32 to vector<256x128xf32>
    %70 = arith.mulf %66, %69 : vector<256x128xf32>
    %71 = math.erf %70 : vector<256x128xf32>
    %cst_82 = arith.constant 1.000000e+00 : f32
    %72 = vector.broadcast %cst_82 : f32 to vector<256x128xf32>
    %73 = arith.addf %72, %71 : vector<256x128xf32>
    %74 = arith.mulf %68, %73 : vector<256x128xf32>
    %cst_83 = arith.constant 0.000000e+00 : f32
    %75 = vector.broadcast %cst_83 : f32 to vector<18x18x128xf32>
    %c0_84 = arith.constant 0 : index
    %c0_85 = arith.constant 0 : index
    %c0_86 = arith.constant 0 : index
    %76 = vector.load %arg11[%c0_84, %c0_85, %c0_86] : memref<18x18x128xf32, #tpu.memory_space<vmem>>, vector<18x18x128xf32>
    tpu.vector_store %arg11[%c0_84, %c0_85, %c0_86], %75 {strides = array<i32>} : memref<18x18x128xf32, #tpu.memory_space<vmem>>, vector<18x18x128xf32>,
    %77 = vector.shape_cast %74 : vector<256x128xf32> to vector<16x16x128xf32>
    %c1_87 = arith.constant 1 : index
    %c1_88 = arith.constant 1 : index
    %c0_89 = arith.constant 0 : index
    %78 = vector.load %arg11[%c1_87, %c1_88, %c0_89] : memref<18x18x128xf32, #tpu.memory_space<vmem>>, vector<16x16x128xf32>
    tpu.vector_store %arg11[%c1_87, %c1_88, %c0_89], %77 {strides = array<i32>} : memref<18x18x128xf32, #tpu.memory_space<vmem>>, vector<16x16x128xf32>,
    %cst_90 = arith.constant 0.000000e+00 : f32
    %79 = vector.broadcast %cst_90 : f32 to vector<256x128xf32>
    %c0_91 = arith.constant 0 : index
    %c0_92 = arith.constant 0 : index
    %c0_93 = arith.constant 0 : index
    %80 = vector.load %arg11[%c0_91, %c0_92, %c0_93] : memref<18x18x128xf32, #tpu.memory_space<vmem>>, vector<16x16x128xf32>
    %81 = vector.shape_cast %80 : vector<16x16x128xf32> to vector<256x128xf32>
    %c0_94 = arith.constant 0 : index
    %c0_95 = arith.constant 0 : index
    %c0_96 = arith.constant 0 : index
    %c0_97 = arith.constant 0 : index
    %82 = vector.load %arg4[%c0_94, %c0_95, %c0_96, %c0_97] : memref<3x3x128x128xf32, #tpu.memory_space<vmem>>, vector<1x1x128x128xf32>
    %83 = vector.shape_cast %82 : vector<1x1x128x128xf32> to vector<128x128xf32>
    %cst_98 = arith.constant dense<0.000000e+00> : vector<256x128xf32>
    %84 = tpu.matmul %81, %83, %cst_98 {dimension_numbers = #tpu.dot_dimension_numbers<[1], [0], [0], [1], [0, 0, 1, 1], [], []>} : vector<256x128xf32>, vector<128x128xf32>, vector<256x128xf32> -> vector<256x128xf32>
    %85 = arith.addf %79, %84 : vector<256x128xf32>
    %c0_99 = arith.constant 0 : index
    %c1_100 = arith.constant 1 : index
    %c0_101 = arith.constant 0 : index
    %86 = vector.load %arg11[%c0_99, %c1_100, %c0_101] : memref<18x18x128xf32, #tpu.memory_space<vmem>>, vector<16x16x128xf32>
    %87 = vector.shape_cast %86 : vector<16x16x128xf32> to vector<256x128xf32>
    %c0_102 = arith.constant 0 : index
    %c1_103 = arith.constant 1 : index
    %c0_104 = arith.constant 0 : index
    %c0_105 = arith.constant 0 : index
    %88 = vector.load %arg4[%c0_102, %c1_103, %c0_104, %c0_105] : memref<3x3x128x128xf32, #tpu.memory_space<vmem>>, vector<1x1x128x128xf32>
    %89 = vector.shape_cast %88 : vector<1x1x128x128xf32> to vector<128x128xf32>
    %cst_106 = arith.constant dense<0.000000e+00> : vector<256x128xf32>
    %90 = tpu.matmul %87, %89, %cst_106 {dimension_numbers = #tpu.dot_dimension_numbers<[1], [0], [0], [1], [0, 0, 1, 1], [], []>} : vector<256x128xf32>, vector<128x128xf32>, vector<256x128xf32> -> vector<256x128xf32>
    %91 = arith.addf %85, %90 : vector<256x128xf32>
    %c0_107 = arith.constant 0 : index
    %c2_108 = arith.constant 2 : index
    %c0_109 = arith.constant 0 : index
    %92 = vector.load %arg11[%c0_107, %c2_108, %c0_109] : memref<18x18x128xf32, #tpu.memory_space<vmem>>, vector<16x16x128xf32>
    %93 = vector.shape_cast %92 : vector<16x16x128xf32> to vector<256x128xf32>
    %c0_110 = arith.constant 0 : index
    %c2_111 = arith.constant 2 : index
    %c0_112 = arith.constant 0 : index
    %c0_113 = arith.constant 0 : index
    %94 = vector.load %arg4[%c0_110, %c2_111, %c0_112, %c0_113] : memref<3x3x128x128xf32, #tpu.memory_space<vmem>>, vector<1x1x128x128xf32>
    %95 = vector.shape_cast %94 : vector<1x1x128x128xf32> to vector<128x128xf32>
    %cst_114 = arith.constant dense<0.000000e+00> : vector<256x128xf32>
    %96 = tpu.matmul %93, %95, %cst_114 {dimension_numbers = #tpu.dot_dimension_numbers<[1], [0], [0], [1], [0, 0, 1, 1], [], []>} : vector<256x128xf32>, vector<128x128xf32>, vector<256x128xf32> -> vector<256x128xf32>
    %97 = arith.addf %91, %96 : vector<256x128xf32>
    %c1_115 = arith.constant 1 : index
    %c0_116 = arith.constant 0 : index
    %c0_117 = arith.constant 0 : index
    %98 = vector.load %arg11[%c1_115, %c0_116, %c0_117] : memref<18x18x128xf32, #tpu.memory_space<vmem>>, vector<16x16x128xf32>
    %99 = vector.shape_cast %98 : vector<16x16x128xf32> to vector<256x128xf32>
    %c1_118 = arith.constant 1 : index
    %c0_119 = arith.constant 0 : index
    %c0_120 = arith.constant 0 : index
    %c0_121 = arith.constant 0 : index
    %100 = vector.load %arg4[%c1_118, %c0_119, %c0_120, %c0_121] : memref<3x3x128x128xf32, #tpu.memory_space<vmem>>, vector<1x1x128x128xf32>
    %101 = vector.shape_cast %100 : vector<1x1x128x128xf32> to vector<128x128xf32>
    %cst_122 = arith.constant dense<0.000000e+00> : vector<256x128xf32>
    %102 = tpu.matmul %99, %101, %cst_122 {dimension_numbers = #tpu.dot_dimension_numbers<[1], [0], [0], [1], [0, 0, 1, 1], [], []>} : vector<256x128xf32>, vector<128x128xf32>, vector<256x128xf32> -> vector<256x128xf32>
    %103 = arith.addf %97, %102 : vector<256x128xf32>
    %c1_123 = arith.constant 1 : index
    %c1_124 = arith.constant 1 : index
    %c0_125 = arith.constant 0 : index
    %104 = vector.load %arg11[%c1_123, %c1_124, %c0_125] : memref<18x18x128xf32, #tpu.memory_space<vmem>>, vector<16x16x128xf32>
    %105 = vector.shape_cast %104 : vector<16x16x128xf32> to vector<256x128xf32>
    %c1_126 = arith.constant 1 : index
    %c1_127 = arith.constant 1 : index
    %c0_128 = arith.constant 0 : index
    %c0_129 = arith.constant 0 : index
    %106 = vector.load %arg4[%c1_126, %c1_127, %c0_128, %c0_129] : memref<3x3x128x128xf32, #tpu.memory_space<vmem>>, vector<1x1x128x128xf32>
    %107 = vector.shape_cast %106 : vector<1x1x128x128xf32> to vector<128x128xf32>
    %cst_130 = arith.constant dense<0.000000e+00> : vector<256x128xf32>
    %108 = tpu.matmul %105, %107, %cst_130 {dimension_numbers = #tpu.dot_dimension_numbers<[1], [0], [0], [1], [0, 0, 1, 1], [], []>} : vector<256x128xf32>, vector<128x128xf32>, vector<256x128xf32> -> vector<256x128xf32>
    %109 = arith.addf %103, %108 : vector<256x128xf32>
    %c1_131 = arith.constant 1 : index
    %c2_132 = arith.constant 2 : index
    %c0_133 = arith.constant 0 : index
    %110 = vector.load %arg11[%c1_131, %c2_132, %c0_133] : memref<18x18x128xf32, #tpu.memory_space<vmem>>, vector<16x16x128xf32>
    %111 = vector.shape_cast %110 : vector<16x16x128xf32> to vector<256x128xf32>
    %c1_134 = arith.constant 1 : index
    %c2_135 = arith.constant 2 : index
    %c0_136 = arith.constant 0 : index
    %c0_137 = arith.constant 0 : index
    %112 = vector.load %arg4[%c1_134, %c2_135, %c0_136, %c0_137] : memref<3x3x128x128xf32, #tpu.memory_space<vmem>>, vector<1x1x128x128xf32>
    %113 = vector.shape_cast %112 : vector<1x1x128x128xf32> to vector<128x128xf32>
    %cst_138 = arith.constant dense<0.000000e+00> : vector<256x128xf32>
    %114 = tpu.matmul %111, %113, %cst_138 {dimension_numbers = #tpu.dot_dimension_numbers<[1], [0], [0], [1], [0, 0, 1, 1], [], []>} : vector<256x128xf32>, vector<128x128xf32>, vector<256x128xf32> -> vector<256x128xf32>
    %115 = arith.addf %109, %114 : vector<256x128xf32>
    %c2_139 = arith.constant 2 : index
    %c0_140 = arith.constant 0 : index
    %c0_141 = arith.constant 0 : index
    %116 = vector.load %arg11[%c2_139, %c0_140, %c0_141] : memref<18x18x128xf32, #tpu.memory_space<vmem>>, vector<16x16x128xf32>
    %117 = vector.shape_cast %116 : vector<16x16x128xf32> to vector<256x128xf32>
    %c2_142 = arith.constant 2 : index
    %c0_143 = arith.constant 0 : index
    %c0_144 = arith.constant 0 : index
    %c0_145 = arith.constant 0 : index
    %118 = vector.load %arg4[%c2_142, %c0_143, %c0_144, %c0_145] : memref<3x3x128x128xf32, #tpu.memory_space<vmem>>, vector<1x1x128x128xf32>
    %119 = vector.shape_cast %118 : vector<1x1x128x128xf32> to vector<128x128xf32>
    %cst_146 = arith.constant dense<0.000000e+00> : vector<256x128xf32>
    %120 = tpu.matmul %117, %119, %cst_146 {dimension_numbers = #tpu.dot_dimension_numbers<[1], [0], [0], [1], [0, 0, 1, 1], [], []>} : vector<256x128xf32>, vector<128x128xf32>, vector<256x128xf32> -> vector<256x128xf32>
    %121 = arith.addf %115, %120 : vector<256x128xf32>
    %c2_147 = arith.constant 2 : index
    %c1_148 = arith.constant 1 : index
    %c0_149 = arith.constant 0 : index
    %122 = vector.load %arg11[%c2_147, %c1_148, %c0_149] : memref<18x18x128xf32, #tpu.memory_space<vmem>>, vector<16x16x128xf32>
    %123 = vector.shape_cast %122 : vector<16x16x128xf32> to vector<256x128xf32>
    %c2_150 = arith.constant 2 : index
    %c1_151 = arith.constant 1 : index
    %c0_152 = arith.constant 0 : index
    %c0_153 = arith.constant 0 : index
    %124 = vector.load %arg4[%c2_150, %c1_151, %c0_152, %c0_153] : memref<3x3x128x128xf32, #tpu.memory_space<vmem>>, vector<1x1x128x128xf32>
    %125 = vector.shape_cast %124 : vector<1x1x128x128xf32> to vector<128x128xf32>
    %cst_154 = arith.constant dense<0.000000e+00> : vector<256x128xf32>
    %126 = tpu.matmul %123, %125, %cst_154 {dimension_numbers = #tpu.dot_dimension_numbers<[1], [0], [0], [1], [0, 0, 1, 1], [], []>} : vector<256x128xf32>, vector<128x128xf32>, vector<256x128xf32> -> vector<256x128xf32>
    %127 = arith.addf %121, %126 : vector<256x128xf32>
    %c2_155 = arith.constant 2 : index
    %c2_156 = arith.constant 2 : index
    %c0_157 = arith.constant 0 : index
    %128 = vector.load %arg11[%c2_155, %c2_156, %c0_157] : memref<18x18x128xf32, #tpu.memory_space<vmem>>, vector<16x16x128xf32>
    %129 = vector.shape_cast %128 : vector<16x16x128xf32> to vector<256x128xf32>
    %c2_158 = arith.constant 2 : index
    %c2_159 = arith.constant 2 : index
    %c0_160 = arith.constant 0 : index
    %c0_161 = arith.constant 0 : index
    %130 = vector.load %arg4[%c2_158, %c2_159, %c0_160, %c0_161] : memref<3x3x128x128xf32, #tpu.memory_space<vmem>>, vector<1x1x128x128xf32>
    %131 = vector.shape_cast %130 : vector<1x1x128x128xf32> to vector<128x128xf32>
    %cst_162 = arith.constant dense<0.000000e+00> : vector<256x128xf32>
    %132 = tpu.matmul %129, %131, %cst_162 {dimension_numbers = #tpu.dot_dimension_numbers<[1], [0], [0], [1], [0, 0, 1, 1], [], []>} : vector<256x128xf32>, vector<128x128xf32>, vector<256x128xf32> -> vector<256x128xf32>
    %133 = arith.addf %127, %132 : vector<256x128xf32>
    %c0_163 = arith.constant 0 : index
    %c0_164 = arith.constant 0 : index
    %134 = vector.load %arg5[%c0_163, %c0_164] : memref<1x128xf32, #tpu.memory_space<vmem>>, vector<1x128xf32>
    %135 = vector.broadcast %134 : vector<1x128xf32> to vector<256x128xf32>
    %136 = arith.addf %133, %135 : vector<256x128xf32>
    %cst_165 = arith.constant dense<0.000000e+00> : vector<128xf32>
    %137 = vector.multi_reduction <add>, %136, %cst_165 [0] : vector<256x128xf32> to vector<128xf32>
    %138 = vector.shape_cast %137 : vector<128xf32> to vector<1x128xf32>
    %cst_166 = arith.constant 2.560000e+02 : f32
    %139 = vector.broadcast %cst_166 : f32 to vector<1x128xf32>
    %140 = arith.divf %138, %139 : vector<1x128xf32>
    %c0_167 = arith.constant 0 : index
    %c0_168 = arith.constant 0 : index
    %141 = vector.load %arg6[%c0_167, %c0_168] : memref<128x128xf32, #tpu.memory_space<vmem>>, vector<128x128xf32>
    %cst_169 = arith.constant dense<0.000000e+00> : vector<1x128xf32>
    %142 = tpu.matmul %140, %141, %cst_169 {dimension_numbers = #tpu.dot_dimension_numbers<[1], [0], [0], [1], [0, 0, 1, 1], [], []>} : vector<1x128xf32>, vector<128x128xf32>, vector<1x128xf32> -> vector<1x128xf32>
    %c0_170 = arith.constant 0 : index
    %c0_171 = arith.constant 0 : index
    %143 = vector.load %arg7[%c0_170, %c0_171] : memref<1x128xf32, #tpu.memory_space<vmem>>, vector<1x128xf32>
    %144 = arith.addf %142, %143 : vector<1x128xf32>
    %cst_172 = arith.constant 0.000000e+00 : f32
    %145 = vector.broadcast %cst_172 : f32 to vector<1x128xf32>
    %146 = arith.maximumf %144, %145 : vector<1x128xf32>
    %c0_173 = arith.constant 0 : index
    %c0_174 = arith.constant 0 : index
    %147 = vector.load %arg8[%c0_173, %c0_174] : memref<128x128xf32, #tpu.memory_space<vmem>>, vector<128x128xf32>
    %cst_175 = arith.constant dense<0.000000e+00> : vector<1x128xf32>
    %148 = tpu.matmul %146, %147, %cst_175 {dimension_numbers = #tpu.dot_dimension_numbers<[1], [0], [0], [1], [0, 0, 1, 1], [], []>} : vector<1x128xf32>, vector<128x128xf32>, vector<1x128xf32> -> vector<1x128xf32>
    %c0_176 = arith.constant 0 : index
    %c0_177 = arith.constant 0 : index
    %149 = vector.load %arg9[%c0_176, %c0_177] : memref<1x128xf32, #tpu.memory_space<vmem>>, vector<1x128xf32>
    %150 = arith.addf %148, %149 : vector<1x128xf32>
    %cst_178 = arith.constant 0.000000e+00 : f32
    %151 = vector.broadcast %cst_178 : f32 to vector<1x128xf32>
    %152 = arith.subf %151, %150 : vector<1x128xf32>
    %153 = math.exp %152 : vector<1x128xf32>
    %cst_179 = arith.constant 1.000000e+00 : f32
    %154 = vector.broadcast %cst_179 : f32 to vector<1x128xf32>
    %155 = arith.addf %154, %153 : vector<1x128xf32>
    %cst_180 = arith.constant 1.000000e+00 : f32
    %156 = vector.broadcast %cst_180 : f32 to vector<1x128xf32>
    %157 = arith.divf %156, %155 : vector<1x128xf32>
    %158 = vector.broadcast %157 : vector<1x128xf32> to vector<256x128xf32>
    %159 = arith.mulf %136, %158 : vector<256x128xf32>
    %160 = vector.shape_cast %159 : vector<256x128xf32> to vector<16x16x128xf32>
    %c0_181 = arith.constant 0 : index
    %c0_182 = arith.constant 0 : index
    %c0_183 = arith.constant 0 : index
    %c0_184 = arith.constant 0 : index
    %161 = vector.load %arg10[%c0_181, %c0_182, %c0_183, %c0_184] : memref<1x16x16x128xf32, #tpu.memory_space<vmem>>, vector<1x16x16x128xf32>
    %162 = vector.shape_cast %161 : vector<1x16x16x128xf32> to vector<16x16x128xf32>
    %163 = vector.shape_cast %160 : vector<16x16x128xf32> to vector<1x16x16x128xf32>
    tpu.vector_store %arg10[%c0_181, %c0_182, %c0_183, %c0_184], %163 {strides = array<i32>} : memref<1x16x16x128xf32, #tpu.memory_space<vmem>>, vector<1x16x16x128xf32>,
    return
  }
  func.func @transform_0(%arg0: i32) -> (i32, i32, i32, i32) {
    %c0_i32 = arith.constant 0 : i32
    %c0_i32_0 = arith.constant 0 : i32
    %c0_i32_1 = arith.constant 0 : i32
    %c0_i32_2 = arith.constant 0 : i32
    return %arg0, %c0_i32, %c0_i32_0, %c0_i32_1 : i32, i32, i32, i32
  }
  func.func @transform_1(%arg0: i32) -> (i32, i32, i32, i32) {
    %c0_i32 = arith.constant 0 : i32
    %c0_i32_0 = arith.constant 0 : i32
    %c0_i32_1 = arith.constant 0 : i32
    %c0_i32_2 = arith.constant 0 : i32
    %c0_i32_3 = arith.constant 0 : i32
    return %c0_i32, %c0_i32_0, %c0_i32_1, %c0_i32_2 : i32, i32, i32, i32
  }
  func.func @transform_2(%arg0: i32) -> (i32, i32) {
    %c0_i32 = arith.constant 0 : i32
    %c0_i32_0 = arith.constant 0 : i32
    %c0_i32_1 = arith.constant 0 : i32
    return %c0_i32, %c0_i32_0 : i32, i32
  }
  func.func @transform_3(%arg0: i32) -> (i32, i32, i32, i32) {
    %c0_i32 = arith.constant 0 : i32
    %c0_i32_0 = arith.constant 0 : i32
    %c0_i32_1 = arith.constant 0 : i32
    %c0_i32_2 = arith.constant 0 : i32
    %c0_i32_3 = arith.constant 0 : i32
    return %c0_i32, %c0_i32_0, %c0_i32_1, %c0_i32_2 : i32, i32, i32, i32
  }
  func.func @transform_4(%arg0: i32) -> (i32, i32) {
    %c0_i32 = arith.constant 0 : i32
    %c0_i32_0 = arith.constant 0 : i32
    %c0_i32_1 = arith.constant 0 : i32
    return %c0_i32, %c0_i32_0 : i32, i32
  }
  func.func @transform_5(%arg0: i32) -> (i32, i32) {
    %c0_i32 = arith.constant 0 : i32
    %c0_i32_0 = arith.constant 0 : i32
    %c0_i32_1 = arith.constant 0 : i32
    return %c0_i32, %c0_i32_0 : i32, i32
  }
  func.func @transform_6(%arg0: i32) -> (i32, i32) {
    %c0_i32 = arith.constant 0 : i32
    %c0_i32_0 = arith.constant 0 : i32
    %c0_i32_1 = arith.constant 0 : i32
    return %c0_i32, %c0_i32_0 : i32, i32
  }
  func.func @transform_7(%arg0: i32) -> (i32, i32) {
    %c0_i32 = arith.constant 0 : i32
    %c0_i32_0 = arith.constant 0 : i32
    %c0_i32_1 = arith.constant 0 : i32
    return %c0_i32, %c0_i32_0 : i32, i32
  }
  func.func @transform_8(%arg0: i32) -> (i32, i32) {
    %c0_i32 = arith.constant 0 : i32
    %c0_i32_0 = arith.constant 0 : i32
    %c0_i32_1 = arith.constant 0 : i32
    return %c0_i32, %c0_i32_0 : i32, i32
  }
  func.func @transform_9(%arg0: i32) -> (i32, i32, i32, i32) {
    %c0_i32 = arith.constant 0 : i32
    %c0_i32_0 = arith.constant 0 : i32
    %c0_i32_1 = arith.constant 0 : i32
    %c0_i32_2 = arith.constant 0 : i32
    return %arg0, %c0_i32, %c0_i32_0, %c0_i32_1 : i32, i32, i32, i32
  }
}

</mosaic_0001>

<llo_original>
// kernel: cab_pallas.1
$region0: #{cab_pallas.1}
  #allocation0 [shape = 'u32[]', space=smem, size = 0x4, offset = 0x4, fixed_abs, tag = 'smem constant byte address 0x4 - core index']
  #allocation1 [shape = 'u32[144,128]{1,0:T(1,128)}', space=vmem, size = 0x12000, scoped, tag = 'internal scratch']
  #allocation2 [shape = 'f32[18,18,128]{2,1,0:T(8,128)}', space=vmem, size = 0x36000, scoped, tag = 'scratch operand']
  %s0 = inlined_call_operand.vmem [shape: f32[2,18,18,128], index: 0, kind: input, shape index: {}]
  %s1 = inlined_call_operand.vmem [shape: f32[3,3,128,128], index: 1, kind: input, shape index: {}]
  %s2 = inlined_call_operand.vmem [shape: f32[1,128], index: 2, kind: input, shape index: {}]
  %s3 = inlined_call_operand.vmem [shape: f32[3,3,128,128], index: 3, kind: input, shape index: {}]
  %s4 = inlined_call_operand.vmem [shape: f32[1,128], index: 4, kind: input, shape index: {}]
  %s5 = inlined_call_operand.vmem [shape: f32[128,128], index: 5, kind: input, shape index: {}]
  %s6 = inlined_call_operand.vmem [shape: f32[1,128], index: 6, kind: input, shape index: {}]
  %s7 = inlined_call_operand.vmem [shape: f32[128,128], index: 7, kind: input, shape index: {}]
  %s8 = inlined_call_operand.vmem [shape: f32[1,128], index: 8, kind: input, shape index: {}]
  %s9 = inlined_call_operand.vmem [shape: f32[2,16,16,128], index: 9, kind: output, shape index: {}]
  %s10 = sld [smem:[#allocation0]]
  $region69: #{cab_pallas.1} parent=0
    _
  %s12 = ssub.s32 1, %s10
  %s13 = scalar_select 0, %s12, %s10
  loop: start=0, step=1, limit=4
  $region2: #{cab_pallas.1} parent=0 // loop_pre_header
    _
  $region3: #{cab_pallas.1} parent=0 // loop_header
    %s15 = sphi 0, %s19
    %p16 = scmp.ge.s32.totalorder %s15, 4
    %s25 = sphi 0, %s27
    %s28 = sphi 0, %s25
    %s29 = sphi 0, %s28
    %s45 = sphi 0, %s29
    %s49 = sphi 0, %s49
    %s51 = sphi 0, %s49
    %s52 = sphi 0, %s51
    %s66 = sphi 0, %s52
    %s70 = sphi 0, %s70
    %s72 = sphi 0, %s70
    %s73 = sphi 0, %s72
    %s87 = sphi 0, %s73
    %s91 = sphi 0, %s91
    %s93 = sphi 0, %s91
    %s94 = sphi 0, %s93
    %s108 = sphi 0, %s94
    %s112 = sphi 0, %s112
    %s114 = sphi 0, %s112
    %s115 = sphi 0, %s114
    %s129 = sphi 0, %s115
    %s133 = sphi 0, %s133
    %s135 = sphi 0, %s133
    %s136 = sphi 0, %s135
    %s150 = sphi 0, %s136
    %s154 = sphi 0, %s154
    %s156 = sphi 0, %s154
    %s157 = sphi 0, %s156
    %s171 = sphi 0, %s157
    %s175 = sphi 0, %s175
    %s177 = sphi 0, %s175
    %s178 = sphi 0, %s177
    %s192 = sphi 0, %s178
    %s196 = sphi 0, %s196
    %s198 = sphi 0, %s196
    %s199 = sphi 0, %s198
    %s213 = sphi 0, %s199
    %s219 = sphi 0, %s221
    %s222 = sphi 0, %s219
    %s223 = sphi 0, %s222
    %s239 = sphi 0, %s223
  $region4: #{cab_pallas.1} parent=0 // loop_header_branch
    %18 = sbr.rel (%p16) target = $region8
  $region5: #{cab_pallas.1} parent=0 // loop_body
    %s20 = ssub.s32 %s15, 1
    %s21 = ssub.s32 %s15, 2
    %s22 = sadd.s32 %s15, 1
    %s23 = ssub.s32 %s15, %s22
    %p24 = scmp.eq.s32.totalorder %s23, 0
    %s26 = sadd.s32 %s25, 1
    %s27 = scalar_select %p24, %s25, %s26
    %p30 = pneg %p24
    %p31 = scmp.eq.s32.totalorder %s15, 1
    %p32 = por %p30, %p31
    %p33 = scmp.ne.s32.totalorder %s25, %s28
    %p34 = scmp.eq.s32.totalorder %s15, 0
    %p35 = por %p33, %p34
    %p36 = scmp.ne.s32.totalorder %s25, %s28
    %p37 = scmp.eq.s32.totalorder %s20, 1
    %p38 = por %p36, %p37
    %p39 = scmp.ne.s32.totalorder %s28, %s29
    %p40 = scmp.eq.s32.totalorder %s20, 0
    %p41 = por %p39, %p40
    %p42 = scmp.ne.s32.totalorder %s28, %s29
    %p43 = scmp.eq.s32.totalorder %s21, 1
    %p44 = por %p42, %p43
    %p46 = scmp.ne.s32.totalorder %s29, %s45
    %p47 = scmp.eq.s32.totalorder %s21, 0
    %p48 = por %p46, %p47
    %s50 = sadd.s32 %s49, 1
    %p53 = scmp.eq.s32.totalorder %s15, 1
    %p54 = scmp.ne.s32.totalorder %s49, %s51
    %p55 = scmp.eq.s32.totalorder %s15, 0
    %p56 = por %p54, %p55
    %p57 = scmp.ne.s32.totalorder %s49, %s51
    %p58 = scmp.eq.s32.totalorder %s20, 1
    %p59 = por %p57, %p58
    %p60 = scmp.ne.s32.totalorder %s51, %s52
    %p61 = scmp.eq.s32.totalorder %s20, 0
    %p62 = por %p60, %p61
    %p63 = scmp.ne.s32.totalorder %s51, %s52
    %p64 = scmp.eq.s32.totalorder %s21, 1
    %p65 = por %p63, %p64
    %p67 = scmp.ne.s32.totalorder %s52, %s66
    %p68 = scmp.eq.s32.totalorder %s21, 0
    %p69 = por %p67, %p68
    %s71 = sadd.s32 %s70, 1
    %p74 = scmp.eq.s32.totalorder %s15, 1
    %p75 = scmp.ne.s32.totalorder %s70, %s72
    %p76 = scmp.eq.s32.totalorder %s15, 0
    %p77 = por %p75, %p76
    %p78 = scmp.ne.s32.totalorder %s70, %s72
    %p79 = scmp.eq.s32.totalorder %s20, 1
    %p80 = por %p78, %p79
    %p81 = scmp.ne.s32.totalorder %s72, %s73
    %p82 = scmp.eq.s32.totalorder %s20, 0
    %p83 = por %p81, %p82
    %p84 = scmp.ne.s32.totalorder %s72, %s73
    %p85 = scmp.eq.s32.totalorder %s21, 1
    %p86 = por %p84, %p85
    %p88 = scmp.ne.s32.totalorder %s73, %s87
    %p89 = scmp.eq.s32.totalorder %s21, 0
    %p90 = por %p88, %p89
    %s92 = sadd.s32 %s91, 1
    %p95 = scmp.eq.s32.totalorder %s15, 1
    %p96 = scmp.ne.s32.totalorder %s91, %s93
    %p97 = scmp.eq.s32.totalorder %s15, 0
    %p98 = por %p96, %p97
    %p99 = scmp.ne.s32.totalorder %s91, %s93
    %p100 = scmp.eq.s32.totalorder %s20, 1
    %p101 = por %p99, %p100
    %p102 = scmp.ne.s32.totalorder %s93, %s94
    %p103 = scmp.eq.s32.totalorder %s20, 0
    %p104 = por %p102, %p103
    %p105 = scmp.ne.s32.totalorder %s93, %s94
    %p106 = scmp.eq.s32.totalorder %s21, 1
    %p107 = por %p105, %p106
    %p109 = scmp.ne.s32.totalorder %s94, %s108
    %p110 = scmp.eq.s32.totalorder %s21, 0
    %p111 = por %p109, %p110
    %s113 = sadd.s32 %s112, 1
    %p116 = scmp.eq.s32.totalorder %s15, 1
    %p117 = scmp.ne.s32.totalorder %s112, %s114
    %p118 = scmp.eq.s32.totalorder %s15, 0
    %p119 = por %p117, %p118
    %p120 = scmp.ne.s32.totalorder %s112, %s114
    %p121 = scmp.eq.s32.totalorder %s20, 1
    %p122 = por %p120, %p121
    %p123 = scmp.ne.s32.totalorder %s114, %s115
    %p124 = scmp.eq.s32.totalorder %s20, 0
    %p125 = por %p123, %p124
    %p126 = scmp.ne.s32.totalorder %s114, %s115
    %p127 = scmp.eq.s32.totalorder %s21, 1
    %p128 = por %p126, %p127
    %p130 = scmp.ne.s32.totalorder %s115, %s129
    %p131 = scmp.eq.s32.totalorder %s21, 0
    %p132 = por %p130, %p131
    %s134 = sadd.s32 %s133, 1
    %p137 = scmp.eq.s32.totalorder %s15, 1
    %p138 = scmp.ne.s32.totalorder %s133, %s135
    %p139 = scmp.eq.s32.totalorder %s15, 0
    %p140 = por %p138, %p139
    %p141 = scmp.ne.s32.totalorder %s133, %s135
    %p142 = scmp.eq.s32.totalorder %s20, 1
    %p143 = por %p141, %p142
    %p144 = scmp.ne.s32.totalorder %s135, %s136
    %p145 = scmp.eq.s32.totalorder %s20, 0
    %p146 = por %p144, %p145
    %p147 = scmp.ne.s32.totalorder %s135, %s136
    %p148 = scmp.eq.s32.totalorder %s21, 1
    %p149 = por %p147, %p148
    %p151 = scmp.ne.s32.totalorder %s136, %s150
    %p152 = scmp.eq.s32.totalorder %s21, 0
    %p153 = por %p151, %p152
    %s155 = sadd.s32 %s154, 1
    %p158 = scmp.eq.s32.totalorder %s15, 1
    %p159 = scmp.ne.s32.totalorder %s154, %s156
    %p160 = scmp.eq.s32.totalorder %s15, 0
    %p161 = por %p159, %p160
    %p162 = scmp.ne.s32.totalorder %s154, %s156
    %p163 = scmp.eq.s32.totalorder %s20, 1
    %p164 = por %p162, %p163
    %p165 = scmp.ne.s32.totalorder %s156, %s157
    %p166 = scmp.eq.s32.totalorder %s20, 0
    %p167 = por %p165, %p166
    %p168 = scmp.ne.s32.totalorder %s156, %s157
    %p169 = scmp.eq.s32.totalorder %s21, 1
    %p170 = por %p168, %p169
    %p172 = scmp.ne.s32.totalorder %s157, %s171
    %p173 = scmp.eq.s32.totalorder %s21, 0
    %p174 = por %p172, %p173
    %s176 = sadd.s32 %s175, 1
    %p179 = scmp.eq.s32.totalorder %s15, 1
    %p180 = scmp.ne.s32.totalorder %s175, %s177
    %p181 = scmp.eq.s32.totalorder %s15, 0
    %p182 = por %p180, %p181
    %p183 = scmp.ne.s32.totalorder %s175, %s177
    %p184 = scmp.eq.s32.totalorder %s20, 1
    %p185 = por %p183, %p184
    %p186 = scmp.ne.s32.totalorder %s177, %s178
    %p187 = scmp.eq.s32.totalorder %s20, 0
    %p188 = por %p186, %p187
    %p189 = scmp.ne.s32.totalorder %s177, %s178
    %p190 = scmp.eq.s32.totalorder %s21, 1
    %p191 = por %p189, %p190
    %p193 = scmp.ne.s32.totalorder %s178, %s192
    %p194 = scmp.eq.s32.totalorder %s21, 0
    %p195 = por %p193, %p194
    %s197 = sadd.s32 %s196, 1
    %p200 = scmp.eq.s32.totalorder %s15, 1
    %p201 = scmp.ne.s32.totalorder %s196, %s198
    %p202 = scmp.eq.s32.totalorder %s15, 0
    %p203 = por %p201, %p202
    %p204 = scmp.ne.s32.totalorder %s196, %s198
    %p205 = scmp.eq.s32.totalorder %s20, 1
    %p206 = por %p204, %p205
    %p207 = scmp.ne.s32.totalorder %s198, %s199
    %p208 = scmp.eq.s32.totalorder %s20, 0
    %p209 = por %p207, %p208
    %p210 = scmp.ne.s32.totalorder %s198, %s199
    %p211 = scmp.eq.s32.totalorder %s21, 1
    %p212 = por %p210, %p211
    %p214 = scmp.ne.s32.totalorder %s199, %s213
    %p215 = scmp.eq.s32.totalorder %s21, 0
    %p216 = por %p214, %p215
    %s217 = ssub.s32 %s15, %s22
    %p218 = scmp.eq.s32.totalorder %s217, 0
    %s220 = sadd.s32 %s219, 1
    %s221 = scalar_select %p218, %s219, %s220
    %p224 = pneg %p218
    %p225 = scmp.eq.s32.totalorder %s15, 1
    %p226 = por %p224, %p225
    %p227 = scmp.ne.s32.totalorder %s219, %s222
    %p228 = scmp.eq.s32.totalorder %s15, 0
    %p229 = por %p227, %p228
    %p230 = scmp.ne.s32.totalorder %s219, %s222
    %p231 = scmp.eq.s32.totalorder %s20, 1
    %p232 = por %p230, %p231
    %p233 = scmp.ne.s32.totalorder %s222, %s223
    %p234 = scmp.eq.s32.totalorder %s20, 0
    %p235 = por %p233, %p234
    %p236 = scmp.ne.s32.totalorder %s222, %s223
    %p237 = scmp.eq.s32.totalorder %s21, 1
    %p238 = por %p236, %p237
    %p240 = scmp.ne.s32.totalorder %s223, %s239
    %p241 = scmp.eq.s32.totalorder %s21, 0
    %p242 = por %p240, %p241
    %p243 = scmp.le.s32.totalorder 1, %s15
    %p244 = scmp.lt.s32.totalorder %s15, 3
    %p245 = pnand %p243, %p244
    %p246 = pneg %p245
    // Predicated region
    $region9: #{cab_pallas.1} parent=5 // pred_check
      _
    $region10: #{cab_pallas.1} parent=5 // pred_check_branch
      %248 = sbr.rel (%p245) target = $region12
    $region11: #{cab_pallas.1} parent=5 // pred_region
      %s249 = ssub.s32 %s15, 1
      // Predicated region
      $region13: #{cab_pallas.1} parent=11 // pred_check
        %p250 = pneg %p62
      $region14: #{cab_pallas.1} parent=11 // pred_check_branch
        %252 = sbr.rel (%p250) target = $region16
      $region15: #{cab_pallas.1} parent=11 // pred_region
        _
      $region16: #{cab_pallas.1} parent=11 // pred_fallthru
        _
      // Predicated region
      $region17: #{cab_pallas.1} parent=11 // pred_check
        %p253 = pneg %p83
      $region18: #{cab_pallas.1} parent=11 // pred_check_branch
        %255 = sbr.rel (%p253) target = $region20
      $region19: #{cab_pallas.1} parent=11 // pred_region
        _
      $region20: #{cab_pallas.1} parent=11 // pred_fallthru
        _
      // Predicated region
      $region21: #{cab_pallas.1} parent=11 // pred_check
        %p256 = pneg %p104
      $region22: #{cab_pallas.1} parent=11 // pred_check_branch
        %258 = sbr.rel (%p256) target = $region24
      $region23: #{cab_pallas.1} parent=11 // pred_region
        _
      $region24: #{cab_pallas.1} parent=11 // pred_fallthru
        _
      // Predicated region
      $region25: #{cab_pallas.1} parent=11 // pred_check
        %p259 = pneg %p125
      $region26: #{cab_pallas.1} parent=11 // pred_check_branch
        %261 = sbr.rel (%p259) target = $region28
      $region27: #{cab_pallas.1} parent=11 // pred_region
        _
      $region28: #{cab_pallas.1} parent=11 // pred_fallthru
        _
      // Predicated region
      $region29: #{cab_pallas.1} parent=11 // pred_check
        %p262 = pneg %p146
      $region30: #{cab_pallas.1} parent=11 // pred_check_branch
        %264 = sbr.rel (%p262) target = $region32
      $region31: #{cab_pallas.1} parent=11 // pred_region
        _
      $region32: #{cab_pallas.1} parent=11 // pred_fallthru
        _
      // Predicated region
      $region33: #{cab_pallas.1} parent=11 // pred_check
        %p265 = pneg %p167
      $region34: #{cab_pallas.1} parent=11 // pred_check_branch
        %267 = sbr.rel (%p265) target = $region36
      $region35: #{cab_pallas.1} parent=11 // pred_region
        _
      $region36: #{cab_pallas.1} parent=11 // pred_fallthru
        _
      // Predicated region
      $region37: #{cab_pallas.1} parent=11 // pred_check
        %p268 = pneg %p188
      $region38: #{cab_pallas.1} parent=11 // pred_check_branch
        %270 = sbr.rel (%p268) target = $region40
      $region39: #{cab_pallas.1} parent=11 // pred_region
        _
      $region40: #{cab_pallas.1} parent=11 // pred_fallthru
        _
      // Predicated region
      $region41: #{cab_pallas.1} parent=11 // pred_check
        %p271 = pneg %p209
      $region42: #{cab_pallas.1} parent=11 // pred_check_branch
        %273 = sbr.rel (%p271) target = $region44
      $region43: #{cab_pallas.1} parent=11 // pred_region
        _
      $region44: #{cab_pallas.1} parent=11 // pred_fallthru
        _
    $region12: #{cab_pallas.1} parent=5 // pred_fallthru
      _
    %p274 = scmp.lt.s32.totalorder %s15, 2
    // Predicated region
    $region45: #{cab_pallas.1} parent=5 // pred_check
      %p275 = pneg %p274
    $region46: #{cab_pallas.1} parent=5 // pred_check_branch
      %277 = sbr.rel (%p275) target = $region48
    $region47: #{cab_pallas.1} parent=5 // pred_region
      // Predicated region
      $region49: #{cab_pallas.1} parent=47 // pred_check
        %p278 = pneg %p35
      $region50: #{cab_pallas.1} parent=47 // pred_check_branch
        %280 = sbr.rel (%p278) target = $region52
      $region51: #{cab_pallas.1} parent=47 // pred_region
        %p281 = scmp.lt.s32.totalorder %s15, 1
        %s282 = scalar_select %p281, %s15, 1
        %s283 = smul.addr %s282, 54
        %s284 = smul.addr %s283, 8
        %s285 = scalar_lea.vmem %s0, %s284
      $region52: #{cab_pallas.1} parent=47 // pred_fallthru
        _
    $region48: #{cab_pallas.1} parent=5 // pred_fallthru
      _
    %p286 = scmp.le.s32.totalorder 1, %s15
    %p287 = scmp.lt.s32.totalorder %s15, 3
    %p288 = pnand %p286, %p287
    %p289 = pneg %p288
    // Predicated region
    $region53: #{cab_pallas.1} parent=5 // pred_check
      _
    $region54: #{cab_pallas.1} parent=5 // pred_check_branch
      %291 = sbr.rel (%p288) target = $region56
    $region55: #{cab_pallas.1} parent=5 // pred_region
      %s292 = ssub.s32 %s15, 1
      %p293 = scmp.lt.s32.totalorder %s20, 1
      %s294 = scalar_select %p293, %s20, 1
      %s295 = smul.addr %s294, 54
      %s296 = smul.addr %s295, 8
      %s297 = scalar_lea.vmem %s0, %s296
      %p298 = pneg %p41
      %p299 = pneg %p38
      %p300 = pneg %p62
      %p301 = pneg %p59
      %p302 = pneg %p83
      %p303 = pneg %p80
      %p304 = pneg %p104
      %p305 = pneg %p101
      %p306 = pneg %p125
      %p307 = pneg %p122
      %p308 = pneg %p146
      %p309 = pneg %p143
      %p310 = pneg %p167
      %p311 = pneg %p164
      %p312 = pneg %p188
      %p313 = pneg %p185
      %p314 = pneg %p209
      %p315 = pneg %p206
      %p316 = pneg %p235
      %p317 = pneg %p232
      %p318 = scmp.lt.s32.totalorder %s20, 1
      %s319 = scalar_select %p318, %s20, 1
      %s320 = smul.addr %s319, 32
      %s321 = smul.addr %s320, 8
      %s322 = scalar_lea.vmem %s9, %s321
      %p323 = scmp.lt.s32.totalorder %s20, 1
      %s324 = scalar_select %p323, %s20, 1
      %s325 = smul.addr %s324, 54
      %s326 = smul.addr %s325, 8
      %s327 = scalar_lea.vmem %s0, %s326
      %p328 = scmp.lt.s32.totalorder %s20, 1
      %s329 = scalar_select %p328, %s20, 1
      %s330 = smul.addr %s329, 32
      %s331 = smul.addr %s330, 8
      %s332 = scalar_lea.vmem %s9, %s331
      %v333 = vld [vmem:[%s327] sm:$0xff]
      %v334 = vld [vmem:[%s327 + $0x8] sm:$0xff]
      %v335 = vld [vmem:[%s327 + $0x18] sm:$0xff]
      %v336 = vld [vmem:[%s327 + $0x20] sm:$0xff]
      %v337 = vld [vmem:[%s327 + $0x30] sm:$0xff]
      %v338 = vld [vmem:[%s327 + $0x38] sm:$0xff]
      %v339 = vld [vmem:[%s327 + $0x48] sm:$0xff]
      %v340 = vld [vmem:[%s327 + $0x50] sm:$0xff]
      %v341 = vld [vmem:[%s327 + $0x60] sm:$0xff]
      %v342 = vld [vmem:[%s327 + $0x68] sm:$0xff]
      %v343 = vld [vmem:[%s327 + $0x78] sm:$0xff]
      %v344 = vld [vmem:[%s327 + $0x80] sm:$0xff]
      %v345 = vld [vmem:[%s327 + $0x90] sm:$0xff]
      %v346 = vld [vmem:[%s327 + $0x98] sm:$0xff]
      %v347 = vld [vmem:[%s327 + $0xa8] sm:$0xff]
      %v348 = vld [vmem:[%s327 + $0xb0] sm:$0xff]
      %v349 = vld [vmem:[%s327 + $0xc0] sm:$0xff]
      %v350 = vld [vmem:[%s327 + $0xc8] sm:$0xff]
      %v351 = vld [vmem:[%s327 + $0xd8] sm:$0xff]
      %v352 = vld [vmem:[%s327 + $0xe0] sm:$0xff]
      %v353 = vld [vmem:[%s327 + $0xf0] sm:$0xff]
      %v354 = vld [vmem:[%s327 + $0xf8] sm:$0xff]
      %v355 = vld [vmem:[%s327 + $0x108] sm:$0xff]
      %v356 = vld [vmem:[%s327 + $0x110] sm:$0xff]
      %v357 = vld [vmem:[%s327 + $0x120] sm:$0xff]
      %v358 = vld [vmem:[%s327 + $0x128] sm:$0xff]
      %v359 = vld [vmem:[%s327 + $0x138] sm:$0xff]
      %v360 = vld [vmem:[%s327 + $0x140] sm:$0xff]
      %v361 = vld [vmem:[%s327 + $0x150] sm:$0xff]
      %v362 = vld [vmem:[%s327 + $0x158] sm:$0xff]
      %v363 = vld [vmem:[%s327 + $0x168] sm:$0xff]
      %v364 = vld [vmem:[%s327 + $0x170] sm:$0xff]
      %v365 = vld [vmem:[%s1] sm:$0xff]
      %v366 = vld [vmem:[%s1 + $0x8] sm:$0xff]
      %v367 = vld [vmem:[%s1 + $0x10] sm:$0xff]
      %v368 = vld [vmem:[%s1 + $0x18] sm:$0xff]
      %v369 = vld [vmem:[%s1 + $0x20] sm:$0xff]
      %v370 = vld [vmem:[%s1 + $0x28] sm:$0xff]
      %v371 = vld [vmem:[%s1 + $0x30] sm:$0xff]
      %v372 = vld [vmem:[%s1 + $0x38] sm:$0xff]
      %v373 = vld [vmem:[%s1 + $0x40] sm:$0xff]
      %v374 = vld [vmem:[%s1 + $0x48] sm:$0xff]
      %v375 = vld [vmem:[%s1 + $0x50] sm:$0xff]
      %v376 = vld [vmem:[%s1 + $0x58] sm:$0xff]
      %v377 = vld [vmem:[%s1 + $0x60] sm:$0xff]
      %v378 = vld [vmem:[%s1 + $0x68] sm:$0xff]
      %v379 = vld [vmem:[%s1 + $0x70] sm:$0xff]
      %v380 = vld [vmem:[%s1 + $0x78] sm:$0xff]
      %v381 = vld [vmem:[%s327 + $0x1] sm:$0xff]
      %v382 = vld [vmem:[%s327 + $0x9] sm:$0xff]
      %v383 = vld [vmem:[%s327 + $0x19] sm:$0xff]
      %v384 = vld [vmem:[%s327 + $0x21] sm:$0xff]
      %v385 = vld [vmem:[%s327 + $0x31] sm:$0xff]
      %v386 = vld [vmem:[%s327 + $0x39] sm:$0xff]
      %v387 = vld [vmem:[%s327 + $0x49] sm:$0xff]
      %v388 = vld [vmem:[%s327 + $0x51] sm:$0xff]
      %v389 = vld [vmem:[%s327 + $0x61] sm:$0xff]
      %v390 = vld [vmem:[%s327 + $0x69] sm:$0xff]
      %v391 = vld [vmem:[%s327 + $0x79] sm:$0xff]
      %v392 = vld [vmem:[%s327 + $0x81] sm:$0xff]
      %v393 = vld [vmem:[%s327 + $0x91] sm:$0xff]
      %v394 = vld [vmem:[%s327 + $0x99] sm:$0xff]
      %v395 = vld [vmem:[%s327 + $0xa9] sm:$0xff]
      %v396 = vld [vmem:[%s327 + $0xb1] sm:$0xff]
      %v397 = vld [vmem:[%s327 + $0xc1] sm:$0xff]
      %v398 = vld [vmem:[%s327 + $0xc9] sm:$0xff]
      %v399 = vld [vmem:[%s327 + $0xd9] sm:$0xff]
      %v400 = vld [vmem:[%s327 + $0xe1] sm:$0xff]
      %v401 = vld [vmem:[%s327 + $0xf1] sm:$0xff]
      %v402 = vld [vmem:[%s327 + $0xf9] sm:$0xff]
      %v403 = vld [vmem:[%s327 + $0x109] sm:$0xff]
      %v404 = vld [vmem:[%s327 + $0x111] sm:$0xff]
      %v405 = vld [vmem:[%s327 + $0x121] sm:$0xff]
      %v406 = vld [vmem:[%s327 + $0x129] sm:$0xff]
      %v407 = vld [vmem:[%s327 + $0x139] sm:$0xff]
      %v408 = vld [vmem:[%s327 + $0x141] sm:$0xff]
      %v409 = vld [vmem:[%s327 + $0x151] sm:$0xff]
      %v410 = vld [vmem:[%s327 + $0x159] sm:$0xff]
      %v411 = vld [vmem:[%s327 + $0x169] sm:$0xff]
      %v412 = vld [vmem:[%s327 + $0x171] sm:$0xff]
      %s413 = scalar_lea.vmem %s1, 128
      %v414 = vld [vmem:[%s413] sm:$0xff]
      %v415 = vld [vmem:[%s413 + $0x8] sm:$0xff]
      %v416 = vld [vmem:[%s413 + $0x10] sm:$0xff]
      %v417 = vld [vmem:[%s413 + $0x18] sm:$0xff]
      %v418 = vld [vmem:[%s413 + $0x20] sm:$0xff]
      %v419 = vld [vmem:[%s413 + $0x28] sm:$0xff]
      %v420 = vld [vmem:[%s413 + $0x30] sm:$0xff]
      %v421 = vld [vmem:[%s413 + $0x38] sm:$0xff]
      %v422 = vld [vmem:[%s413 + $0x40] sm:$0xff]
      %v423 = vld [vmem:[%s413 + $0x48] sm:$0xff]
      %v424 = vld [vmem:[%s413 + $0x50] sm:$0xff]
      %v425 = vld [vmem:[%s413 + $0x58] sm:$0xff]
      %v426 = vld [vmem:[%s413 + $0x60] sm:$0xff]
      %v427 = vld [vmem:[%s413 + $0x68] sm:$0xff]
      %v428 = vld [vmem:[%s413 + $0x70] sm:$0xff]
      %v429 = vld [vmem:[%s413 + $0x78] sm:$0xff]
      %430 = vmatprep.subr.mxu0 0.0
      %431 = vmatpush1.msra.mxu0 %v429
      %432 = vmatprep.subr.mxu0 0.0
      %433 = vmatpush1.msra.mxu0 %v428
      %434 = vmatprep.subr.mxu0 0.0
      %435 = vmatpush1.msra.mxu0 %v427
      %436 = vmatprep.subr.mxu0 0.0
      %437 = vmatpush1.msra.mxu0 %v426
      %438 = vmatprep.subr.mxu0 0.0
      %439 = vmatpush1.msra.mxu0 %v425
      %440 = vmatprep.subr.mxu0 0.0
      %441 = vmatpush1.msra.mxu0 %v424
      %442 = vmatprep.subr.mxu0 0.0
      %443 = vmatpush1.msra.mxu0 %v423
      %444 = vmatprep.subr.mxu0 0.0
      %445 = vmatpush1.msra.mxu0 %v422
      %446 = vmatprep.subr.mxu0 0.0
      %447 = vmatpush1.msra.mxu0 %v421
      %448 = vmatprep.subr.mxu0 0.0
      %449 = vmatpush1.msra.mxu0 %v420
      %450 = vmatprep.subr.mxu0 0.0
      %451 = vmatpush1.msra.mxu0 %v419
      %452 = vmatprep.subr.mxu0 0.0
      %453 = vmatpush1.msra.mxu0 %v418
      %454 = vmatprep.subr.mxu0 0.0
      %455 = vmatpush1.msra.mxu0 %v417
      %456 = vmatprep.subr.mxu0 0.0
      %457 = vmatpush1.msra.mxu0 %v416
      %458 = vmatprep.subr.mxu0 0.0
      %459 = vmatpush1.msra.mxu0 %v415
      %460 = vmatprep.subr.mxu0 0.0
      %461 = vmatpush1.msra.mxu0 %v414
      %462 = vmatprep.subr.mxu0 0.0
      %463 = vmatpush2.msra.mxu0 0.0
      %464 = vmatprep.subr.mxu0 0.0
      %465 = vmatpush2.msra.mxu0 0.0
      %466 = vmatprep.subr.mxu0 0.0
      %467 = vmatpush2.msra.mxu0 0.0
      %468 = vmatprep.subr.mxu0 0.0
      %469 = vmatpush2.msra.mxu0 0.0
      %470 = vmatprep.subr.mxu0 0.0
      %471 = vmatpush2.msra.mxu0 0.0
      %472 = vmatprep.subr.mxu0 0.0
      %473 = vmatpush2.msra.mxu0 0.0
      %474 = vmatprep.subr.mxu0 0.0
      %475 = vmatpush2.msra.mxu0 0.0
      %476 = vmatprep.subr.mxu0 0.0
      %477 = vmatpush2.msra.mxu0 0.0
      %478 = vmatprep.subr.mxu0 0.0
      %479 = vmatpush2.msra.mxu0 0.0
      %480 = vmatprep.subr.mxu0 0.0
      %481 = vmatpush2.msra.mxu0 0.0
      %482 = vmatprep.subr.mxu0 0.0
      %483 = vmatpush2.msra.mxu0 0.0
      %484 = vmatprep.subr.mxu0 0.0
      %485 = vmatpush2.msra.mxu0 0.0
      %486 = vmatprep.subr.mxu0 0.0
      %487 = vmatpush2.msra.mxu0 0.0
      %488 = vmatprep.subr.mxu0 0.0
      %489 = vmatpush2.msra.mxu0 0.0
      %490 = vmatprep.subr.mxu0 0.0
      %491 = vmatpush2.msra.mxu0 0.0
      %492 = vmatprep.subr.mxu0 0.0
      %493 = vmatpush2.msra.mxu0 0.0
      %494 = vmatprep.mubr.f32.mxu0 0.0
      %495 = vmatmul.mubr.f32.gmra.mxu0 %v381
      %v496 = vpop.f32.mrf.mxu0
      %v497 = vadd.f32 0.0, %v496
      %v498 = vpop.f32.mrf.mxu0
      %499 = vmatprep.mubr.f32.mxu0 0.0
      %500 = vmatmul.mubr.f32.gmra.mxu0 %v382
      %v501 = vpop.f32.mrf.mxu0
      %v502 = vadd.f32 0.0, %v501
      %v503 = vpop.f32.mrf.mxu0
      %504 = vmatprep.mubr.f32.mxu0 0.0
      %505 = vmatmul.mubr.f32.gmra.mxu0 %v383
      %v506 = vpop.f32.mrf.mxu0
      %v507 = vadd.f32 0.0, %v506
      %v508 = vpop.f32.mrf.mxu0
      %509 = vmatprep.mubr.f32.mxu0 0.0
      %510 = vmatmul.mubr.f32.gmra.mxu0 %v384
      %v511 = vpop.f32.mrf.mxu0
      %v512 = vadd.f32 0.0, %v511
      %v513 = vpop.f32.mrf.mxu0
      %514 = vmatprep.mubr.f32.mxu0 0.0
      %515 = vmatmul.mubr.f32.gmra.mxu0 %v385
      %v516 = vpop.f32.mrf.mxu0
      %v517 = vadd.f32 0.0, %v516
      %v518 = vpop.f32.mrf.mxu0
      %519 = vmatprep.mubr.f32.mxu0 0.0
      %520 = vmatmul.mubr.f32.gmra.mxu0 %v386
      %v521 = vpop.f32.mrf.mxu0
      %v522 = vadd.f32 0.0, %v521
      %v523 = vpop.f32.mrf.mxu0
      %524 = vmatprep.mubr.f32.mxu0 0.0
      %525 = vmatmul.mubr.f32.gmra.mxu0 %v387
      %v526 = vpop.f32.mrf.mxu0
      %v527 = vadd.f32 0.0, %v526
      %v528 = vpop.f32.mrf.mxu0
      %529 = vmatprep.mubr.f32.mxu0 0.0
      %530 = vmatmul.mubr.f32.gmra.mxu0 %v388
      %v531 = vpop.f32.mrf.mxu0
      %v532 = vadd.f32 0.0, %v531
      %v533 = vpop.f32.mrf.mxu0
      %534 = vmatprep.mubr.f32.mxu0 0.0
      %535 = vmatmul.mubr.f32.gmra.mxu0 %v389
      %v536 = vpop.f32.mrf.mxu0
      %v537 = vadd.f32 0.0, %v536
      %v538 = vpop.f32.mrf.mxu0
      %539 = vmatprep.mubr.f32.mxu0 0.0
      %540 = vmatmul.mubr.f32.gmra.mxu0 %v390
      %v541 = vpop.f32.mrf.mxu0
      %v542 = vadd.f32 0.0, %v541
      %v543 = vpop.f32.mrf.mxu0
      %544 = vmatprep.mubr.f32.mxu0 0.0
      %545 = vmatmul.mubr.f32.gmra.mxu0 %v391
      %v546 = vpop.f32.mrf.mxu0
      %v547 = vadd.f32 0.0, %v546
      %v548 = vpop.f32.mrf.mxu0
      %549 = vmatprep.mubr.f32.mxu0 0.0
      %550 = vmatmul.mubr.f32.gmra.mxu0 %v392
      %v551 = vpop.f32.mrf.mxu0
      %v552 = vadd.f32 0.0, %v551
      %v553 = vpop.f32.mrf.mxu0
      %554 = vmatprep.mubr.f32.mxu0 0.0
      %555 = vmatmul.mubr.f32.gmra.mxu0 %v393
      %v556 = vpop.f32.mrf.mxu0
      %v557 = vadd.f32 0.0, %v556
      %v558 = vpop.f32.mrf.mxu0
      %559 = vmatprep.mubr.f32.mxu0 0.0
      %560 = vmatmul.mubr.f32.gmra.mxu0 %v394
      %v561 = vpop.f32.mrf.mxu0
      %v562 = vadd.f32 0.0, %v561
      %v563 = vpop.f32.mrf.mxu0
      %564 = vmatprep.mubr.f32.mxu0 0.0
      %565 = vmatmul.mubr.f32.gmra.mxu0 %v395
      %v566 = vpop.f32.mrf.mxu0
      %v567 = vadd.f32 0.0, %v566
      %v568 = vpop.f32.mrf.mxu0
      %569 = vmatprep.mubr.f32.mxu0 0.0
      %570 = vmatmul.mubr.f32.gmra.mxu0 %v396
      %v571 = vpop.f32.mrf.mxu0
      %v572 = vadd.f32 0.0, %v571
      %v573 = vpop.f32.mrf.mxu0
      %574 = vmatprep.mubr.f32.mxu0 0.0
      %575 = vmatmul.mubr.f32.gmra.mxu0 %v397
      %v576 = vpop.f32.mrf.mxu0
      %v577 = vadd.f32 0.0, %v576
      %v578 = vpop.f32.mrf.mxu0
      %579 = vmatprep.mubr.f32.mxu0 0.0
      %580 = vmatmul.mubr.f32.gmra.mxu0 %v398
      %v581 = vpop.f32.mrf.mxu0
      %v582 = vadd.f32 0.0, %v581
      %v583 = vpop.f32.mrf.mxu0
      %584 = vmatprep.mubr.f32.mxu0 0.0
      %585 = vmatmul.mubr.f32.gmra.mxu0 %v399
      %v586 = vpop.f32.mrf.mxu0
      %v587 = vadd.f32 0.0, %v586
      %v588 = vpop.f32.mrf.mxu0
      %589 = vmatprep.mubr.f32.mxu0 0.0
      %590 = vmatmul.mubr.f32.gmra.mxu0 %v400
      %v591 = vpop.f32.mrf.mxu0
      %v592 = vadd.f32 0.0, %v591
      %v593 = vpop.f32.mrf.mxu0
      %594 = vmatprep.mubr.f32.mxu0 0.0
      %595 = vmatmul.mubr.f32.gmra.mxu0 %v401
      %v596 = vpop.f32.mrf.mxu0
      %v597 = vadd.f32 0.0, %v596
      %v598 = vpop.f32.mrf.mxu0
      %599 = vmatprep.mubr.f32.mxu0 0.0
      %600 = vmatmul.mubr.f32.gmra.mxu0 %v402
      %v601 = vpop.f32.mrf.mxu0
      %v602 = vadd.f32 0.0, %v601
      %v603 = vpop.f32.mrf.mxu0
      %604 = vmatprep.mubr.f32.mxu0 0.0
      %605 = vmatmul.mubr.f32.gmra.mxu0 %v403
      %v606 = vpop.f32.mrf.mxu0
      %v607 = vadd.f32 0.0, %v606
      %v608 = vpop.f32.mrf.mxu0
      %609 = vmatprep.mubr.f32.mxu0 0.0
      %610 = vmatmul.mubr.f32.gmra.mxu0 %v404
      %v611 = vpop.f32.mrf.mxu0
      %v612 = vadd.f32 0.0, %v611
      %v613 = vpop.f32.mrf.mxu0
      %614 = vmatprep.mubr.f32.mxu0 0.0
      %615 = vmatmul.mubr.f32.gmra.mxu0 %v405
      %v616 = vpop.f32.mrf.mxu0
      %v617 = vadd.f32 0.0, %v616
      %v618 = vpop.f32.mrf.mxu0
      %619 = vmatprep.mubr.f32.mxu0 0.0
      %620 = vmatmul.mubr.f32.gmra.mxu0 %v406
      %v621 = vpop.f32.mrf.mxu0
      %v622 = vadd.f32 0.0, %v621
      %v623 = vpop.f32.mrf.mxu0
      %624 = vmatprep.mubr.f32.mxu0 0.0
      %625 = vmatmul.mubr.f32.gmra.mxu0 %v407
      %v626 = vpop.f32.mrf.mxu0
      %v627 = vadd.f32 0.0, %v626
      %v628 = vpop.f32.mrf.mxu0
      %629 = vmatprep.mubr.f32.mxu0 0.0
      %630 = vmatmul.mubr.f32.gmra.mxu0 %v408
      %v631 = vpop.f32.mrf.mxu0
      %v632 = vadd.f32 0.0, %v631
      %v633 = vpop.f32.mrf.mxu0
      %634 = vmatprep.mubr.f32.mxu0 0.0
      %635 = vmatmul.mubr.f32.gmra.mxu0 %v409
      %v636 = vpop.f32.mrf.mxu0
      %v637 = vadd.f32 0.0, %v636
      %v638 = vpop.f32.mrf.mxu0
      %639 = vmatprep.mubr.f32.mxu0 0.0
      %640 = vmatmul.mubr.f32.gmra.mxu0 %v410
      %v641 = vpop.f32.mrf.mxu0
      %v642 = vadd.f32 0.0, %v641
      %v643 = vpop.f32.mrf.mxu0
      %644 = vmatprep.mubr.f32.mxu0 0.0
      %645 = vmatmul.mubr.f32.gmra.mxu0 %v411
      %v646 = vpop.f32.mrf.mxu0
      %v647 = vadd.f32 0.0, %v646
      %v648 = vpop.f32.mrf.mxu0
      %649 = vmatprep.mubr.f32.mxu0 0.0
      %650 = vmatmul.mubr.f32.gmra.mxu0 %v412
      %v651 = vpop.f32.mrf.mxu0
      %v652 = vadd.f32 0.0, %v651
      %v653 = vpop.f32.mrf.mxu0
      %654 = vdwg.mxu0
      %655 = vmatprep.subr.mxu0 0.0
      %656 = vmatpush1.msra.mxu0 %v380
      %657 = vmatprep.subr.mxu0 0.0
      %658 = vmatpush1.msra.mxu0 %v379
      %659 = vmatprep.subr.mxu0 0.0
      %660 = vmatpush1.msra.mxu0 %v378
      %661 = vmatprep.subr.mxu0 0.0
      %662 = vmatpush1.msra.mxu0 %v377
      %663 = vmatprep.subr.mxu0 0.0
      %664 = vmatpush1.msra.mxu0 %v376
      %665 = vmatprep.subr.mxu0 0.0
      %666 = vmatpush1.msra.mxu0 %v375
      %667 = vmatprep.subr.mxu0 0.0
      %668 = vmatpush1.msra.mxu0 %v374
      %669 = vmatprep.subr.mxu0 0.0
      %670 = vmatpush1.msra.mxu0 %v373
      %671 = vmatprep.subr.mxu0 0.0
      %672 = vmatpush1.msra.mxu0 %v372
      %673 = vmatprep.subr.mxu0 0.0
      %674 = vmatpush1.msra.mxu0 %v371
      %675 = vmatprep.subr.mxu0 0.0
      %676 = vmatpush1.msra.mxu0 %v370
      %677 = vmatprep.subr.mxu0 0.0
      %678 = vmatpush1.msra.mxu0 %v369
      %679 = vmatprep.subr.mxu0 0.0
      %680 = vmatpush1.msra.mxu0 %v368
      %681 = vmatprep.subr.mxu0 0.0
      %682 = vmatpush1.msra.mxu0 %v367
      %683 = vmatprep.subr.mxu0 0.0
      %684 = vmatpush1.msra.mxu0 %v366
      %685 = vmatprep.subr.mxu0 0.0
      %686 = vmatpush1.msra.mxu0 %v365
      %687 = vmatprep.subr.mxu0 0.0
      %688 = vmatpush2.msra.mxu0 0.0
      %689 = vmatprep.subr.mxu0 0.0
      %690 = vmatpush2.msra.mxu0 0.0
      %691 = vmatprep.subr.mxu0 0.0
      %692 = vmatpush2.msra.mxu0 0.0
      %693 = vmatprep.subr.mxu0 0.0
      %694 = vmatpush2.msra.mxu0 0.0
      %695 = vmatprep.subr.mxu0 0.0
      %696 = vmatpush2.msra.mxu0 0.0
      %697 = vmatprep.subr.mxu0 0.0
      %698 = vmatpush2.msra.mxu0 0.0
      %699 = vmatprep.subr.mxu0 0.0
      %700 = vmatpush2.msra.mxu0 0.0
      %701 = vmatprep.subr.mxu0 0.0
      %702 = vmatpush2.msra.mxu0 0.0
      %703 = vmatprep.subr.mxu0 0.0
      %704 = vmatpush2.msra.mxu0 0.0
      %705 = vmatprep.subr.mxu0 0.0
      %706 = vmatpush2.msra.mxu0 0.0
      %707 = vmatprep.subr.mxu0 0.0
      %708 = vmatpush2.msra.mxu0 0.0
      %709 = vmatprep.subr.mxu0 0.0
      %710 = vmatpush2.msra.mxu0 0.0
      %711 = vmatprep.subr.mxu0 0.0
      %712 = vmatpush2.msra.mxu0 0.0
      %713 = vmatprep.subr.mxu0 0.0
      %714 = vmatpush2.msra.mxu0 0.0
      %715 = vmatprep.subr.mxu0 0.0
      %716 = vmatpush2.msra.mxu0 0.0
      %717 = vmatprep.subr.mxu0 0.0
      %718 = vmatpush2.msra.mxu0 0.0
      %719 = vmatprep.mubr.f32.mxu0 0.0
      %720 = vmatmul.mubr.f32.gmra.mxu0 %v333
      %v721 = vpop.f32.mrf.mxu0
      %v722 = vadd.f32 %v497, %v721
      %v723 = vpop.f32.mrf.mxu0
      %724 = vmatprep.mubr.f32.mxu0 0.0
      %725 = vmatmul.mubr.f32.gmra.mxu0 %v334
      %v726 = vpop.f32.mrf.mxu0
      %v727 = vadd.f32 %v502, %v726
      %v728 = vpop.f32.mrf.mxu0
      %729 = vmatprep.mubr.f32.mxu0 0.0
      %730 = vmatmul.mubr.f32.gmra.mxu0 %v335
      %v731 = vpop.f32.mrf.mxu0
      %v732 = vadd.f32 %v507, %v731
      %v733 = vpop.f32.mrf.mxu0
      %734 = vmatprep.mubr.f32.mxu0 0.0
      %735 = vmatmul.mubr.f32.gmra.mxu0 %v336
      %v736 = vpop.f32.mrf.mxu0
      %v737 = vadd.f32 %v512, %v736
      %v738 = vpop.f32.mrf.mxu0
      %739 = vmatprep.mubr.f32.mxu0 0.0
      %740 = vmatmul.mubr.f32.gmra.mxu0 %v337
      %v741 = vpop.f32.mrf.mxu0
      %v742 = vadd.f32 %v517, %v741
      %v743 = vpop.f32.mrf.mxu0
      %744 = vmatprep.mubr.f32.mxu0 0.0
      %745 = vmatmul.mubr.f32.gmra.mxu0 %v338
      %v746 = vpop.f32.mrf.mxu0
      %v747 = vadd.f32 %v522, %v746
      %v748 = vpop.f32.mrf.mxu0
      %749 = vmatprep.mubr.f32.mxu0 0.0
      %750 = vmatmul.mubr.f32.gmra.mxu0 %v339
      %v751 = vpop.f32.mrf.mxu0
      %v752 = vadd.f32 %v527, %v751
      %v753 = vpop.f32.mrf.mxu0
      %754 = vmatprep.mubr.f32.mxu0 0.0
      %755 = vmatmul.mubr.f32.gmra.mxu0 %v340
      %v756 = vpop.f32.mrf.mxu0
      %v757 = vadd.f32 %v532, %v756
      %v758 = vpop.f32.mrf.mxu0
      %759 = vmatprep.mubr.f32.mxu0 0.0
      %760 = vmatmul.mubr.f32.gmra.mxu0 %v341
      %v761 = vpop.f32.mrf.mxu0
      %v762 = vadd.f32 %v537, %v761
      %v763 = vpop.f32.mrf.mxu0
      %764 = vmatprep.mubr.f32.mxu0 0.0
      %765 = vmatmul.mubr.f32.gmra.mxu0 %v342
      %v766 = vpop.f32.mrf.mxu0
      %v767 = vadd.f32 %v542, %v766
      %v768 = vpop.f32.mrf.mxu0
      %769 = vmatprep.mubr.f32.mxu0 0.0
      %770 = vmatmul.mubr.f32.gmra.mxu0 %v343
      %v771 = vpop.f32.mrf.mxu0
      %v772 = vadd.f32 %v547, %v771
      %v773 = vpop.f32.mrf.mxu0
      %774 = vmatprep.mubr.f32.mxu0 0.0
      %775 = vmatmul.mubr.f32.gmra.mxu0 %v344
      %v776 = vpop.f32.mrf.mxu0
      %v777 = vadd.f32 %v552, %v776
      %v778 = vpop.f32.mrf.mxu0
      %779 = vmatprep.mubr.f32.mxu0 0.0
      %780 = vmatmul.mubr.f32.gmra.mxu0 %v345
      %v781 = vpop.f32.mrf.mxu0
      %v782 = vadd.f32 %v557, %v781
      %v783 = vpop.f32.mrf.mxu0
      %784 = vmatprep.mubr.f32.mxu0 0.0
      %785 = vmatmul.mubr.f32.gmra.mxu0 %v346
      %v786 = vpop.f32.mrf.mxu0
      %v787 = vadd.f32 %v562, %v786
      %v788 = vpop.f32.mrf.mxu0
      %789 = vmatprep.mubr.f32.mxu0 0.0
      %790 = vmatmul.mubr.f32.gmra.mxu0 %v347
      %v791 = vpop.f32.mrf.mxu0
      %v792 = vadd.f32 %v567, %v791
      %v793 = vpop.f32.mrf.mxu0
      %794 = vmatprep.mubr.f32.mxu0 0.0
      %795 = vmatmul.mubr.f32.gmra.mxu0 %v348
      %v796 = vpop.f32.mrf.mxu0
      %v797 = vadd.f32 %v572, %v796
      %v798 = vpop.f32.mrf.mxu0
      %799 = vmatprep.mubr.f32.mxu0 0.0
      %800 = vmatmul.mubr.f32.gmra.mxu0 %v349
      %v801 = vpop.f32.mrf.mxu0
      %v802 = vadd.f32 %v577, %v801
      %v803 = vpop.f32.mrf.mxu0
      %804 = vmatprep.mubr.f32.mxu0 0.0
      %805 = vmatmul.mubr.f32.gmra.mxu0 %v350
      %v806 = vpop.f32.mrf.mxu0
      %v807 = vadd.f32 %v582, %v806
      %v808 = vpop.f32.mrf.mxu0
      %809 = vmatprep.mubr.f32.mxu0 0.0
      %810 = vmatmul.mubr.f32.gmra.mxu0 %v351
      %v811 = vpop.f32.mrf.mxu0
      %v812 = vadd.f32 %v587, %v811
      %v813 = vpop.f32.mrf.mxu0
      %814 = vmatprep.mubr.f32.mxu0 0.0
      %815 = vmatmul.mubr.f32.gmra.mxu0 %v352
      %v816 = vpop.f32.mrf.mxu0
      %v817 = vadd.f32 %v592, %v816
      %v818 = vpop.f32.mrf.mxu0
      %819 = vmatprep.mubr.f32.mxu0 0.0
      %820 = vmatmul.mubr.f32.gmra.mxu0 %v353
      %v821 = vpop.f32.mrf.mxu0
      %v822 = vadd.f32 %v597, %v821
      %v823 = vpop.f32.mrf.mxu0
      %824 = vmatprep.mubr.f32.mxu0 0.0
      %825 = vmatmul.mubr.f32.gmra.mxu0 %v354
      %v826 = vpop.f32.mrf.mxu0
      %v827 = vadd.f32 %v602, %v826
      %v828 = vpop.f32.mrf.mxu0
      %829 = vmatprep.mubr.f32.mxu0 0.0
      %830 = vmatmul.mubr.f32.gmra.mxu0 %v355
      %v831 = vpop.f32.mrf.mxu0
      %v832 = vadd.f32 %v607, %v831
      %v833 = vpop.f32.mrf.mxu0
      %834 = vmatprep.mubr.f32.mxu0 0.0
      %835 = vmatmul.mubr.f32.gmra.mxu0 %v356
      %v836 = vpop.f32.mrf.mxu0
      %v837 = vadd.f32 %v612, %v836
      %v838 = vpop.f32.mrf.mxu0
      %839 = vmatprep.mubr.f32.mxu0 0.0
      %840 = vmatmul.mubr.f32.gmra.mxu0 %v357
      %v841 = vpop.f32.mrf.mxu0
      %v842 = vadd.f32 %v617, %v841
      %v843 = vpop.f32.mrf.mxu0
      %844 = vmatprep.mubr.f32.mxu0 0.0
      %845 = vmatmul.mubr.f32.gmra.mxu0 %v358
      %v846 = vpop.f32.mrf.mxu0
      %v847 = vadd.f32 %v622, %v846
      %v848 = vpop.f32.mrf.mxu0
      %849 = vmatprep.mubr.f32.mxu0 0.0
      %850 = vmatmul.mubr.f32.gmra.mxu0 %v359
      %v851 = vpop.f32.mrf.mxu0
      %v852 = vadd.f32 %v627, %v851
      %v853 = vpop.f32.mrf.mxu0
      %854 = vmatprep.mubr.f32.mxu0 0.0
      %855 = vmatmul.mubr.f32.gmra.mxu0 %v360
      %v856 = vpop.f32.mrf.mxu0
      %v857 = vadd.f32 %v632, %v856
      %v858 = vpop.f32.mrf.mxu0
      %859 = vmatprep.mubr.f32.mxu0 0.0
      %860 = vmatmul.mubr.f32.gmra.mxu0 %v361
      %v861 = vpop.f32.mrf.mxu0
      %v862 = vadd.f32 %v637, %v861
      %v863 = vpop.f32.mrf.mxu0
      %864 = vmatprep.mubr.f32.mxu0 0.0
      %865 = vmatmul.mubr.f32.gmra.mxu0 %v362
      %v866 = vpop.f32.mrf.mxu0
      %v867 = vadd.f32 %v642, %v866
      %v868 = vpop.f32.mrf.mxu0
      %869 = vmatprep.mubr.f32.mxu0 0.0
      %870 = vmatmul.mubr.f32.gmra.mxu0 %v363
      %v871 = vpop.f32.mrf.mxu0
      %v872 = vadd.f32 %v647, %v871
      %v873 = vpop.f32.mrf.mxu0
      %874 = vmatprep.mubr.f32.mxu0 0.0
      %875 = vmatmul.mubr.f32.gmra.mxu0 %v364
      %v876 = vpop.f32.mrf.mxu0
      %v877 = vadd.f32 %v652, %v876
      %v878 = vpop.f32.mrf.mxu0
      %879 = vdwg.mxu0
      %v880 = vld [vmem:[%s327 + $0x2] sm:$0xff]
      %v881 = vld [vmem:[%s327 + $0xa] sm:$0xff]
      %v882 = vld [vmem:[%s327 + $0x1a] sm:$0xff]
      %v883 = vld [vmem:[%s327 + $0x22] sm:$0xff]
      %v884 = vld [vmem:[%s327 + $0x32] sm:$0xff]
      %v885 = vld [vmem:[%s327 + $0x3a] sm:$0xff]
      %v886 = vld [vmem:[%s327 + $0x4a] sm:$0xff]
      %v887 = vld [vmem:[%s327 + $0x52] sm:$0xff]
      %v888 = vld [vmem:[%s327 + $0x62] sm:$0xff]
      %v889 = vld [vmem:[%s327 + $0x6a] sm:$0xff]
      %v890 = vld [vmem:[%s327 + $0x7a] sm:$0xff]
      %v891 = vld [vmem:[%s327 + $0x82] sm:$0xff]
      %v892 = vld [vmem:[%s327 + $0x92] sm:$0xff]
      %v893 = vld [vmem:[%s327 + $0x9a] sm:$0xff]
      %v894 = vld [vmem:[%s327 + $0xaa] sm:$0xff]
      %v895 = vld [vmem:[%s327 + $0xb2] sm:$0xff]
      %v896 = vld [vmem:[%s327 + $0xc2] sm:$0xff]
      %v897 = vld [vmem:[%s327 + $0xca] sm:$0xff]
      %v898 = vld [vmem:[%s327 + $0xda] sm:$0xff]
      %v899 = vld [vmem:[%s327 + $0xe2] sm:$0xff]
      %v900 = vld [vmem:[%s327 + $0xf2] sm:$0xff]
      %v901 = vld [vmem:[%s327 + $0xfa] sm:$0xff]
      %v902 = vld [vmem:[%s327 + $0x10a] sm:$0xff]
      %v903 = vld [vmem:[%s327 + $0x112] sm:$0xff]
      %v904 = vld [vmem:[%s327 + $0x122] sm:$0xff]
      %v905 = vld [vmem:[%s327 + $0x12a] sm:$0xff]
      %v906 = vld [vmem:[%s327 + $0x13a] sm:$0xff]
      %v907 = vld [vmem:[%s327 + $0x142] sm:$0xff]
      %v908 = vld [vmem:[%s327 + $0x152] sm:$0xff]
      %v909 = vld [vmem:[%s327 + $0x15a] sm:$0xff]
      %v910 = vld [vmem:[%s327 + $0x16a] sm:$0xff]
      %v911 = vld [vmem:[%s327 + $0x172] sm:$0xff]
      %s912 = scalar_lea.vmem %s1, 256
      %v913 = vld [vmem:[%s912] sm:$0xff]
      %v914 = vld [vmem:[%s912 + $0x8] sm:$0xff]
      %v915 = vld [vmem:[%s912 + $0x10] sm:$0xff]
      %v916 = vld [vmem:[%s912 + $0x18] sm:$0xff]
      %v917 = vld [vmem:[%s912 + $0x20] sm:$0xff]
      %v918 = vld [vmem:[%s912 + $0x28] sm:$0xff]
      %v919 = vld [vmem:[%s912 + $0x30] sm:$0xff]
      %v920 = vld [vmem:[%s912 + $0x38] sm:$0xff]
      %v921 = vld [vmem:[%s912 + $0x40] sm:$0xff]
      %v922 = vld [vmem:[%s912 + $0x48] sm:$0xff]
      %v923 = vld [vmem:[%s912 + $0x50] sm:$0xff]
      %v924 = vld [vmem:[%s912 + $0x58] sm:$0xff]
      %v925 = vld [vmem:[%s912 + $0x60] sm:$0xff]
      %v926 = vld [vmem:[%s912 + $0x68] sm:$0xff]
      %v927 = vld [vmem:[%s912 + $0x70] sm:$0xff]
      %v928 = vld [vmem:[%s912 + $0x78] sm:$0xff]
      %929 = vmatprep.subr.mxu0 0.0
      %930 = vmatpush1.msra.mxu0 %v928
      %931 = vmatprep.subr.mxu0 0.0
      %932 = vmatpush1.msra.mxu0 %v927
      %933 = vmatprep.subr.mxu0 0.0
      %934 = vmatpush1.msra.mxu0 %v926
      %935 = vmatprep.subr.mxu0 0.0
      %936 = vmatpush1.msra.mxu0 %v925
      %937 = vmatprep.subr.mxu0 0.0
      %938 = vmatpush1.msra.mxu0 %v924
      %939 = vmatprep.subr.mxu0 0.0
      %940 = vmatpush1.msra.mxu0 %v923
      %941 = vmatprep.subr.mxu0 0.0
      %942 = vmatpush1.msra.mxu0 %v922
      %943 = vmatprep.subr.mxu0 0.0
      %944 = vmatpush1.msra.mxu0 %v921
      %945 = vmatprep.subr.mxu0 0.0
      %946 = vmatpush1.msra.mxu0 %v920
      %947 = vmatprep.subr.mxu0 0.0
      %948 = vmatpush1.msra.mxu0 %v919
      %949 = vmatprep.subr.mxu0 0.0
      %950 = vmatpush1.msra.mxu0 %v918
      %951 = vmatprep.subr.mxu0 0.0
      %952 = vmatpush1.msra.mxu0 %v917
      %953 = vmatprep.subr.mxu0 0.0
      %954 = vmatpush1.msra.mxu0 %v916
      %955 = vmatprep.subr.mxu0 0.0
      %956 = vmatpush1.msra.mxu0 %v915
      %957 = vmatprep.subr.mxu0 0.0
      %958 = vmatpush1.msra.mxu0 %v914
      %959 = vmatprep.subr.mxu0 0.0
      %960 = vmatpush1.msra.mxu0 %v913
      %961 = vmatprep.subr.mxu0 0.0
      %962 = vmatpush2.msra.mxu0 0.0
      %963 = vmatprep.subr.mxu0 0.0
      %964 = vmatpush2.msra.mxu0 0.0
      %965 = vmatprep.subr.mxu0 0.0
      %966 = vmatpush2.msra.mxu0 0.0
      %967 = vmatprep.subr.mxu0 0.0
      %968 = vmatpush2.msra.mxu0 0.0
      %969 = vmatprep.subr.mxu0 0.0
      %970 = vmatpush2.msra.mxu0 0.0
      %971 = vmatprep.subr.mxu0 0.0
      %972 = vmatpush2.msra.mxu0 0.0
      %973 = vmatprep.subr.mxu0 0.0
      %974 = vmatpush2.msra.mxu0 0.0
      %975 = vmatprep.subr.mxu0 0.0
      %976 = vmatpush2.msra.mxu0 0.0
      %977 = vmatprep.subr.mxu0 0.0
      %978 = vmatpush2.msra.mxu0 0.0
      %979 = vmatprep.subr.mxu0 0.0
      %980 = vmatpush2.msra.mxu0 0.0
      %981 = vmatprep.subr.mxu0 0.0
      %982 = vmatpush2.msra.mxu0 0.0
      %983 = vmatprep.subr.mxu0 0.0
      %984 = vmatpush2.msra.mxu0 0.0
      %985 = vmatprep.subr.mxu0 0.0
      %986 = vmatpush2.msra.mxu0 0.0
      %987 = vmatprep.subr.mxu0 0.0
      %988 = vmatpush2.msra.mxu0 0.0
      %989 = vmatprep.subr.mxu0 0.0
      %990 = vmatpush2.msra.mxu0 0.0
      %991 = vmatprep.subr.mxu0 0.0
      %992 = vmatpush2.msra.mxu0 0.0
      %993 = vmatprep.mubr.f32.mxu0 0.0
      %994 = vmatmul.mubr.f32.gmra.mxu0 %v880
      %v995 = vpop.f32.mrf.mxu0
      %v996 = vadd.f32 0.0, %v995
      %v997 = vpop.f32.mrf.mxu0
      %998 = vmatprep.mubr.f32.mxu0 0.0
      %999 = vmatmul.mubr.f32.gmra.mxu0 %v881
      %v1000 = vpop.f32.mrf.mxu0
      %v1001 = vadd.f32 0.0, %v1000
      %v1002 = vpop.f32.mrf.mxu0
      %1003 = vmatprep.mubr.f32.mxu0 0.0
      %1004 = vmatmul.mubr.f32.gmra.mxu0 %v882
      %v1005 = vpop.f32.mrf.mxu0
      %v1006 = vadd.f32 0.0, %v1005
      %v1007 = vpop.f32.mrf.mxu0
      %1008 = vmatprep.mubr.f32.mxu0 0.0
      %1009 = vmatmul.mubr.f32.gmra.mxu0 %v883
      %v1010 = vpop.f32.mrf.mxu0
      %v1011 = vadd.f32 0.0, %v1010
      %v1012 = vpop.f32.mrf.mxu0
      %1013 = vmatprep.mubr.f32.mxu0 0.0
      %1014 = vmatmul.mubr.f32.gmra.mxu0 %v884
      %v1015 = vpop.f32.mrf.mxu0
      %v1016 = vadd.f32 0.0, %v1015
      %v1017 = vpop.f32.mrf.mxu0
      %1018 = vmatprep.mubr.f32.mxu0 0.0
      %1019 = vmatmul.mubr.f32.gmra.mxu0 %v885
      %v1020 = vpop.f32.mrf.mxu0
      %v1021 = vadd.f32 0.0, %v1020
      %v1022 = vpop.f32.mrf.mxu0
      %1023 = vmatprep.mubr.f32.mxu0 0.0
      %1024 = vmatmul.mubr.f32.gmra.mxu0 %v886
      %v1025 = vpop.f32.mrf.mxu0
      %v1026 = vadd.f32 0.0, %v1025
      %v1027 = vpop.f32.mrf.mxu0
      %1028 = vmatprep.mubr.f32.mxu0 0.0
      %1029 = vmatmul.mubr.f32.gmra.mxu0 %v887
      %v1030 = vpop.f32.mrf.mxu0
      %v1031 = vadd.f32 0.0, %v1030
      %v1032 = vpop.f32.mrf.mxu0
      %1033 = vmatprep.mubr.f32.mxu0 0.0
      %1034 = vmatmul.mubr.f32.gmra.mxu0 %v888
      %v1035 = vpop.f32.mrf.mxu0
      %v1036 = vadd.f32 0.0, %v1035
      %v1037 = vpop.f32.mrf.mxu0
      %1038 = vmatprep.mubr.f32.mxu0 0.0
      %1039 = vmatmul.mubr.f32.gmra.mxu0 %v889
      %v1040 = vpop.f32.mrf.mxu0
      %v1041 = vadd.f32 0.0, %v1040
      %v1042 = vpop.f32.mrf.mxu0
      %1043 = vmatprep.mubr.f32.mxu0 0.0
      %1044 = vmatmul.mubr.f32.gmra.mxu0 %v890
      %v1045 = vpop.f32.mrf.mxu0
      %v1046 = vadd.f32 0.0, %v1045
      %v1047 = vpop.f32.mrf.mxu0
      %1048 = vmatprep.mubr.f32.mxu0 0.0
      %1049 = vmatmul.mubr.f32.gmra.mxu0 %v891
      %v1050 = vpop.f32.mrf.mxu0
      %v1051 = vadd.f32 0.0, %v1050
      %v1052 = vpop.f32.mrf.mxu0
      %1053 = vmatprep.mubr.f32.mxu0 0.0
      %1054 = vmatmul.mubr.f32.gmra.mxu0 %v892
      %v1055 = vpop.f32.mrf.mxu0
      %v1056 = vadd.f32 0.0, %v1055
      %v1057 = vpop.f32.mrf.mxu0
      %1058 = vmatprep.mubr.f32.mxu0 0.0
      %1059 = vmatmul.mubr.f32.gmra.mxu0 %v893
      %v1060 = vpop.f32.mrf.mxu0
      %v1061 = vadd.f32 0.0, %v1060
      %v1062 = vpop.f32.mrf.mxu0
      %1063 = vmatprep.mubr.f32.mxu0 0.0
      %1064 = vmatmul.mubr.f32.gmra.mxu0 %v894
      %v1065 = vpop.f32.mrf.mxu0
      %v1066 = vadd.f32 0.0, %v1065
      %v1067 = vpop.f32.mrf.mxu0
      %1068 = vmatprep.mubr.f32.mxu0 0.0
      %1069 = vmatmul.mubr.f32.gmra.mxu0 %v895
      %v1070 = vpop.f32.mrf.mxu0
      %v1071 = vadd.f32 0.0, %v1070
      %v1072 = vpop.f32.mrf.mxu0
      %1073 = vmatprep.mubr.f32.mxu0 0.0
      %1074 = vmatmul.mubr.f32.gmra.mxu0 %v896
      %v1075 = vpop.f32.mrf.mxu0
      %v1076 = vadd.f32 0.0, %v1075
      %v1077 = vpop.f32.mrf.mxu0
      %1078 = vmatprep.mubr.f32.mxu0 0.0
      %1079 = vmatmul.mubr.f32.gmra.mxu0 %v897
      %v1080 = vpop.f32.mrf.mxu0
      %v1081 = vadd.f32 0.0, %v1080
      %v1082 = vpop.f32.mrf.mxu0
      %1083 = vmatprep.mubr.f32.mxu0 0.0
      %1084 = vmatmul.mubr.f32.gmra.mxu0 %v898
      %v1085 = vpop.f32.mrf.mxu0
      %v1086 = vadd.f32 0.0, %v1085
      %v1087 = vpop.f32.mrf.mxu0
      %1088 = vmatprep.mubr.f32.mxu0 0.0
      %1089 = vmatmul.mubr.f32.gmra.mxu0 %v899
      %v1090 = vpop.f32.mrf.mxu0
      %v1091 = vadd.f32 0.0, %v1090
      %v1092 = vpop.f32.mrf.mxu0
      %1093 = vmatprep.mubr.f32.mxu0 0.0
      %1094 = vmatmul.mubr.f32.gmra.mxu0 %v900
      %v1095 = vpop.f32.mrf.mxu0
      %v1096 = vadd.f32 0.0, %v1095
      %v1097 = vpop.f32.mrf.mxu0
      %1098 = vmatprep.mubr.f32.mxu0 0.0
      %1099 = vmatmul.mubr.f32.gmra.mxu0 %v901
      %v1100 = vpop.f32.mrf.mxu0
      %v1101 = vadd.f32 0.0, %v1100
      %v1102 = vpop.f32.mrf.mxu0
      %1103 = vmatprep.mubr.f32.mxu0 0.0
      %1104 = vmatmul.mubr.f32.gmra.mxu0 %v902
      %v1105 = vpop.f32.mrf.mxu0
      %v1106 = vadd.f32 0.0, %v1105
      %v1107 = vpop.f32.mrf.mxu0
      %1108 = vmatprep.mubr.f32.mxu0 0.0
      %1109 = vmatmul.mubr.f32.gmra.mxu0 %v903
      %v1110 = vpop.f32.mrf.mxu0
      %v1111 = vadd.f32 0.0, %v1110
      %v1112 = vpop.f32.mrf.mxu0
      %1113 = vmatprep.mubr.f32.mxu0 0.0
      %1114 = vmatmul.mubr.f32.gmra.mxu0 %v904
      %v1115 = vpop.f32.mrf.mxu0
      %v1116 = vadd.f32 0.0, %v1115
      %v1117 = vpop.f32.mrf.mxu0
      %1118 = vmatprep.mubr.f32.mxu0 0.0
      %1119 = vmatmul.mubr.f32.gmra.mxu0 %v905
      %v1120 = vpop.f32.mrf.mxu0
      %v1121 = vadd.f32 0.0, %v1120
      %v1122 = vpop.f32.mrf.mxu0
      %1123 = vmatprep.mubr.f32.mxu0 0.0
      %1124 = vmatmul.mubr.f32.gmra.mxu0 %v906
      %v1125 = vpop.f32.mrf.mxu0
      %v1126 = vadd.f32 0.0, %v1125
      %v1127 = vpop.f32.mrf.mxu0
      %1128 = vmatprep.mubr.f32.mxu0 0.0
      %1129 = vmatmul.mubr.f32.gmra.mxu0 %v907
      %v1130 = vpop.f32.mrf.mxu0
      %v1131 = vadd.f32 0.0, %v1130
      %v1132 = vpop.f32.mrf.mxu0
      %1133 = vmatprep.mubr.f32.mxu0 0.0
      %1134 = vmatmul.mubr.f32.gmra.mxu0 %v908
      %v1135 = vpop.f32.mrf.mxu0
      %v1136 = vadd.f32 0.0, %v1135
      %v1137 = vpop.f32.mrf.mxu0
      %1138 = vmatprep.mubr.f32.mxu0 0.0
      %1139 = vmatmul.mubr.f32.gmra.mxu0 %v909
      %v1140 = vpop.f32.mrf.mxu0
      %v1141 = vadd.f32 0.0, %v1140
      %v1142 = vpop.f32.mrf.mxu0
      %1143 = vmatprep.mubr.f32.mxu0 0.0
      %1144 = vmatmul.mubr.f32.gmra.mxu0 %v910
      %v1145 = vpop.f32.mrf.mxu0
      %v1146 = vadd.f32 0.0, %v1145
      %v1147 = vpop.f32.mrf.mxu0
      %1148 = vmatprep.mubr.f32.mxu0 0.0
      %1149 = vmatmul.mubr.f32.gmra.mxu0 %v911
      %v1150 = vpop.f32.mrf.mxu0
      %v1151 = vadd.f32 0.0, %v1150
      %v1152 = vpop.f32.mrf.mxu0
      %1153 = vdwg.mxu0
      %v1154 = vadd.f32 %v722, %v996
      %v1155 = vadd.f32 %v727, %v1001
      %v1156 = vadd.f32 %v732, %v1006
      %v1157 = vadd.f32 %v737, %v1011
      %v1158 = vadd.f32 %v742, %v1016
      %v1159 = vadd.f32 %v747, %v1021
      %v1160 = vadd.f32 %v752, %v1026
      %v1161 = vadd.f32 %v757, %v1031
      %v1162 = vadd.f32 %v762, %v1036
      %v1163 = vadd.f32 %v767, %v1041
      %v1164 = vadd.f32 %v772, %v1046
      %v1165 = vadd.f32 %v777, %v1051
      %v1166 = vadd.f32 %v782, %v1056
      %v1167 = vadd.f32 %v787, %v1061
      %v1168 = vadd.f32 %v792, %v1066
      %v1169 = vadd.f32 %v797, %v1071
      %v1170 = vadd.f32 %v802, %v1076
      %v1171 = vadd.f32 %v807, %v1081
      %v1172 = vadd.f32 %v812, %v1086
      %v1173 = vadd.f32 %v817, %v1091
      %v1174 = vadd.f32 %v822, %v1096
      %v1175 = vadd.f32 %v827, %v1101
      %v1176 = vadd.f32 %v832, %v1106
      %v1177 = vadd.f32 %v837, %v1111
      %v1178 = vadd.f32 %v842, %v1116
      %v1179 = vadd.f32 %v847, %v1121
      %v1180 = vadd.f32 %v852, %v1126
      %v1181 = vadd.f32 %v857, %v1131
      %v1182 = vadd.f32 %v862, %v1136
      %v1183 = vadd.f32 %v867, %v1141
      %v1184 = vadd.f32 %v872, %v1146
      %v1185 = vadd.f32 %v877, %v1151
      %s1186 = scalar_lea.vmem %s327, 24
      %v1187 = vld [vmem:[%s1186] sm:$0xff]
      %v1188 = vld [vmem:[%s1186 + $0x8] sm:$0xff]
      %v1189 = vld [vmem:[%s1186 + $0x18] sm:$0xff]
      %v1190 = vld [vmem:[%s1186 + $0x20] sm:$0xff]
      %v1191 = vld [vmem:[%s1186 + $0x30] sm:$0xff]
      %v1192 = vld [vmem:[%s1186 + $0x38] sm:$0xff]
      %v1193 = vld [vmem:[%s1186 + $0x48] sm:$0xff]
      %v1194 = vld [vmem:[%s1186 + $0x50] sm:$0xff]
      %v1195 = vld [vmem:[%s1186 + $0x60] sm:$0xff]
      %v1196 = vld [vmem:[%s1186 + $0x68] sm:$0xff]
      %v1197 = vld [vmem:[%s1186 + $0x78] sm:$0xff]
      %v1198 = vld [vmem:[%s1186 + $0x80] sm:$0xff]
      %v1199 = vld [vmem:[%s1186 + $0x90] sm:$0xff]
      %v1200 = vld [vmem:[%s1186 + $0x98] sm:$0xff]
      %v1201 = vld [vmem:[%s1186 + $0xa8] sm:$0xff]
      %v1202 = vld [vmem:[%s1186 + $0xb0] sm:$0xff]
      %v1203 = vld [vmem:[%s1186 + $0xc0] sm:$0xff]
      %v1204 = vld [vmem:[%s1186 + $0xc8] sm:$0xff]
      %v1205 = vld [vmem:[%s1186 + $0xd8] sm:$0xff]
      %v1206 = vld [vmem:[%s1186 + $0xe0] sm:$0xff]
      %v1207 = vld [vmem:[%s1186 + $0xf0] sm:$0xff]
      %v1208 = vld [vmem:[%s1186 + $0xf8] sm:$0xff]
      %v1209 = vld [vmem:[%s1186 + $0x108] sm:$0xff]
      %v1210 = vld [vmem:[%s1186 + $0x110] sm:$0xff]
      %v1211 = vld [vmem:[%s1186 + $0x120] sm:$0xff]
      %v1212 = vld [vmem:[%s1186 + $0x128] sm:$0xff]
      %v1213 = vld [vmem:[%s1186 + $0x138] sm:$0xff]
      %v1214 = vld [vmem:[%s1186 + $0x140] sm:$0xff]
      %v1215 = vld [vmem:[%s1186 + $0x150] sm:$0xff]
      %v1216 = vld [vmem:[%s1186 + $0x158] sm:$0xff]
      %v1217 = vld [vmem:[%s1186 + $0x168] sm:$0xff]
      %v1218 = vld [vmem:[%s1186 + $0x170] sm:$0xff]
      %s1219 = scalar_lea.vmem %s1, 384
      %v1220 = vld [vmem:[%s1219] sm:$0xff]
      %v1221 = vld [vmem:[%s1219 + $0x8] sm:$0xff]
      %v1222 = vld [vmem:[%s1219 + $0x10] sm:$0xff]
      %v1223 = vld [vmem:[%s1219 + $0x18] sm:$0xff]
      %v1224 = vld [vmem:[%s1219 + $0x20] sm:$0xff]
      %v1225 = vld [vmem:[%s1219 + $0x28] sm:$0xff]
      %v1226 = vld [vmem:[%s1219 + $0x30] sm:$0xff]
      %v1227 = vld [vmem:[%s1219 + $0x38] sm:$0xff]
      %v1228 = vld [vmem:[%s1219 + $0x40] sm:$0xff]
      %v1229 = vld [vmem:[%s1219 + $0x48] sm:$0xff]
      %v1230 = vld [vmem:[%s1219 + $0x50] sm:$0xff]
      %v1231 = vld [vmem:[%s1219 + $0x58] sm:$0xff]
      %v1232 = vld [vmem:[%s1219 + $0x60] sm:$0xff]
      %v1233 = vld [vmem:[%s1219 + $0x68] sm:$0xff]
      %v1234 = vld [vmem:[%s1219 + $0x70] sm:$0xff]
      %v1235 = vld [vmem:[%s1219 + $0x78] sm:$0xff]
      %1236 = vmatprep.subr.mxu0 0.0
      %1237 = vmatpush1.msra.mxu0 %v1235
      %1238 = vmatprep.subr.mxu0 0.0
      %1239 = vmatpush1.msra.mxu0 %v1234
      %1240 = vmatprep.subr.mxu0 0.0
      %1241 = vmatpush1.msra.mxu0 %v1233
      %1242 = vmatprep.subr.mxu0 0.0
      %1243 = vmatpush1.msra.mxu0 %v1232
      %1244 = vmatprep.subr.mxu0 0.0
      %1245 = vmatpush1.msra.mxu0 %v1231
      %1246 = vmatprep.subr.mxu0 0.0
      %1247 = vmatpush1.msra.mxu0 %v1230
      %1248 = vmatprep.subr.mxu0 0.0
      %1249 = vmatpush1.msra.mxu0 %v1229
      %1250 = vmatprep.subr.mxu0 0.0
      %1251 = vmatpush1.msra.mxu0 %v1228
      %1252 = vmatprep.subr.mxu0 0.0
      %1253 = vmatpush1.msra.mxu0 %v1227
      %1254 = vmatprep.subr.mxu0 0.0
      %1255 = vmatpush1.msra.mxu0 %v1226
      %1256 = vmatprep.subr.mxu0 0.0
      %1257 = vmatpush1.msra.mxu0 %v1225
      %1258 = vmatprep.subr.mxu0 0.0
      %1259 = vmatpush1.msra.mxu0 %v1224
      %1260 = vmatprep.subr.mxu0 0.0
      %1261 = vmatpush1.msra.mxu0 %v1223
      %1262 = vmatprep.subr.mxu0 0.0
      %1263 = vmatpush1.msra.mxu0 %v1222
      %1264 = vmatprep.subr.mxu0 0.0
      %1265 = vmatpush1.msra.mxu0 %v1221
      %1266 = vmatprep.subr.mxu0 0.0
      %1267 = vmatpush1.msra.mxu0 %v1220
      %1268 = vmatprep.subr.mxu0 0.0
      %1269 = vmatpush2.msra.mxu0 0.0
      %1270 = vmatprep.subr.mxu0 0.0
      %1271 = vmatpush2.msra.mxu0 0.0
      %1272 = vmatprep.subr.mxu0 0.0
      %1273 = vmatpush2.msra.mxu0 0.0
      %1274 = vmatprep.subr.mxu0 0.0
      %1275 = vmatpush2.msra.mxu0 0.0
      %1276 = vmatprep.subr.mxu0 0.0
      %1277 = vmatpush2.msra.mxu0 0.0
      %1278 = vmatprep.subr.mxu0 0.0
      %1279 = vmatpush2.msra.mxu0 0.0
      %1280 = vmatprep.subr.mxu0 0.0
      %1281 = vmatpush2.msra.mxu0 0.0
      %1282 = vmatprep.subr.mxu0 0.0
      %1283 = vmatpush2.msra.mxu0 0.0
      %1284 = vmatprep.subr.mxu0 0.0
      %1285 = vmatpush2.msra.mxu0 0.0
      %1286 = vmatprep.subr.mxu0 0.0
      %1287 = vmatpush2.msra.mxu0 0.0
      %1288 = vmatprep.subr.mxu0 0.0
      %1289 = vmatpush2.msra.mxu0 0.0
      %1290 = vmatprep.subr.mxu0 0.0
      %1291 = vmatpush2.msra.mxu0 0.0
      %1292 = vmatprep.subr.mxu0 0.0
      %1293 = vmatpush2.msra.mxu0 0.0
      %1294 = vmatprep.subr.mxu0 0.0
      %1295 = vmatpush2.msra.mxu0 0.0
      %1296 = vmatprep.subr.mxu0 0.0
      %1297 = vmatpush2.msra.mxu0 0.0
      %1298 = vmatprep.subr.mxu0 0.0
      %1299 = vmatpush2.msra.mxu0 0.0
      %1300 = vmatprep.mubr.f32.mxu0 0.0
      %1301 = vmatmul.mubr.f32.gmra.mxu0 %v1187
      %v1302 = vpop.f32.mrf.mxu0
      %v1303 = vadd.f32 0.0, %v1302
      %v1304 = vpop.f32.mrf.mxu0
      %1305 = vmatprep.mubr.f32.mxu0 0.0
      %1306 = vmatmul.mubr.f32.gmra.mxu0 %v1188
      %v1307 = vpop.f32.mrf.mxu0
      %v1308 = vadd.f32 0.0, %v1307
      %v1309 = vpop.f32.mrf.mxu0
      %1310 = vmatprep.mubr.f32.mxu0 0.0
      %1311 = vmatmul.mubr.f32.gmra.mxu0 %v1189
      %v1312 = vpop.f32.mrf.mxu0
      %v1313 = vadd.f32 0.0, %v1312
      %v1314 = vpop.f32.mrf.mxu0
      %1315 = vmatprep.mubr.f32.mxu0 0.0
      %1316 = vmatmul.mubr.f32.gmra.mxu0 %v1190
      %v1317 = vpop.f32.mrf.mxu0
      %v1318 = vadd.f32 0.0, %v1317
      %v1319 = vpop.f32.mrf.mxu0
      %1320 = vmatprep.mubr.f32.mxu0 0.0
      %1321 = vmatmul.mubr.f32.gmra.mxu0 %v1191
      %v1322 = vpop.f32.mrf.mxu0
      %v1323 = vadd.f32 0.0, %v1322
      %v1324 = vpop.f32.mrf.mxu0
      %1325 = vmatprep.mubr.f32.mxu0 0.0
      %1326 = vmatmul.mubr.f32.gmra.mxu0 %v1192
      %v1327 = vpop.f32.mrf.mxu0
      %v1328 = vadd.f32 0.0, %v1327
      %v1329 = vpop.f32.mrf.mxu0
      %1330 = vmatprep.mubr.f32.mxu0 0.0
      %1331 = vmatmul.mubr.f32.gmra.mxu0 %v1193
      %v1332 = vpop.f32.mrf.mxu0
      %v1333 = vadd.f32 0.0, %v1332
      %v1334 = vpop.f32.mrf.mxu0
      %1335 = vmatprep.mubr.f32.mxu0 0.0
      %1336 = vmatmul.mubr.f32.gmra.mxu0 %v1194
      %v1337 = vpop.f32.mrf.mxu0
      %v1338 = vadd.f32 0.0, %v1337
      %v1339 = vpop.f32.mrf.mxu0
      %1340 = vmatprep.mubr.f32.mxu0 0.0
      %1341 = vmatmul.mubr.f32.gmra.mxu0 %v1195
      %v1342 = vpop.f32.mrf.mxu0
      %v1343 = vadd.f32 0.0, %v1342
      %v1344 = vpop.f32.mrf.mxu0
      %1345 = vmatprep.mubr.f32.mxu0 0.0
      %1346 = vmatmul.mubr.f32.gmra.mxu0 %v1196
      %v1347 = vpop.f32.mrf.mxu0
      %v1348 = vadd.f32 0.0, %v1347
      %v1349 = vpop.f32.mrf.mxu0
      %1350 = vmatprep.mubr.f32.mxu0 0.0
      %1351 = vmatmul.mubr.f32.gmra.mxu0 %v1197
      %v1352 = vpop.f32.mrf.mxu0
      %v1353 = vadd.f32 0.0, %v1352
      %v1354 = vpop.f32.mrf.mxu0
      %1355 = vmatprep.mubr.f32.mxu0 0.0
      %1356 = vmatmul.mubr.f32.gmra.mxu0 %v1198
      %v1357 = vpop.f32.mrf.mxu0
      %v1358 = vadd.f32 0.0, %v1357
      %v1359 = vpop.f32.mrf.mxu0
      %1360 = vmatprep.mubr.f32.mxu0 0.0
      %1361 = vmatmul.mubr.f32.gmra.mxu0 %v1199
      %v1362 = vpop.f32.mrf.mxu0
      %v1363 = vadd.f32 0.0, %v1362
      %v1364 = vpop.f32.mrf.mxu0
      %1365 = vmatprep.mubr.f32.mxu0 0.0
      %1366 = vmatmul.mubr.f32.gmra.mxu0 %v1200
      %v1367 = vpop.f32.mrf.mxu0
      %v1368 = vadd.f32 0.0, %v1367
      %v1369 = vpop.f32.mrf.mxu0
      %1370 = vmatprep.mubr.f32.mxu0 0.0
      %1371 = vmatmul.mubr.f32.gmra.mxu0 %v1201
      %v1372 = vpop.f32.mrf.mxu0
      %v1373 = vadd.f32 0.0, %v1372
      %v1374 = vpop.f32.mrf.mxu0
      %1375 = vmatprep.mubr.f32.mxu0 0.0
      %1376 = vmatmul.mubr.f32.gmra.mxu0 %v1202
      %v1377 = vpop.f32.mrf.mxu0
      %v1378 = vadd.f32 0.0, %v1377
      %v1379 = vpop.f32.mrf.mxu0
      %1380 = vmatprep.mubr.f32.mxu0 0.0
      %1381 = vmatmul.mubr.f32.gmra.mxu0 %v1203
      %v1382 = vpop.f32.mrf.mxu0
      %v1383 = vadd.f32 0.0, %v1382
      %v1384 = vpop.f32.mrf.mxu0
      %1385 = vmatprep.mubr.f32.mxu0 0.0
      %1386 = vmatmul.mubr.f32.gmra.mxu0 %v1204
      %v1387 = vpop.f32.mrf.mxu0
      %v1388 = vadd.f32 0.0, %v1387
      %v1389 = vpop.f32.mrf.mxu0
      %1390 = vmatprep.mubr.f32.mxu0 0.0
      %1391 = vmatmul.mubr.f32.gmra.mxu0 %v1205
      %v1392 = vpop.f32.mrf.mxu0
      %v1393 = vadd.f32 0.0, %v1392
      %v1394 = vpop.f32.mrf.mxu0
      %1395 = vmatprep.mubr.f32.mxu0 0.0
      %1396 = vmatmul.mubr.f32.gmra.mxu0 %v1206
      %v1397 = vpop.f32.mrf.mxu0
      %v1398 = vadd.f32 0.0, %v1397
      %v1399 = vpop.f32.mrf.mxu0
      %1400 = vmatprep.mubr.f32.mxu0 0.0
      %1401 = vmatmul.mubr.f32.gmra.mxu0 %v1207
      %v1402 = vpop.f32.mrf.mxu0
      %v1403 = vadd.f32 0.0, %v1402
      %v1404 = vpop.f32.mrf.mxu0
      %1405 = vmatprep.mubr.f32.mxu0 0.0
      %1406 = vmatmul.mubr.f32.gmra.mxu0 %v1208
      %v1407 = vpop.f32.mrf.mxu0
      %v1408 = vadd.f32 0.0, %v1407
      %v1409 = vpop.f32.mrf.mxu0
      %1410 = vmatprep.mubr.f32.mxu0 0.0
      %1411 = vmatmul.mubr.f32.gmra.mxu0 %v1209
      %v1412 = vpop.f32.mrf.mxu0
      %v1413 = vadd.f32 0.0, %v1412
      %v1414 = vpop.f32.mrf.mxu0
      %1415 = vmatprep.mubr.f32.mxu0 0.0
      %1416 = vmatmul.mubr.f32.gmra.mxu0 %v1210
      %v1417 = vpop.f32.mrf.mxu0
      %v1418 = vadd.f32 0.0, %v1417
      %v1419 = vpop.f32.mrf.mxu0
      %1420 = vmatprep.mubr.f32.mxu0 0.0
      %1421 = vmatmul.mubr.f32.gmra.mxu0 %v1211
      %v1422 = vpop.f32.mrf.mxu0
      %v1423 = vadd.f32 0.0, %v1422
      %v1424 = vpop.f32.mrf.mxu0
      %1425 = vmatprep.mubr.f32.mxu0 0.0
      %1426 = vmatmul.mubr.f32.gmra.mxu0 %v1212
      %v1427 = vpop.f32.mrf.mxu0
      %v1428 = vadd.f32 0.0, %v1427
      %v1429 = vpop.f32.mrf.mxu0
      %1430 = vmatprep.mubr.f32.mxu0 0.0
      %1431 = vmatmul.mubr.f32.gmra.mxu0 %v1213
      %v1432 = vpop.f32.mrf.mxu0
      %v1433 = vadd.f32 0.0, %v1432
      %v1434 = vpop.f32.mrf.mxu0
      %1435 = vmatprep.mubr.f32.mxu0 0.0
      %1436 = vmatmul.mubr.f32.gmra.mxu0 %v1214
      %v1437 = vpop.f32.mrf.mxu0
      %v1438 = vadd.f32 0.0, %v1437
      %v1439 = vpop.f32.mrf.mxu0
      %1440 = vmatprep.mubr.f32.mxu0 0.0
      %1441 = vmatmul.mubr.f32.gmra.mxu0 %v1215
      %v1442 = vpop.f32.mrf.mxu0
      %v1443 = vadd.f32 0.0, %v1442
      %v1444 = vpop.f32.mrf.mxu0
      %1445 = vmatprep.mubr.f32.mxu0 0.0
      %1446 = vmatmul.mubr.f32.gmra.mxu0 %v1216
      %v1447 = vpop.f32.mrf.mxu0
      %v1448 = vadd.f32 0.0, %v1447
      %v1449 = vpop.f32.mrf.mxu0
      %1450 = vmatprep.mubr.f32.mxu0 0.0
      %1451 = vmatmul.mubr.f32.gmra.mxu0 %v1217
      %v1452 = vpop.f32.mrf.mxu0
      %v1453 = vadd.f32 0.0, %v1452
      %v1454 = vpop.f32.mrf.mxu0
      %1455 = vmatprep.mubr.f32.mxu0 0.0
      %1456 = vmatmul.mubr.f32.gmra.mxu0 %v1218
      %v1457 = vpop.f32.mrf.mxu0
      %v1458 = vadd.f32 0.0, %v1457
      %v1459 = vpop.f32.mrf.mxu0
      %1460 = vdwg.mxu0
      %v1461 = vadd.f32 %v1154, %v1303
      %v1462 = vadd.f32 %v1155, %v1308
      %v1463 = vadd.f32 %v1156, %v1313
      %v1464 = vadd.f32 %v1157, %v1318
      %v1465 = vadd.f32 %v1158, %v1323
      %v1466 = vadd.f32 %v1159, %v1328
      %v1467 = vadd.f32 %v1160, %v1333
      %v1468 = vadd.f32 %v1161, %v1338
      %v1469 = vadd.f32 %v1162, %v1343
      %v1470 = vadd.f32 %v1163, %v1348
      %v1471 = vadd.f32 %v1164, %v1353
      %v1472 = vadd.f32 %v1165, %v1358
      %v1473 = vadd.f32 %v1166, %v1363
      %v1474 = vadd.f32 %v1167, %v1368
      %v1475 = vadd.f32 %v1168, %v1373
      %v1476 = vadd.f32 %v1169, %v1378
      %v1477 = vadd.f32 %v1170, %v1383
      %v1478 = vadd.f32 %v1171, %v1388
      %v1479 = vadd.f32 %v1172, %v1393
      %v1480 = vadd.f32 %v1173, %v1398
      %v1481 = vadd.f32 %v1174, %v1403
      %v1482 = vadd.f32 %v1175, %v1408
      %v1483 = vadd.f32 %v1176, %v1413
      %v1484 = vadd.f32 %v1177, %v1418
      %v1485 = vadd.f32 %v1178, %v1423
      %v1486 = vadd.f32 %v1179, %v1428
      %v1487 = vadd.f32 %v1180, %v1433
      %v1488 = vadd.f32 %v1181, %v1438
      %v1489 = vadd.f32 %v1182, %v1443
      %v1490 = vadd.f32 %v1183, %v1448
      %v1491 = vadd.f32 %v1184, %v1453
      %v1492 = vadd.f32 %v1185, %v1458
      %v1493 = vld [vmem:[%s1186 + $0x1] sm:$0xff]
      %v1494 = vld [vmem:[%s1186 + $0x9] sm:$0xff]
      %v1495 = vld [vmem:[%s1186 + $0x19] sm:$0xff]
      %v1496 = vld [vmem:[%s1186 + $0x21] sm:$0xff]
      %v1497 = vld [vmem:[%s1186 + $0x31] sm:$0xff]
      %v1498 = vld [vmem:[%s1186 + $0x39] sm:$0xff]
      %v1499 = vld [vmem:[%s1186 + $0x49] sm:$0xff]
      %v1500 = vld [vmem:[%s1186 + $0x51] sm:$0xff]
      %v1501 = vld [vmem:[%s1186 + $0x61] sm:$0xff]
      %v1502 = vld [vmem:[%s1186 + $0x69] sm:$0xff]
      %v1503 = vld [vmem:[%s1186 + $0x79] sm:$0xff]
      %v1504 = vld [vmem:[%s1186 + $0x81] sm:$0xff]
      %v1505 = vld [vmem:[%s1186 + $0x91] sm:$0xff]
      %v1506 = vld [vmem:[%s1186 + $0x99] sm:$0xff]
      %v1507 = vld [vmem:[%s1186 + $0xa9] sm:$0xff]
      %v1508 = vld [vmem:[%s1186 + $0xb1] sm:$0xff]
      %v1509 = vld [vmem:[%s1186 + $0xc1] sm:$0xff]
      %v1510 = vld [vmem:[%s1186 + $0xc9] sm:$0xff]
      %v1511 = vld [vmem:[%s1186 + $0xd9] sm:$0xff]
      %v1512 = vld [vmem:[%s1186 + $0xe1] sm:$0xff]
      %v1513 = vld [vmem:[%s1186 + $0xf1] sm:$0xff]
      %v1514 = vld [vmem:[%s1186 + $0xf9] sm:$0xff]
      %v1515 = vld [vmem:[%s1186 + $0x109] sm:$0xff]
      %v1516 = vld [vmem:[%s1186 + $0x111] sm:$0xff]
      %v1517 = vld [vmem:[%s1186 + $0x121] sm:$0xff]
      %v1518 = vld [vmem:[%s1186 + $0x129] sm:$0xff]
      %v1519 = vld [vmem:[%s1186 + $0x139] sm:$0xff]
      %v1520 = vld [vmem:[%s1186 + $0x141] sm:$0xff]
      %v1521 = vld [vmem:[%s1186 + $0x151] sm:$0xff]
      %v1522 = vld [vmem:[%s1186 + $0x159] sm:$0xff]
      %v1523 = vld [vmem:[%s1186 + $0x169] sm:$0xff]
      %v1524 = vld [vmem:[%s1186 + $0x171] sm:$0xff]
      %s1525 = scalar_lea.vmem %s1, 512
      %v1526 = vld [vmem:[%s1525] sm:$0xff]
      %v1527 = vld [vmem:[%s1525 + $0x8] sm:$0xff]
      %v1528 = vld [vmem:[%s1525 + $0x10] sm:$0xff]
      %v1529 = vld [vmem:[%s1525 + $0x18] sm:$0xff]
      %v1530 = vld [vmem:[%s1525 + $0x20] sm:$0xff]
      %v1531 = vld [vmem:[%s1525 + $0x28] sm:$0xff]
      %v1532 = vld [vmem:[%s1525 + $0x30] sm:$0xff]
      %v1533 = vld [vmem:[%s1525 + $0x38] sm:$0xff]
      %v1534 = vld [vmem:[%s1525 + $0x40] sm:$0xff]
      %v1535 = vld [vmem:[%s1525 + $0x48] sm:$0xff]
      %v1536 = vld [vmem:[%s1525 + $0x50] sm:$0xff]
      %v1537 = vld [vmem:[%s1525 + $0x58] sm:$0xff]
      %v1538 = vld [vmem:[%s1525 + $0x60] sm:$0xff]
      %v1539 = vld [vmem:[%s1525 + $0x68] sm:$0xff]
      %v1540 = vld [vmem:[%s1525 + $0x70] sm:$0xff]
      %v1541 = vld [vmem:[%s1525 + $0x78] sm:$0xff]
      %1542 = vmatprep.subr.mxu0 0.0
      %1543 = vmatpush1.msra.mxu0 %v1541
      %1544 = vmatprep.subr.mxu0 0.0
      %1545 = vmatpush1.msra.mxu0 %v1540
      %1546 = vmatprep.subr.mxu0 0.0
      %1547 = vmatpush1.msra.mxu0 %v1539
      %1548 = vmatprep.subr.mxu0 0.0
      %1549 = vmatpush1.msra.mxu0 %v1538
      %1550 = vmatprep.subr.mxu0 0.0
      %1551 = vmatpush1.msra.mxu0 %v1537
      %1552 = vmatprep.subr.mxu0 0.0
      %1553 = vmatpush1.msra.mxu0 %v1536
      %1554 = vmatprep.subr.mxu0 0.0
      %1555 = vmatpush1.msra.mxu0 %v1535
      %1556 = vmatprep.subr.mxu0 0.0
      %1557 = vmatpush1.msra.mxu0 %v1534
      %1558 = vmatprep.subr.mxu0 0.0
      %1559 = vmatpush1.msra.mxu0 %v1533
      %1560 = vmatprep.subr.mxu0 0.0
      %1561 = vmatpush1.msra.mxu0 %v1532
      %1562 = vmatprep.subr.mxu0 0.0
      %1563 = vmatpush1.msra.mxu0 %v1531
      %1564 = vmatprep.subr.mxu0 0.0
      %1565 = vmatpush1.msra.mxu0 %v1530
      %1566 = vmatprep.subr.mxu0 0.0
      %1567 = vmatpush1.msra.mxu0 %v1529
      %1568 = vmatprep.subr.mxu0 0.0
      %1569 = vmatpush1.msra.mxu0 %v1528
      %1570 = vmatprep.subr.mxu0 0.0
      %1571 = vmatpush1.msra.mxu0 %v1527
      %1572 = vmatprep.subr.mxu0 0.0
      %1573 = vmatpush1.msra.mxu0 %v1526
      %1574 = vmatprep.subr.mxu0 0.0
      %1575 = vmatpush2.msra.mxu0 0.0
      %1576 = vmatprep.subr.mxu0 0.0
      %1577 = vmatpush2.msra.mxu0 0.0
      %1578 = vmatprep.subr.mxu0 0.0
      %1579 = vmatpush2.msra.mxu0 0.0
      %1580 = vmatprep.subr.mxu0 0.0
      %1581 = vmatpush2.msra.mxu0 0.0
      %1582 = vmatprep.subr.mxu0 0.0
      %1583 = vmatpush2.msra.mxu0 0.0
      %1584 = vmatprep.subr.mxu0 0.0
      %1585 = vmatpush2.msra.mxu0 0.0
      %1586 = vmatprep.subr.mxu0 0.0
      %1587 = vmatpush2.msra.mxu0 0.0
      %1588 = vmatprep.subr.mxu0 0.0
      %1589 = vmatpush2.msra.mxu0 0.0
      %1590 = vmatprep.subr.mxu0 0.0
      %1591 = vmatpush2.msra.mxu0 0.0
      %1592 = vmatprep.subr.mxu0 0.0
      %1593 = vmatpush2.msra.mxu0 0.0
      %1594 = vmatprep.subr.mxu0 0.0
      %1595 = vmatpush2.msra.mxu0 0.0
      %1596 = vmatprep.subr.mxu0 0.0
      %1597 = vmatpush2.msra.mxu0 0.0
      %1598 = vmatprep.subr.mxu0 0.0
      %1599 = vmatpush2.msra.mxu0 0.0
      %1600 = vmatprep.subr.mxu0 0.0
      %1601 = vmatpush2.msra.mxu0 0.0
      %1602 = vmatprep.subr.mxu0 0.0
      %1603 = vmatpush2.msra.mxu0 0.0
      %1604 = vmatprep.subr.mxu0 0.0
      %1605 = vmatpush2.msra.mxu0 0.0
      %1606 = vmatprep.mubr.f32.mxu0 0.0
      %1607 = vmatmul.mubr.f32.gmra.mxu0 %v1493
      %v1608 = vpop.f32.mrf.mxu0
      %v1609 = vadd.f32 0.0, %v1608
      %v1610 = vpop.f32.mrf.mxu0
      %1611 = vmatprep.mubr.f32.mxu0 0.0
      %1612 = vmatmul.mubr.f32.gmra.mxu0 %v1494
      %v1613 = vpop.f32.mrf.mxu0
      %v1614 = vadd.f32 0.0, %v1613
      %v1615 = vpop.f32.mrf.mxu0
      %1616 = vmatprep.mubr.f32.mxu0 0.0
      %1617 = vmatmul.mubr.f32.gmra.mxu0 %v1495
      %v1618 = vpop.f32.mrf.mxu0
      %v1619 = vadd.f32 0.0, %v1618
      %v1620 = vpop.f32.mrf.mxu0
      %1621 = vmatprep.mubr.f32.mxu0 0.0
      %1622 = vmatmul.mubr.f32.gmra.mxu0 %v1496
      %v1623 = vpop.f32.mrf.mxu0
      %v1624 = vadd.f32 0.0, %v1623
      %v1625 = vpop.f32.mrf.mxu0
      %1626 = vmatprep.mubr.f32.mxu0 0.0
      %1627 = vmatmul.mubr.f32.gmra.mxu0 %v1497
      %v1628 = vpop.f32.mrf.mxu0
      %v1629 = vadd.f32 0.0, %v1628
      %v1630 = vpop.f32.mrf.mxu0
      %1631 = vmatprep.mubr.f32.mxu0 0.0
      %1632 = vmatmul.mubr.f32.gmra.mxu0 %v1498
      %v1633 = vpop.f32.mrf.mxu0
      %v1634 = vadd.f32 0.0, %v1633
      %v1635 = vpop.f32.mrf.mxu0
      %1636 = vmatprep.mubr.f32.mxu0 0.0
      %1637 = vmatmul.mubr.f32.gmra.mxu0 %v1499
      %v1638 = vpop.f32.mrf.mxu0
      %v1639 = vadd.f32 0.0, %v1638
      %v1640 = vpop.f32.mrf.mxu0
      %1641 = vmatprep.mubr.f32.mxu0 0.0
      %1642 = vmatmul.mubr.f32.gmra.mxu0 %v1500
      %v1643 = vpop.f32.mrf.mxu0
      %v1644 = vadd.f32 0.0, %v1643
      %v1645 = vpop.f32.mrf.mxu0
      %1646 = vmatprep.mubr.f32.mxu0 0.0
      %1647 = vmatmul.mubr.f32.gmra.mxu0 %v1501
      %v1648 = vpop.f32.mrf.mxu0
      %v1649 = vadd.f32 0.0, %v1648
      %v1650 = vpop.f32.mrf.mxu0
      %1651 = vmatprep.mubr.f32.mxu0 0.0
      %1652 = vmatmul.mubr.f32.gmra.mxu0 %v1502
      %v1653 = vpop.f32.mrf.mxu0
      %v1654 = vadd.f32 0.0, %v1653
      %v1655 = vpop.f32.mrf.mxu0
      %1656 = vmatprep.mubr.f32.mxu0 0.0
      %1657 = vmatmul.mubr.f32.gmra.mxu0 %v1503
      %v1658 = vpop.f32.mrf.mxu0
      %v1659 = vadd.f32 0.0, %v1658
      %v1660 = vpop.f32.mrf.mxu0
      %1661 = vmatprep.mubr.f32.mxu0 0.0
      %1662 = vmatmul.mubr.f32.gmra.mxu0 %v1504
      %v1663 = vpop.f32.mrf.mxu0
      %v1664 = vadd.f32 0.0, %v1663
      %v1665 = vpop.f32.mrf.mxu0
      %1666 = vmatprep.mubr.f32.mxu0 0.0
      %1667 = vmatmul.mubr.f32.gmra.mxu0 %v1505
      %v1668 = vpop.f32.mrf.mxu0
      %v1669 = vadd.f32 0.0, %v1668
      %v1670 = vpop.f32.mrf.mxu0
      %1671 = vmatprep.mubr.f32.mxu0 0.0
      %1672 = vmatmul.mubr.f32.gmra.mxu0 %v1506
      %v1673 = vpop.f32.mrf.mxu0
      %v1674 = vadd.f32 0.0, %v1673
      %v1675 = vpop.f32.mrf.mxu0
      %1676 = vmatprep.mubr.f32.mxu0 0.0
      %1677 = vmatmul.mubr.f32.gmra.mxu0 %v1507
      %v1678 = vpop.f32.mrf.mxu0
      %v1679 = vadd.f32 0.0, %v1678
      %v1680 = vpop.f32.mrf.mxu0
      %1681 = vmatprep.mubr.f32.mxu0 0.0
      %1682 = vmatmul.mubr.f32.gmra.mxu0 %v1508
      %v1683 = vpop.f32.mrf.mxu0
      %v1684 = vadd.f32 0.0, %v1683
      %v1685 = vpop.f32.mrf.mxu0
      %1686 = vmatprep.mubr.f32.mxu0 0.0
      %1687 = vmatmul.mubr.f32.gmra.mxu0 %v1509
      %v1688 = vpop.f32.mrf.mxu0
      %v1689 = vadd.f32 0.0, %v1688
      %v1690 = vpop.f32.mrf.mxu0
      %1691 = vmatprep.mubr.f32.mxu0 0.0
      %1692 = vmatmul.mubr.f32.gmra.mxu0 %v1510
      %v1693 = vpop.f32.mrf.mxu0
      %v1694 = vadd.f32 0.0, %v1693
      %v1695 = vpop.f32.mrf.mxu0
      %1696 = vmatprep.mubr.f32.mxu0 0.0
      %1697 = vmatmul.mubr.f32.gmra.mxu0 %v1511
      %v1698 = vpop.f32.mrf.mxu0
      %v1699 = vadd.f32 0.0, %v1698
      %v1700 = vpop.f32.mrf.mxu0
      %1701 = vmatprep.mubr.f32.mxu0 0.0
      %1702 = vmatmul.mubr.f32.gmra.mxu0 %v1512
      %v1703 = vpop.f32.mrf.mxu0
      %v1704 = vadd.f32 0.0, %v1703
      %v1705 = vpop.f32.mrf.mxu0
      %1706 = vmatprep.mubr.f32.mxu0 0.0
      %1707 = vmatmul.mubr.f32.gmra.mxu0 %v1513
      %v1708 = vpop.f32.mrf.mxu0
      %v1709 = vadd.f32 0.0, %v1708
      %v1710 = vpop.f32.mrf.mxu0
      %1711 = vmatprep.mubr.f32.mxu0 0.0
      %1712 = vmatmul.mubr.f32.gmra.mxu0 %v1514
      %v1713 = vpop.f32.mrf.mxu0
      %v1714 = vadd.f32 0.0, %v1713
      %v1715 = vpop.f32.mrf.mxu0
      %1716 = vmatprep.mubr.f32.mxu0 0.0
      %1717 = vmatmul.mubr.f32.gmra.mxu0 %v1515
      %v1718 = vpop.f32.mrf.mxu0
      %v1719 = vadd.f32 0.0, %v1718
      %v1720 = vpop.f32.mrf.mxu0
      %1721 = vmatprep.mubr.f32.mxu0 0.0
      %1722 = vmatmul.mubr.f32.gmra.mxu0 %v1516
      %v1723 = vpop.f32.mrf.mxu0
      %v1724 = vadd.f32 0.0, %v1723
      %v1725 = vpop.f32.mrf.mxu0
      %1726 = vmatprep.mubr.f32.mxu0 0.0
      %1727 = vmatmul.mubr.f32.gmra.mxu0 %v1517
      %v1728 = vpop.f32.mrf.mxu0
      %v1729 = vadd.f32 0.0, %v1728
      %v1730 = vpop.f32.mrf.mxu0
      %1731 = vmatprep.mubr.f32.mxu0 0.0
      %1732 = vmatmul.mubr.f32.gmra.mxu0 %v1518
      %v1733 = vpop.f32.mrf.mxu0
      %v1734 = vadd.f32 0.0, %v1733
      %v1735 = vpop.f32.mrf.mxu0
      %1736 = vmatprep.mubr.f32.mxu0 0.0
      %1737 = vmatmul.mubr.f32.gmra.mxu0 %v1519
      %v1738 = vpop.f32.mrf.mxu0
      %v1739 = vadd.f32 0.0, %v1738
      %v1740 = vpop.f32.mrf.mxu0
      %1741 = vmatprep.mubr.f32.mxu0 0.0
      %1742 = vmatmul.mubr.f32.gmra.mxu0 %v1520
      %v1743 = vpop.f32.mrf.mxu0
      %v1744 = vadd.f32 0.0, %v1743
      %v1745 = vpop.f32.mrf.mxu0
      %1746 = vmatprep.mubr.f32.mxu0 0.0
      %1747 = vmatmul.mubr.f32.gmra.mxu0 %v1521
      %v1748 = vpop.f32.mrf.mxu0
      %v1749 = vadd.f32 0.0, %v1748
      %v1750 = vpop.f32.mrf.mxu0
      %1751 = vmatprep.mubr.f32.mxu0 0.0
      %1752 = vmatmul.mubr.f32.gmra.mxu0 %v1522
      %v1753 = vpop.f32.mrf.mxu0
      %v1754 = vadd.f32 0.0, %v1753
      %v1755 = vpop.f32.mrf.mxu0
      %1756 = vmatprep.mubr.f32.mxu0 0.0
      %1757 = vmatmul.mubr.f32.gmra.mxu0 %v1523
      %v1758 = vpop.f32.mrf.mxu0
      %v1759 = vadd.f32 0.0, %v1758
      %v1760 = vpop.f32.mrf.mxu0
      %1761 = vmatprep.mubr.f32.mxu0 0.0
      %1762 = vmatmul.mubr.f32.gmra.mxu0 %v1524
      %v1763 = vpop.f32.mrf.mxu0
      %v1764 = vadd.f32 0.0, %v1763
      %v1765 = vpop.f32.mrf.mxu0
      %1766 = vdwg.mxu0
      %v1767 = vadd.f32 %v1461, %v1609
      %v1768 = vadd.f32 %v1462, %v1614
      %v1769 = vadd.f32 %v1463, %v1619
      %v1770 = vadd.f32 %v1464, %v1624
      %v1771 = vadd.f32 %v1465, %v1629
      %v1772 = vadd.f32 %v1466, %v1634
      %v1773 = vadd.f32 %v1467, %v1639
      %v1774 = vadd.f32 %v1468, %v1644
      %v1775 = vadd.f32 %v1469, %v1649
      %v1776 = vadd.f32 %v1470, %v1654
      %v1777 = vadd.f32 %v1471, %v1659
      %v1778 = vadd.f32 %v1472, %v1664
      %v1779 = vadd.f32 %v1473, %v1669
      %v1780 = vadd.f32 %v1474, %v1674
      %v1781 = vadd.f32 %v1475, %v1679
      %v1782 = vadd.f32 %v1476, %v1684
      %v1783 = vadd.f32 %v1477, %v1689
      %v1784 = vadd.f32 %v1478, %v1694
      %v1785 = vadd.f32 %v1479, %v1699
      %v1786 = vadd.f32 %v1480, %v1704
      %v1787 = vadd.f32 %v1481, %v1709
      %v1788 = vadd.f32 %v1482, %v1714
      %v1789 = vadd.f32 %v1483, %v1719
      %v1790 = vadd.f32 %v1484, %v1724
      %v1791 = vadd.f32 %v1485, %v1729
      %v1792 = vadd.f32 %v1486, %v1734
      %v1793 = vadd.f32 %v1487, %v1739
      %v1794 = vadd.f32 %v1488, %v1744
      %v1795 = vadd.f32 %v1489, %v1749
      %v1796 = vadd.f32 %v1490, %v1754
      %v1797 = vadd.f32 %v1491, %v1759
      %v1798 = vadd.f32 %v1492, %v1764
      %v1799 = vld [vmem:[%s1186 + $0x2] sm:$0xff]
      %v1800 = vld [vmem:[%s1186 + $0xa] sm:$0xff]
      %v1801 = vld [vmem:[%s1186 + $0x1a] sm:$0xff]
      %v1802 = vld [vmem:[%s1186 + $0x22] sm:$0xff]
      %v1803 = vld [vmem:[%s1186 + $0x32] sm:$0xff]
      %v1804 = vld [vmem:[%s1186 + $0x3a] sm:$0xff]
      %v1805 = vld [vmem:[%s1186 + $0x4a] sm:$0xff]
      %v1806 = vld [vmem:[%s1186 + $0x52] sm:$0xff]
      %v1807 = vld [vmem:[%s1186 + $0x62] sm:$0xff]
      %v1808 = vld [vmem:[%s1186 + $0x6a] sm:$0xff]
      %v1809 = vld [vmem:[%s1186 + $0x7a] sm:$0xff]
      %v1810 = vld [vmem:[%s1186 + $0x82] sm:$0xff]
      %v1811 = vld [vmem:[%s1186 + $0x92] sm:$0xff]
      %v1812 = vld [vmem:[%s1186 + $0x9a] sm:$0xff]
      %v1813 = vld [vmem:[%s1186 + $0xaa] sm:$0xff]
      %v1814 = vld [vmem:[%s1186 + $0xb2] sm:$0xff]
      %v1815 = vld [vmem:[%s1186 + $0xc2] sm:$0xff]
      %v1816 = vld [vmem:[%s1186 + $0xca] sm:$0xff]
      %v1817 = vld [vmem:[%s1186 + $0xda] sm:$0xff]
      %v1818 = vld [vmem:[%s1186 + $0xe2] sm:$0xff]
      %v1819 = vld [vmem:[%s1186 + $0xf2] sm:$0xff]
      %v1820 = vld [vmem:[%s1186 + $0xfa] sm:$0xff]
      %v1821 = vld [vmem:[%s1186 + $0x10a] sm:$0xff]
      %v1822 = vld [vmem:[%s1186 + $0x112] sm:$0xff]
      %v1823 = vld [vmem:[%s1186 + $0x122] sm:$0xff]
      %v1824 = vld [vmem:[%s1186 + $0x12a] sm:$0xff]
      %v1825 = vld [vmem:[%s1186 + $0x13a] sm:$0xff]
      %v1826 = vld [vmem:[%s1186 + $0x142] sm:$0xff]
      %v1827 = vld [vmem:[%s1186 + $0x152] sm:$0xff]
      %v1828 = vld [vmem:[%s1186 + $0x15a] sm:$0xff]
      %v1829 = vld [vmem:[%s1186 + $0x16a] sm:$0xff]
      %v1830 = vld [vmem:[%s1186 + $0x172] sm:$0xff]
      %s1831 = scalar_lea.vmem %s1, 640
      %v1832 = vld [vmem:[%s1831] sm:$0xff]
      %v1833 = vld [vmem:[%s1831 + $0x8] sm:$0xff]
      %v1834 = vld [vmem:[%s1831 + $0x10] sm:$0xff]
      %v1835 = vld [vmem:[%s1831 + $0x18] sm:$0xff]
      %v1836 = vld [vmem:[%s1831 + $0x20] sm:$0xff]
      %v1837 = vld [vmem:[%s1831 + $0x28] sm:$0xff]
      %v1838 = vld [vmem:[%s1831 + $0x30] sm:$0xff]
      %v1839 = vld [vmem:[%s1831 + $0x38] sm:$0xff]
      %v1840 = vld [vmem:[%s1831 + $0x40] sm:$0xff]
      %v1841 = vld [vmem:[%s1831 + $0x48] sm:$0xff]
      %v1842 = vld [vmem:[%s1831 + $0x50] sm:$0xff]
      %v1843 = vld [vmem:[%s1831 + $0x58] sm:$0xff]
      %v1844 = vld [vmem:[%s1831 + $0x60] sm:$0xff]
      %v1845 = vld [vmem:[%s1831 + $0x68] sm:$0xff]
      %v1846 = vld [vmem:[%s1831 + $0x70] sm:$0xff]
      %v1847 = vld [vmem:[%s1831 + $0x78] sm:$0xff]
      %1848 = vmatprep.subr.mxu0 0.0
      %1849 = vmatpush1.msra.mxu0 %v1847
      %1850 = vmatprep.subr.mxu0 0.0
      %1851 = vmatpush1.msra.mxu0 %v1846
      %1852 = vmatprep.subr.mxu0 0.0
      %1853 = vmatpush1.msra.mxu0 %v1845
      %1854 = vmatprep.subr.mxu0 0.0
      %1855 = vmatpush1.msra.mxu0 %v1844
      %1856 = vmatprep.subr.mxu0 0.0
      %1857 = vmatpush1.msra.mxu0 %v1843
      %1858 = vmatprep.subr.mxu0 0.0
      %1859 = vmatpush1.msra.mxu0 %v1842
      %1860 = vmatprep.subr.mxu0 0.0
      %1861 = vmatpush1.msra.mxu0 %v1841
      %1862 = vmatprep.subr.mxu0 0.0
      %1863 = vmatpush1.msra.mxu0 %v1840
      %1864 = vmatprep.subr.mxu0 0.0
      %1865 = vmatpush1.msra.mxu0 %v1839
      %1866 = vmatprep.subr.mxu0 0.0
      %1867 = vmatpush1.msra.mxu0 %v1838
      %1868 = vmatprep.subr.mxu0 0.0
      %1869 = vmatpush1.msra.mxu0 %v1837
      %1870 = vmatprep.subr.mxu0 0.0
      %1871 = vmatpush1.msra.mxu0 %v1836
      %1872 = vmatprep.subr.mxu0 0.0
      %1873 = vmatpush1.msra.mxu0 %v1835
      %1874 = vmatprep.subr.mxu0 0.0
      %1875 = vmatpush1.msra.mxu0 %v1834
      %1876 = vmatprep.subr.mxu0 0.0
      %1877 = vmatpush1.msra.mxu0 %v1833
      %1878 = vmatprep.subr.mxu0 0.0
      %1879 = vmatpush1.msra.mxu0 %v1832
      %1880 = vmatprep.subr.mxu0 0.0
      %1881 = vmatpush2.msra.mxu0 0.0
      %1882 = vmatprep.subr.mxu0 0.0
      %1883 = vmatpush2.msra.mxu0 0.0
      %1884 = vmatprep.subr.mxu0 0.0
      %1885 = vmatpush2.msra.mxu0 0.0
      %1886 = vmatprep.subr.mxu0 0.0
      %1887 = vmatpush2.msra.mxu0 0.0
      %1888 = vmatprep.subr.mxu0 0.0
      %1889 = vmatpush2.msra.mxu0 0.0
      %1890 = vmatprep.subr.mxu0 0.0
      %1891 = vmatpush2.msra.mxu0 0.0
      %1892 = vmatprep.subr.mxu0 0.0
      %1893 = vmatpush2.msra.mxu0 0.0
      %1894 = vmatprep.subr.mxu0 0.0
      %1895 = vmatpush2.msra.mxu0 0.0
      %1896 = vmatprep.subr.mxu0 0.0
      %1897 = vmatpush2.msra.mxu0 0.0
      %1898 = vmatprep.subr.mxu0 0.0
      %1899 = vmatpush2.msra.mxu0 0.0
      %1900 = vmatprep.subr.mxu0 0.0
      %1901 = vmatpush2.msra.mxu0 0.0
      %1902 = vmatprep.subr.mxu0 0.0
      %1903 = vmatpush2.msra.mxu0 0.0
      %1904 = vmatprep.subr.mxu0 0.0
      %1905 = vmatpush2.msra.mxu0 0.0
      %1906 = vmatprep.subr.mxu0 0.0
      %1907 = vmatpush2.msra.mxu0 0.0
      %1908 = vmatprep.subr.mxu0 0.0
      %1909 = vmatpush2.msra.mxu0 0.0
      %1910 = vmatprep.subr.mxu0 0.0
      %1911 = vmatpush2.msra.mxu0 0.0
      %1912 = vmatprep.mubr.f32.mxu0 0.0
      %1913 = vmatmul.mubr.f32.gmra.mxu0 %v1799
      %v1914 = vpop.f32.mrf.mxu0
      %v1915 = vadd.f32 0.0, %v1914
      %v1916 = vpop.f32.mrf.mxu0
      %1917 = vmatprep.mubr.f32.mxu0 0.0
      %1918 = vmatmul.mubr.f32.gmra.mxu0 %v1800
      %v1919 = vpop.f32.mrf.mxu0
      %v1920 = vadd.f32 0.0, %v1919
      %v1921 = vpop.f32.mrf.mxu0
      %1922 = vmatprep.mubr.f32.mxu0 0.0
      %1923 = vmatmul.mubr.f32.gmra.mxu0 %v1801
      %v1924 = vpop.f32.mrf.mxu0
      %v1925 = vadd.f32 0.0, %v1924
      %v1926 = vpop.f32.mrf.mxu0
      %1927 = vmatprep.mubr.f32.mxu0 0.0
      %1928 = vmatmul.mubr.f32.gmra.mxu0 %v1802
      %v1929 = vpop.f32.mrf.mxu0
      %v1930 = vadd.f32 0.0, %v1929
      %v1931 = vpop.f32.mrf.mxu0
      %1932 = vmatprep.mubr.f32.mxu0 0.0
      %1933 = vmatmul.mubr.f32.gmra.mxu0 %v1803
      %v1934 = vpop.f32.mrf.mxu0
      %v1935 = vadd.f32 0.0, %v1934
      %v1936 = vpop.f32.mrf.mxu0
      %1937 = vmatprep.mubr.f32.mxu0 0.0
      %1938 = vmatmul.mubr.f32.gmra.mxu0 %v1804
      %v1939 = vpop.f32.mrf.mxu0
      %v1940 = vadd.f32 0.0, %v1939
      %v1941 = vpop.f32.mrf.mxu0
      %1942 = vmatprep.mubr.f32.mxu0 0.0
      %1943 = vmatmul.mubr.f32.gmra.mxu0 %v1805
      %v1944 = vpop.f32.mrf.mxu0
      %v1945 = vadd.f32 0.0, %v1944
      %v1946 = vpop.f32.mrf.mxu0
      %1947 = vmatprep.mubr.f32.mxu0 0.0
      %1948 = vmatmul.mubr.f32.gmra.mxu0 %v1806
      %v1949 = vpop.f32.mrf.mxu0
      %v1950 = vadd.f32 0.0, %v1949
      %v1951 = vpop.f32.mrf.mxu0
      %1952 = vmatprep.mubr.f32.mxu0 0.0
      %1953 = vmatmul.mubr.f32.gmra.mxu0 %v1807
      %v1954 = vpop.f32.mrf.mxu0
      %v1955 = vadd.f32 0.0, %v1954
      %v1956 = vpop.f32.mrf.mxu0
      %1957 = vmatprep.mubr.f32.mxu0 0.0
      %1958 = vmatmul.mubr.f32.gmra.mxu0 %v1808
      %v1959 = vpop.f32.mrf.mxu0
      %v1960 = vadd.f32 0.0, %v1959
      %v1961 = vpop.f32.mrf.mxu0
      %1962 = vmatprep.mubr.f32.mxu0 0.0
      %1963 = vmatmul.mubr.f32.gmra.mxu0 %v1809
      %v1964 = vpop.f32.mrf.mxu0
      %v1965 = vadd.f32 0.0, %v1964
      %v1966 = vpop.f32.mrf.mxu0
      %1967 = vmatprep.mubr.f32.mxu0 0.0
      %1968 = vmatmul.mubr.f32.gmra.mxu0 %v1810
      %v1969 = vpop.f32.mrf.mxu0
      %v1970 = vadd.f32 0.0, %v1969
      %v1971 = vpop.f32.mrf.mxu0
      %1972 = vmatprep.mubr.f32.mxu0 0.0
      %1973 = vmatmul.mubr.f32.gmra.mxu0 %v1811
      %v1974 = vpop.f32.mrf.mxu0
      %v1975 = vadd.f32 0.0, %v1974
      %v1976 = vpop.f32.mrf.mxu0
      %1977 = vmatprep.mubr.f32.mxu0 0.0
      %1978 = vmatmul.mubr.f32.gmra.mxu0 %v1812
      %v1979 = vpop.f32.mrf.mxu0
      %v1980 = vadd.f32 0.0, %v1979
      %v1981 = vpop.f32.mrf.mxu0
      %1982 = vmatprep.mubr.f32.mxu0 0.0
      %1983 = vmatmul.mubr.f32.gmra.mxu0 %v1813
      %v1984 = vpop.f32.mrf.mxu0
      %v1985 = vadd.f32 0.0, %v1984
      %v1986 = vpop.f32.mrf.mxu0
      %1987 = vmatprep.mubr.f32.mxu0 0.0
      %1988 = vmatmul.mubr.f32.gmra.mxu0 %v1814
      %v1989 = vpop.f32.mrf.mxu0
      %v1990 = vadd.f32 0.0, %v1989
      %v1991 = vpop.f32.mrf.mxu0
      %1992 = vmatprep.mubr.f32.mxu0 0.0
      %1993 = vmatmul.mubr.f32.gmra.mxu0 %v1815
      %v1994 = vpop.f32.mrf.mxu0
      %v1995 = vadd.f32 0.0, %v1994
      %v1996 = vpop.f32.mrf.mxu0
      %1997 = vmatprep.mubr.f32.mxu0 0.0
      %1998 = vmatmul.mubr.f32.gmra.mxu0 %v1816
      %v1999 = vpop.f32.mrf.mxu0
      %v2000 = vadd.f32 0.0, %v1999
      %v2001 = vpop.f32.mrf.mxu0
      %2002 = vmatprep.mubr.f32.mxu0 0.0
      %2003 = vmatmul.mubr.f32.gmra.mxu0 %v1817
      %v2004 = vpop.f32.mrf.mxu0
      %v2005 = vadd.f32 0.0, %v2004
      %v2006 = vpop.f32.mrf.mxu0
      %2007 = vmatprep.mubr.f32.mxu0 0.0
      %2008 = vmatmul.mubr.f32.gmra.mxu0 %v1818
      %v2009 = vpop.f32.mrf.mxu0
      %v2010 = vadd.f32 0.0, %v2009
      %v2011 = vpop.f32.mrf.mxu0
      %2012 = vmatprep.mubr.f32.mxu0 0.0
      %2013 = vmatmul.mubr.f32.gmra.mxu0 %v1819
      %v2014 = vpop.f32.mrf.mxu0
      %v2015 = vadd.f32 0.0, %v2014
      %v2016 = vpop.f32.mrf.mxu0
      %2017 = vmatprep.mubr.f32.mxu0 0.0
      %2018 = vmatmul.mubr.f32.gmra.mxu0 %v1820
      %v2019 = vpop.f32.mrf.mxu0
      %v2020 = vadd.f32 0.0, %v2019
      %v2021 = vpop.f32.mrf.mxu0
      %2022 = vmatprep.mubr.f32.mxu0 0.0
      %2023 = vmatmul.mubr.f32.gmra.mxu0 %v1821
      %v2024 = vpop.f32.mrf.mxu0
      %v2025 = vadd.f32 0.0, %v2024
      %v2026 = vpop.f32.mrf.mxu0
      %2027 = vmatprep.mubr.f32.mxu0 0.0
      %2028 = vmatmul.mubr.f32.gmra.mxu0 %v1822
      %v2029 = vpop.f32.mrf.mxu0
      %v2030 = vadd.f32 0.0, %v2029
      %v2031 = vpop.f32.mrf.mxu0
      %2032 = vmatprep.mubr.f32.mxu0 0.0
      %2033 = vmatmul.mubr.f32.gmra.mxu0 %v1823
      %v2034 = vpop.f32.mrf.mxu0
      %v2035 = vadd.f32 0.0, %v2034
      %v2036 = vpop.f32.mrf.mxu0
      %2037 = vmatprep.mubr.f32.mxu0 0.0
      %2038 = vmatmul.mubr.f32.gmra.mxu0 %v1824
      %v2039 = vpop.f32.mrf.mxu0
      %v2040 = vadd.f32 0.0, %v2039
      %v2041 = vpop.f32.mrf.mxu0
      %2042 = vmatprep.mubr.f32.mxu0 0.0
      %2043 = vmatmul.mubr.f32.gmra.mxu0 %v1825
      %v2044 = vpop.f32.mrf.mxu0
      %v2045 = vadd.f32 0.0, %v2044
      %v2046 = vpop.f32.mrf.mxu0
      %2047 = vmatprep.mubr.f32.mxu0 0.0
      %2048 = vmatmul.mubr.f32.gmra.mxu0 %v1826
      %v2049 = vpop.f32.mrf.mxu0
      %v2050 = vadd.f32 0.0, %v2049
      %v2051 = vpop.f32.mrf.mxu0
      %2052 = vmatprep.mubr.f32.mxu0 0.0
      %2053 = vmatmul.mubr.f32.gmra.mxu0 %v1827
      %v2054 = vpop.f32.mrf.mxu0
      %v2055 = vadd.f32 0.0, %v2054
      %v2056 = vpop.f32.mrf.mxu0
      %2057 = vmatprep.mubr.f32.mxu0 0.0
      %2058 = vmatmul.mubr.f32.gmra.mxu0 %v1828
      %v2059 = vpop.f32.mrf.mxu0
      %v2060 = vadd.f32 0.0, %v2059
      %v2061 = vpop.f32.mrf.mxu0
      %2062 = vmatprep.mubr.f32.mxu0 0.0
      %2063 = vmatmul.mubr.f32.gmra.mxu0 %v1829
      %v2064 = vpop.f32.mrf.mxu0
      %v2065 = vadd.f32 0.0, %v2064
      %v2066 = vpop.f32.mrf.mxu0
      %2067 = vmatprep.mubr.f32.mxu0 0.0
      %2068 = vmatmul.mubr.f32.gmra.mxu0 %v1830
      %v2069 = vpop.f32.mrf.mxu0
      %v2070 = vadd.f32 0.0, %v2069
      %v2071 = vpop.f32.mrf.mxu0
      %2072 = vdwg.mxu0
      %v2073 = vadd.f32 %v1767, %v1915
      %v2074 = vadd.f32 %v1768, %v1920
      %v2075 = vadd.f32 %v1769, %v1925
      %v2076 = vadd.f32 %v1770, %v1930
      %v2077 = vadd.f32 %v1771, %v1935
      %v2078 = vadd.f32 %v1772, %v1940
      %v2079 = vadd.f32 %v1773, %v1945
      %v2080 = vadd.f32 %v1774, %v1950
      %v2081 = vadd.f32 %v1775, %v1955
      %v2082 = vadd.f32 %v1776, %v1960
      %v2083 = vadd.f32 %v1777, %v1965
      %v2084 = vadd.f32 %v1778, %v1970
      %v2085 = vadd.f32 %v1779, %v1975
      %v2086 = vadd.f32 %v1780, %v1980
      %v2087 = vadd.f32 %v1781, %v1985
      %v2088 = vadd.f32 %v1782, %v1990
      %v2089 = vadd.f32 %v1783, %v1995
      %v2090 = vadd.f32 %v1784, %v2000
      %v2091 = vadd.f32 %v1785, %v2005
      %v2092 = vadd.f32 %v1786, %v2010
      %v2093 = vadd.f32 %v1787, %v2015
      %v2094 = vadd.f32 %v1788, %v2020
      %v2095 = vadd.f32 %v1789, %v2025
      %v2096 = vadd.f32 %v1790, %v2030
      %v2097 = vadd.f32 %v1791, %v2035
      %v2098 = vadd.f32 %v1792, %v2040
      %v2099 = vadd.f32 %v1793, %v2045
      %v2100 = vadd.f32 %v1794, %v2050
      %v2101 = vadd.f32 %v1795, %v2055
      %v2102 = vadd.f32 %v1796, %v2060
      %v2103 = vadd.f32 %v1797, %v2065
      %v2104 = vadd.f32 %v1798, %v2070
      %s2105 = scalar_lea.vmem %s327, 48
      %v2106 = vld [vmem:[%s2105] sm:$0xff]
      %v2107 = vld [vmem:[%s2105 + $0x8] sm:$0xff]
      %v2108 = vld [vmem:[%s2105 + $0x18] sm:$0xff]
      %v2109 = vld [vmem:[%s2105 + $0x20] sm:$0xff]
      %v2110 = vld [vmem:[%s2105 + $0x30] sm:$0xff]
      %v2111 = vld [vmem:[%s2105 + $0x38] sm:$0xff]
      %v2112 = vld [vmem:[%s2105 + $0x48] sm:$0xff]
      %v2113 = vld [vmem:[%s2105 + $0x50] sm:$0xff]
      %v2114 = vld [vmem:[%s2105 + $0x60] sm:$0xff]
      %v2115 = vld [vmem:[%s2105 + $0x68] sm:$0xff]
      %v2116 = vld [vmem:[%s2105 + $0x78] sm:$0xff]
      %v2117 = vld [vmem:[%s2105 + $0x80] sm:$0xff]
      %v2118 = vld [vmem:[%s2105 + $0x90] sm:$0xff]
      %v2119 = vld [vmem:[%s2105 + $0x98] sm:$0xff]
      %v2120 = vld [vmem:[%s2105 + $0xa8] sm:$0xff]
      %v2121 = vld [vmem:[%s2105 + $0xb0] sm:$0xff]
      %v2122 = vld [vmem:[%s2105 + $0xc0] sm:$0xff]
      %v2123 = vld [vmem:[%s2105 + $0xc8] sm:$0xff]
      %v2124 = vld [vmem:[%s2105 + $0xd8] sm:$0xff]
      %v2125 = vld [vmem:[%s2105 + $0xe0] sm:$0xff]
      %v2126 = vld [vmem:[%s2105 + $0xf0] sm:$0xff]
      %v2127 = vld [vmem:[%s2105 + $0xf8] sm:$0xff]
      %v2128 = vld [vmem:[%s2105 + $0x108] sm:$0xff]
      %v2129 = vld [vmem:[%s2105 + $0x110] sm:$0xff]
      %v2130 = vld [vmem:[%s2105 + $0x120] sm:$0xff]
      %v2131 = vld [vmem:[%s2105 + $0x128] sm:$0xff]
      %v2132 = vld [vmem:[%s2105 + $0x138] sm:$0xff]
      %v2133 = vld [vmem:[%s2105 + $0x140] sm:$0xff]
      %v2134 = vld [vmem:[%s2105 + $0x150] sm:$0xff]
      %v2135 = vld [vmem:[%s2105 + $0x158] sm:$0xff]
      %v2136 = vld [vmem:[%s2105 + $0x168] sm:$0xff]
      %v2137 = vld [vmem:[%s2105 + $0x170] sm:$0xff]
      %s2138 = scalar_lea.vmem %s1, 768
      %v2139 = vld [vmem:[%s2138] sm:$0xff]
      %v2140 = vld [vmem:[%s2138 + $0x8] sm:$0xff]
      %v2141 = vld [vmem:[%s2138 + $0x10] sm:$0xff]
      %v2142 = vld [vmem:[%s2138 + $0x18] sm:$0xff]
      %v2143 = vld [vmem:[%s2138 + $0x20] sm:$0xff]
      %v2144 = vld [vmem:[%s2138 + $0x28] sm:$0xff]
      %v2145 = vld [vmem:[%s2138 + $0x30] sm:$0xff]
      %v2146 = vld [vmem:[%s2138 + $0x38] sm:$0xff]
      %v2147 = vld [vmem:[%s2138 + $0x40] sm:$0xff]
      %v2148 = vld [vmem:[%s2138 + $0x48] sm:$0xff]
      %v2149 = vld [vmem:[%s2138 + $0x50] sm:$0xff]
      %v2150 = vld [vmem:[%s2138 + $0x58] sm:$0xff]
      %v2151 = vld [vmem:[%s2138 + $0x60] sm:$0xff]
      %v2152 = vld [vmem:[%s2138 + $0x68] sm:$0xff]
      %v2153 = vld [vmem:[%s2138 + $0x70] sm:$0xff]
      %v2154 = vld [vmem:[%s2138 + $0x78] sm:$0xff]
      %2155 = vmatprep.subr.mxu0 0.0
      %2156 = vmatpush1.msra.mxu0 %v2154
      %2157 = vmatprep.subr.mxu0 0.0
      %2158 = vmatpush1.msra.mxu0 %v2153
      %2159 = vmatprep.subr.mxu0 0.0
      %2160 = vmatpush1.msra.mxu0 %v2152
      %2161 = vmatprep.subr.mxu0 0.0
      %2162 = vmatpush1.msra.mxu0 %v2151
      %2163 = vmatprep.subr.mxu0 0.0
      %2164 = vmatpush1.msra.mxu0 %v2150
      %2165 = vmatprep.subr.mxu0 0.0
      %2166 = vmatpush1.msra.mxu0 %v2149
      %2167 = vmatprep.subr.mxu0 0.0
      %2168 = vmatpush1.msra.mxu0 %v2148
      %2169 = vmatprep.subr.mxu0 0.0
      %2170 = vmatpush1.msra.mxu0 %v2147
      %2171 = vmatprep.subr.mxu0 0.0
      %2172 = vmatpush1.msra.mxu0 %v2146
      %2173 = vmatprep.subr.mxu0 0.0
      %2174 = vmatpush1.msra.mxu0 %v2145
      %2175 = vmatprep.subr.mxu0 0.0
      %2176 = vmatpush1.msra.mxu0 %v2144
      %2177 = vmatprep.subr.mxu0 0.0
      %2178 = vmatpush1.msra.mxu0 %v2143
      %2179 = vmatprep.subr.mxu0 0.0
      %2180 = vmatpush1.msra.mxu0 %v2142
      %2181 = vmatprep.subr.mxu0 0.0
      %2182 = vmatpush1.msra.mxu0 %v2141
      %2183 = vmatprep.subr.mxu0 0.0
      %2184 = vmatpush1.msra.mxu0 %v2140
      %2185 = vmatprep.subr.mxu0 0.0
      %2186 = vmatpush1.msra.mxu0 %v2139
      %2187 = vmatprep.subr.mxu0 0.0
      %2188 = vmatpush2.msra.mxu0 0.0
      %2189 = vmatprep.subr.mxu0 0.0
      %2190 = vmatpush2.msra.mxu0 0.0
      %2191 = vmatprep.subr.mxu0 0.0
      %2192 = vmatpush2.msra.mxu0 0.0
      %2193 = vmatprep.subr.mxu0 0.0
      %2194 = vmatpush2.msra.mxu0 0.0
      %2195 = vmatprep.subr.mxu0 0.0
      %2196 = vmatpush2.msra.mxu0 0.0
      %2197 = vmatprep.subr.mxu0 0.0
      %2198 = vmatpush2.msra.mxu0 0.0
      %2199 = vmatprep.subr.mxu0 0.0
      %2200 = vmatpush2.msra.mxu0 0.0
      %2201 = vmatprep.subr.mxu0 0.0
      %2202 = vmatpush2.msra.mxu0 0.0
      %2203 = vmatprep.subr.mxu0 0.0
      %2204 = vmatpush2.msra.mxu0 0.0
      %2205 = vmatprep.subr.mxu0 0.0
      %2206 = vmatpush2.msra.mxu0 0.0
      %2207 = vmatprep.subr.mxu0 0.0
      %2208 = vmatpush2.msra.mxu0 0.0
      %2209 = vmatprep.subr.mxu0 0.0
      %2210 = vmatpush2.msra.mxu0 0.0
      %2211 = vmatprep.subr.mxu0 0.0
      %2212 = vmatpush2.msra.mxu0 0.0
      %2213 = vmatprep.subr.mxu0 0.0
      %2214 = vmatpush2.msra.mxu0 0.0
      %2215 = vmatprep.subr.mxu0 0.0
      %2216 = vmatpush2.msra.mxu0 0.0
      %2217 = vmatprep.subr.mxu0 0.0
      %2218 = vmatpush2.msra.mxu0 0.0
      %2219 = vmatprep.mubr.f32.mxu0 0.0
      %2220 = vmatmul.mubr.f32.gmra.mxu0 %v2106
      %v2221 = vpop.f32.mrf.mxu0
      %v2222 = vadd.f32 0.0, %v2221
      %v2223 = vpop.f32.mrf.mxu0
      %2224 = vmatprep.mubr.f32.mxu0 0.0
      %2225 = vmatmul.mubr.f32.gmra.mxu0 %v2107
      %v2226 = vpop.f32.mrf.mxu0
      %v2227 = vadd.f32 0.0, %v2226
      %v2228 = vpop.f32.mrf.mxu0
      %2229 = vmatprep.mubr.f32.mxu0 0.0
      %2230 = vmatmul.mubr.f32.gmra.mxu0 %v2108
      %v2231 = vpop.f32.mrf.mxu0
      %v2232 = vadd.f32 0.0, %v2231
      %v2233 = vpop.f32.mrf.mxu0
      %2234 = vmatprep.mubr.f32.mxu0 0.0
      %2235 = vmatmul.mubr.f32.gmra.mxu0 %v2109
      %v2236 = vpop.f32.mrf.mxu0
      %v2237 = vadd.f32 0.0, %v2236
      %v2238 = vpop.f32.mrf.mxu0
      %2239 = vmatprep.mubr.f32.mxu0 0.0
      %2240 = vmatmul.mubr.f32.gmra.mxu0 %v2110
      %v2241 = vpop.f32.mrf.mxu0
      %v2242 = vadd.f32 0.0, %v2241
      %v2243 = vpop.f32.mrf.mxu0
      %2244 = vmatprep.mubr.f32.mxu0 0.0
      %2245 = vmatmul.mubr.f32.gmra.mxu0 %v2111
      %v2246 = vpop.f32.mrf.mxu0
      %v2247 = vadd.f32 0.0, %v2246
      %v2248 = vpop.f32.mrf.mxu0
      %2249 = vmatprep.mubr.f32.mxu0 0.0
      %2250 = vmatmul.mubr.f32.gmra.mxu0 %v2112
      %v2251 = vpop.f32.mrf.mxu0
      %v2252 = vadd.f32 0.0, %v2251
      %v2253 = vpop.f32.mrf.mxu0
      %2254 = vmatprep.mubr.f32.mxu0 0.0
      %2255 = vmatmul.mubr.f32.gmra.mxu0 %v2113
      %v2256 = vpop.f32.mrf.mxu0
      %v2257 = vadd.f32 0.0, %v2256
      %v2258 = vpop.f32.mrf.mxu0
      %2259 = vmatprep.mubr.f32.mxu0 0.0
      %2260 = vmatmul.mubr.f32.gmra.mxu0 %v2114
      %v2261 = vpop.f32.mrf.mxu0
      %v2262 = vadd.f32 0.0, %v2261
      %v2263 = vpop.f32.mrf.mxu0
      %2264 = vmatprep.mubr.f32.mxu0 0.0
      %2265 = vmatmul.mubr.f32.gmra.mxu0 %v2115
      %v2266 = vpop.f32.mrf.mxu0
      %v2267 = vadd.f32 0.0, %v2266
      %v2268 = vpop.f32.mrf.mxu0
      %2269 = vmatprep.mubr.f32.mxu0 0.0
      %2270 = vmatmul.mubr.f32.gmra.mxu0 %v2116
      %v2271 = vpop.f32.mrf.mxu0
      %v2272 = vadd.f32 0.0, %v2271
      %v2273 = vpop.f32.mrf.mxu0
      %2274 = vmatprep.mubr.f32.mxu0 0.0
      %2275 = vmatmul.mubr.f32.gmra.mxu0 %v2117
      %v2276 = vpop.f32.mrf.mxu0
      %v2277 = vadd.f32 0.0, %v2276
      %v2278 = vpop.f32.mrf.mxu0
      %2279 = vmatprep.mubr.f32.mxu0 0.0
      %2280 = vmatmul.mubr.f32.gmra.mxu0 %v2118
      %v2281 = vpop.f32.mrf.mxu0
      %v2282 = vadd.f32 0.0, %v2281
      %v2283 = vpop.f32.mrf.mxu0
      %2284 = vmatprep.mubr.f32.mxu0 0.0
      %2285 = vmatmul.mubr.f32.gmra.mxu0 %v2119
      %v2286 = vpop.f32.mrf.mxu0
      %v2287 = vadd.f32 0.0, %v2286
      %v2288 = vpop.f32.mrf.mxu0
      %2289 = vmatprep.mubr.f32.mxu0 0.0
      %2290 = vmatmul.mubr.f32.gmra.mxu0 %v2120
      %v2291 = vpop.f32.mrf.mxu0
      %v2292 = vadd.f32 0.0, %v2291
      %v2293 = vpop.f32.mrf.mxu0
      %2294 = vmatprep.mubr.f32.mxu0 0.0
      %2295 = vmatmul.mubr.f32.gmra.mxu0 %v2121
      %v2296 = vpop.f32.mrf.mxu0
      %v2297 = vadd.f32 0.0, %v2296
      %v2298 = vpop.f32.mrf.mxu0
      %2299 = vmatprep.mubr.f32.mxu0 0.0
      %2300 = vmatmul.mubr.f32.gmra.mxu0 %v2122
      %v2301 = vpop.f32.mrf.mxu0
      %v2302 = vadd.f32 0.0, %v2301
      %v2303 = vpop.f32.mrf.mxu0
      %2304 = vmatprep.mubr.f32.mxu0 0.0
      %2305 = vmatmul.mubr.f32.gmra.mxu0 %v2123
      %v2306 = vpop.f32.mrf.mxu0
      %v2307 = vadd.f32 0.0, %v2306
      %v2308 = vpop.f32.mrf.mxu0
      %2309 = vmatprep.mubr.f32.mxu0 0.0
      %2310 = vmatmul.mubr.f32.gmra.mxu0 %v2124
      %v2311 = vpop.f32.mrf.mxu0
      %v2312 = vadd.f32 0.0, %v2311
      %v2313 = vpop.f32.mrf.mxu0
      %2314 = vmatprep.mubr.f32.mxu0 0.0
      %2315 = vmatmul.mubr.f32.gmra.mxu0 %v2125
      %v2316 = vpop.f32.mrf.mxu0
      %v2317 = vadd.f32 0.0, %v2316
      %v2318 = vpop.f32.mrf.mxu0
      %2319 = vmatprep.mubr.f32.mxu0 0.0
      %2320 = vmatmul.mubr.f32.gmra.mxu0 %v2126
      %v2321 = vpop.f32.mrf.mxu0
      %v2322 = vadd.f32 0.0, %v2321
      %v2323 = vpop.f32.mrf.mxu0
      %2324 = vmatprep.mubr.f32.mxu0 0.0
      %2325 = vmatmul.mubr.f32.gmra.mxu0 %v2127
      %v2326 = vpop.f32.mrf.mxu0
      %v2327 = vadd.f32 0.0, %v2326
      %v2328 = vpop.f32.mrf.mxu0
      %2329 = vmatprep.mubr.f32.mxu0 0.0
      %2330 = vmatmul.mubr.f32.gmra.mxu0 %v2128
      %v2331 = vpop.f32.mrf.mxu0
      %v2332 = vadd.f32 0.0, %v2331
      %v2333 = vpop.f32.mrf.mxu0
      %2334 = vmatprep.mubr.f32.mxu0 0.0
      %2335 = vmatmul.mubr.f32.gmra.mxu0 %v2129
      %v2336 = vpop.f32.mrf.mxu0
      %v2337 = vadd.f32 0.0, %v2336
      %v2338 = vpop.f32.mrf.mxu0
      %2339 = vmatprep.mubr.f32.mxu0 0.0
      %2340 = vmatmul.mubr.f32.gmra.mxu0 %v2130
      %v2341 = vpop.f32.mrf.mxu0
      %v2342 = vadd.f32 0.0, %v2341
      %v2343 = vpop.f32.mrf.mxu0
      %2344 = vmatprep.mubr.f32.mxu0 0.0
      %2345 = vmatmul.mubr.f32.gmra.mxu0 %v2131
      %v2346 = vpop.f32.mrf.mxu0
      %v2347 = vadd.f32 0.0, %v2346
      %v2348 = vpop.f32.mrf.mxu0
      %2349 = vmatprep.mubr.f32.mxu0 0.0
      %2350 = vmatmul.mubr.f32.gmra.mxu0 %v2132
      %v2351 = vpop.f32.mrf.mxu0
      %v2352 = vadd.f32 0.0, %v2351
      %v2353 = vpop.f32.mrf.mxu0
      %2354 = vmatprep.mubr.f32.mxu0 0.0
      %2355 = vmatmul.mubr.f32.gmra.mxu0 %v2133
      %v2356 = vpop.f32.mrf.mxu0
      %v2357 = vadd.f32 0.0, %v2356
      %v2358 = vpop.f32.mrf.mxu0
      %2359 = vmatprep.mubr.f32.mxu0 0.0
      %2360 = vmatmul.mubr.f32.gmra.mxu0 %v2134
      %v2361 = vpop.f32.mrf.mxu0
      %v2362 = vadd.f32 0.0, %v2361
      %v2363 = vpop.f32.mrf.mxu0
      %2364 = vmatprep.mubr.f32.mxu0 0.0
      %2365 = vmatmul.mubr.f32.gmra.mxu0 %v2135
      %v2366 = vpop.f32.mrf.mxu0
      %v2367 = vadd.f32 0.0, %v2366
      %v2368 = vpop.f32.mrf.mxu0
      %2369 = vmatprep.mubr.f32.mxu0 0.0
      %2370 = vmatmul.mubr.f32.gmra.mxu0 %v2136
      %v2371 = vpop.f32.mrf.mxu0
      %v2372 = vadd.f32 0.0, %v2371
      %v2373 = vpop.f32.mrf.mxu0
      %2374 = vmatprep.mubr.f32.mxu0 0.0
      %2375 = vmatmul.mubr.f32.gmra.mxu0 %v2137
      %v2376 = vpop.f32.mrf.mxu0
      %v2377 = vadd.f32 0.0, %v2376
      %v2378 = vpop.f32.mrf.mxu0
      %2379 = vdwg.mxu0
      %v2380 = vadd.f32 %v2073, %v2222
      %v2381 = vadd.f32 %v2074, %v2227
      %v2382 = vadd.f32 %v2075, %v2232
      %v2383 = vadd.f32 %v2076, %v2237
      %v2384 = vadd.f32 %v2077, %v2242
      %v2385 = vadd.f32 %v2078, %v2247
      %v2386 = vadd.f32 %v2079, %v2252
      %v2387 = vadd.f32 %v2080, %v2257
      %v2388 = vadd.f32 %v2081, %v2262
      %v2389 = vadd.f32 %v2082, %v2267
      %v2390 = vadd.f32 %v2083, %v2272
      %v2391 = vadd.f32 %v2084, %v2277
      %v2392 = vadd.f32 %v2085, %v2282
      %v2393 = vadd.f32 %v2086, %v2287
      %v2394 = vadd.f32 %v2087, %v2292
      %v2395 = vadd.f32 %v2088, %v2297
      %v2396 = vadd.f32 %v2089, %v2302
      %v2397 = vadd.f32 %v2090, %v2307
      %v2398 = vadd.f32 %v2091, %v2312
      %v2399 = vadd.f32 %v2092, %v2317
      %v2400 = vadd.f32 %v2093, %v2322
      %v2401 = vadd.f32 %v2094, %v2327
      %v2402 = vadd.f32 %v2095, %v2332
      %v2403 = vadd.f32 %v2096, %v2337
      %v2404 = vadd.f32 %v2097, %v2342
      %v2405 = vadd.f32 %v2098, %v2347
      %v2406 = vadd.f32 %v2099, %v2352
      %v2407 = vadd.f32 %v2100, %v2357
      %v2408 = vadd.f32 %v2101, %v2362
      %v2409 = vadd.f32 %v2102, %v2367
      %v2410 = vadd.f32 %v2103, %v2372
      %v2411 = vadd.f32 %v2104, %v2377
      %v2412 = vld [vmem:[%s2105 + $0x1] sm:$0xff]
      %v2413 = vld [vmem:[%s2105 + $0x9] sm:$0xff]
      %v2414 = vld [vmem:[%s2105 + $0x19] sm:$0xff]
      %v2415 = vld [vmem:[%s2105 + $0x21] sm:$0xff]
      %v2416 = vld [vmem:[%s2105 + $0x31] sm:$0xff]
      %v2417 = vld [vmem:[%s2105 + $0x39] sm:$0xff]
      %v2418 = vld [vmem:[%s2105 + $0x49] sm:$0xff]
      %v2419 = vld [vmem:[%s2105 + $0x51] sm:$0xff]
      %v2420 = vld [vmem:[%s2105 + $0x61] sm:$0xff]
      %v2421 = vld [vmem:[%s2105 + $0x69] sm:$0xff]
      %v2422 = vld [vmem:[%s2105 + $0x79] sm:$0xff]
      %v2423 = vld [vmem:[%s2105 + $0x81] sm:$0xff]
      %v2424 = vld [vmem:[%s2105 + $0x91] sm:$0xff]
      %v2425 = vld [vmem:[%s2105 + $0x99] sm:$0xff]
      %v2426 = vld [vmem:[%s2105 + $0xa9] sm:$0xff]
      %v2427 = vld [vmem:[%s2105 + $0xb1] sm:$0xff]
      %v2428 = vld [vmem:[%s2105 + $0xc1] sm:$0xff]
      %v2429 = vld [vmem:[%s2105 + $0xc9] sm:$0xff]
      %v2430 = vld [vmem:[%s2105 + $0xd9] sm:$0xff]
      %v2431 = vld [vmem:[%s2105 + $0xe1] sm:$0xff]
      %v2432 = vld [vmem:[%s2105 + $0xf1] sm:$0xff]
      %v2433 = vld [vmem:[%s2105 + $0xf9] sm:$0xff]
      %v2434 = vld [vmem:[%s2105 + $0x109] sm:$0xff]
      %v2435 = vld [vmem:[%s2105 + $0x111] sm:$0xff]
      %v2436 = vld [vmem:[%s2105 + $0x121] sm:$0xff]
      %v2437 = vld [vmem:[%s2105 + $0x129] sm:$0xff]
      %v2438 = vld [vmem:[%s2105 + $0x139] sm:$0xff]
      %v2439 = vld [vmem:[%s2105 + $0x141] sm:$0xff]
      %v2440 = vld [vmem:[%s2105 + $0x151] sm:$0xff]
      %v2441 = vld [vmem:[%s2105 + $0x159] sm:$0xff]
      %v2442 = vld [vmem:[%s2105 + $0x169] sm:$0xff]
      %v2443 = vld [vmem:[%s2105 + $0x171] sm:$0xff]
      %s2444 = scalar_lea.vmem %s1, 896
      %v2445 = vld [vmem:[%s2444] sm:$0xff]
      %v2446 = vld [vmem:[%s2444 + $0x8] sm:$0xff]
      %v2447 = vld [vmem:[%s2444 + $0x10] sm:$0xff]
      %v2448 = vld [vmem:[%s2444 + $0x18] sm:$0xff]
      %v2449 = vld [vmem:[%s2444 + $0x20] sm:$0xff]
      %v2450 = vld [vmem:[%s2444 + $0x28] sm:$0xff]
      %v2451 = vld [vmem:[%s2444 + $0x30] sm:$0xff]
      %v2452 = vld [vmem:[%s2444 + $0x38] sm:$0xff]
      %v2453 = vld [vmem:[%s2444 + $0x40] sm:$0xff]
      %v2454 = vld [vmem:[%s2444 + $0x48] sm:$0xff]
      %v2455 = vld [vmem:[%s2444 + $0x50] sm:$0xff]
      %v2456 = vld [vmem:[%s2444 + $0x58] sm:$0xff]
      %v2457 = vld [vmem:[%s2444 + $0x60] sm:$0xff]
      %v2458 = vld [vmem:[%s2444 + $0x68] sm:$0xff]
      %v2459 = vld [vmem:[%s2444 + $0x70] sm:$0xff]
      %v2460 = vld [vmem:[%s2444 + $0x78] sm:$0xff]
      %2461 = vmatprep.subr.mxu0 0.0
      %2462 = vmatpush1.msra.mxu0 %v2460
      %2463 = vmatprep.subr.mxu0 0.0
      %2464 = vmatpush1.msra.mxu0 %v2459
      %2465 = vmatprep.subr.mxu0 0.0
      %2466 = vmatpush1.msra.mxu0 %v2458
      %2467 = vmatprep.subr.mxu0 0.0
      %2468 = vmatpush1.msra.mxu0 %v2457
      %2469 = vmatprep.subr.mxu0 0.0
      %2470 = vmatpush1.msra.mxu0 %v2456
      %2471 = vmatprep.subr.mxu0 0.0
      %2472 = vmatpush1.msra.mxu0 %v2455
      %2473 = vmatprep.subr.mxu0 0.0
      %2474 = vmatpush1.msra.mxu0 %v2454
      %2475 = vmatprep.subr.mxu0 0.0
      %2476 = vmatpush1.msra.mxu0 %v2453
      %2477 = vmatprep.subr.mxu0 0.0
      %2478 = vmatpush1.msra.mxu0 %v2452
      %2479 = vmatprep.subr.mxu0 0.0
      %2480 = vmatpush1.msra.mxu0 %v2451
      %2481 = vmatprep.subr.mxu0 0.0
      %2482 = vmatpush1.msra.mxu0 %v2450
      %2483 = vmatprep.subr.mxu0 0.0
      %2484 = vmatpush1.msra.mxu0 %v2449
      %2485 = vmatprep.subr.mxu0 0.0
      %2486 = vmatpush1.msra.mxu0 %v2448
      %2487 = vmatprep.subr.mxu0 0.0
      %2488 = vmatpush1.msra.mxu0 %v2447
      %2489 = vmatprep.subr.mxu0 0.0
      %2490 = vmatpush1.msra.mxu0 %v2446
      %2491 = vmatprep.subr.mxu0 0.0
      %2492 = vmatpush1.msra.mxu0 %v2445
      %2493 = vmatprep.subr.mxu0 0.0
      %2494 = vmatpush2.msra.mxu0 0.0
      %2495 = vmatprep.subr.mxu0 0.0
      %2496 = vmatpush2.msra.mxu0 0.0
      %2497 = vmatprep.subr.mxu0 0.0
      %2498 = vmatpush2.msra.mxu0 0.0
      %2499 = vmatprep.subr.mxu0 0.0
      %2500 = vmatpush2.msra.mxu0 0.0
      %2501 = vmatprep.subr.mxu0 0.0
      %2502 = vmatpush2.msra.mxu0 0.0
      %2503 = vmatprep.subr.mxu0 0.0
      %2504 = vmatpush2.msra.mxu0 0.0
      %2505 = vmatprep.subr.mxu0 0.0
      %2506 = vmatpush2.msra.mxu0 0.0
      %2507 = vmatprep.subr.mxu0 0.0
      %2508 = vmatpush2.msra.mxu0 0.0
      %2509 = vmatprep.subr.mxu0 0.0
      %2510 = vmatpush2.msra.mxu0 0.0
      %2511 = vmatprep.subr.mxu0 0.0
      %2512 = vmatpush2.msra.mxu0 0.0
      %2513 = vmatprep.subr.mxu0 0.0
      %2514 = vmatpush2.msra.mxu0 0.0
      %2515 = vmatprep.subr.mxu0 0.0
      %2516 = vmatpush2.msra.mxu0 0.0
      %2517 = vmatprep.subr.mxu0 0.0
      %2518 = vmatpush2.msra.mxu0 0.0
      %2519 = vmatprep.subr.mxu0 0.0
      %2520 = vmatpush2.msra.mxu0 0.0
      %2521 = vmatprep.subr.mxu0 0.0
      %2522 = vmatpush2.msra.mxu0 0.0
      %2523 = vmatprep.subr.mxu0 0.0
      %2524 = vmatpush2.msra.mxu0 0.0
      %2525 = vmatprep.mubr.f32.mxu0 0.0
      %2526 = vmatmul.mubr.f32.gmra.mxu0 %v2412
      %v2527 = vpop.f32.mrf.mxu0
      %v2528 = vadd.f32 0.0, %v2527
      %v2529 = vpop.f32.mrf.mxu0
      %2530 = vmatprep.mubr.f32.mxu0 0.0
      %2531 = vmatmul.mubr.f32.gmra.mxu0 %v2413
      %v2532 = vpop.f32.mrf.mxu0
      %v2533 = vadd.f32 0.0, %v2532
      %v2534 = vpop.f32.mrf.mxu0
      %2535 = vmatprep.mubr.f32.mxu0 0.0
      %2536 = vmatmul.mubr.f32.gmra.mxu0 %v2414
      %v2537 = vpop.f32.mrf.mxu0
      %v2538 = vadd.f32 0.0, %v2537
      %v2539 = vpop.f32.mrf.mxu0
      %2540 = vmatprep.mubr.f32.mxu0 0.0
      %2541 = vmatmul.mubr.f32.gmra.mxu0 %v2415
      %v2542 = vpop.f32.mrf.mxu0
      %v2543 = vadd.f32 0.0, %v2542
      %v2544 = vpop.f32.mrf.mxu0
      %2545 = vmatprep.mubr.f32.mxu0 0.0
      %2546 = vmatmul.mubr.f32.gmra.mxu0 %v2416
      %v2547 = vpop.f32.mrf.mxu0
      %v2548 = vadd.f32 0.0, %v2547
      %v2549 = vpop.f32.mrf.mxu0
      %2550 = vmatprep.mubr.f32.mxu0 0.0
      %2551 = vmatmul.mubr.f32.gmra.mxu0 %v2417
      %v2552 = vpop.f32.mrf.mxu0
      %v2553 = vadd.f32 0.0, %v2552
      %v2554 = vpop.f32.mrf.mxu0
      %2555 = vmatprep.mubr.f32.mxu0 0.0
      %2556 = vmatmul.mubr.f32.gmra.mxu0 %v2418
      %v2557 = vpop.f32.mrf.mxu0
      %v2558 = vadd.f32 0.0, %v2557
      %v2559 = vpop.f32.mrf.mxu0
      %2560 = vmatprep.mubr.f32.mxu0 0.0
      %2561 = vmatmul.mubr.f32.gmra.mxu0 %v2419
      %v2562 = vpop.f32.mrf.mxu0
      %v2563 = vadd.f32 0.0, %v2562
      %v2564 = vpop.f32.mrf.mxu0
      %2565 = vmatprep.mubr.f32.mxu0 0.0
      %2566 = vmatmul.mubr.f32.gmra.mxu0 %v2420
      %v2567 = vpop.f32.mrf.mxu0
      %v2568 = vadd.f32 0.0, %v2567
      %v2569 = vpop.f32.mrf.mxu0
      %2570 = vmatprep.mubr.f32.mxu0 0.0
      %2571 = vmatmul.mubr.f32.gmra.mxu0 %v2421
      %v2572 = vpop.f32.mrf.mxu0
      %v2573 = vadd.f32 0.0, %v2572
      %v2574 = vpop.f32.mrf.mxu0
      %2575 = vmatprep.mubr.f32.mxu0 0.0
      %2576 = vmatmul.mubr.f32.gmra.mxu0 %v2422
      %v2577 = vpop.f32.mrf.mxu0
      %v2578 = vadd.f32 0.0, %v2577
      %v2579 = vpop.f32.mrf.mxu0
      %2580 = vmatprep.mubr.f32.mxu0 0.0
      %2581 = vmatmul.mubr.f32.gmra.mxu0 %v2423
      %v2582 = vpop.f32.mrf.mxu0
      %v2583 = vadd.f32 0.0, %v2582
      %v2584 = vpop.f32.mrf.mxu0
      %2585 = vmatprep.mubr.f32.mxu0 0.0
      %2586 = vmatmul.mubr.f32.gmra.mxu0 %v2424
      %v2587 = vpop.f32.mrf.mxu0
      %v2588 = vadd.f32 0.0, %v2587
      %v2589 = vpop.f32.mrf.mxu0
      %2590 = vmatprep.mubr.f32.mxu0 0.0
      %2591 = vmatmul.mubr.f32.gmra.mxu0 %v2425
      %v2592 = vpop.f32.mrf.mxu0
      %v2593 = vadd.f32 0.0, %v2592
      %v2594 = vpop.f32.mrf.mxu0
      %2595 = vmatprep.mubr.f32.mxu0 0.0
      %2596 = vmatmul.mubr.f32.gmra.mxu0 %v2426
      %v2597 = vpop.f32.mrf.mxu0
      %v2598 = vadd.f32 0.0, %v2597
      %v2599 = vpop.f32.mrf.mxu0
      %2600 = vmatprep.mubr.f32.mxu0 0.0
      %2601 = vmatmul.mubr.f32.gmra.mxu0 %v2427
      %v2602 = vpop.f32.mrf.mxu0
      %v2603 = vadd.f32 0.0, %v2602
      %v2604 = vpop.f32.mrf.mxu0
      %2605 = vmatprep.mubr.f32.mxu0 0.0
      %2606 = vmatmul.mubr.f32.gmra.mxu0 %v2428
      %v2607 = vpop.f32.mrf.mxu0
      %v2608 = vadd.f32 0.0, %v2607
      %v2609 = vpop.f32.mrf.mxu0
      %2610 = vmatprep.mubr.f32.mxu0 0.0
      %2611 = vmatmul.mubr.f32.gmra.mxu0 %v2429
      %v2612 = vpop.f32.mrf.mxu0
      %v2613 = vadd.f32 0.0, %v2612
      %v2614 = vpop.f32.mrf.mxu0
      %2615 = vmatprep.mubr.f32.mxu0 0.0
      %2616 = vmatmul.mubr.f32.gmra.mxu0 %v2430
      %v2617 = vpop.f32.mrf.mxu0
      %v2618 = vadd.f32 0.0, %v2617
      %v2619 = vpop.f32.mrf.mxu0
      %2620 = vmatprep.mubr.f32.mxu0 0.0
      %2621 = vmatmul.mubr.f32.gmra.mxu0 %v2431
      %v2622 = vpop.f32.mrf.mxu0
      %v2623 = vadd.f32 0.0, %v2622
      %v2624 = vpop.f32.mrf.mxu0
      %2625 = vmatprep.mubr.f32.mxu0 0.0
      %2626 = vmatmul.mubr.f32.gmra.mxu0 %v2432
      %v2627 = vpop.f32.mrf.mxu0
      %v2628 = vadd.f32 0.0, %v2627
      %v2629 = vpop.f32.mrf.mxu0
      %2630 = vmatprep.mubr.f32.mxu0 0.0
      %2631 = vmatmul.mubr.f32.gmra.mxu0 %v2433
      %v2632 = vpop.f32.mrf.mxu0
      %v2633 = vadd.f32 0.0, %v2632
      %v2634 = vpop.f32.mrf.mxu0
      %2635 = vmatprep.mubr.f32.mxu0 0.0
      %2636 = vmatmul.mubr.f32.gmra.mxu0 %v2434
      %v2637 = vpop.f32.mrf.mxu0
      %v2638 = vadd.f32 0.0, %v2637
      %v2639 = vpop.f32.mrf.mxu0
      %2640 = vmatprep.mubr.f32.mxu0 0.0
      %2641 = vmatmul.mubr.f32.gmra.mxu0 %v2435
      %v2642 = vpop.f32.mrf.mxu0
      %v2643 = vadd.f32 0.0, %v2642
      %v2644 = vpop.f32.mrf.mxu0
      %2645 = vmatprep.mubr.f32.mxu0 0.0
      %2646 = vmatmul.mubr.f32.gmra.mxu0 %v2436
      %v2647 = vpop.f32.mrf.mxu0
      %v2648 = vadd.f32 0.0, %v2647
      %v2649 = vpop.f32.mrf.mxu0
      %2650 = vmatprep.mubr.f32.mxu0 0.0
      %2651 = vmatmul.mubr.f32.gmra.mxu0 %v2437
      %v2652 = vpop.f32.mrf.mxu0
      %v2653 = vadd.f32 0.0, %v2652
      %v2654 = vpop.f32.mrf.mxu0
      %2655 = vmatprep.mubr.f32.mxu0 0.0
      %2656 = vmatmul.mubr.f32.gmra.mxu0 %v2438
      %v2657 = vpop.f32.mrf.mxu0
      %v2658 = vadd.f32 0.0, %v2657
      %v2659 = vpop.f32.mrf.mxu0
      %2660 = vmatprep.mubr.f32.mxu0 0.0
      %2661 = vmatmul.mubr.f32.gmra.mxu0 %v2439
      %v2662 = vpop.f32.mrf.mxu0
      %v2663 = vadd.f32 0.0, %v2662
      %v2664 = vpop.f32.mrf.mxu0
      %2665 = vmatprep.mubr.f32.mxu0 0.0
      %2666 = vmatmul.mubr.f32.gmra.mxu0 %v2440
      %v2667 = vpop.f32.mrf.mxu0
      %v2668 = vadd.f32 0.0, %v2667
      %v2669 = vpop.f32.mrf.mxu0
      %2670 = vmatprep.mubr.f32.mxu0 0.0
      %2671 = vmatmul.mubr.f32.gmra.mxu0 %v2441
      %v2672 = vpop.f32.mrf.mxu0
      %v2673 = vadd.f32 0.0, %v2672
      %v2674 = vpop.f32.mrf.mxu0
      %2675 = vmatprep.mubr.f32.mxu0 0.0
      %2676 = vmatmul.mubr.f32.gmra.mxu0 %v2442
      %v2677 = vpop.f32.mrf.mxu0
      %v2678 = vadd.f32 0.0, %v2677
      %v2679 = vpop.f32.mrf.mxu0
      %2680 = vmatprep.mubr.f32.mxu0 0.0
      %2681 = vmatmul.mubr.f32.gmra.mxu0 %v2443
      %v2682 = vpop.f32.mrf.mxu0
      %v2683 = vadd.f32 0.0, %v2682
      %v2684 = vpop.f32.mrf.mxu0
      %2685 = vdwg.mxu0
      %v2686 = vadd.f32 %v2380, %v2528
      %v2687 = vadd.f32 %v2381, %v2533
      %v2688 = vadd.f32 %v2382, %v2538
      %v2689 = vadd.f32 %v2383, %v2543
      %v2690 = vadd.f32 %v2384, %v2548
      %v2691 = vadd.f32 %v2385, %v2553
      %v2692 = vadd.f32 %v2386, %v2558
      %v2693 = vadd.f32 %v2387, %v2563
      %v2694 = vadd.f32 %v2388, %v2568
      %v2695 = vadd.f32 %v2389, %v2573
      %v2696 = vadd.f32 %v2390, %v2578
      %v2697 = vadd.f32 %v2391, %v2583
      %v2698 = vadd.f32 %v2392, %v2588
      %v2699 = vadd.f32 %v2393, %v2593
      %v2700 = vadd.f32 %v2394, %v2598
      %v2701 = vadd.f32 %v2395, %v2603
      %v2702 = vadd.f32 %v2396, %v2608
      %v2703 = vadd.f32 %v2397, %v2613
      %v2704 = vadd.f32 %v2398, %v2618
      %v2705 = vadd.f32 %v2399, %v2623
      %v2706 = vadd.f32 %v2400, %v2628
      %v2707 = vadd.f32 %v2401, %v2633
      %v2708 = vadd.f32 %v2402, %v2638
      %v2709 = vadd.f32 %v2403, %v2643
      %v2710 = vadd.f32 %v2404, %v2648
      %v2711 = vadd.f32 %v2405, %v2653
      %v2712 = vadd.f32 %v2406, %v2658
      %v2713 = vadd.f32 %v2407, %v2663
      %v2714 = vadd.f32 %v2408, %v2668
      %v2715 = vadd.f32 %v2409, %v2673
      %v2716 = vadd.f32 %v2410, %v2678
      %v2717 = vadd.f32 %v2411, %v2683
      %v2718 = vld [vmem:[%s2105 + $0x2] sm:$0xff]
      %v2719 = vld [vmem:[%s2105 + $0xa] sm:$0xff]
      %v2720 = vld [vmem:[%s2105 + $0x1a] sm:$0xff]
      %v2721 = vld [vmem:[%s2105 + $0x22] sm:$0xff]
      %v2722 = vld [vmem:[%s2105 + $0x32] sm:$0xff]
      %v2723 = vld [vmem:[%s2105 + $0x3a] sm:$0xff]
      %v2724 = vld [vmem:[%s2105 + $0x4a] sm:$0xff]
      %v2725 = vld [vmem:[%s2105 + $0x52] sm:$0xff]
      %v2726 = vld [vmem:[%s2105 + $0x62] sm:$0xff]
      %v2727 = vld [vmem:[%s2105 + $0x6a] sm:$0xff]
      %v2728 = vld [vmem:[%s2105 + $0x7a] sm:$0xff]
      %v2729 = vld [vmem:[%s2105 + $0x82] sm:$0xff]
      %v2730 = vld [vmem:[%s2105 + $0x92] sm:$0xff]
      %v2731 = vld [vmem:[%s2105 + $0x9a] sm:$0xff]
      %v2732 = vld [vmem:[%s2105 + $0xaa] sm:$0xff]
      %v2733 = vld [vmem:[%s2105 + $0xb2] sm:$0xff]
      %v2734 = vld [vmem:[%s2105 + $0xc2] sm:$0xff]
      %v2735 = vld [vmem:[%s2105 + $0xca] sm:$0xff]
      %v2736 = vld [vmem:[%s2105 + $0xda] sm:$0xff]
      %v2737 = vld [vmem:[%s2105 + $0xe2] sm:$0xff]
      %v2738 = vld [vmem:[%s2105 + $0xf2] sm:$0xff]
      %v2739 = vld [vmem:[%s2105 + $0xfa] sm:$0xff]
      %v2740 = vld [vmem:[%s2105 + $0x10a] sm:$0xff]
      %v2741 = vld [vmem:[%s2105 + $0x112] sm:$0xff]
      %v2742 = vld [vmem:[%s2105 + $0x122] sm:$0xff]
      %v2743 = vld [vmem:[%s2105 + $0x12a] sm:$0xff]
      %v2744 = vld [vmem:[%s2105 + $0x13a] sm:$0xff]
      %v2745 = vld [vmem:[%s2105 + $0x142] sm:$0xff]
      %v2746 = vld [vmem:[%s2105 + $0x152] sm:$0xff]
      %v2747 = vld [vmem:[%s2105 + $0x15a] sm:$0xff]
      %v2748 = vld [vmem:[%s2105 + $0x16a] sm:$0xff]
      %v2749 = vld [vmem:[%s2105 + $0x172] sm:$0xff]
      %s2750 = scalar_lea.vmem %s1, 1024
      %v2751 = vld [vmem:[%s2750] sm:$0xff]
      %v2752 = vld [vmem:[%s2750 + $0x8] sm:$0xff]
      %v2753 = vld [vmem:[%s2750 + $0x10] sm:$0xff]
      %v2754 = vld [vmem:[%s2750 + $0x18] sm:$0xff]
      %v2755 = vld [vmem:[%s2750 + $0x20] sm:$0xff]
      %v2756 = vld [vmem:[%s2750 + $0x28] sm:$0xff]
      %v2757 = vld [vmem:[%s2750 + $0x30] sm:$0xff]
      %v2758 = vld [vmem:[%s2750 + $0x38] sm:$0xff]
      %v2759 = vld [vmem:[%s2750 + $0x40] sm:$0xff]
      %v2760 = vld [vmem:[%s2750 + $0x48] sm:$0xff]
      %v2761 = vld [vmem:[%s2750 + $0x50] sm:$0xff]
      %v2762 = vld [vmem:[%s2750 + $0x58] sm:$0xff]
      %v2763 = vld [vmem:[%s2750 + $0x60] sm:$0xff]
      %v2764 = vld [vmem:[%s2750 + $0x68] sm:$0xff]
      %v2765 = vld [vmem:[%s2750 + $0x70] sm:$0xff]
      %v2766 = vld [vmem:[%s2750 + $0x78] sm:$0xff]
      %2767 = vmatprep.subr.mxu0 0.0
      %2768 = vmatpush1.msra.mxu0 %v2766
      %2769 = vmatprep.subr.mxu0 0.0
      %2770 = vmatpush1.msra.mxu0 %v2765
      %2771 = vmatprep.subr.mxu0 0.0
      %2772 = vmatpush1.msra.mxu0 %v2764
      %2773 = vmatprep.subr.mxu0 0.0
      %2774 = vmatpush1.msra.mxu0 %v2763
      %2775 = vmatprep.subr.mxu0 0.0
      %2776 = vmatpush1.msra.mxu0 %v2762
      %2777 = vmatprep.subr.mxu0 0.0
      %2778 = vmatpush1.msra.mxu0 %v2761
      %2779 = vmatprep.subr.mxu0 0.0
      %2780 = vmatpush1.msra.mxu0 %v2760
      %2781 = vmatprep.subr.mxu0 0.0
      %2782 = vmatpush1.msra.mxu0 %v2759
      %2783 = vmatprep.subr.mxu0 0.0
      %2784 = vmatpush1.msra.mxu0 %v2758
      %2785 = vmatprep.subr.mxu0 0.0
      %2786 = vmatpush1.msra.mxu0 %v2757
      %2787 = vmatprep.subr.mxu0 0.0
      %2788 = vmatpush1.msra.mxu0 %v2756
      %2789 = vmatprep.subr.mxu0 0.0
      %2790 = vmatpush1.msra.mxu0 %v2755
      %2791 = vmatprep.subr.mxu0 0.0
      %2792 = vmatpush1.msra.mxu0 %v2754
      %2793 = vmatprep.subr.mxu0 0.0
      %2794 = vmatpush1.msra.mxu0 %v2753
      %2795 = vmatprep.subr.mxu0 0.0
      %2796 = vmatpush1.msra.mxu0 %v2752
      %2797 = vmatprep.subr.mxu0 0.0
      %2798 = vmatpush1.msra.mxu0 %v2751
      %2799 = vmatprep.subr.mxu0 0.0
      %2800 = vmatpush2.msra.mxu0 0.0
      %2801 = vmatprep.subr.mxu0 0.0
      %2802 = vmatpush2.msra.mxu0 0.0
      %2803 = vmatprep.subr.mxu0 0.0
      %2804 = vmatpush2.msra.mxu0 0.0
      %2805 = vmatprep.subr.mxu0 0.0
      %2806 = vmatpush2.msra.mxu0 0.0
      %2807 = vmatprep.subr.mxu0 0.0
      %2808 = vmatpush2.msra.mxu0 0.0
      %2809 = vmatprep.subr.mxu0 0.0
      %2810 = vmatpush2.msra.mxu0 0.0
      %2811 = vmatprep.subr.mxu0 0.0
      %2812 = vmatpush2.msra.mxu0 0.0
      %2813 = vmatprep.subr.mxu0 0.0
      %2814 = vmatpush2.msra.mxu0 0.0
      %2815 = vmatprep.subr.mxu0 0.0
      %2816 = vmatpush2.msra.mxu0 0.0
      %2817 = vmatprep.subr.mxu0 0.0
      %2818 = vmatpush2.msra.mxu0 0.0
      %2819 = vmatprep.subr.mxu0 0.0
      %2820 = vmatpush2.msra.mxu0 0.0
      %2821 = vmatprep.subr.mxu0 0.0
      %2822 = vmatpush2.msra.mxu0 0.0
      %2823 = vmatprep.subr.mxu0 0.0
      %2824 = vmatpush2.msra.mxu0 0.0
      %2825 = vmatprep.subr.mxu0 0.0
      %2826 = vmatpush2.msra.mxu0 0.0
      %2827 = vmatprep.subr.mxu0 0.0
      %2828 = vmatpush2.msra.mxu0 0.0
      %2829 = vmatprep.subr.mxu0 0.0
      %2830 = vmatpush2.msra.mxu0 0.0
      %2831 = vmatprep.mubr.f32.mxu0 0.0
      %2832 = vmatmul.mubr.f32.gmra.mxu0 %v2718
      %v2833 = vpop.f32.mrf.mxu0
      %v2834 = vadd.f32 0.0, %v2833
      %v2835 = vpop.f32.mrf.mxu0
      %2836 = vmatprep.mubr.f32.mxu0 0.0
      %2837 = vmatmul.mubr.f32.gmra.mxu0 %v2719
      %v2838 = vpop.f32.mrf.mxu0
      %v2839 = vadd.f32 0.0, %v2838
      %v2840 = vpop.f32.mrf.mxu0
      %2841 = vmatprep.mubr.f32.mxu0 0.0
      %2842 = vmatmul.mubr.f32.gmra.mxu0 %v2720
      %v2843 = vpop.f32.mrf.mxu0
      %v2844 = vadd.f32 0.0, %v2843
      %v2845 = vpop.f32.mrf.mxu0
      %2846 = vmatprep.mubr.f32.mxu0 0.0
      %2847 = vmatmul.mubr.f32.gmra.mxu0 %v2721
      %v2848 = vpop.f32.mrf.mxu0
      %v2849 = vadd.f32 0.0, %v2848
      %v2850 = vpop.f32.mrf.mxu0
      %2851 = vmatprep.mubr.f32.mxu0 0.0
      %2852 = vmatmul.mubr.f32.gmra.mxu0 %v2722
      %v2853 = vpop.f32.mrf.mxu0
      %v2854 = vadd.f32 0.0, %v2853
      %v2855 = vpop.f32.mrf.mxu0
      %2856 = vmatprep.mubr.f32.mxu0 0.0
      %2857 = vmatmul.mubr.f32.gmra.mxu0 %v2723
      %v2858 = vpop.f32.mrf.mxu0
      %v2859 = vadd.f32 0.0, %v2858
      %v2860 = vpop.f32.mrf.mxu0
      %2861 = vmatprep.mubr.f32.mxu0 0.0
      %2862 = vmatmul.mubr.f32.gmra.mxu0 %v2724
      %v2863 = vpop.f32.mrf.mxu0
      %v2864 = vadd.f32 0.0, %v2863
      %v2865 = vpop.f32.mrf.mxu0
      %2866 = vmatprep.mubr.f32.mxu0 0.0
      %2867 = vmatmul.mubr.f32.gmra.mxu0 %v2725
      %v2868 = vpop.f32.mrf.mxu0
      %v2869 = vadd.f32 0.0, %v2868
      %v2870 = vpop.f32.mrf.mxu0
      %2871 = vmatprep.mubr.f32.mxu0 0.0
      %2872 = vmatmul.mubr.f32.gmra.mxu0 %v2726
      %v2873 = vpop.f32.mrf.mxu0
      %v2874 = vadd.f32 0.0, %v2873
      %v2875 = vpop.f32.mrf.mxu0
      %2876 = vmatprep.mubr.f32.mxu0 0.0
      %2877 = vmatmul.mubr.f32.gmra.mxu0 %v2727
      %v2878 = vpop.f32.mrf.mxu0
      %v2879 = vadd.f32 0.0, %v2878
      %v2880 = vpop.f32.mrf.mxu0
      %2881 = vmatprep.mubr.f32.mxu0 0.0
      %2882 = vmatmul.mubr.f32.gmra.mxu0 %v2728
      %v2883 = vpop.f32.mrf.mxu0
      %v2884 = vadd.f32 0.0, %v2883
      %v2885 = vpop.f32.mrf.mxu0
      %2886 = vmatprep.mubr.f32.mxu0 0.0
      %2887 = vmatmul.mubr.f32.gmra.mxu0 %v2729
      %v2888 = vpop.f32.mrf.mxu0
      %v2889 = vadd.f32 0.0, %v2888
      %v2890 = vpop.f32.mrf.mxu0
      %2891 = vmatprep.mubr.f32.mxu0 0.0
      %2892 = vmatmul.mubr.f32.gmra.mxu0 %v2730
      %v2893 = vpop.f32.mrf.mxu0
      %v2894 = vadd.f32 0.0, %v2893
      %v2895 = vpop.f32.mrf.mxu0
      %2896 = vmatprep.mubr.f32.mxu0 0.0
      %2897 = vmatmul.mubr.f32.gmra.mxu0 %v2731
      %v2898 = vpop.f32.mrf.mxu0
      %v2899 = vadd.f32 0.0, %v2898
      %v2900 = vpop.f32.mrf.mxu0
      %2901 = vmatprep.mubr.f32.mxu0 0.0
      %2902 = vmatmul.mubr.f32.gmra.mxu0 %v2732
      %v2903 = vpop.f32.mrf.mxu0
      %v2904 = vadd.f32 0.0, %v2903
      %v2905 = vpop.f32.mrf.mxu0
      %2906 = vmatprep.mubr.f32.mxu0 0.0
      %2907 = vmatmul.mubr.f32.gmra.mxu0 %v2733
      %v2908 = vpop.f32.mrf.mxu0
      %v2909 = vadd.f32 0.0, %v2908
      %v2910 = vpop.f32.mrf.mxu0
      %2911 = vmatprep.mubr.f32.mxu0 0.0
      %2912 = vmatmul.mubr.f32.gmra.mxu0 %v2734
      %v2913 = vpop.f32.mrf.mxu0
      %v2914 = vadd.f32 0.0, %v2913
      %v2915 = vpop.f32.mrf.mxu0
      %2916 = vmatprep.mubr.f32.mxu0 0.0
      %2917 = vmatmul.mubr.f32.gmra.mxu0 %v2735
      %v2918 = vpop.f32.mrf.mxu0
      %v2919 = vadd.f32 0.0, %v2918
      %v2920 = vpop.f32.mrf.mxu0
      %2921 = vmatprep.mubr.f32.mxu0 0.0
      %2922 = vmatmul.mubr.f32.gmra.mxu0 %v2736
      %v2923 = vpop.f32.mrf.mxu0
      %v2924 = vadd.f32 0.0, %v2923
      %v2925 = vpop.f32.mrf.mxu0
      %2926 = vmatprep.mubr.f32.mxu0 0.0
      %2927 = vmatmul.mubr.f32.gmra.mxu0 %v2737
      %v2928 = vpop.f32.mrf.mxu0
      %v2929 = vadd.f32 0.0, %v2928
      %v2930 = vpop.f32.mrf.mxu0
      %2931 = vmatprep.mubr.f32.mxu0 0.0
      %2932 = vmatmul.mubr.f32.gmra.mxu0 %v2738
      %v2933 = vpop.f32.mrf.mxu0
      %v2934 = vadd.f32 0.0, %v2933
      %v2935 = vpop.f32.mrf.mxu0
      %2936 = vmatprep.mubr.f32.mxu0 0.0
      %2937 = vmatmul.mubr.f32.gmra.mxu0 %v2739
      %v2938 = vpop.f32.mrf.mxu0
      %v2939 = vadd.f32 0.0, %v2938
      %v2940 = vpop.f32.mrf.mxu0
      %2941 = vmatprep.mubr.f32.mxu0 0.0
      %2942 = vmatmul.mubr.f32.gmra.mxu0 %v2740
      %v2943 = vpop.f32.mrf.mxu0
      %v2944 = vadd.f32 0.0, %v2943
      %v2945 = vpop.f32.mrf.mxu0
      %2946 = vmatprep.mubr.f32.mxu0 0.0
      %2947 = vmatmul.mubr.f32.gmra.mxu0 %v2741
      %v2948 = vpop.f32.mrf.mxu0
      %v2949 = vadd.f32 0.0, %v2948
      %v2950 = vpop.f32.mrf.mxu0
      %2951 = vmatprep.mubr.f32.mxu0 0.0
      %2952 = vmatmul.mubr.f32.gmra.mxu0 %v2742
      %v2953 = vpop.f32.mrf.mxu0
      %v2954 = vadd.f32 0.0, %v2953
      %v2955 = vpop.f32.mrf.mxu0
      %2956 = vmatprep.mubr.f32.mxu0 0.0
      %2957 = vmatmul.mubr.f32.gmra.mxu0 %v2743
      %v2958 = vpop.f32.mrf.mxu0
      %v2959 = vadd.f32 0.0, %v2958
      %v2960 = vpop.f32.mrf.mxu0
      %2961 = vmatprep.mubr.f32.mxu0 0.0
      %2962 = vmatmul.mubr.f32.gmra.mxu0 %v2744
      %v2963 = vpop.f32.mrf.mxu0
      %v2964 = vadd.f32 0.0, %v2963
      %v2965 = vpop.f32.mrf.mxu0
      %2966 = vmatprep.mubr.f32.mxu0 0.0
      %2967 = vmatmul.mubr.f32.gmra.mxu0 %v2745
      %v2968 = vpop.f32.mrf.mxu0
      %v2969 = vadd.f32 0.0, %v2968
      %v2970 = vpop.f32.mrf.mxu0
      %2971 = vmatprep.mubr.f32.mxu0 0.0
      %2972 = vmatmul.mubr.f32.gmra.mxu0 %v2746
      %v2973 = vpop.f32.mrf.mxu0
      %v2974 = vadd.f32 0.0, %v2973
      %v2975 = vpop.f32.mrf.mxu0
      %2976 = vmatprep.mubr.f32.mxu0 0.0
      %2977 = vmatmul.mubr.f32.gmra.mxu0 %v2747
      %v2978 = vpop.f32.mrf.mxu0
      %v2979 = vadd.f32 0.0, %v2978
      %v2980 = vpop.f32.mrf.mxu0
      %2981 = vmatprep.mubr.f32.mxu0 0.0
      %2982 = vmatmul.mubr.f32.gmra.mxu0 %v2748
      %v2983 = vpop.f32.mrf.mxu0
      %v2984 = vadd.f32 0.0, %v2983
      %v2985 = vpop.f32.mrf.mxu0
      %2986 = vmatprep.mubr.f32.mxu0 0.0
      %2987 = vmatmul.mubr.f32.gmra.mxu0 %v2749
      %v2988 = vpop.f32.mrf.mxu0
      %v2989 = vadd.f32 0.0, %v2988
      %v2990 = vpop.f32.mrf.mxu0
      %2991 = vdwg.mxu0
      %v2992 = vadd.f32 %v2686, %v2834
      %v2993 = vadd.f32 %v2687, %v2839
      %v2994 = vadd.f32 %v2688, %v2844
      %v2995 = vadd.f32 %v2689, %v2849
      %v2996 = vadd.f32 %v2690, %v2854
      %v2997 = vadd.f32 %v2691, %v2859
      %v2998 = vadd.f32 %v2692, %v2864
      %v2999 = vadd.f32 %v2693, %v2869
      %v3000 = vadd.f32 %v2694, %v2874
      %v3001 = vadd.f32 %v2695, %v2879
      %v3002 = vadd.f32 %v2696, %v2884
      %v3003 = vadd.f32 %v2697, %v2889
      %v3004 = vadd.f32 %v2698, %v2894
      %v3005 = vadd.f32 %v2699, %v2899
      %v3006 = vadd.f32 %v2700, %v2904
      %v3007 = vadd.f32 %v2701, %v2909
      %v3008 = vadd.f32 %v2702, %v2914
      %v3009 = vadd.f32 %v2703, %v2919
      %v3010 = vadd.f32 %v2704, %v2924
      %v3011 = vadd.f32 %v2705, %v2929
      %v3012 = vadd.f32 %v2706, %v2934
      %v3013 = vadd.f32 %v2707, %v2939
      %v3014 = vadd.f32 %v2708, %v2944
      %v3015 = vadd.f32 %v2709, %v2949
      %v3016 = vadd.f32 %v2710, %v2954
      %v3017 = vadd.f32 %v2711, %v2959
      %v3018 = vadd.f32 %v2712, %v2964
      %v3019 = vadd.f32 %v2713, %v2969
      %v3020 = vadd.f32 %v2714, %v2974
      %v3021 = vadd.f32 %v2715, %v2979
      %v3022 = vadd.f32 %v2716, %v2984
      %v3023 = vadd.f32 %v2717, %v2989
      %v3024 = vld [vmem:[%s2] sm:$0x1]
      %v3026 = vlaneseq
      %v3027 = vshrl.u32 %v3026, 7
      %v3028 = vsub.s32 0, %v3027
      %v3029 = vrot.slane %v3024, %v3028
      %v3031 = vadd.f32 %v2992, %v3029
      %v3032 = vadd.f32 %v2993, %v3029
      %v3033 = vadd.f32 %v2994, %v3029
      %v3034 = vadd.f32 %v2995, %v3029
      %v3035 = vadd.f32 %v2996, %v3029
      %v3036 = vadd.f32 %v2997, %v3029
      %v3037 = vadd.f32 %v2998, %v3029
      %v3038 = vadd.f32 %v2999, %v3029
      %v3039 = vadd.f32 %v3000, %v3029
      %v3040 = vadd.f32 %v3001, %v3029
      %v3041 = vadd.f32 %v3002, %v3029
      %v3042 = vadd.f32 %v3003, %v3029
      %v3043 = vadd.f32 %v3004, %v3029
      %v3044 = vadd.f32 %v3005, %v3029
      %v3045 = vadd.f32 %v3006, %v3029
      %v3046 = vadd.f32 %v3007, %v3029
      %v3047 = vadd.f32 %v3008, %v3029
      %v3048 = vadd.f32 %v3009, %v3029
      %v3049 = vadd.f32 %v3010, %v3029
      %v3050 = vadd.f32 %v3011, %v3029
      %v3051 = vadd.f32 %v3012, %v3029
      %v3052 = vadd.f32 %v3013, %v3029
      %v3053 = vadd.f32 %v3014, %v3029
      %v3054 = vadd.f32 %v3015, %v3029
      %v3055 = vadd.f32 %v3016, %v3029
      %v3056 = vadd.f32 %v3017, %v3029
      %v3057 = vadd.f32 %v3018, %v3029
      %v3058 = vadd.f32 %v3019, %v3029
      %v3059 = vadd.f32 %v3020, %v3029
      %v3060 = vadd.f32 %v3021, %v3029
      %v3061 = vadd.f32 %v3022, %v3029
      %v3062 = vadd.f32 %v3023, %v3029
      %v3063 = vmul.f32 %v3031, 0.5
      %v3064 = vmul.f32 %v3032, 0.5
      %v3065 = vmul.f32 %v3033, 0.5
      %v3066 = vmul.f32 %v3034, 0.5
      %v3067 = vmul.f32 %v3035, 0.5
      %v3068 = vmul.f32 %v3036, 0.5
      %v3069 = vmul.f32 %v3037, 0.5
      %v3070 = vmul.f32 %v3038, 0.5
      %v3071 = vmul.f32 %v3039, 0.5
      %v3072 = vmul.f32 %v3040, 0.5
      %v3073 = vmul.f32 %v3041, 0.5
      %v3074 = vmul.f32 %v3042, 0.5
      %v3075 = vmul.f32 %v3043, 0.5
      %v3076 = vmul.f32 %v3044, 0.5
      %v3077 = vmul.f32 %v3045, 0.5
      %v3078 = vmul.f32 %v3046, 0.5
      %v3079 = vmul.f32 %v3047, 0.5
      %v3080 = vmul.f32 %v3048, 0.5
      %v3081 = vmul.f32 %v3049, 0.5
      %v3082 = vmul.f32 %v3050, 0.5
      %v3083 = vmul.f32 %v3051, 0.5
      %v3084 = vmul.f32 %v3052, 0.5
      %v3085 = vmul.f32 %v3053, 0.5
      %v3086 = vmul.f32 %v3054, 0.5
      %v3087 = vmul.f32 %v3055, 0.5
      %v3088 = vmul.f32 %v3056, 0.5
      %v3089 = vmul.f32 %v3057, 0.5
      %v3090 = vmul.f32 %v3058, 0.5
      %v3091 = vmul.f32 %v3059, 0.5
      %v3092 = vmul.f32 %v3060, 0.5
      %v3093 = vmul.f32 %v3061, 0.5
      %v3094 = vmul.f32 %v3062, 0.5
      %v3095 = vmul.f32 %v3031, 0.70710677
      %v3096 = vmul.f32 %v3032, 0.70710677
      %v3097 = vmul.f32 %v3033, 0.70710677
      %v3098 = vmul.f32 %v3034, 0.70710677
      %v3099 = vmul.f32 %v3035, 0.70710677
      %v3100 = vmul.f32 %v3036, 0.70710677
      %v3101 = vmul.f32 %v3037, 0.70710677
      %v3102 = vmul.f32 %v3038, 0.70710677
      %v3103 = vmul.f32 %v3039, 0.70710677
      %v3104 = vmul.f32 %v3040, 0.70710677
      %v3105 = vmul.f32 %v3041, 0.70710677
      %v3106 = vmul.f32 %v3042, 0.70710677
      %v3107 = vmul.f32 %v3043, 0.70710677
      %v3108 = vmul.f32 %v3044, 0.70710677
      %v3109 = vmul.f32 %v3045, 0.70710677
      %v3110 = vmul.f32 %v3046, 0.70710677
      %v3111 = vmul.f32 %v3047, 0.70710677
      %v3112 = vmul.f32 %v3048, 0.70710677
      %v3113 = vmul.f32 %v3049, 0.70710677
      %v3114 = vmul.f32 %v3050, 0.70710677
      %v3115 = vmul.f32 %v3051, 0.70710677
      %v3116 = vmul.f32 %v3052, 0.70710677
      %v3117 = vmul.f32 %v3053, 0.70710677
      %v3118 = vmul.f32 %v3054, 0.70710677
      %v3119 = vmul.f32 %v3055, 0.70710677
      %v3120 = vmul.f32 %v3056, 0.70710677
      %v3121 = vmul.f32 %v3057, 0.70710677
      %v3122 = vmul.f32 %v3058, 0.70710677
      %v3123 = vmul.f32 %v3059, 0.70710677
      %v3124 = vmul.f32 %v3060, 0.70710677
      %v3125 = vmul.f32 %v3061, 0.70710677
      %v3126 = vmul.f32 %v3062, 0.70710677
      %v3127 = verf.f32.pop %v3095
      %v3128 = verf.f32.pop %v3096
      %v3129 = verf.f32.pop %v3097
      %v3130 = verf.f32.pop %v3098
      %v3131 = verf.f32.pop %v3099
      %v3132 = verf.f32.pop %v3100
      %v3133 = verf.f32.pop %v3101
      %v3134 = verf.f32.pop %v3102
      %v3135 = verf.f32.pop %v3103
      %v3136 = verf.f32.pop %v3104
      %v3137 = verf.f32.pop %v3105
      %v3138 = verf.f32.pop %v3106
      %v3139 = verf.f32.pop %v3107
      %v3140 = verf.f32.pop %v3108
      %v3141 = verf.f32.pop %v3109
      %v3142 = verf.f32.pop %v3110
      %v3143 = verf.f32.pop %v3111
      %v3144 = verf.f32.pop %v3112
      %v3145 = verf.f32.pop %v3113
      %v3146 = verf.f32.pop %v3114
      %v3147 = verf.f32.pop %v3115
      %v3148 = verf.f32.pop %v3116
      %v3149 = verf.f32.pop %v3117
      %v3150 = verf.f32.pop %v3118
      %v3151 = verf.f32.pop %v3119
      %v3152 = verf.f32.pop %v3120
      %v3153 = verf.f32.pop %v3121
      %v3154 = verf.f32.pop %v3122
      %v3155 = verf.f32.pop %v3123
      %v3156 = verf.f32.pop %v3124
      %v3157 = verf.f32.pop %v3125
      %v3158 = verf.f32.pop %v3126
      %v3159 = vadd.f32 %v3127, 1.0
      %v3160 = vadd.f32 %v3128, 1.0
      %v3161 = vadd.f32 %v3129, 1.0
      %v3162 = vadd.f32 %v3130, 1.0
      %v3163 = vadd.f32 %v3131, 1.0
      %v3164 = vadd.f32 %v3132, 1.0
      %v3165 = vadd.f32 %v3133, 1.0
      %v3166 = vadd.f32 %v3134, 1.0
      %v3167 = vadd.f32 %v3135, 1.0
      %v3168 = vadd.f32 %v3136, 1.0
      %v3169 = vadd.f32 %v3137, 1.0
      %v3170 = vadd.f32 %v3138, 1.0
      %v3171 = vadd.f32 %v3139, 1.0
      %v3172 = vadd.f32 %v3140, 1.0
      %v3173 = vadd.f32 %v3141, 1.0
      %v3174 = vadd.f32 %v3142, 1.0
      %v3175 = vadd.f32 %v3143, 1.0
      %v3176 = vadd.f32 %v3144, 1.0
      %v3177 = vadd.f32 %v3145, 1.0
      %v3178 = vadd.f32 %v3146, 1.0
      %v3179 = vadd.f32 %v3147, 1.0
      %v3180 = vadd.f32 %v3148, 1.0
      %v3181 = vadd.f32 %v3149, 1.0
      %v3182 = vadd.f32 %v3150, 1.0
      %v3183 = vadd.f32 %v3151, 1.0
      %v3184 = vadd.f32 %v3152, 1.0
      %v3185 = vadd.f32 %v3153, 1.0
      %v3186 = vadd.f32 %v3154, 1.0
      %v3187 = vadd.f32 %v3155, 1.0
      %v3188 = vadd.f32 %v3156, 1.0
      %v3189 = vadd.f32 %v3157, 1.0
      %v3190 = vadd.f32 %v3158, 1.0
      %v3191 = vmul.f32 %v3063, %v3159
      %v3192 = vmul.f32 %v3064, %v3160
      %v3193 = vmul.f32 %v3065, %v3161
      %v3194 = vmul.f32 %v3066, %v3162
      %v3195 = vmul.f32 %v3067, %v3163
      %v3196 = vmul.f32 %v3068, %v3164
      %v3197 = vmul.f32 %v3069, %v3165
      %v3198 = vmul.f32 %v3070, %v3166
      %v3199 = vmul.f32 %v3071, %v3167
      %v3200 = vmul.f32 %v3072, %v3168
      %v3201 = vmul.f32 %v3073, %v3169
      %v3202 = vmul.f32 %v3074, %v3170
      %v3203 = vmul.f32 %v3075, %v3171
      %v3204 = vmul.f32 %v3076, %v3172
      %v3205 = vmul.f32 %v3077, %v3173
      %v3206 = vmul.f32 %v3078, %v3174
      %v3207 = vmul.f32 %v3079, %v3175
      %v3208 = vmul.f32 %v3080, %v3176
      %v3209 = vmul.f32 %v3081, %v3177
      %v3210 = vmul.f32 %v3082, %v3178
      %v3211 = vmul.f32 %v3083, %v3179
      %v3212 = vmul.f32 %v3084, %v3180
      %v3213 = vmul.f32 %v3085, %v3181
      %v3214 = vmul.f32 %v3086, %v3182
      %v3215 = vmul.f32 %v3087, %v3183
      %v3216 = vmul.f32 %v3088, %v3184
      %v3217 = vmul.f32 %v3089, %v3185
      %v3218 = vmul.f32 %v3090, %v3186
      %v3219 = vmul.f32 %v3091, %v3187
      %v3220 = vmul.f32 %v3092, %v3188
      %v3221 = vmul.f32 %v3093, %v3189
      %v3222 = vmul.f32 %v3094, %v3190
      %3223 = vst [vmem:[#allocation2] sm:$0xff] 0.0
      %3224 = vst [vmem:[#allocation2 + $0x8] sm:$0xff] 0.0
      %3225 = vst [vmem:[#allocation2 + $0x10] sm:$0x3] 0.0
      %3226 = vst [vmem:[#allocation2 + $0x18] sm:$0xff] 0.0
      %3227 = vst [vmem:[#allocation2 + $0x20] sm:$0xff] 0.0
      %3228 = vst [vmem:[#allocation2 + $0x28] sm:$0x3] 0.0
      %3229 = vst [vmem:[#allocation2 + $0x30] sm:$0xff] 0.0
      %3230 = vst [vmem:[#allocation2 + $0x38] sm:$0xff] 0.0
      %3231 = vst [vmem:[#allocation2 + $0x40] sm:$0x3] 0.0
      %3232 = vst [vmem:[#allocation2 + $0x48] sm:$0xff] 0.0
      %3233 = vst [vmem:[#allocation2 + $0x50] sm:$0xff] 0.0
      %3234 = vst [vmem:[#allocation2 + $0x58] sm:$0x3] 0.0
      %3235 = vst [vmem:[#allocation2 + $0x60] sm:$0xff] 0.0
      %3236 = vst [vmem:[#allocation2 + $0x68] sm:$0xff] 0.0
      %3237 = vst [vmem:[#allocation2 + $0x70] sm:$0x3] 0.0
      %3238 = vst [vmem:[#allocation2 + $0x78] sm:$0xff] 0.0
      %3239 = vst [vmem:[#allocation2 + $0x80] sm:$0xff] 0.0
      %3240 = vst [vmem:[#allocation2 + $0x88] sm:$0x3] 0.0
      %3241 = vst [vmem:[#allocation2 + $0x90] sm:$0xff] 0.0
      %3242 = vst [vmem:[#allocation2 + $0x98] sm:$0xff] 0.0
      %3243 = vst [vmem:[#allocation2 + $0xa0] sm:$0x3] 0.0
      %3244 = vst [vmem:[#allocation2 + $0xa8] sm:$0xff] 0.0
      %3245 = vst [vmem:[#allocation2 + $0xb0] sm:$0xff] 0.0
      %3246 = vst [vmem:[#allocation2 + $0xb8] sm:$0x3] 0.0
      %3247 = vst [vmem:[#allocation2 + $0xc0] sm:$0xff] 0.0
      %3248 = vst [vmem:[#allocation2 + $0xc8] sm:$0xff] 0.0
      %3249 = vst [vmem:[#allocation2 + $0xd0] sm:$0x3] 0.0
      %3250 = vst [vmem:[#allocation2 + $0xd8] sm:$0xff] 0.0
      %3251 = vst [vmem:[#allocation2 + $0xe0] sm:$0xff] 0.0
      %3252 = vst [vmem:[#allocation2 + $0xe8] sm:$0x3] 0.0
      %3253 = vst [vmem:[#allocation2 + $0xf0] sm:$0xff] 0.0
      %3254 = vst [vmem:[#allocation2 + $0xf8] sm:$0xff] 0.0
      %3255 = vst [vmem:[#allocation2 + $0x100] sm:$0x3] 0.0
      %3256 = vst [vmem:[#allocation2 + $0x108] sm:$0xff] 0.0
      %3257 = vst [vmem:[#allocation2 + $0x110] sm:$0xff] 0.0
      %3258 = vst [vmem:[#allocation2 + $0x118] sm:$0x3] 0.0
      %3259 = vst [vmem:[#allocation2 + $0x120] sm:$0xff] 0.0
      %3260 = vst [vmem:[#allocation2 + $0x128] sm:$0xff] 0.0
      %3261 = vst [vmem:[#allocation2 + $0x130] sm:$0x3] 0.0
      %3262 = vst [vmem:[#allocation2 + $0x138] sm:$0xff] 0.0
      %3263 = vst [vmem:[#allocation2 + $0x140] sm:$0xff] 0.0
      %3264 = vst [vmem:[#allocation2 + $0x148] sm:$0x3] 0.0
      %3265 = vst [vmem:[#allocation2 + $0x150] sm:$0xff] 0.0
      %3266 = vst [vmem:[#allocation2 + $0x158] sm:$0xff] 0.0
      %3267 = vst [vmem:[#allocation2 + $0x160] sm:$0x3] 0.0
      %3268 = vst [vmem:[#allocation2 + $0x168] sm:$0xff] 0.0
      %3269 = vst [vmem:[#allocation2 + $0x170] sm:$0xff] 0.0
      %3270 = vst [vmem:[#allocation2 + $0x178] sm:$0x3] 0.0
      %3271 = vst [vmem:[#allocation2 + $0x180] sm:$0xff] 0.0
      %3272 = vst [vmem:[#allocation2 + $0x188] sm:$0xff] 0.0
      %3273 = vst [vmem:[#allocation2 + $0x190] sm:$0x3] 0.0
      %3274 = vst [vmem:[#allocation2 + $0x198] sm:$0xff] 0.0
      %3275 = vst [vmem:[#allocation2 + $0x1a0] sm:$0xff] 0.0
      %3276 = vst [vmem:[#allocation2 + $0x1a8] sm:$0x3] 0.0
      %s3277 = scalar_lea.vmem [#allocation2], 24
      %3278 = vst [vmem:[%s3277 + $0x1] sm:$0xff] %v3191
      %3279 = vst [vmem:[%s3277 + $0x9] sm:$0xff] %v3192
      %3280 = vst [vmem:[%s3277 + $0x19] sm:$0xff] %v3193
      %3281 = vst [vmem:[%s3277 + $0x21] sm:$0xff] %v3194
      %3282 = vst [vmem:[%s3277 + $0x31] sm:$0xff] %v3195
      %3283 = vst [vmem:[%s3277 + $0x39] sm:$0xff] %v3196
      %3284 = vst [vmem:[%s3277 + $0x49] sm:$0xff] %v3197
      %3285 = vst [vmem:[%s3277 + $0x51] sm:$0xff] %v3198
      %3286 = vst [vmem:[%s3277 + $0x61] sm:$0xff] %v3199
      %3287 = vst [vmem:[%s3277 + $0x69] sm:$0xff] %v3200
      %3288 = vst [vmem:[%s3277 + $0x79] sm:$0xff] %v3201
      %3289 = vst [vmem:[%s3277 + $0x81] sm:$0xff] %v3202
      %3290 = vst [vmem:[%s3277 + $0x91] sm:$0xff] %v3203
      %3291 = vst [vmem:[%s3277 + $0x99] sm:$0xff] %v3204
      %3292 = vst [vmem:[%s3277 + $0xa9] sm:$0xff] %v3205
      %3293 = vst [vmem:[%s3277 + $0xb1] sm:$0xff] %v3206
      %3294 = vst [vmem:[%s3277 + $0xc1] sm:$0xff] %v3207
      %3295 = vst [vmem:[%s3277 + $0xc9] sm:$0xff] %v3208
      %3296 = vst [vmem:[%s3277 + $0xd9] sm:$0xff] %v3209
      %3297 = vst [vmem:[%s3277 + $0xe1] sm:$0xff] %v3210
      %3298 = vst [vmem:[%s3277 + $0xf1] sm:$0xff] %v3211
      %3299 = vst [vmem:[%s3277 + $0xf9] sm:$0xff] %v3212
      %3300 = vst [vmem:[%s3277 + $0x109] sm:$0xff] %v3213
      %3301 = vst [vmem:[%s3277 + $0x111] sm:$0xff] %v3214
      %3302 = vst [vmem:[%s3277 + $0x121] sm:$0xff] %v3215
      %3303 = vst [vmem:[%s3277 + $0x129] sm:$0xff] %v3216
      %3304 = vst [vmem:[%s3277 + $0x139] sm:$0xff] %v3217
      %3305 = vst [vmem:[%s3277 + $0x141] sm:$0xff] %v3218
      %3306 = vst [vmem:[%s3277 + $0x151] sm:$0xff] %v3219
      %3307 = vst [vmem:[%s3277 + $0x159] sm:$0xff] %v3220
      %3308 = vst [vmem:[%s3277 + $0x169] sm:$0xff] %v3221
      %3309 = vst [vmem:[%s3277 + $0x171] sm:$0xff] %v3222
      %v3310 = vld [vmem:[#allocation2] sm:$0xff]
      %v3311 = vld [vmem:[#allocation2 + $0x8] sm:$0xff]
      %v3312 = vld [vmem:[#allocation2 + $0x18] sm:$0xff]
      %v3313 = vld [vmem:[#allocation2 + $0x20] sm:$0xff]
      %v3314 = vld [vmem:[#allocation2 + $0x30] sm:$0xff]
      %v3315 = vld [vmem:[#allocation2 + $0x38] sm:$0xff]
      %v3316 = vld [vmem:[#allocation2 + $0x48] sm:$0xff]
      %v3317 = vld [vmem:[#allocation2 + $0x50] sm:$0xff]
      %v3318 = vld [vmem:[#allocation2 + $0x60] sm:$0xff]
      %v3319 = vld [vmem:[#allocation2 + $0x68] sm:$0xff]
      %v3320 = vld [vmem:[#allocation2 + $0x78] sm:$0xff]
      %v3321 = vld [vmem:[#allocation2 + $0x80] sm:$0xff]
      %v3322 = vld [vmem:[#allocation2 + $0x90] sm:$0xff]
      %v3323 = vld [vmem:[#allocation2 + $0x98] sm:$0xff]
      %v3324 = vld [vmem:[#allocation2 + $0xa8] sm:$0xff]
      %v3325 = vld [vmem:[#allocation2 + $0xb0] sm:$0xff]
      %v3326 = vld [vmem:[#allocation2 + $0xc0] sm:$0xff]
      %v3327 = vld [vmem:[#allocation2 + $0xc8] sm:$0xff]
      %v3328 = vld [vmem:[#allocation2 + $0xd8] sm:$0xff]
      %v3329 = vld [vmem:[#allocation2 + $0xe0] sm:$0xff]
      %v3330 = vld [vmem:[#allocation2 + $0xf0] sm:$0xff]
      %v3331 = vld [vmem:[#allocation2 + $0xf8] sm:$0xff]
      %v3332 = vld [vmem:[#allocation2 + $0x108] sm:$0xff]
      %v3333 = vld [vmem:[#allocation2 + $0x110] sm:$0xff]
      %v3334 = vld [vmem:[#allocation2 + $0x120] sm:$0xff]
      %v3335 = vld [vmem:[#allocation2 + $0x128] sm:$0xff]
      %v3336 = vld [vmem:[#allocation2 + $0x138] sm:$0xff]
      %v3337 = vld [vmem:[#allocation2 + $0x140] sm:$0xff]
      %v3338 = vld [vmem:[#allocation2 + $0x150] sm:$0xff]
      %v3339 = vld [vmem:[#allocation2 + $0x158] sm:$0xff]
      %v3340 = vld [vmem:[#allocation2 + $0x168] sm:$0xff]
      %v3341 = vld [vmem:[#allocation2 + $0x170] sm:$0xff]
      %v3342 = vld [vmem:[%s3] sm:$0xff]
      %v3343 = vld [vmem:[%s3 + $0x8] sm:$0xff]
      %v3344 = vld [vmem:[%s3 + $0x10] sm:$0xff]
      %v3345 = vld [vmem:[%s3 + $0x18] sm:$0xff]
      %v3346 = vld [vmem:[%s3 + $0x20] sm:$0xff]
      %v3347 = vld [vmem:[%s3 + $0x28] sm:$0xff]
      %v3348 = vld [vmem:[%s3 + $0x30] sm:$0xff]
      %v3349 = vld [vmem:[%s3 + $0x38] sm:$0xff]
      %v3350 = vld [vmem:[%s3 + $0x40] sm:$0xff]
      %v3351 = vld [vmem:[%s3 + $0x48] sm:$0xff]
      %v3352 = vld [vmem:[%s3 + $0x50] sm:$0xff]
      %v3353 = vld [vmem:[%s3 + $0x58] sm:$0xff]
      %v3354 = vld [vmem:[%s3 + $0x60] sm:$0xff]
      %v3355 = vld [vmem:[%s3 + $0x68] sm:$0xff]
      %v3356 = vld [vmem:[%s3 + $0x70] sm:$0xff]
      %v3357 = vld [vmem:[%s3 + $0x78] sm:$0xff]
      %v3358 = vld [vmem:[#allocation2 + $0x1] sm:$0xff]
      %v3359 = vld [vmem:[#allocation2 + $0x9] sm:$0xff]
      %v3360 = vld [vmem:[#allocation2 + $0x19] sm:$0xff]
      %v3361 = vld [vmem:[#allocation2 + $0x21] sm:$0xff]
      %v3362 = vld [vmem:[#allocation2 + $0x31] sm:$0xff]
      %v3363 = vld [vmem:[#allocation2 + $0x39] sm:$0xff]
      %v3364 = vld [vmem:[#allocation2 + $0x49] sm:$0xff]
      %v3365 = vld [vmem:[#allocation2 + $0x51] sm:$0xff]
      %v3366 = vld [vmem:[#allocation2 + $0x61] sm:$0xff]
      %v3367 = vld [vmem:[#allocation2 + $0x69] sm:$0xff]
      %v3368 = vld [vmem:[#allocation2 + $0x79] sm:$0xff]
      %v3369 = vld [vmem:[#allocation2 + $0x81] sm:$0xff]
      %v3370 = vld [vmem:[#allocation2 + $0x91] sm:$0xff]
      %v3371 = vld [vmem:[#allocation2 + $0x99] sm:$0xff]
      %v3372 = vld [vmem:[#allocation2 + $0xa9] sm:$0xff]
      %v3373 = vld [vmem:[#allocation2 + $0xb1] sm:$0xff]
      %v3374 = vld [vmem:[#allocation2 + $0xc1] sm:$0xff]
      %v3375 = vld [vmem:[#allocation2 + $0xc9] sm:$0xff]
      %v3376 = vld [vmem:[#allocation2 + $0xd9] sm:$0xff]
      %v3377 = vld [vmem:[#allocation2 + $0xe1] sm:$0xff]
      %v3378 = vld [vmem:[#allocation2 + $0xf1] sm:$0xff]
      %v3379 = vld [vmem:[#allocation2 + $0xf9] sm:$0xff]
      %v3380 = vld [vmem:[#allocation2 + $0x109] sm:$0xff]
      %v3381 = vld [vmem:[#allocation2 + $0x111] sm:$0xff]
      %v3382 = vld [vmem:[#allocation2 + $0x121] sm:$0xff]
      %v3383 = vld [vmem:[#allocation2 + $0x129] sm:$0xff]
      %v3384 = vld [vmem:[#allocation2 + $0x139] sm:$0xff]
      %v3385 = vld [vmem:[#allocation2 + $0x141] sm:$0xff]
      %v3386 = vld [vmem:[#allocation2 + $0x151] sm:$0xff]
      %v3387 = vld [vmem:[#allocation2 + $0x159] sm:$0xff]
      %v3388 = vld [vmem:[#allocation2 + $0x169] sm:$0xff]
      %v3389 = vld [vmem:[#allocation2 + $0x171] sm:$0xff]
      %s3390 = scalar_lea.vmem %s3, 128
      %v3391 = vld [vmem:[%s3390] sm:$0xff]
      %v3392 = vld [vmem:[%s3390 + $0x8] sm:$0xff]
      %v3393 = vld [vmem:[%s3390 + $0x10] sm:$0xff]
      %v3394 = vld [vmem:[%s3390 + $0x18] sm:$0xff]
      %v3395 = vld [vmem:[%s3390 + $0x20] sm:$0xff]
      %v3396 = vld [vmem:[%s3390 + $0x28] sm:$0xff]
      %v3397 = vld [vmem:[%s3390 + $0x30] sm:$0xff]
      %v3398 = vld [vmem:[%s3390 + $0x38] sm:$0xff]
      %v3399 = vld [vmem:[%s3390 + $0x40] sm:$0xff]
      %v3400 = vld [vmem:[%s3390 + $0x48] sm:$0xff]
      %v3401 = vld [vmem:[%s3390 + $0x50] sm:$0xff]
      %v3402 = vld [vmem:[%s3390 + $0x58] sm:$0xff]
      %v3403 = vld [vmem:[%s3390 + $0x60] sm:$0xff]
      %v3404 = vld [vmem:[%s3390 + $0x68] sm:$0xff]
      %v3405 = vld [vmem:[%s3390 + $0x70] sm:$0xff]
      %v3406 = vld [vmem:[%s3390 + $0x78] sm:$0xff]
      %3407 = vmatprep.subr.mxu0 0.0
      %3408 = vmatpush1.msra.mxu0 %v3406
      %3409 = vmatprep.subr.mxu0 0.0
      %3410 = vmatpush1.msra.mxu0 %v3405
      %3411 = vmatprep.subr.mxu0 0.0
      %3412 = vmatpush1.msra.mxu0 %v3404
      %3413 = vmatprep.subr.mxu0 0.0
      %3414 = vmatpush1.msra.mxu0 %v3403
      %3415 = vmatprep.subr.mxu0 0.0
      %3416 = vmatpush1.msra.mxu0 %v3402
      %3417 = vmatprep.subr.mxu0 0.0
      %3418 = vmatpush1.msra.mxu0 %v3401
      %3419 = vmatprep.subr.mxu0 0.0
      %3420 = vmatpush1.msra.mxu0 %v3400
      %3421 = vmatprep.subr.mxu0 0.0
      %3422 = vmatpush1.msra.mxu0 %v3399
      %3423 = vmatprep.subr.mxu0 0.0
      %3424 = vmatpush1.msra.mxu0 %v3398
      %3425 = vmatprep.subr.mxu0 0.0
      %3426 = vmatpush1.msra.mxu0 %v3397
      %3427 = vmatprep.subr.mxu0 0.0
      %3428 = vmatpush1.msra.mxu0 %v3396
      %3429 = vmatprep.subr.mxu0 0.0
      %3430 = vmatpush1.msra.mxu0 %v3395
      %3431 = vmatprep.subr.mxu0 0.0
      %3432 = vmatpush1.msra.mxu0 %v3394
      %3433 = vmatprep.subr.mxu0 0.0
      %3434 = vmatpush1.msra.mxu0 %v3393
      %3435 = vmatprep.subr.mxu0 0.0
      %3436 = vmatpush1.msra.mxu0 %v3392
      %3437 = vmatprep.subr.mxu0 0.0
      %3438 = vmatpush1.msra.mxu0 %v3391
      %3439 = vmatprep.subr.mxu0 0.0
      %3440 = vmatpush2.msra.mxu0 0.0
      %3441 = vmatprep.subr.mxu0 0.0
      %3442 = vmatpush2.msra.mxu0 0.0
      %3443 = vmatprep.subr.mxu0 0.0
      %3444 = vmatpush2.msra.mxu0 0.0
      %3445 = vmatprep.subr.mxu0 0.0
      %3446 = vmatpush2.msra.mxu0 0.0
      %3447 = vmatprep.subr.mxu0 0.0
      %3448 = vmatpush2.msra.mxu0 0.0
      %3449 = vmatprep.subr.mxu0 0.0
      %3450 = vmatpush2.msra.mxu0 0.0
      %3451 = vmatprep.subr.mxu0 0.0
      %3452 = vmatpush2.msra.mxu0 0.0
      %3453 = vmatprep.subr.mxu0 0.0
      %3454 = vmatpush2.msra.mxu0 0.0
      %3455 = vmatprep.subr.mxu0 0.0
      %3456 = vmatpush2.msra.mxu0 0.0
      %3457 = vmatprep.subr.mxu0 0.0
      %3458 = vmatpush2.msra.mxu0 0.0
      %3459 = vmatprep.subr.mxu0 0.0
      %3460 = vmatpush2.msra.mxu0 0.0
      %3461 = vmatprep.subr.mxu0 0.0
      %3462 = vmatpush2.msra.mxu0 0.0
      %3463 = vmatprep.subr.mxu0 0.0
      %3464 = vmatpush2.msra.mxu0 0.0
      %3465 = vmatprep.subr.mxu0 0.0
      %3466 = vmatpush2.msra.mxu0 0.0
      %3467 = vmatprep.subr.mxu0 0.0
      %3468 = vmatpush2.msra.mxu0 0.0
      %3469 = vmatprep.subr.mxu0 0.0
      %3470 = vmatpush2.msra.mxu0 0.0
      %3471 = vmatprep.mubr.f32.mxu0 0.0
      %3472 = vmatmul.mubr.f32.gmra.mxu0 %v3358
      %v3473 = vpop.f32.mrf.mxu0
      %v3474 = vadd.f32 0.0, %v3473
      %v3475 = vpop.f32.mrf.mxu0
      %3476 = vmatprep.mubr.f32.mxu0 0.0
      %3477 = vmatmul.mubr.f32.gmra.mxu0 %v3359
      %v3478 = vpop.f32.mrf.mxu0
      %v3479 = vadd.f32 0.0, %v3478
      %v3480 = vpop.f32.mrf.mxu0
      %3481 = vmatprep.mubr.f32.mxu0 0.0
      %3482 = vmatmul.mubr.f32.gmra.mxu0 %v3360
      %v3483 = vpop.f32.mrf.mxu0
      %v3484 = vadd.f32 0.0, %v3483
      %v3485 = vpop.f32.mrf.mxu0
      %3486 = vmatprep.mubr.f32.mxu0 0.0
      %3487 = vmatmul.mubr.f32.gmra.mxu0 %v3361
      %v3488 = vpop.f32.mrf.mxu0
      %v3489 = vadd.f32 0.0, %v3488
      %v3490 = vpop.f32.mrf.mxu0
      %3491 = vmatprep.mubr.f32.mxu0 0.0
      %3492 = vmatmul.mubr.f32.gmra.mxu0 %v3362
      %v3493 = vpop.f32.mrf.mxu0
      %v3494 = vadd.f32 0.0, %v3493
      %v3495 = vpop.f32.mrf.mxu0
      %3496 = vmatprep.mubr.f32.mxu0 0.0
      %3497 = vmatmul.mubr.f32.gmra.mxu0 %v3363
      %v3498 = vpop.f32.mrf.mxu0
      %v3499 = vadd.f32 0.0, %v3498
      %v3500 = vpop.f32.mrf.mxu0
      %3501 = vmatprep.mubr.f32.mxu0 0.0
      %3502 = vmatmul.mubr.f32.gmra.mxu0 %v3364
      %v3503 = vpop.f32.mrf.mxu0
      %v3504 = vadd.f32 0.0, %v3503
      %v3505 = vpop.f32.mrf.mxu0
      %3506 = vmatprep.mubr.f32.mxu0 0.0
      %3507 = vmatmul.mubr.f32.gmra.mxu0 %v3365
      %v3508 = vpop.f32.mrf.mxu0
      %v3509 = vadd.f32 0.0, %v3508
      %v3510 = vpop.f32.mrf.mxu0
      %3511 = vmatprep.mubr.f32.mxu0 0.0
      %3512 = vmatmul.mubr.f32.gmra.mxu0 %v3366
      %v3513 = vpop.f32.mrf.mxu0
      %v3514 = vadd.f32 0.0, %v3513
      %v3515 = vpop.f32.mrf.mxu0
      %3516 = vmatprep.mubr.f32.mxu0 0.0
      %3517 = vmatmul.mubr.f32.gmra.mxu0 %v3367
      %v3518 = vpop.f32.mrf.mxu0
      %v3519 = vadd.f32 0.0, %v3518
      %v3520 = vpop.f32.mrf.mxu0
      %3521 = vmatprep.mubr.f32.mxu0 0.0
      %3522 = vmatmul.mubr.f32.gmra.mxu0 %v3368
      %v3523 = vpop.f32.mrf.mxu0
      %v3524 = vadd.f32 0.0, %v3523
      %v3525 = vpop.f32.mrf.mxu0
      %3526 = vmatprep.mubr.f32.mxu0 0.0
      %3527 = vmatmul.mubr.f32.gmra.mxu0 %v3369
      %v3528 = vpop.f32.mrf.mxu0
      %v3529 = vadd.f32 0.0, %v3528
      %v3530 = vpop.f32.mrf.mxu0
      %3531 = vmatprep.mubr.f32.mxu0 0.0
      %3532 = vmatmul.mubr.f32.gmra.mxu0 %v3370
      %v3533 = vpop.f32.mrf.mxu0
      %v3534 = vadd.f32 0.0, %v3533
      %v3535 = vpop.f32.mrf.mxu0
      %3536 = vmatprep.mubr.f32.mxu0 0.0
      %3537 = vmatmul.mubr.f32.gmra.mxu0 %v3371
      %v3538 = vpop.f32.mrf.mxu0
      %v3539 = vadd.f32 0.0, %v3538
      %v3540 = vpop.f32.mrf.mxu0
      %3541 = vmatprep.mubr.f32.mxu0 0.0
      %3542 = vmatmul.mubr.f32.gmra.mxu0 %v3372
      %v3543 = vpop.f32.mrf.mxu0
      %v3544 = vadd.f32 0.0, %v3543
      %v3545 = vpop.f32.mrf.mxu0
      %3546 = vmatprep.mubr.f32.mxu0 0.0
      %3547 = vmatmul.mubr.f32.gmra.mxu0 %v3373
      %v3548 = vpop.f32.mrf.mxu0
      %v3549 = vadd.f32 0.0, %v3548
      %v3550 = vpop.f32.mrf.mxu0
      %3551 = vmatprep.mubr.f32.mxu0 0.0
      %3552 = vmatmul.mubr.f32.gmra.mxu0 %v3374
      %v3553 = vpop.f32.mrf.mxu0
      %v3554 = vadd.f32 0.0, %v3553
      %v3555 = vpop.f32.mrf.mxu0
      %3556 = vmatprep.mubr.f32.mxu0 0.0
      %3557 = vmatmul.mubr.f32.gmra.mxu0 %v3375
      %v3558 = vpop.f32.mrf.mxu0
      %v3559 = vadd.f32 0.0, %v3558
      %v3560 = vpop.f32.mrf.mxu0
      %3561 = vmatprep.mubr.f32.mxu0 0.0
      %3562 = vmatmul.mubr.f32.gmra.mxu0 %v3376
      %v3563 = vpop.f32.mrf.mxu0
      %v3564 = vadd.f32 0.0, %v3563
      %v3565 = vpop.f32.mrf.mxu0
      %3566 = vmatprep.mubr.f32.mxu0 0.0
      %3567 = vmatmul.mubr.f32.gmra.mxu0 %v3377
      %v3568 = vpop.f32.mrf.mxu0
      %v3569 = vadd.f32 0.0, %v3568
      %v3570 = vpop.f32.mrf.mxu0
      %3571 = vmatprep.mubr.f32.mxu0 0.0
      %3572 = vmatmul.mubr.f32.gmra.mxu0 %v3378
      %v3573 = vpop.f32.mrf.mxu0
      %v3574 = vadd.f32 0.0, %v3573
      %v3575 = vpop.f32.mrf.mxu0
      %3576 = vmatprep.mubr.f32.mxu0 0.0
      %3577 = vmatmul.mubr.f32.gmra.mxu0 %v3379
      %v3578 = vpop.f32.mrf.mxu0
      %v3579 = vadd.f32 0.0, %v3578
      %v3580 = vpop.f32.mrf.mxu0
      %3581 = vmatprep.mubr.f32.mxu0 0.0
      %3582 = vmatmul.mubr.f32.gmra.mxu0 %v3380
      %v3583 = vpop.f32.mrf.mxu0
      %v3584 = vadd.f32 0.0, %v3583
      %v3585 = vpop.f32.mrf.mxu0
      %3586 = vmatprep.mubr.f32.mxu0 0.0
      %3587 = vmatmul.mubr.f32.gmra.mxu0 %v3381
      %v3588 = vpop.f32.mrf.mxu0
      %v3589 = vadd.f32 0.0, %v3588
      %v3590 = vpop.f32.mrf.mxu0
      %3591 = vmatprep.mubr.f32.mxu0 0.0
      %3592 = vmatmul.mubr.f32.gmra.mxu0 %v3382
      %v3593 = vpop.f32.mrf.mxu0
      %v3594 = vadd.f32 0.0, %v3593
      %v3595 = vpop.f32.mrf.mxu0
      %3596 = vmatprep.mubr.f32.mxu0 0.0
      %3597 = vmatmul.mubr.f32.gmra.mxu0 %v3383
      %v3598 = vpop.f32.mrf.mxu0
      %v3599 = vadd.f32 0.0, %v3598
      %v3600 = vpop.f32.mrf.mxu0
      %3601 = vmatprep.mubr.f32.mxu0 0.0
      %3602 = vmatmul.mubr.f32.gmra.mxu0 %v3384
      %v3603 = vpop.f32.mrf.mxu0
      %v3604 = vadd.f32 0.0, %v3603
      %v3605 = vpop.f32.mrf.mxu0
      %3606 = vmatprep.mubr.f32.mxu0 0.0
      %3607 = vmatmul.mubr.f32.gmra.mxu0 %v3385
      %v3608 = vpop.f32.mrf.mxu0
      %v3609 = vadd.f32 0.0, %v3608
      %v3610 = vpop.f32.mrf.mxu0
      %3611 = vmatprep.mubr.f32.mxu0 0.0
      %3612 = vmatmul.mubr.f32.gmra.mxu0 %v3386
      %v3613 = vpop.f32.mrf.mxu0
      %v3614 = vadd.f32 0.0, %v3613
      %v3615 = vpop.f32.mrf.mxu0
      %3616 = vmatprep.mubr.f32.mxu0 0.0
      %3617 = vmatmul.mubr.f32.gmra.mxu0 %v3387
      %v3618 = vpop.f32.mrf.mxu0
      %v3619 = vadd.f32 0.0, %v3618
      %v3620 = vpop.f32.mrf.mxu0
      %3621 = vmatprep.mubr.f32.mxu0 0.0
      %3622 = vmatmul.mubr.f32.gmra.mxu0 %v3388
      %v3623 = vpop.f32.mrf.mxu0
      %v3624 = vadd.f32 0.0, %v3623
      %v3625 = vpop.f32.mrf.mxu0
      %3626 = vmatprep.mubr.f32.mxu0 0.0
      %3627 = vmatmul.mubr.f32.gmra.mxu0 %v3389
      %v3628 = vpop.f32.mrf.mxu0
      %v3629 = vadd.f32 0.0, %v3628
      %v3630 = vpop.f32.mrf.mxu0
      %3631 = vdwg.mxu0
      %3632 = vmatprep.subr.mxu0 0.0
      %3633 = vmatpush1.msra.mxu0 %v3357
      %3634 = vmatprep.subr.mxu0 0.0
      %3635 = vmatpush1.msra.mxu0 %v3356
      %3636 = vmatprep.subr.mxu0 0.0
      %3637 = vmatpush1.msra.mxu0 %v3355
      %3638 = vmatprep.subr.mxu0 0.0
      %3639 = vmatpush1.msra.mxu0 %v3354
      %3640 = vmatprep.subr.mxu0 0.0
      %3641 = vmatpush1.msra.mxu0 %v3353
      %3642 = vmatprep.subr.mxu0 0.0
      %3643 = vmatpush1.msra.mxu0 %v3352
      %3644 = vmatprep.subr.mxu0 0.0
      %3645 = vmatpush1.msra.mxu0 %v3351
      %3646 = vmatprep.subr.mxu0 0.0
      %3647 = vmatpush1.msra.mxu0 %v3350
      %3648 = vmatprep.subr.mxu0 0.0
      %3649 = vmatpush1.msra.mxu0 %v3349
      %3650 = vmatprep.subr.mxu0 0.0
      %3651 = vmatpush1.msra.mxu0 %v3348
      %3652 = vmatprep.subr.mxu0 0.0
      %3653 = vmatpush1.msra.mxu0 %v3347
      %3654 = vmatprep.subr.mxu0 0.0
      %3655 = vmatpush1.msra.mxu0 %v3346
      %3656 = vmatprep.subr.mxu0 0.0
      %3657 = vmatpush1.msra.mxu0 %v3345
      %3658 = vmatprep.subr.mxu0 0.0
      %3659 = vmatpush1.msra.mxu0 %v3344
      %3660 = vmatprep.subr.mxu0 0.0
      %3661 = vmatpush1.msra.mxu0 %v3343
      %3662 = vmatprep.subr.mxu0 0.0
      %3663 = vmatpush1.msra.mxu0 %v3342
      %3664 = vmatprep.subr.mxu0 0.0
      %3665 = vmatpush2.msra.mxu0 0.0
      %3666 = vmatprep.subr.mxu0 0.0
      %3667 = vmatpush2.msra.mxu0 0.0
      %3668 = vmatprep.subr.mxu0 0.0
      %3669 = vmatpush2.msra.mxu0 0.0
      %3670 = vmatprep.subr.mxu0 0.0
      %3671 = vmatpush2.msra.mxu0 0.0
      %3672 = vmatprep.subr.mxu0 0.0
      %3673 = vmatpush2.msra.mxu0 0.0
      %3674 = vmatprep.subr.mxu0 0.0
      %3675 = vmatpush2.msra.mxu0 0.0
      %3676 = vmatprep.subr.mxu0 0.0
      %3677 = vmatpush2.msra.mxu0 0.0
      %3678 = vmatprep.subr.mxu0 0.0
      %3679 = vmatpush2.msra.mxu0 0.0
      %3680 = vmatprep.subr.mxu0 0.0
      %3681 = vmatpush2.msra.mxu0 0.0
      %3682 = vmatprep.subr.mxu0 0.0
      %3683 = vmatpush2.msra.mxu0 0.0
      %3684 = vmatprep.subr.mxu0 0.0
      %3685 = vmatpush2.msra.mxu0 0.0
      %3686 = vmatprep.subr.mxu0 0.0
      %3687 = vmatpush2.msra.mxu0 0.0
      %3688 = vmatprep.subr.mxu0 0.0
      %3689 = vmatpush2.msra.mxu0 0.0
      %3690 = vmatprep.subr.mxu0 0.0
      %3691 = vmatpush2.msra.mxu0 0.0
      %3692 = vmatprep.subr.mxu0 0.0
      %3693 = vmatpush2.msra.mxu0 0.0
      %3694 = vmatprep.subr.mxu0 0.0
      %3695 = vmatpush2.msra.mxu0 0.0
      %3696 = vmatprep.mubr.f32.mxu0 0.0
      %3697 = vmatmul.mubr.f32.gmra.mxu0 %v3310
      %v3698 = vpop.f32.mrf.mxu0
      %v3699 = vadd.f32 %v3474, %v3698
      %v3700 = vpop.f32.mrf.mxu0
      %3701 = vmatprep.mubr.f32.mxu0 0.0
      %3702 = vmatmul.mubr.f32.gmra.mxu0 %v3311
      %v3703 = vpop.f32.mrf.mxu0
      %v3704 = vadd.f32 %v3479, %v3703
      %v3705 = vpop.f32.mrf.mxu0
      %3706 = vmatprep.mubr.f32.mxu0 0.0
      %3707 = vmatmul.mubr.f32.gmra.mxu0 %v3312
      %v3708 = vpop.f32.mrf.mxu0
      %v3709 = vadd.f32 %v3484, %v3708
      %v3710 = vpop.f32.mrf.mxu0
      %3711 = vmatprep.mubr.f32.mxu0 0.0
      %3712 = vmatmul.mubr.f32.gmra.mxu0 %v3313
      %v3713 = vpop.f32.mrf.mxu0
      %v3714 = vadd.f32 %v3489, %v3713
      %v3715 = vpop.f32.mrf.mxu0
      %3716 = vmatprep.mubr.f32.mxu0 0.0
      %3717 = vmatmul.mubr.f32.gmra.mxu0 %v3314
      %v3718 = vpop.f32.mrf.mxu0
      %v3719 = vadd.f32 %v3494, %v3718
      %v3720 = vpop.f32.mrf.mxu0
      %3721 = vmatprep.mubr.f32.mxu0 0.0
      %3722 = vmatmul.mubr.f32.gmra.mxu0 %v3315
      %v3723 = vpop.f32.mrf.mxu0
      %v3724 = vadd.f32 %v3499, %v3723
      %v3725 = vpop.f32.mrf.mxu0
      %3726 = vmatprep.mubr.f32.mxu0 0.0
      %3727 = vmatmul.mubr.f32.gmra.mxu0 %v3316
      %v3728 = vpop.f32.mrf.mxu0
      %v3729 = vadd.f32 %v3504, %v3728
      %v3730 = vpop.f32.mrf.mxu0
      %3731 = vmatprep.mubr.f32.mxu0 0.0
      %3732 = vmatmul.mubr.f32.gmra.mxu0 %v3317
      %v3733 = vpop.f32.mrf.mxu0
      %v3734 = vadd.f32 %v3509, %v3733
      %v3735 = vpop.f32.mrf.mxu0
      %3736 = vmatprep.mubr.f32.mxu0 0.0
      %3737 = vmatmul.mubr.f32.gmra.mxu0 %v3318
      %v3738 = vpop.f32.mrf.mxu0
      %v3739 = vadd.f32 %v3514, %v3738
      %v3740 = vpop.f32.mrf.mxu0
      %3741 = vmatprep.mubr.f32.mxu0 0.0
      %3742 = vmatmul.mubr.f32.gmra.mxu0 %v3319
      %v3743 = vpop.f32.mrf.mxu0
      %v3744 = vadd.f32 %v3519, %v3743
      %v3745 = vpop.f32.mrf.mxu0
      %3746 = vmatprep.mubr.f32.mxu0 0.0
      %3747 = vmatmul.mubr.f32.gmra.mxu0 %v3320
      %v3748 = vpop.f32.mrf.mxu0
      %v3749 = vadd.f32 %v3524, %v3748
      %v3750 = vpop.f32.mrf.mxu0
      %3751 = vmatprep.mubr.f32.mxu0 0.0
      %3752 = vmatmul.mubr.f32.gmra.mxu0 %v3321
      %v3753 = vpop.f32.mrf.mxu0
      %v3754 = vadd.f32 %v3529, %v3753
      %v3755 = vpop.f32.mrf.mxu0
      %3756 = vmatprep.mubr.f32.mxu0 0.0
      %3757 = vmatmul.mubr.f32.gmra.mxu0 %v3322
      %v3758 = vpop.f32.mrf.mxu0
      %v3759 = vadd.f32 %v3534, %v3758
      %v3760 = vpop.f32.mrf.mxu0
      %3761 = vmatprep.mubr.f32.mxu0 0.0
      %3762 = vmatmul.mubr.f32.gmra.mxu0 %v3323
      %v3763 = vpop.f32.mrf.mxu0
      %v3764 = vadd.f32 %v3539, %v3763
      %v3765 = vpop.f32.mrf.mxu0
      %3766 = vmatprep.mubr.f32.mxu0 0.0
      %3767 = vmatmul.mubr.f32.gmra.mxu0 %v3324
      %v3768 = vpop.f32.mrf.mxu0
      %v3769 = vadd.f32 %v3544, %v3768
      %v3770 = vpop.f32.mrf.mxu0
      %3771 = vmatprep.mubr.f32.mxu0 0.0
      %3772 = vmatmul.mubr.f32.gmra.mxu0 %v3325
      %v3773 = vpop.f32.mrf.mxu0
      %v3774 = vadd.f32 %v3549, %v3773
      %v3775 = vpop.f32.mrf.mxu0
      %3776 = vmatprep.mubr.f32.mxu0 0.0
      %3777 = vmatmul.mubr.f32.gmra.mxu0 %v3326
      %v3778 = vpop.f32.mrf.mxu0
      %v3779 = vadd.f32 %v3554, %v3778
      %v3780 = vpop.f32.mrf.mxu0
      %3781 = vmatprep.mubr.f32.mxu0 0.0
      %3782 = vmatmul.mubr.f32.gmra.mxu0 %v3327
      %v3783 = vpop.f32.mrf.mxu0
      %v3784 = vadd.f32 %v3559, %v3783
      %v3785 = vpop.f32.mrf.mxu0
      %3786 = vmatprep.mubr.f32.mxu0 0.0
      %3787 = vmatmul.mubr.f32.gmra.mxu0 %v3328
      %v3788 = vpop.f32.mrf.mxu0
      %v3789 = vadd.f32 %v3564, %v3788
      %v3790 = vpop.f32.mrf.mxu0
      %3791 = vmatprep.mubr.f32.mxu0 0.0
      %3792 = vmatmul.mubr.f32.gmra.mxu0 %v3329
      %v3793 = vpop.f32.mrf.mxu0
      %v3794 = vadd.f32 %v3569, %v3793
      %v3795 = vpop.f32.mrf.mxu0
      %3796 = vmatprep.mubr.f32.mxu0 0.0
      %3797 = vmatmul.mubr.f32.gmra.mxu0 %v3330
      %v3798 = vpop.f32.mrf.mxu0
      %v3799 = vadd.f32 %v3574, %v3798
      %v3800 = vpop.f32.mrf.mxu0
      %3801 = vmatprep.mubr.f32.mxu0 0.0
      %3802 = vmatmul.mubr.f32.gmra.mxu0 %v3331
      %v3803 = vpop.f32.mrf.mxu0
      %v3804 = vadd.f32 %v3579, %v3803
      %v3805 = vpop.f32.mrf.mxu0
      %3806 = vmatprep.mubr.f32.mxu0 0.0
      %3807 = vmatmul.mubr.f32.gmra.mxu0 %v3332
      %v3808 = vpop.f32.mrf.mxu0
      %v3809 = vadd.f32 %v3584, %v3808
      %v3810 = vpop.f32.mrf.mxu0
      %3811 = vmatprep.mubr.f32.mxu0 0.0
      %3812 = vmatmul.mubr.f32.gmra.mxu0 %v3333
      %v3813 = vpop.f32.mrf.mxu0
      %v3814 = vadd.f32 %v3589, %v3813
      %v3815 = vpop.f32.mrf.mxu0
      %3816 = vmatprep.mubr.f32.mxu0 0.0
      %3817 = vmatmul.mubr.f32.gmra.mxu0 %v3334
      %v3818 = vpop.f32.mrf.mxu0
      %v3819 = vadd.f32 %v3594, %v3818
      %v3820 = vpop.f32.mrf.mxu0
      %3821 = vmatprep.mubr.f32.mxu0 0.0
      %3822 = vmatmul.mubr.f32.gmra.mxu0 %v3335
      %v3823 = vpop.f32.mrf.mxu0
      %v3824 = vadd.f32 %v3599, %v3823
      %v3825 = vpop.f32.mrf.mxu0
      %3826 = vmatprep.mubr.f32.mxu0 0.0
      %3827 = vmatmul.mubr.f32.gmra.mxu0 %v3336
      %v3828 = vpop.f32.mrf.mxu0
      %v3829 = vadd.f32 %v3604, %v3828
      %v3830 = vpop.f32.mrf.mxu0
      %3831 = vmatprep.mubr.f32.mxu0 0.0
      %3832 = vmatmul.mubr.f32.gmra.mxu0 %v3337
      %v3833 = vpop.f32.mrf.mxu0
      %v3834 = vadd.f32 %v3609, %v3833
      %v3835 = vpop.f32.mrf.mxu0
      %3836 = vmatprep.mubr.f32.mxu0 0.0
      %3837 = vmatmul.mubr.f32.gmra.mxu0 %v3338
      %v3838 = vpop.f32.mrf.mxu0
      %v3839 = vadd.f32 %v3614, %v3838
      %v3840 = vpop.f32.mrf.mxu0
      %3841 = vmatprep.mubr.f32.mxu0 0.0
      %3842 = vmatmul.mubr.f32.gmra.mxu0 %v3339
      %v3843 = vpop.f32.mrf.mxu0
      %v3844 = vadd.f32 %v3619, %v3843
      %v3845 = vpop.f32.mrf.mxu0
      %3846 = vmatprep.mubr.f32.mxu0 0.0
      %3847 = vmatmul.mubr.f32.gmra.mxu0 %v3340
      %v3848 = vpop.f32.mrf.mxu0
      %v3849 = vadd.f32 %v3624, %v3848
      %v3850 = vpop.f32.mrf.mxu0
      %3851 = vmatprep.mubr.f32.mxu0 0.0
      %3852 = vmatmul.mubr.f32.gmra.mxu0 %v3341
      %v3853 = vpop.f32.mrf.mxu0
      %v3854 = vadd.f32 %v3629, %v3853
      %v3855 = vpop.f32.mrf.mxu0
      %3856 = vdwg.mxu0
      %v3857 = vld [vmem:[#allocation2 + $0x2] sm:$0xff]
      %v3858 = vld [vmem:[#allocation2 + $0xa] sm:$0xff]
      %v3859 = vld [vmem:[#allocation2 + $0x1a] sm:$0xff]
      %v3860 = vld [vmem:[#allocation2 + $0x22] sm:$0xff]
      %v3861 = vld [vmem:[#allocation2 + $0x32] sm:$0xff]
      %v3862 = vld [vmem:[#allocation2 + $0x3a] sm:$0xff]
      %v3863 = vld [vmem:[#allocation2 + $0x4a] sm:$0xff]
      %v3864 = vld [vmem:[#allocation2 + $0x52] sm:$0xff]
      %v3865 = vld [vmem:[#allocation2 + $0x62] sm:$0xff]
      %v3866 = vld [vmem:[#allocation2 + $0x6a] sm:$0xff]
      %v3867 = vld [vmem:[#allocation2 + $0x7a] sm:$0xff]
      %v3868 = vld [vmem:[#allocation2 + $0x82] sm:$0xff]
      %v3869 = vld [vmem:[#allocation2 + $0x92] sm:$0xff]
      %v3870 = vld [vmem:[#allocation2 + $0x9a] sm:$0xff]
      %v3871 = vld [vmem:[#allocation2 + $0xaa] sm:$0xff]
      %v3872 = vld [vmem:[#allocation2 + $0xb2] sm:$0xff]
      %v3873 = vld [vmem:[#allocation2 + $0xc2] sm:$0xff]
      %v3874 = vld [vmem:[#allocation2 + $0xca] sm:$0xff]
      %v3875 = vld [vmem:[#allocation2 + $0xda] sm:$0xff]
      %v3876 = vld [vmem:[#allocation2 + $0xe2] sm:$0xff]
      %v3877 = vld [vmem:[#allocation2 + $0xf2] sm:$0xff]
      %v3878 = vld [vmem:[#allocation2 + $0xfa] sm:$0xff]
      %v3879 = vld [vmem:[#allocation2 + $0x10a] sm:$0xff]
      %v3880 = vld [vmem:[#allocation2 + $0x112] sm:$0xff]
      %v3881 = vld [vmem:[#allocation2 + $0x122] sm:$0xff]
      %v3882 = vld [vmem:[#allocation2 + $0x12a] sm:$0xff]
      %v3883 = vld [vmem:[#allocation2 + $0x13a] sm:$0xff]
      %v3884 = vld [vmem:[#allocation2 + $0x142] sm:$0xff]
      %v3885 = vld [vmem:[#allocation2 + $0x152] sm:$0xff]
      %v3886 = vld [vmem:[#allocation2 + $0x15a] sm:$0xff]
      %v3887 = vld [vmem:[#allocation2 + $0x16a] sm:$0xff]
      %v3888 = vld [vmem:[#allocation2 + $0x172] sm:$0xff]
      %s3889 = scalar_lea.vmem %s3, 256
      %v3890 = vld [vmem:[%s3889] sm:$0xff]
      %v3891 = vld [vmem:[%s3889 + $0x8] sm:$0xff]
      %v3892 = vld [vmem:[%s3889 + $0x10] sm:$0xff]
      %v3893 = vld [vmem:[%s3889 + $0x18] sm:$0xff]
      %v3894 = vld [vmem:[%s3889 + $0x20] sm:$0xff]
      %v3895 = vld [vmem:[%s3889 + $0x28] sm:$0xff]
      %v3896 = vld [vmem:[%s3889 + $0x30] sm:$0xff]
      %v3897 = vld [vmem:[%s3889 + $0x38] sm:$0xff]
      %v3898 = vld [vmem:[%s3889 + $0x40] sm:$0xff]
      %v3899 = vld [vmem:[%s3889 + $0x48] sm:$0xff]
      %v3900 = vld [vmem:[%s3889 + $0x50] sm:$0xff]
      %v3901 = vld [vmem:[%s3889 + $0x58] sm:$0xff]
      %v3902 = vld [vmem:[%s3889 + $0x60] sm:$0xff]
      %v3903 = vld [vmem:[%s3889 + $0x68] sm:$0xff]
      %v3904 = vld [vmem:[%s3889 + $0x70] sm:$0xff]
      %v3905 = vld [vmem:[%s3889 + $0x78] sm:$0xff]
      %3906 = vmatprep.subr.mxu0 0.0
      %3907 = vmatpush1.msra.mxu0 %v3905
      %3908 = vmatprep.subr.mxu0 0.0
      %3909 = vmatpush1.msra.mxu0 %v3904
      %3910 = vmatprep.subr.mxu0 0.0
      %3911 = vmatpush1.msra.mxu0 %v3903
      %3912 = vmatprep.subr.mxu0 0.0
      %3913 = vmatpush1.msra.mxu0 %v3902
      %3914 = vmatprep.subr.mxu0 0.0
      %3915 = vmatpush1.msra.mxu0 %v3901
      %3916 = vmatprep.subr.mxu0 0.0
      %3917 = vmatpush1.msra.mxu0 %v3900
      %3918 = vmatprep.subr.mxu0 0.0
      %3919 = vmatpush1.msra.mxu0 %v3899
      %3920 = vmatprep.subr.mxu0 0.0
      %3921 = vmatpush1.msra.mxu0 %v3898
      %3922 = vmatprep.subr.mxu0 0.0
      %3923 = vmatpush1.msra.mxu0 %v3897
      %3924 = vmatprep.subr.mxu0 0.0
      %3925 = vmatpush1.msra.mxu0 %v3896
      %3926 = vmatprep.subr.mxu0 0.0
      %3927 = vmatpush1.msra.mxu0 %v3895
      %3928 = vmatprep.subr.mxu0 0.0
      %3929 = vmatpush1.msra.mxu0 %v3894
      %3930 = vmatprep.subr.mxu0 0.0
      %3931 = vmatpush1.msra.mxu0 %v3893
      %3932 = vmatprep.subr.mxu0 0.0
      %3933 = vmatpush1.msra.mxu0 %v3892
      %3934 = vmatprep.subr.mxu0 0.0
      %3935 = vmatpush1.msra.mxu0 %v3891
      %3936 = vmatprep.subr.mxu0 0.0
      %3937 = vmatpush1.msra.mxu0 %v3890
      %3938 = vmatprep.subr.mxu0 0.0
      %3939 = vmatpush2.msra.mxu0 0.0
      %3940 = vmatprep.subr.mxu0 0.0
      %3941 = vmatpush2.msra.mxu0 0.0
      %3942 = vmatprep.subr.mxu0 0.0
      %3943 = vmatpush2.msra.mxu0 0.0
      %3944 = vmatprep.subr.mxu0 0.0
      %3945 = vmatpush2.msra.mxu0 0.0
      %3946 = vmatprep.subr.mxu0 0.0
      %3947 = vmatpush2.msra.mxu0 0.0
      %3948 = vmatprep.subr.mxu0 0.0
      %3949 = vmatpush2.msra.mxu0 0.0
      %3950 = vmatprep.subr.mxu0 0.0
      %3951 = vmatpush2.msra.mxu0 0.0
      %3952 = vmatprep.subr.mxu0 0.0
      %3953 = vmatpush2.msra.mxu0 0.0
      %3954 = vmatprep.subr.mxu0 0.0
      %3955 = vmatpush2.msra.mxu0 0.0
      %3956 = vmatprep.subr.mxu0 0.0
      %3957 = vmatpush2.msra.mxu0 0.0
      %3958 = vmatprep.subr.mxu0 0.0
      %3959 = vmatpush2.msra.mxu0 0.0
      %3960 = vmatprep.subr.mxu0 0.0
      %3961 = vmatpush2.msra.mxu0 0.0
      %3962 = vmatprep.subr.mxu0 0.0
      %3963 = vmatpush2.msra.mxu0 0.0
      %3964 = vmatprep.subr.mxu0 0.0
      %3965 = vmatpush2.msra.mxu0 0.0
      %3966 = vmatprep.subr.mxu0 0.0
      %3967 = vmatpush2.msra.mxu0 0.0
      %3968 = vmatprep.subr.mxu0 0.0
      %3969 = vmatpush2.msra.mxu0 0.0
      %3970 = vmatprep.mubr.f32.mxu0 0.0
      %3971 = vmatmul.mubr.f32.gmra.mxu0 %v3857
      %v3972 = vpop.f32.mrf.mxu0
      %v3973 = vadd.f32 0.0, %v3972
      %v3974 = vpop.f32.mrf.mxu0
      %3975 = vmatprep.mubr.f32.mxu0 0.0
      %3976 = vmatmul.mubr.f32.gmra.mxu0 %v3858
      %v3977 = vpop.f32.mrf.mxu0
      %v3978 = vadd.f32 0.0, %v3977
      %v3979 = vpop.f32.mrf.mxu0
      %3980 = vmatprep.mubr.f32.mxu0 0.0
      %3981 = vmatmul.mubr.f32.gmra.mxu0 %v3859
      %v3982 = vpop.f32.mrf.mxu0
      %v3983 = vadd.f32 0.0, %v3982
      %v3984 = vpop.f32.mrf.mxu0
      %3985 = vmatprep.mubr.f32.mxu0 0.0
      %3986 = vmatmul.mubr.f32.gmra.mxu0 %v3860
      %v3987 = vpop.f32.mrf.mxu0
      %v3988 = vadd.f32 0.0, %v3987
      %v3989 = vpop.f32.mrf.mxu0
      %3990 = vmatprep.mubr.f32.mxu0 0.0
      %3991 = vmatmul.mubr.f32.gmra.mxu0 %v3861
      %v3992 = vpop.f32.mrf.mxu0
      %v3993 = vadd.f32 0.0, %v3992
      %v3994 = vpop.f32.mrf.mxu0
      %3995 = vmatprep.mubr.f32.mxu0 0.0
      %3996 = vmatmul.mubr.f32.gmra.mxu0 %v3862
      %v3997 = vpop.f32.mrf.mxu0
      %v3998 = vadd.f32 0.0, %v3997
      %v3999 = vpop.f32.mrf.mxu0
      %4000 = vmatprep.mubr.f32.mxu0 0.0
      %4001 = vmatmul.mubr.f32.gmra.mxu0 %v3863
      %v4002 = vpop.f32.mrf.mxu0
      %v4003 = vadd.f32 0.0, %v4002
      %v4004 = vpop.f32.mrf.mxu0
      %4005 = vmatprep.mubr.f32.mxu0 0.0
      %4006 = vmatmul.mubr.f32.gmra.mxu0 %v3864
      %v4007 = vpop.f32.mrf.mxu0
      %v4008 = vadd.f32 0.0, %v4007
      %v4009 = vpop.f32.mrf.mxu0
      %4010 = vmatprep.mubr.f32.mxu0 0.0
      %4011 = vmatmul.mubr.f32.gmra.mxu0 %v3865
      %v4012 = vpop.f32.mrf.mxu0
      %v4013 = vadd.f32 0.0, %v4012
      %v4014 = vpop.f32.mrf.mxu0
      %4015 = vmatprep.mubr.f32.mxu0 0.0
      %4016 = vmatmul.mubr.f32.gmra.mxu0 %v3866
      %v4017 = vpop.f32.mrf.mxu0
      %v4018 = vadd.f32 0.0, %v4017
      %v4019 = vpop.f32.mrf.mxu0
      %4020 = vmatprep.mubr.f32.mxu0 0.0
      %4021 = vmatmul.mubr.f32.gmra.mxu0 %v3867
      %v4022 = vpop.f32.mrf.mxu0
      %v4023 = vadd.f32 0.0, %v4022
      %v4024 = vpop.f32.mrf.mxu0
      %4025 = vmatprep.mubr.f32.mxu0 0.0
      %4026 = vmatmul.mubr.f32.gmra.mxu0 %v3868
      %v4027 = vpop.f32.mrf.mxu0
      %v4028 = vadd.f32 0.0, %v4027
      %v4029 = vpop.f32.mrf.mxu0
      %4030 = vmatprep.mubr.f32.mxu0 0.0
      %4031 = vmatmul.mubr.f32.gmra.mxu0 %v3869
      %v4032 = vpop.f32.mrf.mxu0
      %v4033 = vadd.f32 0.0, %v4032
      %v4034 = vpop.f32.mrf.mxu0
      %4035 = vmatprep.mubr.f32.mxu0 0.0
      %4036 = vmatmul.mubr.f32.gmra.mxu0 %v3870
      %v4037 = vpop.f32.mrf.mxu0
      %v4038 = vadd.f32 0.0, %v4037
      %v4039 = vpop.f32.mrf.mxu0
      %4040 = vmatprep.mubr.f32.mxu0 0.0
      %4041 = vmatmul.mubr.f32.gmra.mxu0 %v3871
      %v4042 = vpop.f32.mrf.mxu0
      %v4043 = vadd.f32 0.0, %v4042
      %v4044 = vpop.f32.mrf.mxu0
      %4045 = vmatprep.mubr.f32.mxu0 0.0
      %4046 = vmatmul.mubr.f32.gmra.mxu0 %v3872
      %v4047 = vpop.f32.mrf.mxu0
      %v4048 = vadd.f32 0.0, %v4047
      %v4049 = vpop.f32.mrf.mxu0
      %4050 = vmatprep.mubr.f32.mxu0 0.0
      %4051 = vmatmul.mubr.f32.gmra.mxu0 %v3873
      %v4052 = vpop.f32.mrf.mxu0
      %v4053 = vadd.f32 0.0, %v4052
      %v4054 = vpop.f32.mrf.mxu0
      %4055 = vmatprep.mubr.f32.mxu0 0.0
      %4056 = vmatmul.mubr.f32.gmra.mxu0 %v3874
      %v4057 = vpop.f32.mrf.mxu0
      %v4058 = vadd.f32 0.0, %v4057
      %v4059 = vpop.f32.mrf.mxu0
      %4060 = vmatprep.mubr.f32.mxu0 0.0
      %4061 = vmatmul.mubr.f32.gmra.mxu0 %v3875
      %v4062 = vpop.f32.mrf.mxu0
      %v4063 = vadd.f32 0.0, %v4062
      %v4064 = vpop.f32.mrf.mxu0
      %4065 = vmatprep.mubr.f32.mxu0 0.0
      %4066 = vmatmul.mubr.f32.gmra.mxu0 %v3876
      %v4067 = vpop.f32.mrf.mxu0
      %v4068 = vadd.f32 0.0, %v4067
      %v4069 = vpop.f32.mrf.mxu0
      %4070 = vmatprep.mubr.f32.mxu0 0.0
      %4071 = vmatmul.mubr.f32.gmra.mxu0 %v3877
      %v4072 = vpop.f32.mrf.mxu0
      %v4073 = vadd.f32 0.0, %v4072
      %v4074 = vpop.f32.mrf.mxu0
      %4075 = vmatprep.mubr.f32.mxu0 0.0
      %4076 = vmatmul.mubr.f32.gmra.mxu0 %v3878
      %v4077 = vpop.f32.mrf.mxu0
      %v4078 = vadd.f32 0.0, %v4077
      %v4079 = vpop.f32.mrf.mxu0
      %4080 = vmatprep.mubr.f32.mxu0 0.0
      %4081 = vmatmul.mubr.f32.gmra.mxu0 %v3879
      %v4082 = vpop.f32.mrf.mxu0
      %v4083 = vadd.f32 0.0, %v4082
      %v4084 = vpop.f32.mrf.mxu0
      %4085 = vmatprep.mubr.f32.mxu0 0.0
      %4086 = vmatmul.mubr.f32.gmra.mxu0 %v3880
      %v4087 = vpop.f32.mrf.mxu0
      %v4088 = vadd.f32 0.0, %v4087
      %v4089 = vpop.f32.mrf.mxu0
      %4090 = vmatprep.mubr.f32.mxu0 0.0
      %4091 = vmatmul.mubr.f32.gmra.mxu0 %v3881
      %v4092 = vpop.f32.mrf.mxu0
      %v4093 = vadd.f32 0.0, %v4092
      %v4094 = vpop.f32.mrf.mxu0
      %4095 = vmatprep.mubr.f32.mxu0 0.0
      %4096 = vmatmul.mubr.f32.gmra.mxu0 %v3882
      %v4097 = vpop.f32.mrf.mxu0
      %v4098 = vadd.f32 0.0, %v4097
      %v4099 = vpop.f32.mrf.mxu0
      %4100 = vmatprep.mubr.f32.mxu0 0.0
      %4101 = vmatmul.mubr.f32.gmra.mxu0 %v3883
      %v4102 = vpop.f32.mrf.mxu0
      %v4103 = vadd.f32 0.0, %v4102
      %v4104 = vpop.f32.mrf.mxu0
      %4105 = vmatprep.mubr.f32.mxu0 0.0
      %4106 = vmatmul.mubr.f32.gmra.mxu0 %v3884
      %v4107 = vpop.f32.mrf.mxu0
      %v4108 = vadd.f32 0.0, %v4107
      %v4109 = vpop.f32.mrf.mxu0
      %4110 = vmatprep.mubr.f32.mxu0 0.0
      %4111 = vmatmul.mubr.f32.gmra.mxu0 %v3885
      %v4112 = vpop.f32.mrf.mxu0
      %v4113 = vadd.f32 0.0, %v4112
      %v4114 = vpop.f32.mrf.mxu0
      %4115 = vmatprep.mubr.f32.mxu0 0.0
      %4116 = vmatmul.mubr.f32.gmra.mxu0 %v3886
      %v4117 = vpop.f32.mrf.mxu0
      %v4118 = vadd.f32 0.0, %v4117
      %v4119 = vpop.f32.mrf.mxu0
      %4120 = vmatprep.mubr.f32.mxu0 0.0
      %4121 = vmatmul.mubr.f32.gmra.mxu0 %v3887
      %v4122 = vpop.f32.mrf.mxu0
      %v4123 = vadd.f32 0.0, %v4122
      %v4124 = vpop.f32.mrf.mxu0
      %4125 = vmatprep.mubr.f32.mxu0 0.0
      %4126 = vmatmul.mubr.f32.gmra.mxu0 %v3888
      %v4127 = vpop.f32.mrf.mxu0
      %v4128 = vadd.f32 0.0, %v4127
      %v4129 = vpop.f32.mrf.mxu0
      %4130 = vdwg.mxu0
      %v4131 = vadd.f32 %v3699, %v3973
      %v4132 = vadd.f32 %v3704, %v3978
      %v4133 = vadd.f32 %v3709, %v3983
      %v4134 = vadd.f32 %v3714, %v3988
      %v4135 = vadd.f32 %v3719, %v3993
      %v4136 = vadd.f32 %v3724, %v3998
      %v4137 = vadd.f32 %v3729, %v4003
      %v4138 = vadd.f32 %v3734, %v4008
      %v4139 = vadd.f32 %v3739, %v4013
      %v4140 = vadd.f32 %v3744, %v4018
      %v4141 = vadd.f32 %v3749, %v4023
      %v4142 = vadd.f32 %v3754, %v4028
      %v4143 = vadd.f32 %v3759, %v4033
      %v4144 = vadd.f32 %v3764, %v4038
      %v4145 = vadd.f32 %v3769, %v4043
      %v4146 = vadd.f32 %v3774, %v4048
      %v4147 = vadd.f32 %v3779, %v4053
      %v4148 = vadd.f32 %v3784, %v4058
      %v4149 = vadd.f32 %v3789, %v4063
      %v4150 = vadd.f32 %v3794, %v4068
      %v4151 = vadd.f32 %v3799, %v4073
      %v4152 = vadd.f32 %v3804, %v4078
      %v4153 = vadd.f32 %v3809, %v4083
      %v4154 = vadd.f32 %v3814, %v4088
      %v4155 = vadd.f32 %v3819, %v4093
      %v4156 = vadd.f32 %v3824, %v4098
      %v4157 = vadd.f32 %v3829, %v4103
      %v4158 = vadd.f32 %v3834, %v4108
      %v4159 = vadd.f32 %v3839, %v4113
      %v4160 = vadd.f32 %v3844, %v4118
      %v4161 = vadd.f32 %v3849, %v4123
      %v4162 = vadd.f32 %v3854, %v4128
      %v4163 = vld [vmem:[%s3277] sm:$0xff]
      %v4164 = vld [vmem:[%s3277 + $0x8] sm:$0xff]
      %v4165 = vld [vmem:[%s3277 + $0x18] sm:$0xff]
      %v4166 = vld [vmem:[%s3277 + $0x20] sm:$0xff]
      %v4167 = vld [vmem:[%s3277 + $0x30] sm:$0xff]
      %v4168 = vld [vmem:[%s3277 + $0x38] sm:$0xff]
      %v4169 = vld [vmem:[%s3277 + $0x48] sm:$0xff]
      %v4170 = vld [vmem:[%s3277 + $0x50] sm:$0xff]
      %v4171 = vld [vmem:[%s3277 + $0x60] sm:$0xff]
      %v4172 = vld [vmem:[%s3277 + $0x68] sm:$0xff]
      %v4173 = vld [vmem:[%s3277 + $0x78] sm:$0xff]
      %v4174 = vld [vmem:[%s3277 + $0x80] sm:$0xff]
      %v4175 = vld [vmem:[%s3277 + $0x90] sm:$0xff]
      %v4176 = vld [vmem:[%s3277 + $0x98] sm:$0xff]
      %v4177 = vld [vmem:[%s3277 + $0xa8] sm:$0xff]
      %v4178 = vld [vmem:[%s3277 + $0xb0] sm:$0xff]
      %v4179 = vld [vmem:[%s3277 + $0xc0] sm:$0xff]
      %v4180 = vld [vmem:[%s3277 + $0xc8] sm:$0xff]
      %v4181 = vld [vmem:[%s3277 + $0xd8] sm:$0xff]
      %v4182 = vld [vmem:[%s3277 + $0xe0] sm:$0xff]
      %v4183 = vld [vmem:[%s3277 + $0xf0] sm:$0xff]
      %v4184 = vld [vmem:[%s3277 + $0xf8] sm:$0xff]
      %v4185 = vld [vmem:[%s3277 + $0x108] sm:$0xff]
      %v4186 = vld [vmem:[%s3277 + $0x110] sm:$0xff]
      %v4187 = vld [vmem:[%s3277 + $0x120] sm:$0xff]
      %v4188 = vld [vmem:[%s3277 + $0x128] sm:$0xff]
      %v4189 = vld [vmem:[%s3277 + $0x138] sm:$0xff]
      %v4190 = vld [vmem:[%s3277 + $0x140] sm:$0xff]
      %v4191 = vld [vmem:[%s3277 + $0x150] sm:$0xff]
      %v4192 = vld [vmem:[%s3277 + $0x158] sm:$0xff]
      %v4193 = vld [vmem:[%s3277 + $0x168] sm:$0xff]
      %v4194 = vld [vmem:[%s3277 + $0x170] sm:$0xff]
      %s4195 = scalar_lea.vmem %s3, 384
      %v4196 = vld [vmem:[%s4195] sm:$0xff]
      %v4197 = vld [vmem:[%s4195 + $0x8] sm:$0xff]
      %v4198 = vld [vmem:[%s4195 + $0x10] sm:$0xff]
      %v4199 = vld [vmem:[%s4195 + $0x18] sm:$0xff]
      %v4200 = vld [vmem:[%s4195 + $0x20] sm:$0xff]
      %v4201 = vld [vmem:[%s4195 + $0x28] sm:$0xff]
      %v4202 = vld [vmem:[%s4195 + $0x30] sm:$0xff]
      %v4203 = vld [vmem:[%s4195 + $0x38] sm:$0xff]
      %v4204 = vld [vmem:[%s4195 + $0x40] sm:$0xff]
      %v4205 = vld [vmem:[%s4195 + $0x48] sm:$0xff]
      %v4206 = vld [vmem:[%s4195 + $0x50] sm:$0xff]
      %v4207 = vld [vmem:[%s4195 + $0x58] sm:$0xff]
      %v4208 = vld [vmem:[%s4195 + $0x60] sm:$0xff]
      %v4209 = vld [vmem:[%s4195 + $0x68] sm:$0xff]
      %v4210 = vld [vmem:[%s4195 + $0x70] sm:$0xff]
      %v4211 = vld [vmem:[%s4195 + $0x78] sm:$0xff]
      %4212 = vmatprep.subr.mxu0 0.0
      %4213 = vmatpush1.msra.mxu0 %v4211
      %4214 = vmatprep.subr.mxu0 0.0
      %4215 = vmatpush1.msra.mxu0 %v4210
      %4216 = vmatprep.subr.mxu0 0.0
      %4217 = vmatpush1.msra.mxu0 %v4209
      %4218 = vmatprep.subr.mxu0 0.0
      %4219 = vmatpush1.msra.mxu0 %v4208
      %4220 = vmatprep.subr.mxu0 0.0
      %4221 = vmatpush1.msra.mxu0 %v4207
      %4222 = vmatprep.subr.mxu0 0.0
      %4223 = vmatpush1.msra.mxu0 %v4206
      %4224 = vmatprep.subr.mxu0 0.0
      %4225 = vmatpush1.msra.mxu0 %v4205
      %4226 = vmatprep.subr.mxu0 0.0
      %4227 = vmatpush1.msra.mxu0 %v4204
      %4228 = vmatprep.subr.mxu0 0.0
      %4229 = vmatpush1.msra.mxu0 %v4203
      %4230 = vmatprep.subr.mxu0 0.0
      %4231 = vmatpush1.msra.mxu0 %v4202
      %4232 = vmatprep.subr.mxu0 0.0
      %4233 = vmatpush1.msra.mxu0 %v4201
      %4234 = vmatprep.subr.mxu0 0.0
      %4235 = vmatpush1.msra.mxu0 %v4200
      %4236 = vmatprep.subr.mxu0 0.0
      %4237 = vmatpush1.msra.mxu0 %v4199
      %4238 = vmatprep.subr.mxu0 0.0
      %4239 = vmatpush1.msra.mxu0 %v4198
      %4240 = vmatprep.subr.mxu0 0.0
      %4241 = vmatpush1.msra.mxu0 %v4197
      %4242 = vmatprep.subr.mxu0 0.0
      %4243 = vmatpush1.msra.mxu0 %v4196
      %4244 = vmatprep.subr.mxu0 0.0
      %4245 = vmatpush2.msra.mxu0 0.0
      %4246 = vmatprep.subr.mxu0 0.0
      %4247 = vmatpush2.msra.mxu0 0.0
      %4248 = vmatprep.subr.mxu0 0.0
      %4249 = vmatpush2.msra.mxu0 0.0
      %4250 = vmatprep.subr.mxu0 0.0
      %4251 = vmatpush2.msra.mxu0 0.0
      %4252 = vmatprep.subr.mxu0 0.0
      %4253 = vmatpush2.msra.mxu0 0.0
      %4254 = vmatprep.subr.mxu0 0.0
      %4255 = vmatpush2.msra.mxu0 0.0
      %4256 = vmatprep.subr.mxu0 0.0
      %4257 = vmatpush2.msra.mxu0 0.0
      %4258 = vmatprep.subr.mxu0 0.0
      %4259 = vmatpush2.msra.mxu0 0.0
      %4260 = vmatprep.subr.mxu0 0.0
      %4261 = vmatpush2.msra.mxu0 0.0
      %4262 = vmatprep.subr.mxu0 0.0
      %4263 = vmatpush2.msra.mxu0 0.0
      %4264 = vmatprep.subr.mxu0 0.0
      %4265 = vmatpush2.msra.mxu0 0.0
      %4266 = vmatprep.subr.mxu0 0.0
      %4267 = vmatpush2.msra.mxu0 0.0
      %4268 = vmatprep.subr.mxu0 0.0
      %4269 = vmatpush2.msra.mxu0 0.0
      %4270 = vmatprep.subr.mxu0 0.0
      %4271 = vmatpush2.msra.mxu0 0.0
      %4272 = vmatprep.subr.mxu0 0.0
      %4273 = vmatpush2.msra.mxu0 0.0
      %4274 = vmatprep.subr.mxu0 0.0
      %4275 = vmatpush2.msra.mxu0 0.0
      %4276 = vmatprep.mubr.f32.mxu0 0.0
      %4277 = vmatmul.mubr.f32.gmra.mxu0 %v4163
      %v4278 = vpop.f32.mrf.mxu0
      %v4279 = vadd.f32 0.0, %v4278
      %v4280 = vpop.f32.mrf.mxu0
      %4281 = vmatprep.mubr.f32.mxu0 0.0
      %4282 = vmatmul.mubr.f32.gmra.mxu0 %v4164
      %v4283 = vpop.f32.mrf.mxu0
      %v4284 = vadd.f32 0.0, %v4283
      %v4285 = vpop.f32.mrf.mxu0
      %4286 = vmatprep.mubr.f32.mxu0 0.0
      %4287 = vmatmul.mubr.f32.gmra.mxu0 %v4165
      %v4288 = vpop.f32.mrf.mxu0
      %v4289 = vadd.f32 0.0, %v4288
      %v4290 = vpop.f32.mrf.mxu0
      %4291 = vmatprep.mubr.f32.mxu0 0.0
      %4292 = vmatmul.mubr.f32.gmra.mxu0 %v4166
      %v4293 = vpop.f32.mrf.mxu0
      %v4294 = vadd.f32 0.0, %v4293
      %v4295 = vpop.f32.mrf.mxu0
      %4296 = vmatprep.mubr.f32.mxu0 0.0
      %4297 = vmatmul.mubr.f32.gmra.mxu0 %v4167
      %v4298 = vpop.f32.mrf.mxu0
      %v4299 = vadd.f32 0.0, %v4298
      %v4300 = vpop.f32.mrf.mxu0
      %4301 = vmatprep.mubr.f32.mxu0 0.0
      %4302 = vmatmul.mubr.f32.gmra.mxu0 %v4168
      %v4303 = vpop.f32.mrf.mxu0
      %v4304 = vadd.f32 0.0, %v4303
      %v4305 = vpop.f32.mrf.mxu0
      %4306 = vmatprep.mubr.f32.mxu0 0.0
      %4307 = vmatmul.mubr.f32.gmra.mxu0 %v4169
      %v4308 = vpop.f32.mrf.mxu0
      %v4309 = vadd.f32 0.0, %v4308
      %v4310 = vpop.f32.mrf.mxu0
      %4311 = vmatprep.mubr.f32.mxu0 0.0
      %4312 = vmatmul.mubr.f32.gmra.mxu0 %v4170
      %v4313 = vpop.f32.mrf.mxu0
      %v4314 = vadd.f32 0.0, %v4313
      %v4315 = vpop.f32.mrf.mxu0
      %4316 = vmatprep.mubr.f32.mxu0 0.0
      %4317 = vmatmul.mubr.f32.gmra.mxu0 %v4171
      %v4318 = vpop.f32.mrf.mxu0
      %v4319 = vadd.f32 0.0, %v4318
      %v4320 = vpop.f32.mrf.mxu0
      %4321 = vmatprep.mubr.f32.mxu0 0.0
      %4322 = vmatmul.mubr.f32.gmra.mxu0 %v4172
      %v4323 = vpop.f32.mrf.mxu0
      %v4324 = vadd.f32 0.0, %v4323
      %v4325 = vpop.f32.mrf.mxu0
      %4326 = vmatprep.mubr.f32.mxu0 0.0
      %4327 = vmatmul.mubr.f32.gmra.mxu0 %v4173
      %v4328 = vpop.f32.mrf.mxu0
      %v4329 = vadd.f32 0.0, %v4328
      %v4330 = vpop.f32.mrf.mxu0
      %4331 = vmatprep.mubr.f32.mxu0 0.0
      %4332 = vmatmul.mubr.f32.gmra.mxu0 %v4174
      %v4333 = vpop.f32.mrf.mxu0
      %v4334 = vadd.f32 0.0, %v4333
      %v4335 = vpop.f32.mrf.mxu0
      %4336 = vmatprep.mubr.f32.mxu0 0.0
      %4337 = vmatmul.mubr.f32.gmra.mxu0 %v4175
      %v4338 = vpop.f32.mrf.mxu0
      %v4339 = vadd.f32 0.0, %v4338
      %v4340 = vpop.f32.mrf.mxu0
      %4341 = vmatprep.mubr.f32.mxu0 0.0
      %4342 = vmatmul.mubr.f32.gmra.mxu0 %v4176
      %v4343 = vpop.f32.mrf.mxu0
      %v4344 = vadd.f32 0.0, %v4343
      %v4345 = vpop.f32.mrf.mxu0
      %4346 = vmatprep.mubr.f32.mxu0 0.0
      %4347 = vmatmul.mubr.f32.gmra.mxu0 %v4177
      %v4348 = vpop.f32.mrf.mxu0
      %v4349 = vadd.f32 0.0, %v4348
      %v4350 = vpop.f32.mrf.mxu0
      %4351 = vmatprep.mubr.f32.mxu0 0.0
      %4352 = vmatmul.mubr.f32.gmra.mxu0 %v4178
      %v4353 = vpop.f32.mrf.mxu0
      %v4354 = vadd.f32 0.0, %v4353
      %v4355 = vpop.f32.mrf.mxu0
      %4356 = vmatprep.mubr.f32.mxu0 0.0
      %4357 = vmatmul.mubr.f32.gmra.mxu0 %v4179
      %v4358 = vpop.f32.mrf.mxu0
      %v4359 = vadd.f32 0.0, %v4358
      %v4360 = vpop.f32.mrf.mxu0
      %4361 = vmatprep.mubr.f32.mxu0 0.0
      %4362 = vmatmul.mubr.f32.gmra.mxu0 %v4180
      %v4363 = vpop.f32.mrf.mxu0
      %v4364 = vadd.f32 0.0, %v4363
      %v4365 = vpop.f32.mrf.mxu0
      %4366 = vmatprep.mubr.f32.mxu0 0.0
      %4367 = vmatmul.mubr.f32.gmra.mxu0 %v4181
      %v4368 = vpop.f32.mrf.mxu0
      %v4369 = vadd.f32 0.0, %v4368
      %v4370 = vpop.f32.mrf.mxu0
      %4371 = vmatprep.mubr.f32.mxu0 0.0
      %4372 = vmatmul.mubr.f32.gmra.mxu0 %v4182
      %v4373 = vpop.f32.mrf.mxu0
      %v4374 = vadd.f32 0.0, %v4373
      %v4375 = vpop.f32.mrf.mxu0
      %4376 = vmatprep.mubr.f32.mxu0 0.0
      %4377 = vmatmul.mubr.f32.gmra.mxu0 %v4183
      %v4378 = vpop.f32.mrf.mxu0
      %v4379 = vadd.f32 0.0, %v4378
      %v4380 = vpop.f32.mrf.mxu0
      %4381 = vmatprep.mubr.f32.mxu0 0.0
      %4382 = vmatmul.mubr.f32.gmra.mxu0 %v4184
      %v4383 = vpop.f32.mrf.mxu0
      %v4384 = vadd.f32 0.0, %v4383
      %v4385 = vpop.f32.mrf.mxu0
      %4386 = vmatprep.mubr.f32.mxu0 0.0
      %4387 = vmatmul.mubr.f32.gmra.mxu0 %v4185
      %v4388 = vpop.f32.mrf.mxu0
      %v4389 = vadd.f32 0.0, %v4388
      %v4390 = vpop.f32.mrf.mxu0
      %4391 = vmatprep.mubr.f32.mxu0 0.0
      %4392 = vmatmul.mubr.f32.gmra.mxu0 %v4186
      %v4393 = vpop.f32.mrf.mxu0
      %v4394 = vadd.f32 0.0, %v4393
      %v4395 = vpop.f32.mrf.mxu0
      %4396 = vmatprep.mubr.f32.mxu0 0.0
      %4397 = vmatmul.mubr.f32.gmra.mxu0 %v4187
      %v4398 = vpop.f32.mrf.mxu0
      %v4399 = vadd.f32 0.0, %v4398
      %v4400 = vpop.f32.mrf.mxu0
      %4401 = vmatprep.mubr.f32.mxu0 0.0
      %4402 = vmatmul.mubr.f32.gmra.mxu0 %v4188
      %v4403 = vpop.f32.mrf.mxu0
      %v4404 = vadd.f32 0.0, %v4403
      %v4405 = vpop.f32.mrf.mxu0
      %4406 = vmatprep.mubr.f32.mxu0 0.0
      %4407 = vmatmul.mubr.f32.gmra.mxu0 %v4189
      %v4408 = vpop.f32.mrf.mxu0
      %v4409 = vadd.f32 0.0, %v4408
      %v4410 = vpop.f32.mrf.mxu0
      %4411 = vmatprep.mubr.f32.mxu0 0.0
      %4412 = vmatmul.mubr.f32.gmra.mxu0 %v4190
      %v4413 = vpop.f32.mrf.mxu0
      %v4414 = vadd.f32 0.0, %v4413
      %v4415 = vpop.f32.mrf.mxu0
      %4416 = vmatprep.mubr.f32.mxu0 0.0
      %4417 = vmatmul.mubr.f32.gmra.mxu0 %v4191
      %v4418 = vpop.f32.mrf.mxu0
      %v4419 = vadd.f32 0.0, %v4418
      %v4420 = vpop.f32.mrf.mxu0
      %4421 = vmatprep.mubr.f32.mxu0 0.0
      %4422 = vmatmul.mubr.f32.gmra.mxu0 %v4192
      %v4423 = vpop.f32.mrf.mxu0
      %v4424 = vadd.f32 0.0, %v4423
      %v4425 = vpop.f32.mrf.mxu0
      %4426 = vmatprep.mubr.f32.mxu0 0.0
      %4427 = vmatmul.mubr.f32.gmra.mxu0 %v4193
      %v4428 = vpop.f32.mrf.mxu0
      %v4429 = vadd.f32 0.0, %v4428
      %v4430 = vpop.f32.mrf.mxu0
      %4431 = vmatprep.mubr.f32.mxu0 0.0
      %4432 = vmatmul.mubr.f32.gmra.mxu0 %v4194
      %v4433 = vpop.f32.mrf.mxu0
      %v4434 = vadd.f32 0.0, %v4433
      %v4435 = vpop.f32.mrf.mxu0
      %4436 = vdwg.mxu0
      %v4437 = vadd.f32 %v4131, %v4279
      %v4438 = vadd.f32 %v4132, %v4284
      %v4439 = vadd.f32 %v4133, %v4289
      %v4440 = vadd.f32 %v4134, %v4294
      %v4441 = vadd.f32 %v4135, %v4299
      %v4442 = vadd.f32 %v4136, %v4304
      %v4443 = vadd.f32 %v4137, %v4309
      %v4444 = vadd.f32 %v4138, %v4314
      %v4445 = vadd.f32 %v4139, %v4319
      %v4446 = vadd.f32 %v4140, %v4324
      %v4447 = vadd.f32 %v4141, %v4329
      %v4448 = vadd.f32 %v4142, %v4334
      %v4449 = vadd.f32 %v4143, %v4339
      %v4450 = vadd.f32 %v4144, %v4344
      %v4451 = vadd.f32 %v4145, %v4349
      %v4452 = vadd.f32 %v4146, %v4354
      %v4453 = vadd.f32 %v4147, %v4359
      %v4454 = vadd.f32 %v4148, %v4364
      %v4455 = vadd.f32 %v4149, %v4369
      %v4456 = vadd.f32 %v4150, %v4374
      %v4457 = vadd.f32 %v4151, %v4379
      %v4458 = vadd.f32 %v4152, %v4384
      %v4459 = vadd.f32 %v4153, %v4389
      %v4460 = vadd.f32 %v4154, %v4394
      %v4461 = vadd.f32 %v4155, %v4399
      %v4462 = vadd.f32 %v4156, %v4404
      %v4463 = vadd.f32 %v4157, %v4409
      %v4464 = vadd.f32 %v4158, %v4414
      %v4465 = vadd.f32 %v4159, %v4419
      %v4466 = vadd.f32 %v4160, %v4424
      %v4467 = vadd.f32 %v4161, %v4429
      %v4468 = vadd.f32 %v4162, %v4434
      %v4469 = vld [vmem:[%s3277 + $0x1] sm:$0xff]
      %v4470 = vld [vmem:[%s3277 + $0x9] sm:$0xff]
      %v4471 = vld [vmem:[%s3277 + $0x19] sm:$0xff]
      %v4472 = vld [vmem:[%s3277 + $0x21] sm:$0xff]
      %v4473 = vld [vmem:[%s3277 + $0x31] sm:$0xff]
      %v4474 = vld [vmem:[%s3277 + $0x39] sm:$0xff]
      %v4475 = vld [vmem:[%s3277 + $0x49] sm:$0xff]
      %v4476 = vld [vmem:[%s3277 + $0x51] sm:$0xff]
      %v4477 = vld [vmem:[%s3277 + $0x61] sm:$0xff]
      %v4478 = vld [vmem:[%s3277 + $0x69] sm:$0xff]
      %v4479 = vld [vmem:[%s3277 + $0x79] sm:$0xff]
      %v4480 = vld [vmem:[%s3277 + $0x81] sm:$0xff]
      %v4481 = vld [vmem:[%s3277 + $0x91] sm:$0xff]
      %v4482 = vld [vmem:[%s3277 + $0x99] sm:$0xff]
      %v4483 = vld [vmem:[%s3277 + $0xa9] sm:$0xff]
      %v4484 = vld [vmem:[%s3277 + $0xb1] sm:$0xff]
      %v4485 = vld [vmem:[%s3277 + $0xc1] sm:$0xff]
      %v4486 = vld [vmem:[%s3277 + $0xc9] sm:$0xff]
      %v4487 = vld [vmem:[%s3277 + $0xd9] sm:$0xff]
      %v4488 = vld [vmem:[%s3277 + $0xe1] sm:$0xff]
      %v4489 = vld [vmem:[%s3277 + $0xf1] sm:$0xff]
      %v4490 = vld [vmem:[%s3277 + $0xf9] sm:$0xff]
      %v4491 = vld [vmem:[%s3277 + $0x109] sm:$0xff]
      %v4492 = vld [vmem:[%s3277 + $0x111] sm:$0xff]
      %v4493 = vld [vmem:[%s3277 + $0x121] sm:$0xff]
      %v4494 = vld [vmem:[%s3277 + $0x129] sm:$0xff]
      %v4495 = vld [vmem:[%s3277 + $0x139] sm:$0xff]
      %v4496 = vld [vmem:[%s3277 + $0x141] sm:$0xff]
      %v4497 = vld [vmem:[%s3277 + $0x151] sm:$0xff]
      %v4498 = vld [vmem:[%s3277 + $0x159] sm:$0xff]
      %v4499 = vld [vmem:[%s3277 + $0x169] sm:$0xff]
      %v4500 = vld [vmem:[%s3277 + $0x171] sm:$0xff]
      %s4501 = scalar_lea.vmem %s3, 512
      %v4502 = vld [vmem:[%s4501] sm:$0xff]
      %v4503 = vld [vmem:[%s4501 + $0x8] sm:$0xff]
      %v4504 = vld [vmem:[%s4501 + $0x10] sm:$0xff]
      %v4505 = vld [vmem:[%s4501 + $0x18] sm:$0xff]
      %v4506 = vld [vmem:[%s4501 + $0x20] sm:$0xff]
      %v4507 = vld [vmem:[%s4501 + $0x28] sm:$0xff]
      %v4508 = vld [vmem:[%s4501 + $0x30] sm:$0xff]
      %v4509 = vld [vmem:[%s4501 + $0x38] sm:$0xff]
      %v4510 = vld [vmem:[%s4501 + $0x40] sm:$0xff]
      %v4511 = vld [vmem:[%s4501 + $0x48] sm:$0xff]
      %v4512 = vld [vmem:[%s4501 + $0x50] sm:$0xff]
      %v4513 = vld [vmem:[%s4501 + $0x58] sm:$0xff]
      %v4514 = vld [vmem:[%s4501 + $0x60] sm:$0xff]
      %v4515 = vld [vmem:[%s4501 + $0x68] sm:$0xff]
      %v4516 = vld [vmem:[%s4501 + $0x70] sm:$0xff]
      %v4517 = vld [vmem:[%s4501 + $0x78] sm:$0xff]
      %4518 = vmatprep.subr.mxu0 0.0
      %4519 = vmatpush1.msra.mxu0 %v4517
      %4520 = vmatprep.subr.mxu0 0.0
      %4521 = vmatpush1.msra.mxu0 %v4516
      %4522 = vmatprep.subr.mxu0 0.0
      %4523 = vmatpush1.msra.mxu0 %v4515
      %4524 = vmatprep.subr.mxu0 0.0
      %4525 = vmatpush1.msra.mxu0 %v4514
      %4526 = vmatprep.subr.mxu0 0.0
      %4527 = vmatpush1.msra.mxu0 %v4513
      %4528 = vmatprep.subr.mxu0 0.0
      %4529 = vmatpush1.msra.mxu0 %v4512
      %4530 = vmatprep.subr.mxu0 0.0
      %4531 = vmatpush1.msra.mxu0 %v4511
      %4532 = vmatprep.subr.mxu0 0.0
      %4533 = vmatpush1.msra.mxu0 %v4510
      %4534 = vmatprep.subr.mxu0 0.0
      %4535 = vmatpush1.msra.mxu0 %v4509
      %4536 = vmatprep.subr.mxu0 0.0
      %4537 = vmatpush1.msra.mxu0 %v4508
      %4538 = vmatprep.subr.mxu0 0.0
      %4539 = vmatpush1.msra.mxu0 %v4507
      %4540 = vmatprep.subr.mxu0 0.0
      %4541 = vmatpush1.msra.mxu0 %v4506
      %4542 = vmatprep.subr.mxu0 0.0
      %4543 = vmatpush1.msra.mxu0 %v4505
      %4544 = vmatprep.subr.mxu0 0.0
      %4545 = vmatpush1.msra.mxu0 %v4504
      %4546 = vmatprep.subr.mxu0 0.0
      %4547 = vmatpush1.msra.mxu0 %v4503
      %4548 = vmatprep.subr.mxu0 0.0
      %4549 = vmatpush1.msra.mxu0 %v4502
      %4550 = vmatprep.subr.mxu0 0.0
      %4551 = vmatpush2.msra.mxu0 0.0
      %4552 = vmatprep.subr.mxu0 0.0
      %4553 = vmatpush2.msra.mxu0 0.0
      %4554 = vmatprep.subr.mxu0 0.0
      %4555 = vmatpush2.msra.mxu0 0.0
      %4556 = vmatprep.subr.mxu0 0.0
      %4557 = vmatpush2.msra.mxu0 0.0
      %4558 = vmatprep.subr.mxu0 0.0
      %4559 = vmatpush2.msra.mxu0 0.0
      %4560 = vmatprep.subr.mxu0 0.0
      %4561 = vmatpush2.msra.mxu0 0.0
      %4562 = vmatprep.subr.mxu0 0.0
      %4563 = vmatpush2.msra.mxu0 0.0
      %4564 = vmatprep.subr.mxu0 0.0
      %4565 = vmatpush2.msra.mxu0 0.0
      %4566 = vmatprep.subr.mxu0 0.0
      %4567 = vmatpush2.msra.mxu0 0.0
      %4568 = vmatprep.subr.mxu0 0.0
      %4569 = vmatpush2.msra.mxu0 0.0
      %4570 = vmatprep.subr.mxu0 0.0
      %4571 = vmatpush2.msra.mxu0 0.0
      %4572 = vmatprep.subr.mxu0 0.0
      %4573 = vmatpush2.msra.mxu0 0.0
      %4574 = vmatprep.subr.mxu0 0.0
      %4575 = vmatpush2.msra.mxu0 0.0
      %4576 = vmatprep.subr.mxu0 0.0
      %4577 = vmatpush2.msra.mxu0 0.0
      %4578 = vmatprep.subr.mxu0 0.0
      %4579 = vmatpush2.msra.mxu0 0.0
      %4580 = vmatprep.subr.mxu0 0.0
      %4581 = vmatpush2.msra.mxu0 0.0
      %4582 = vmatprep.mubr.f32.mxu0 0.0
      %4583 = vmatmul.mubr.f32.gmra.mxu0 %v4469
      %v4584 = vpop.f32.mrf.mxu0
      %v4585 = vadd.f32 0.0, %v4584
      %v4586 = vpop.f32.mrf.mxu0
      %4587 = vmatprep.mubr.f32.mxu0 0.0
      %4588 = vmatmul.mubr.f32.gmra.mxu0 %v4470
      %v4589 = vpop.f32.mrf.mxu0
      %v4590 = vadd.f32 0.0, %v4589
      %v4591 = vpop.f32.mrf.mxu0
      %4592 = vmatprep.mubr.f32.mxu0 0.0
      %4593 = vmatmul.mubr.f32.gmra.mxu0 %v4471
      %v4594 = vpop.f32.mrf.mxu0
      %v4595 = vadd.f32 0.0, %v4594
      %v4596 = vpop.f32.mrf.mxu0
      %4597 = vmatprep.mubr.f32.mxu0 0.0
      %4598 = vmatmul.mubr.f32.gmra.mxu0 %v4472
      %v4599 = vpop.f32.mrf.mxu0
      %v4600 = vadd.f32 0.0, %v4599
      %v4601 = vpop.f32.mrf.mxu0
      %4602 = vmatprep.mubr.f32.mxu0 0.0
      %4603 = vmatmul.mubr.f32.gmra.mxu0 %v4473
      %v4604 = vpop.f32.mrf.mxu0
      %v4605 = vadd.f32 0.0, %v4604
      %v4606 = vpop.f32.mrf.mxu0
      %4607 = vmatprep.mubr.f32.mxu0 0.0
      %4608 = vmatmul.mubr.f32.gmra.mxu0 %v4474
      %v4609 = vpop.f32.mrf.mxu0
      %v4610 = vadd.f32 0.0, %v4609
      %v4611 = vpop.f32.mrf.mxu0
      %4612 = vmatprep.mubr.f32.mxu0 0.0
      %4613 = vmatmul.mubr.f32.gmra.mxu0 %v4475
      %v4614 = vpop.f32.mrf.mxu0
      %v4615 = vadd.f32 0.0, %v4614
      %v4616 = vpop.f32.mrf.mxu0
      %4617 = vmatprep.mubr.f32.mxu0 0.0
      %4618 = vmatmul.mubr.f32.gmra.mxu0 %v4476
      %v4619 = vpop.f32.mrf.mxu0
      %v4620 = vadd.f32 0.0, %v4619
      %v4621 = vpop.f32.mrf.mxu0
      %4622 = vmatprep.mubr.f32.mxu0 0.0
      %4623 = vmatmul.mubr.f32.gmra.mxu0 %v4477
      %v4624 = vpop.f32.mrf.mxu0
      %v4625 = vadd.f32 0.0, %v4624
      %v4626 = vpop.f32.mrf.mxu0
      %4627 = vmatprep.mubr.f32.mxu0 0.0
      %4628 = vmatmul.mubr.f32.gmra.mxu0 %v4478
      %v4629 = vpop.f32.mrf.mxu0
      %v4630 = vadd.f32 0.0, %v4629
      %v4631 = vpop.f32.mrf.mxu0
      %4632 = vmatprep.mubr.f32.mxu0 0.0
      %4633 = vmatmul.mubr.f32.gmra.mxu0 %v4479
      %v4634 = vpop.f32.mrf.mxu0
      %v4635 = vadd.f32 0.0, %v4634
      %v4636 = vpop.f32.mrf.mxu0
      %4637 = vmatprep.mubr.f32.mxu0 0.0
      %4638 = vmatmul.mubr.f32.gmra.mxu0 %v4480
      %v4639 = vpop.f32.mrf.mxu0
      %v4640 = vadd.f32 0.0, %v4639
      %v4641 = vpop.f32.mrf.mxu0
      %4642 = vmatprep.mubr.f32.mxu0 0.0
      %4643 = vmatmul.mubr.f32.gmra.mxu0 %v4481
      %v4644 = vpop.f32.mrf.mxu0
      %v4645 = vadd.f32 0.0, %v4644
      %v4646 = vpop.f32.mrf.mxu0
      %4647 = vmatprep.mubr.f32.mxu0 0.0
      %4648 = vmatmul.mubr.f32.gmra.mxu0 %v4482
      %v4649 = vpop.f32.mrf.mxu0
      %v4650 = vadd.f32 0.0, %v4649
      %v4651 = vpop.f32.mrf.mxu0
      %4652 = vmatprep.mubr.f32.mxu0 0.0
      %4653 = vmatmul.mubr.f32.gmra.mxu0 %v4483
      %v4654 = vpop.f32.mrf.mxu0
      %v4655 = vadd.f32 0.0, %v4654
      %v4656 = vpop.f32.mrf.mxu0
      %4657 = vmatprep.mubr.f32.mxu0 0.0
      %4658 = vmatmul.mubr.f32.gmra.mxu0 %v4484
      %v4659 = vpop.f32.mrf.mxu0
      %v4660 = vadd.f32 0.0, %v4659
      %v4661 = vpop.f32.mrf.mxu0
      %4662 = vmatprep.mubr.f32.mxu0 0.0
      %4663 = vmatmul.mubr.f32.gmra.mxu0 %v4485
      %v4664 = vpop.f32.mrf.mxu0
      %v4665 = vadd.f32 0.0, %v4664
      %v4666 = vpop.f32.mrf.mxu0
      %4667 = vmatprep.mubr.f32.mxu0 0.0
      %4668 = vmatmul.mubr.f32.gmra.mxu0 %v4486
      %v4669 = vpop.f32.mrf.mxu0
      %v4670 = vadd.f32 0.0, %v4669
      %v4671 = vpop.f32.mrf.mxu0
      %4672 = vmatprep.mubr.f32.mxu0 0.0
      %4673 = vmatmul.mubr.f32.gmra.mxu0 %v4487
      %v4674 = vpop.f32.mrf.mxu0
      %v4675 = vadd.f32 0.0, %v4674
      %v4676 = vpop.f32.mrf.mxu0
      %4677 = vmatprep.mubr.f32.mxu0 0.0
      %4678 = vmatmul.mubr.f32.gmra.mxu0 %v4488
      %v4679 = vpop.f32.mrf.mxu0
      %v4680 = vadd.f32 0.0, %v4679
      %v4681 = vpop.f32.mrf.mxu0
      %4682 = vmatprep.mubr.f32.mxu0 0.0
      %4683 = vmatmul.mubr.f32.gmra.mxu0 %v4489
      %v4684 = vpop.f32.mrf.mxu0
      %v4685 = vadd.f32 0.0, %v4684
      %v4686 = vpop.f32.mrf.mxu0
      %4687 = vmatprep.mubr.f32.mxu0 0.0
      %4688 = vmatmul.mubr.f32.gmra.mxu0 %v4490
      %v4689 = vpop.f32.mrf.mxu0
      %v4690 = vadd.f32 0.0, %v4689
      %v4691 = vpop.f32.mrf.mxu0
      %4692 = vmatprep.mubr.f32.mxu0 0.0
      %4693 = vmatmul.mubr.f32.gmra.mxu0 %v4491
      %v4694 = vpop.f32.mrf.mxu0
      %v4695 = vadd.f32 0.0, %v4694
      %v4696 = vpop.f32.mrf.mxu0
      %4697 = vmatprep.mubr.f32.mxu0 0.0
      %4698 = vmatmul.mubr.f32.gmra.mxu0 %v4492
      %v4699 = vpop.f32.mrf.mxu0
      %v4700 = vadd.f32 0.0, %v4699
      %v4701 = vpop.f32.mrf.mxu0
      %4702 = vmatprep.mubr.f32.mxu0 0.0
      %4703 = vmatmul.mubr.f32.gmra.mxu0 %v4493
      %v4704 = vpop.f32.mrf.mxu0
      %v4705 = vadd.f32 0.0, %v4704
      %v4706 = vpop.f32.mrf.mxu0
      %4707 = vmatprep.mubr.f32.mxu0 0.0
      %4708 = vmatmul.mubr.f32.gmra.mxu0 %v4494
      %v4709 = vpop.f32.mrf.mxu0
      %v4710 = vadd.f32 0.0, %v4709
      %v4711 = vpop.f32.mrf.mxu0
      %4712 = vmatprep.mubr.f32.mxu0 0.0
      %4713 = vmatmul.mubr.f32.gmra.mxu0 %v4495
      %v4714 = vpop.f32.mrf.mxu0
      %v4715 = vadd.f32 0.0, %v4714
      %v4716 = vpop.f32.mrf.mxu0
      %4717 = vmatprep.mubr.f32.mxu0 0.0
      %4718 = vmatmul.mubr.f32.gmra.mxu0 %v4496
      %v4719 = vpop.f32.mrf.mxu0
      %v4720 = vadd.f32 0.0, %v4719
      %v4721 = vpop.f32.mrf.mxu0
      %4722 = vmatprep.mubr.f32.mxu0 0.0
      %4723 = vmatmul.mubr.f32.gmra.mxu0 %v4497
      %v4724 = vpop.f32.mrf.mxu0
      %v4725 = vadd.f32 0.0, %v4724
      %v4726 = vpop.f32.mrf.mxu0
      %4727 = vmatprep.mubr.f32.mxu0 0.0
      %4728 = vmatmul.mubr.f32.gmra.mxu0 %v4498
      %v4729 = vpop.f32.mrf.mxu0
      %v4730 = vadd.f32 0.0, %v4729
      %v4731 = vpop.f32.mrf.mxu0
      %4732 = vmatprep.mubr.f32.mxu0 0.0
      %4733 = vmatmul.mubr.f32.gmra.mxu0 %v4499
      %v4734 = vpop.f32.mrf.mxu0
      %v4735 = vadd.f32 0.0, %v4734
      %v4736 = vpop.f32.mrf.mxu0
      %4737 = vmatprep.mubr.f32.mxu0 0.0
      %4738 = vmatmul.mubr.f32.gmra.mxu0 %v4500
      %v4739 = vpop.f32.mrf.mxu0
      %v4740 = vadd.f32 0.0, %v4739
      %v4741 = vpop.f32.mrf.mxu0
      %4742 = vdwg.mxu0
      %v4743 = vadd.f32 %v4437, %v4585
      %v4744 = vadd.f32 %v4438, %v4590
      %v4745 = vadd.f32 %v4439, %v4595
      %v4746 = vadd.f32 %v4440, %v4600
      %v4747 = vadd.f32 %v4441, %v4605
      %v4748 = vadd.f32 %v4442, %v4610
      %v4749 = vadd.f32 %v4443, %v4615
      %v4750 = vadd.f32 %v4444, %v4620
      %v4751 = vadd.f32 %v4445, %v4625
      %v4752 = vadd.f32 %v4446, %v4630
      %v4753 = vadd.f32 %v4447, %v4635
      %v4754 = vadd.f32 %v4448, %v4640
      %v4755 = vadd.f32 %v4449, %v4645
      %v4756 = vadd.f32 %v4450, %v4650
      %v4757 = vadd.f32 %v4451, %v4655
      %v4758 = vadd.f32 %v4452, %v4660
      %v4759 = vadd.f32 %v4453, %v4665
      %v4760 = vadd.f32 %v4454, %v4670
      %v4761 = vadd.f32 %v4455, %v4675
      %v4762 = vadd.f32 %v4456, %v4680
      %v4763 = vadd.f32 %v4457, %v4685
      %v4764 = vadd.f32 %v4458, %v4690
      %v4765 = vadd.f32 %v4459, %v4695
      %v4766 = vadd.f32 %v4460, %v4700
      %v4767 = vadd.f32 %v4461, %v4705
      %v4768 = vadd.f32 %v4462, %v4710
      %v4769 = vadd.f32 %v4463, %v4715
      %v4770 = vadd.f32 %v4464, %v4720
      %v4771 = vadd.f32 %v4465, %v4725
      %v4772 = vadd.f32 %v4466, %v4730
      %v4773 = vadd.f32 %v4467, %v4735
      %v4774 = vadd.f32 %v4468, %v4740
      %v4775 = vld [vmem:[%s3277 + $0x2] sm:$0xff]
      %v4776 = vld [vmem:[%s3277 + $0xa] sm:$0xff]
      %v4777 = vld [vmem:[%s3277 + $0x1a] sm:$0xff]
      %v4778 = vld [vmem:[%s3277 + $0x22] sm:$0xff]
      %v4779 = vld [vmem:[%s3277 + $0x32] sm:$0xff]
      %v4780 = vld [vmem:[%s3277 + $0x3a] sm:$0xff]
      %v4781 = vld [vmem:[%s3277 + $0x4a] sm:$0xff]
      %v4782 = vld [vmem:[%s3277 + $0x52] sm:$0xff]
      %v4783 = vld [vmem:[%s3277 + $0x62] sm:$0xff]
      %v4784 = vld [vmem:[%s3277 + $0x6a] sm:$0xff]
      %v4785 = vld [vmem:[%s3277 + $0x7a] sm:$0xff]
      %v4786 = vld [vmem:[%s3277 + $0x82] sm:$0xff]
      %v4787 = vld [vmem:[%s3277 + $0x92] sm:$0xff]
      %v4788 = vld [vmem:[%s3277 + $0x9a] sm:$0xff]
      %v4789 = vld [vmem:[%s3277 + $0xaa] sm:$0xff]
      %v4790 = vld [vmem:[%s3277 + $0xb2] sm:$0xff]
      %v4791 = vld [vmem:[%s3277 + $0xc2] sm:$0xff]
      %v4792 = vld [vmem:[%s3277 + $0xca] sm:$0xff]
      %v4793 = vld [vmem:[%s3277 + $0xda] sm:$0xff]
      %v4794 = vld [vmem:[%s3277 + $0xe2] sm:$0xff]
      %v4795 = vld [vmem:[%s3277 + $0xf2] sm:$0xff]
      %v4796 = vld [vmem:[%s3277 + $0xfa] sm:$0xff]
      %v4797 = vld [vmem:[%s3277 + $0x10a] sm:$0xff]
      %v4798 = vld [vmem:[%s3277 + $0x112] sm:$0xff]
      %v4799 = vld [vmem:[%s3277 + $0x122] sm:$0xff]
      %v4800 = vld [vmem:[%s3277 + $0x12a] sm:$0xff]
      %v4801 = vld [vmem:[%s3277 + $0x13a] sm:$0xff]
      %v4802 = vld [vmem:[%s3277 + $0x142] sm:$0xff]
      %v4803 = vld [vmem:[%s3277 + $0x152] sm:$0xff]
      %v4804 = vld [vmem:[%s3277 + $0x15a] sm:$0xff]
      %v4805 = vld [vmem:[%s3277 + $0x16a] sm:$0xff]
      %v4806 = vld [vmem:[%s3277 + $0x172] sm:$0xff]
      %s4807 = scalar_lea.vmem %s3, 640
      %v4808 = vld [vmem:[%s4807] sm:$0xff]
      %v4809 = vld [vmem:[%s4807 + $0x8] sm:$0xff]
      %v4810 = vld [vmem:[%s4807 + $0x10] sm:$0xff]
      %v4811 = vld [vmem:[%s4807 + $0x18] sm:$0xff]
      %v4812 = vld [vmem:[%s4807 + $0x20] sm:$0xff]
      %v4813 = vld [vmem:[%s4807 + $0x28] sm:$0xff]
      %v4814 = vld [vmem:[%s4807 + $0x30] sm:$0xff]
      %v4815 = vld [vmem:[%s4807 + $0x38] sm:$0xff]
      %v4816 = vld [vmem:[%s4807 + $0x40] sm:$0xff]
      %v4817 = vld [vmem:[%s4807 + $0x48] sm:$0xff]
      %v4818 = vld [vmem:[%s4807 + $0x50] sm:$0xff]
      %v4819 = vld [vmem:[%s4807 + $0x58] sm:$0xff]
      %v4820 = vld [vmem:[%s4807 + $0x60] sm:$0xff]
      %v4821 = vld [vmem:[%s4807 + $0x68] sm:$0xff]
      %v4822 = vld [vmem:[%s4807 + $0x70] sm:$0xff]
      %v4823 = vld [vmem:[%s4807 + $0x78] sm:$0xff]
      %4824 = vmatprep.subr.mxu0 0.0
      %4825 = vmatpush1.msra.mxu0 %v4823
      %4826 = vmatprep.subr.mxu0 0.0
      %4827 = vmatpush1.msra.mxu0 %v4822
      %4828 = vmatprep.subr.mxu0 0.0
      %4829 = vmatpush1.msra.mxu0 %v4821
      %4830 = vmatprep.subr.mxu0 0.0
      %4831 = vmatpush1.msra.mxu0 %v4820
      %4832 = vmatprep.subr.mxu0 0.0
      %4833 = vmatpush1.msra.mxu0 %v4819
      %4834 = vmatprep.subr.mxu0 0.0
      %4835 = vmatpush1.msra.mxu0 %v4818
      %4836 = vmatprep.subr.mxu0 0.0
      %4837 = vmatpush1.msra.mxu0 %v4817
      %4838 = vmatprep.subr.mxu0 0.0
      %4839 = vmatpush1.msra.mxu0 %v4816
      %4840 = vmatprep.subr.mxu0 0.0
      %4841 = vmatpush1.msra.mxu0 %v4815
      %4842 = vmatprep.subr.mxu0 0.0
      %4843 = vmatpush1.msra.mxu0 %v4814
      %4844 = vmatprep.subr.mxu0 0.0
      %4845 = vmatpush1.msra.mxu0 %v4813
      %4846 = vmatprep.subr.mxu0 0.0
      %4847 = vmatpush1.msra.mxu0 %v4812
      %4848 = vmatprep.subr.mxu0 0.0
      %4849 = vmatpush1.msra.mxu0 %v4811
      %4850 = vmatprep.subr.mxu0 0.0
      %4851 = vmatpush1.msra.mxu0 %v4810
      %4852 = vmatprep.subr.mxu0 0.0
      %4853 = vmatpush1.msra.mxu0 %v4809
      %4854 = vmatprep.subr.mxu0 0.0
      %4855 = vmatpush1.msra.mxu0 %v4808
      %4856 = vmatprep.subr.mxu0 0.0
      %4857 = vmatpush2.msra.mxu0 0.0
      %4858 = vmatprep.subr.mxu0 0.0
      %4859 = vmatpush2.msra.mxu0 0.0
      %4860 = vmatprep.subr.mxu0 0.0
      %4861 = vmatpush2.msra.mxu0 0.0
      %4862 = vmatprep.subr.mxu0 0.0
      %4863 = vmatpush2.msra.mxu0 0.0
      %4864 = vmatprep.subr.mxu0 0.0
      %4865 = vmatpush2.msra.mxu0 0.0
      %4866 = vmatprep.subr.mxu0 0.0
      %4867 = vmatpush2.msra.mxu0 0.0
      %4868 = vmatprep.subr.mxu0 0.0
      %4869 = vmatpush2.msra.mxu0 0.0
      %4870 = vmatprep.subr.mxu0 0.0
      %4871 = vmatpush2.msra.mxu0 0.0
      %4872 = vmatprep.subr.mxu0 0.0
      %4873 = vmatpush2.msra.mxu0 0.0
      %4874 = vmatprep.subr.mxu0 0.0
      %4875 = vmatpush2.msra.mxu0 0.0
      %4876 = vmatprep.subr.mxu0 0.0
      %4877 = vmatpush2.msra.mxu0 0.0
      %4878 = vmatprep.subr.mxu0 0.0
      %4879 = vmatpush2.msra.mxu0 0.0
      %4880 = vmatprep.subr.mxu0 0.0
      %4881 = vmatpush2.msra.mxu0 0.0
      %4882 = vmatprep.subr.mxu0 0.0
      %4883 = vmatpush2.msra.mxu0 0.0
      %4884 = vmatprep.subr.mxu0 0.0
      %4885 = vmatpush2.msra.mxu0 0.0
      %4886 = vmatprep.subr.mxu0 0.0
      %4887 = vmatpush2.msra.mxu0 0.0
      %4888 = vmatprep.mubr.f32.mxu0 0.0
      %4889 = vmatmul.mubr.f32.gmra.mxu0 %v4775
      %v4890 = vpop.f32.mrf.mxu0
      %v4891 = vadd.f32 0.0, %v4890
      %v4892 = vpop.f32.mrf.mxu0
      %4893 = vmatprep.mubr.f32.mxu0 0.0
      %4894 = vmatmul.mubr.f32.gmra.mxu0 %v4776
      %v4895 = vpop.f32.mrf.mxu0
      %v4896 = vadd.f32 0.0, %v4895
      %v4897 = vpop.f32.mrf.mxu0
      %4898 = vmatprep.mubr.f32.mxu0 0.0
      %4899 = vmatmul.mubr.f32.gmra.mxu0 %v4777
      %v4900 = vpop.f32.mrf.mxu0
      %v4901 = vadd.f32 0.0, %v4900
      %v4902 = vpop.f32.mrf.mxu0
      %4903 = vmatprep.mubr.f32.mxu0 0.0
      %4904 = vmatmul.mubr.f32.gmra.mxu0 %v4778
      %v4905 = vpop.f32.mrf.mxu0
      %v4906 = vadd.f32 0.0, %v4905
      %v4907 = vpop.f32.mrf.mxu0
      %4908 = vmatprep.mubr.f32.mxu0 0.0
      %4909 = vmatmul.mubr.f32.gmra.mxu0 %v4779
      %v4910 = vpop.f32.mrf.mxu0
      %v4911 = vadd.f32 0.0, %v4910
      %v4912 = vpop.f32.mrf.mxu0
      %4913 = vmatprep.mubr.f32.mxu0 0.0
      %4914 = vmatmul.mubr.f32.gmra.mxu0 %v4780
      %v4915 = vpop.f32.mrf.mxu0
      %v4916 = vadd.f32 0.0, %v4915
      %v4917 = vpop.f32.mrf.mxu0
      %4918 = vmatprep.mubr.f32.mxu0 0.0
      %4919 = vmatmul.mubr.f32.gmra.mxu0 %v4781
      %v4920 = vpop.f32.mrf.mxu0
      %v4921 = vadd.f32 0.0, %v4920
      %v4922 = vpop.f32.mrf.mxu0
      %4923 = vmatprep.mubr.f32.mxu0 0.0
      %4924 = vmatmul.mubr.f32.gmra.mxu0 %v4782
      %v4925 = vpop.f32.mrf.mxu0
      %v4926 = vadd.f32 0.0, %v4925
      %v4927 = vpop.f32.mrf.mxu0
      %4928 = vmatprep.mubr.f32.mxu0 0.0
      %4929 = vmatmul.mubr.f32.gmra.mxu0 %v4783
      %v4930 = vpop.f32.mrf.mxu0
      %v4931 = vadd.f32 0.0, %v4930
      %v4932 = vpop.f32.mrf.mxu0
      %4933 = vmatprep.mubr.f32.mxu0 0.0
      %4934 = vmatmul.mubr.f32.gmra.mxu0 %v4784
      %v4935 = vpop.f32.mrf.mxu0
      %v4936 = vadd.f32 0.0, %v4935
      %v4937 = vpop.f32.mrf.mxu0
      %4938 = vmatprep.mubr.f32.mxu0 0.0
      %4939 = vmatmul.mubr.f32.gmra.mxu0 %v4785
      %v4940 = vpop.f32.mrf.mxu0
      %v4941 = vadd.f32 0.0, %v4940
      %v4942 = vpop.f32.mrf.mxu0
      %4943 = vmatprep.mubr.f32.mxu0 0.0
      %4944 = vmatmul.mubr.f32.gmra.mxu0 %v4786
      %v4945 = vpop.f32.mrf.mxu0
      %v4946 = vadd.f32 0.0, %v4945
      %v4947 = vpop.f32.mrf.mxu0
      %4948 = vmatprep.mubr.f32.mxu0 0.0
      %4949 = vmatmul.mubr.f32.gmra.mxu0 %v4787
      %v4950 = vpop.f32.mrf.mxu0
      %v4951 = vadd.f32 0.0, %v4950
      %v4952 = vpop.f32.mrf.mxu0
      %4953 = vmatprep.mubr.f32.mxu0 0.0
      %4954 = vmatmul.mubr.f32.gmra.mxu0 %v4788
      %v4955 = vpop.f32.mrf.mxu0
      %v4956 = vadd.f32 0.0, %v4955
      %v4957 = vpop.f32.mrf.mxu0
      %4958 = vmatprep.mubr.f32.mxu0 0.0
      %4959 = vmatmul.mubr.f32.gmra.mxu0 %v4789
      %v4960 = vpop.f32.mrf.mxu0
      %v4961 = vadd.f32 0.0, %v4960
      %v4962 = vpop.f32.mrf.mxu0
      %4963 = vmatprep.mubr.f32.mxu0 0.0
      %4964 = vmatmul.mubr.f32.gmra.mxu0 %v4790
      %v4965 = vpop.f32.mrf.mxu0
      %v4966 = vadd.f32 0.0, %v4965
      %v4967 = vpop.f32.mrf.mxu0
      %4968 = vmatprep.mubr.f32.mxu0 0.0
      %4969 = vmatmul.mubr.f32.gmra.mxu0 %v4791
      %v4970 = vpop.f32.mrf.mxu0
      %v4971 = vadd.f32 0.0, %v4970
      %v4972 = vpop.f32.mrf.mxu0
      %4973 = vmatprep.mubr.f32.mxu0 0.0
      %4974 = vmatmul.mubr.f32.gmra.mxu0 %v4792
      %v4975 = vpop.f32.mrf.mxu0
      %v4976 = vadd.f32 0.0, %v4975
      %v4977 = vpop.f32.mrf.mxu0
      %4978 = vmatprep.mubr.f32.mxu0 0.0
      %4979 = vmatmul.mubr.f32.gmra.mxu0 %v4793
      %v4980 = vpop.f32.mrf.mxu0
      %v4981 = vadd.f32 0.0, %v4980
      %v4982 = vpop.f32.mrf.mxu0
      %4983 = vmatprep.mubr.f32.mxu0 0.0
      %4984 = vmatmul.mubr.f32.gmra.mxu0 %v4794
      %v4985 = vpop.f32.mrf.mxu0
      %v4986 = vadd.f32 0.0, %v4985
      %v4987 = vpop.f32.mrf.mxu0
      %4988 = vmatprep.mubr.f32.mxu0 0.0
      %4989 = vmatmul.mubr.f32.gmra.mxu0 %v4795
      %v4990 = vpop.f32.mrf.mxu0
      %v4991 = vadd.f32 0.0, %v4990
      %v4992 = vpop.f32.mrf.mxu0
      %4993 = vmatprep.mubr.f32.mxu0 0.0
      %4994 = vmatmul.mubr.f32.gmra.mxu0 %v4796
      %v4995 = vpop.f32.mrf.mxu0
      %v4996 = vadd.f32 0.0, %v4995
      %v4997 = vpop.f32.mrf.mxu0
      %4998 = vmatprep.mubr.f32.mxu0 0.0
      %4999 = vmatmul.mubr.f32.gmra.mxu0 %v4797
      %v5000 = vpop.f32.mrf.mxu0
      %v5001 = vadd.f32 0.0, %v5000
      %v5002 = vpop.f32.mrf.mxu0
      %5003 = vmatprep.mubr.f32.mxu0 0.0
      %5004 = vmatmul.mubr.f32.gmra.mxu0 %v4798
      %v5005 = vpop.f32.mrf.mxu0
      %v5006 = vadd.f32 0.0, %v5005
      %v5007 = vpop.f32.mrf.mxu0
      %5008 = vmatprep.mubr.f32.mxu0 0.0
      %5009 = vmatmul.mubr.f32.gmra.mxu0 %v4799
      %v5010 = vpop.f32.mrf.mxu0
      %v5011 = vadd.f32 0.0, %v5010
      %v5012 = vpop.f32.mrf.mxu0
      %5013 = vmatprep.mubr.f32.mxu0 0.0
      %5014 = vmatmul.mubr.f32.gmra.mxu0 %v4800
      %v5015 = vpop.f32.mrf.mxu0
      %v5016 = vadd.f32 0.0, %v5015
      %v5017 = vpop.f32.mrf.mxu0
      %5018 = vmatprep.mubr.f32.mxu0 0.0
      %5019 = vmatmul.mubr.f32.gmra.mxu0 %v4801
      %v5020 = vpop.f32.mrf.mxu0
      %v5021 = vadd.f32 0.0, %v5020
      %v5022 = vpop.f32.mrf.mxu0
      %5023 = vmatprep.mubr.f32.mxu0 0.0
      %5024 = vmatmul.mubr.f32.gmra.mxu0 %v4802
      %v5025 = vpop.f32.mrf.mxu0
      %v5026 = vadd.f32 0.0, %v5025
      %v5027 = vpop.f32.mrf.mxu0
      %5028 = vmatprep.mubr.f32.mxu0 0.0
      %5029 = vmatmul.mubr.f32.gmra.mxu0 %v4803
      %v5030 = vpop.f32.mrf.mxu0
      %v5031 = vadd.f32 0.0, %v5030
      %v5032 = vpop.f32.mrf.mxu0
      %5033 = vmatprep.mubr.f32.mxu0 0.0
      %5034 = vmatmul.mubr.f32.gmra.mxu0 %v4804
      %v5035 = vpop.f32.mrf.mxu0
      %v5036 = vadd.f32 0.0, %v5035
      %v5037 = vpop.f32.mrf.mxu0
      %5038 = vmatprep.mubr.f32.mxu0 0.0
      %5039 = vmatmul.mubr.f32.gmra.mxu0 %v4805
      %v5040 = vpop.f32.mrf.mxu0
      %v5041 = vadd.f32 0.0, %v5040
      %v5042 = vpop.f32.mrf.mxu0
      %5043 = vmatprep.mubr.f32.mxu0 0.0
      %5044 = vmatmul.mubr.f32.gmra.mxu0 %v4806
      %v5045 = vpop.f32.mrf.mxu0
      %v5046 = vadd.f32 0.0, %v5045
      %v5047 = vpop.f32.mrf.mxu0
      %5048 = vdwg.mxu0
      %v5049 = vadd.f32 %v4743, %v4891
      %v5050 = vadd.f32 %v4744, %v4896
      %v5051 = vadd.f32 %v4745, %v4901
      %v5052 = vadd.f32 %v4746, %v4906
      %v5053 = vadd.f32 %v4747, %v4911
      %v5054 = vadd.f32 %v4748, %v4916
      %v5055 = vadd.f32 %v4749, %v4921
      %v5056 = vadd.f32 %v4750, %v4926
      %v5057 = vadd.f32 %v4751, %v4931
      %v5058 = vadd.f32 %v4752, %v4936
      %v5059 = vadd.f32 %v4753, %v4941
      %v5060 = vadd.f32 %v4754, %v4946
      %v5061 = vadd.f32 %v4755, %v4951
      %v5062 = vadd.f32 %v4756, %v4956
      %v5063 = vadd.f32 %v4757, %v4961
      %v5064 = vadd.f32 %v4758, %v4966
      %v5065 = vadd.f32 %v4759, %v4971
      %v5066 = vadd.f32 %v4760, %v4976
      %v5067 = vadd.f32 %v4761, %v4981
      %v5068 = vadd.f32 %v4762, %v4986
      %v5069 = vadd.f32 %v4763, %v4991
      %v5070 = vadd.f32 %v4764, %v4996
      %v5071 = vadd.f32 %v4765, %v5001
      %v5072 = vadd.f32 %v4766, %v5006
      %v5073 = vadd.f32 %v4767, %v5011
      %v5074 = vadd.f32 %v4768, %v5016
      %v5075 = vadd.f32 %v4769, %v5021
      %v5076 = vadd.f32 %v4770, %v5026
      %v5077 = vadd.f32 %v4771, %v5031
      %v5078 = vadd.f32 %v4772, %v5036
      %v5079 = vadd.f32 %v4773, %v5041
      %v5080 = vadd.f32 %v4774, %v5046
      %s5081 = scalar_lea.vmem [#allocation2], 48
      %v5082 = vld [vmem:[%s5081] sm:$0xff]
      %v5083 = vld [vmem:[%s5081 + $0x8] sm:$0xff]
      %v5084 = vld [vmem:[%s5081 + $0x18] sm:$0xff]
      %v5085 = vld [vmem:[%s5081 + $0x20] sm:$0xff]
      %v5086 = vld [vmem:[%s5081 + $0x30] sm:$0xff]
      %v5087 = vld [vmem:[%s5081 + $0x38] sm:$0xff]
      %v5088 = vld [vmem:[%s5081 + $0x48] sm:$0xff]
      %v5089 = vld [vmem:[%s5081 + $0x50] sm:$0xff]
      %v5090 = vld [vmem:[%s5081 + $0x60] sm:$0xff]
      %v5091 = vld [vmem:[%s5081 + $0x68] sm:$0xff]
      %v5092 = vld [vmem:[%s5081 + $0x78] sm:$0xff]
      %v5093 = vld [vmem:[%s5081 + $0x80] sm:$0xff]
      %v5094 = vld [vmem:[%s5081 + $0x90] sm:$0xff]
      %v5095 = vld [vmem:[%s5081 + $0x98] sm:$0xff]
      %v5096 = vld [vmem:[%s5081 + $0xa8] sm:$0xff]
      %v5097 = vld [vmem:[%s5081 + $0xb0] sm:$0xff]
      %v5098 = vld [vmem:[%s5081 + $0xc0] sm:$0xff]
      %v5099 = vld [vmem:[%s5081 + $0xc8] sm:$0xff]
      %v5100 = vld [vmem:[%s5081 + $0xd8] sm:$0xff]
      %v5101 = vld [vmem:[%s5081 + $0xe0] sm:$0xff]
      %v5102 = vld [vmem:[%s5081 + $0xf0] sm:$0xff]
      %v5103 = vld [vmem:[%s5081 + $0xf8] sm:$0xff]
      %v5104 = vld [vmem:[%s5081 + $0x108] sm:$0xff]
      %v5105 = vld [vmem:[%s5081 + $0x110] sm:$0xff]
      %v5106 = vld [vmem:[%s5081 + $0x120] sm:$0xff]
      %v5107 = vld [vmem:[%s5081 + $0x128] sm:$0xff]
      %v5108 = vld [vmem:[%s5081 + $0x138] sm:$0xff]
      %v5109 = vld [vmem:[%s5081 + $0x140] sm:$0xff]
      %v5110 = vld [vmem:[%s5081 + $0x150] sm:$0xff]
      %v5111 = vld [vmem:[%s5081 + $0x158] sm:$0xff]
      %v5112 = vld [vmem:[%s5081 + $0x168] sm:$0xff]
      %v5113 = vld [vmem:[%s5081 + $0x170] sm:$0xff]
      %s5114 = scalar_lea.vmem %s3, 768
      %v5115 = vld [vmem:[%s5114] sm:$0xff]
      %v5116 = vld [vmem:[%s5114 + $0x8] sm:$0xff]
      %v5117 = vld [vmem:[%s5114 + $0x10] sm:$0xff]
      %v5118 = vld [vmem:[%s5114 + $0x18] sm:$0xff]
      %v5119 = vld [vmem:[%s5114 + $0x20] sm:$0xff]
      %v5120 = vld [vmem:[%s5114 + $0x28] sm:$0xff]
      %v5121 = vld [vmem:[%s5114 + $0x30] sm:$0xff]
      %v5122 = vld [vmem:[%s5114 + $0x38] sm:$0xff]
      %v5123 = vld [vmem:[%s5114 + $0x40] sm:$0xff]
      %v5124 = vld [vmem:[%s5114 + $0x48] sm:$0xff]
      %v5125 = vld [vmem:[%s5114 + $0x50] sm:$0xff]
      %v5126 = vld [vmem:[%s5114 + $0x58] sm:$0xff]
      %v5127 = vld [vmem:[%s5114 + $0x60] sm:$0xff]
      %v5128 = vld [vmem:[%s5114 + $0x68] sm:$0xff]
      %v5129 = vld [vmem:[%s5114 + $0x70] sm:$0xff]
      %v5130 = vld [vmem:[%s5114 + $0x78] sm:$0xff]
      %5131 = vmatprep.subr.mxu0 0.0
      %5132 = vmatpush1.msra.mxu0 %v5130
      %5133 = vmatprep.subr.mxu0 0.0
      %5134 = vmatpush1.msra.mxu0 %v5129
      %5135 = vmatprep.subr.mxu0 0.0
      %5136 = vmatpush1.msra.mxu0 %v5128
      %5137 = vmatprep.subr.mxu0 0.0
      %5138 = vmatpush1.msra.mxu0 %v5127
      %5139 = vmatprep.subr.mxu0 0.0
      %5140 = vmatpush1.msra.mxu0 %v5126
      %5141 = vmatprep.subr.mxu0 0.0
      %5142 = vmatpush1.msra.mxu0 %v5125
      %5143 = vmatprep.subr.mxu0 0.0
      %5144 = vmatpush1.msra.mxu0 %v5124
      %5145 = vmatprep.subr.mxu0 0.0
      %5146 = vmatpush1.msra.mxu0 %v5123
      %5147 = vmatprep.subr.mxu0 0.0
      %5148 = vmatpush1.msra.mxu0 %v5122
      %5149 = vmatprep.subr.mxu0 0.0
      %5150 = vmatpush1.msra.mxu0 %v5121
      %5151 = vmatprep.subr.mxu0 0.0
      %5152 = vmatpush1.msra.mxu0 %v5120
      %5153 = vmatprep.subr.mxu0 0.0
      %5154 = vmatpush1.msra.mxu0 %v5119
      %5155 = vmatprep.subr.mxu0 0.0
      %5156 = vmatpush1.msra.mxu0 %v5118
      %5157 = vmatprep.subr.mxu0 0.0
      %5158 = vmatpush1.msra.mxu0 %v5117
      %5159 = vmatprep.subr.mxu0 0.0
      %5160 = vmatpush1.msra.mxu0 %v5116
      %5161 = vmatprep.subr.mxu0 0.0
      %5162 = vmatpush1.msra.mxu0 %v5115
      %5163 = vmatprep.subr.mxu0 0.0
      %5164 = vmatpush2.msra.mxu0 0.0
      %5165 = vmatprep.subr.mxu0 0.0
      %5166 = vmatpush2.msra.mxu0 0.0
      %5167 = vmatprep.subr.mxu0 0.0
      %5168 = vmatpush2.msra.mxu0 0.0
      %5169 = vmatprep.subr.mxu0 0.0
      %5170 = vmatpush2.msra.mxu0 0.0
      %5171 = vmatprep.subr.mxu0 0.0
      %5172 = vmatpush2.msra.mxu0 0.0
      %5173 = vmatprep.subr.mxu0 0.0
      %5174 = vmatpush2.msra.mxu0 0.0
      %5175 = vmatprep.subr.mxu0 0.0
      %5176 = vmatpush2.msra.mxu0 0.0
      %5177 = vmatprep.subr.mxu0 0.0
      %5178 = vmatpush2.msra.mxu0 0.0
      %5179 = vmatprep.subr.mxu0 0.0
      %5180 = vmatpush2.msra.mxu0 0.0
      %5181 = vmatprep.subr.mxu0 0.0
      %5182 = vmatpush2.msra.mxu0 0.0
      %5183 = vmatprep.subr.mxu0 0.0
      %5184 = vmatpush2.msra.mxu0 0.0
      %5185 = vmatprep.subr.mxu0 0.0
      %5186 = vmatpush2.msra.mxu0 0.0
      %5187 = vmatprep.subr.mxu0 0.0
      %5188 = vmatpush2.msra.mxu0 0.0
      %5189 = vmatprep.subr.mxu0 0.0
      %5190 = vmatpush2.msra.mxu0 0.0
      %5191 = vmatprep.subr.mxu0 0.0
      %5192 = vmatpush2.msra.mxu0 0.0
      %5193 = vmatprep.subr.mxu0 0.0
      %5194 = vmatpush2.msra.mxu0 0.0
      %5195 = vmatprep.mubr.f32.mxu0 0.0
      %5196 = vmatmul.mubr.f32.gmra.mxu0 %v5082
      %v5197 = vpop.f32.mrf.mxu0
      %v5198 = vadd.f32 0.0, %v5197
      %v5199 = vpop.f32.mrf.mxu0
      %5200 = vmatprep.mubr.f32.mxu0 0.0
      %5201 = vmatmul.mubr.f32.gmra.mxu0 %v5083
      %v5202 = vpop.f32.mrf.mxu0
      %v5203 = vadd.f32 0.0, %v5202
      %v5204 = vpop.f32.mrf.mxu0
      %5205 = vmatprep.mubr.f32.mxu0 0.0
      %5206 = vmatmul.mubr.f32.gmra.mxu0 %v5084
      %v5207 = vpop.f32.mrf.mxu0
      %v5208 = vadd.f32 0.0, %v5207
      %v5209 = vpop.f32.mrf.mxu0
      %5210 = vmatprep.mubr.f32.mxu0 0.0
      %5211 = vmatmul.mubr.f32.gmra.mxu0 %v5085
      %v5212 = vpop.f32.mrf.mxu0
      %v5213 = vadd.f32 0.0, %v5212
      %v5214 = vpop.f32.mrf.mxu0
      %5215 = vmatprep.mubr.f32.mxu0 0.0
      %5216 = vmatmul.mubr.f32.gmra.mxu0 %v5086
      %v5217 = vpop.f32.mrf.mxu0
      %v5218 = vadd.f32 0.0, %v5217
      %v5219 = vpop.f32.mrf.mxu0
      %5220 = vmatprep.mubr.f32.mxu0 0.0
      %5221 = vmatmul.mubr.f32.gmra.mxu0 %v5087
      %v5222 = vpop.f32.mrf.mxu0
      %v5223 = vadd.f32 0.0, %v5222
      %v5224 = vpop.f32.mrf.mxu0
      %5225 = vmatprep.mubr.f32.mxu0 0.0
      %5226 = vmatmul.mubr.f32.gmra.mxu0 %v5088
      %v5227 = vpop.f32.mrf.mxu0
      %v5228 = vadd.f32 0.0, %v5227
      %v5229 = vpop.f32.mrf.mxu0
      %5230 = vmatprep.mubr.f32.mxu0 0.0
      %5231 = vmatmul.mubr.f32.gmra.mxu0 %v5089
      %v5232 = vpop.f32.mrf.mxu0
      %v5233 = vadd.f32 0.0, %v5232
      %v5234 = vpop.f32.mrf.mxu0
      %5235 = vmatprep.mubr.f32.mxu0 0.0
      %5236 = vmatmul.mubr.f32.gmra.mxu0 %v5090
      %v5237 = vpop.f32.mrf.mxu0
      %v5238 = vadd.f32 0.0, %v5237
      %v5239 = vpop.f32.mrf.mxu0
      %5240 = vmatprep.mubr.f32.mxu0 0.0
      %5241 = vmatmul.mubr.f32.gmra.mxu0 %v5091
      %v5242 = vpop.f32.mrf.mxu0
      %v5243 = vadd.f32 0.0, %v5242
      %v5244 = vpop.f32.mrf.mxu0
      %5245 = vmatprep.mubr.f32.mxu0 0.0
      %5246 = vmatmul.mubr.f32.gmra.mxu0 %v5092
      %v5247 = vpop.f32.mrf.mxu0
      %v5248 = vadd.f32 0.0, %v5247
      %v5249 = vpop.f32.mrf.mxu0
      %5250 = vmatprep.mubr.f32.mxu0 0.0
      %5251 = vmatmul.mubr.f32.gmra.mxu0 %v5093
      %v5252 = vpop.f32.mrf.mxu0
      %v5253 = vadd.f32 0.0, %v5252
      %v5254 = vpop.f32.mrf.mxu0
      %5255 = vmatprep.mubr.f32.mxu0 0.0
      %5256 = vmatmul.mubr.f32.gmra.mxu0 %v5094
      %v5257 = vpop.f32.mrf.mxu0
      %v5258 = vadd.f32 0.0, %v5257
      %v5259 = vpop.f32.mrf.mxu0
      %5260 = vmatprep.mubr.f32.mxu0 0.0
      %5261 = vmatmul.mubr.f32.gmra.mxu0 %v5095
      %v5262 = vpop.f32.mrf.mxu0
      %v5263 = vadd.f32 0.0, %v5262
      %v5264 = vpop.f32.mrf.mxu0
      %5265 = vmatprep.mubr.f32.mxu0 0.0
      %5266 = vmatmul.mubr.f32.gmra.mxu0 %v5096
      %v5267 = vpop.f32.mrf.mxu0
      %v5268 = vadd.f32 0.0, %v5267
      %v5269 = vpop.f32.mrf.mxu0
      %5270 = vmatprep.mubr.f32.mxu0 0.0
      %5271 = vmatmul.mubr.f32.gmra.mxu0 %v5097
      %v5272 = vpop.f32.mrf.mxu0
      %v5273 = vadd.f32 0.0, %v5272
      %v5274 = vpop.f32.mrf.mxu0
      %5275 = vmatprep.mubr.f32.mxu0 0.0
      %5276 = vmatmul.mubr.f32.gmra.mxu0 %v5098
      %v5277 = vpop.f32.mrf.mxu0
      %v5278 = vadd.f32 0.0, %v5277
      %v5279 = vpop.f32.mrf.mxu0
      %5280 = vmatprep.mubr.f32.mxu0 0.0
      %5281 = vmatmul.mubr.f32.gmra.mxu0 %v5099
      %v5282 = vpop.f32.mrf.mxu0
      %v5283 = vadd.f32 0.0, %v5282
      %v5284 = vpop.f32.mrf.mxu0
      %5285 = vmatprep.mubr.f32.mxu0 0.0
      %5286 = vmatmul.mubr.f32.gmra.mxu0 %v5100
      %v5287 = vpop.f32.mrf.mxu0
      %v5288 = vadd.f32 0.0, %v5287
      %v5289 = vpop.f32.mrf.mxu0
      %5290 = vmatprep.mubr.f32.mxu0 0.0
      %5291 = vmatmul.mubr.f32.gmra.mxu0 %v5101
      %v5292 = vpop.f32.mrf.mxu0
      %v5293 = vadd.f32 0.0, %v5292
      %v5294 = vpop.f32.mrf.mxu0
      %5295 = vmatprep.mubr.f32.mxu0 0.0
      %5296 = vmatmul.mubr.f32.gmra.mxu0 %v5102
      %v5297 = vpop.f32.mrf.mxu0
      %v5298 = vadd.f32 0.0, %v5297
      %v5299 = vpop.f32.mrf.mxu0
      %5300 = vmatprep.mubr.f32.mxu0 0.0
      %5301 = vmatmul.mubr.f32.gmra.mxu0 %v5103
      %v5302 = vpop.f32.mrf.mxu0
      %v5303 = vadd.f32 0.0, %v5302
      %v5304 = vpop.f32.mrf.mxu0
      %5305 = vmatprep.mubr.f32.mxu0 0.0
      %5306 = vmatmul.mubr.f32.gmra.mxu0 %v5104
      %v5307 = vpop.f32.mrf.mxu0
      %v5308 = vadd.f32 0.0, %v5307
      %v5309 = vpop.f32.mrf.mxu0
      %5310 = vmatprep.mubr.f32.mxu0 0.0
      %5311 = vmatmul.mubr.f32.gmra.mxu0 %v5105
      %v5312 = vpop.f32.mrf.mxu0
      %v5313 = vadd.f32 0.0, %v5312
      %v5314 = vpop.f32.mrf.mxu0
      %5315 = vmatprep.mubr.f32.mxu0 0.0
      %5316 = vmatmul.mubr.f32.gmra.mxu0 %v5106
      %v5317 = vpop.f32.mrf.mxu0
      %v5318 = vadd.f32 0.0, %v5317
      %v5319 = vpop.f32.mrf.mxu0
      %5320 = vmatprep.mubr.f32.mxu0 0.0
      %5321 = vmatmul.mubr.f32.gmra.mxu0 %v5107
      %v5322 = vpop.f32.mrf.mxu0
      %v5323 = vadd.f32 0.0, %v5322
      %v5324 = vpop.f32.mrf.mxu0
      %5325 = vmatprep.mubr.f32.mxu0 0.0
      %5326 = vmatmul.mubr.f32.gmra.mxu0 %v5108
      %v5327 = vpop.f32.mrf.mxu0
      %v5328 = vadd.f32 0.0, %v5327
      %v5329 = vpop.f32.mrf.mxu0
      %5330 = vmatprep.mubr.f32.mxu0 0.0
      %5331 = vmatmul.mubr.f32.gmra.mxu0 %v5109
      %v5332 = vpop.f32.mrf.mxu0
      %v5333 = vadd.f32 0.0, %v5332
      %v5334 = vpop.f32.mrf.mxu0
      %5335 = vmatprep.mubr.f32.mxu0 0.0
      %5336 = vmatmul.mubr.f32.gmra.mxu0 %v5110
      %v5337 = vpop.f32.mrf.mxu0
      %v5338 = vadd.f32 0.0, %v5337
      %v5339 = vpop.f32.mrf.mxu0
      %5340 = vmatprep.mubr.f32.mxu0 0.0
      %5341 = vmatmul.mubr.f32.gmra.mxu0 %v5111
      %v5342 = vpop.f32.mrf.mxu0
      %v5343 = vadd.f32 0.0, %v5342
      %v5344 = vpop.f32.mrf.mxu0
      %5345 = vmatprep.mubr.f32.mxu0 0.0
      %5346 = vmatmul.mubr.f32.gmra.mxu0 %v5112
      %v5347 = vpop.f32.mrf.mxu0
      %v5348 = vadd.f32 0.0, %v5347
      %v5349 = vpop.f32.mrf.mxu0
      %5350 = vmatprep.mubr.f32.mxu0 0.0
      %5351 = vmatmul.mubr.f32.gmra.mxu0 %v5113
      %v5352 = vpop.f32.mrf.mxu0
      %v5353 = vadd.f32 0.0, %v5352
      %v5354 = vpop.f32.mrf.mxu0
      %5355 = vdwg.mxu0
      %v5356 = vadd.f32 %v5049, %v5198
      %v5357 = vadd.f32 %v5050, %v5203
      %v5358 = vadd.f32 %v5051, %v5208
      %v5359 = vadd.f32 %v5052, %v5213
      %v5360 = vadd.f32 %v5053, %v5218
      %v5361 = vadd.f32 %v5054, %v5223
      %v5362 = vadd.f32 %v5055, %v5228
      %v5363 = vadd.f32 %v5056, %v5233
      %v5364 = vadd.f32 %v5057, %v5238
      %v5365 = vadd.f32 %v5058, %v5243
      %v5366 = vadd.f32 %v5059, %v5248
      %v5367 = vadd.f32 %v5060, %v5253
      %v5368 = vadd.f32 %v5061, %v5258
      %v5369 = vadd.f32 %v5062, %v5263
      %v5370 = vadd.f32 %v5063, %v5268
      %v5371 = vadd.f32 %v5064, %v5273
      %v5372 = vadd.f32 %v5065, %v5278
      %v5373 = vadd.f32 %v5066, %v5283
      %v5374 = vadd.f32 %v5067, %v5288
      %v5375 = vadd.f32 %v5068, %v5293
      %v5376 = vadd.f32 %v5069, %v5298
      %v5377 = vadd.f32 %v5070, %v5303
      %v5378 = vadd.f32 %v5071, %v5308
      %v5379 = vadd.f32 %v5072, %v5313
      %v5380 = vadd.f32 %v5073, %v5318
      %v5381 = vadd.f32 %v5074, %v5323
      %v5382 = vadd.f32 %v5075, %v5328
      %v5383 = vadd.f32 %v5076, %v5333
      %v5384 = vadd.f32 %v5077, %v5338
      %v5385 = vadd.f32 %v5078, %v5343
      %v5386 = vadd.f32 %v5079, %v5348
      %v5387 = vadd.f32 %v5080, %v5353
      %v5388 = vld [vmem:[%s5081 + $0x1] sm:$0xff]
      %v5389 = vld [vmem:[%s5081 + $0x9] sm:$0xff]
      %v5390 = vld [vmem:[%s5081 + $0x19] sm:$0xff]
      %v5391 = vld [vmem:[%s5081 + $0x21] sm:$0xff]
      %v5392 = vld [vmem:[%s5081 + $0x31] sm:$0xff]
      %v5393 = vld [vmem:[%s5081 + $0x39] sm:$0xff]
      %v5394 = vld [vmem:[%s5081 + $0x49] sm:$0xff]
      %v5395 = vld [vmem:[%s5081 + $0x51] sm:$0xff]
      %v5396 = vld [vmem:[%s5081 + $0x61] sm:$0xff]
      %v5397 = vld [vmem:[%s5081 + $0x69] sm:$0xff]
      %v5398 = vld [vmem:[%s5081 + $0x79] sm:$0xff]
      %v5399 = vld [vmem:[%s5081 + $0x81] sm:$0xff]
      %v5400 = vld [vmem:[%s5081 + $0x91] sm:$0xff]
      %v5401 = vld [vmem:[%s5081 + $0x99] sm:$0xff]
      %v5402 = vld [vmem:[%s5081 + $0xa9] sm:$0xff]
      %v5403 = vld [vmem:[%s5081 + $0xb1] sm:$0xff]
      %v5404 = vld [vmem:[%s5081 + $0xc1] sm:$0xff]
      %v5405 = vld [vmem:[%s5081 + $0xc9] sm:$0xff]
      %v5406 = vld [vmem:[%s5081 + $0xd9] sm:$0xff]
      %v5407 = vld [vmem:[%s5081 + $0xe1] sm:$0xff]
      %v5408 = vld [vmem:[%s5081 + $0xf1] sm:$0xff]
      %v5409 = vld [vmem:[%s5081 + $0xf9] sm:$0xff]
      %v5410 = vld [vmem:[%s5081 + $0x109] sm:$0xff]
      %v5411 = vld [vmem:[%s5081 + $0x111] sm:$0xff]
      %v5412 = vld [vmem:[%s5081 + $0x121] sm:$0xff]
      %v5413 = vld [vmem:[%s5081 + $0x129] sm:$0xff]
      %v5414 = vld [vmem:[%s5081 + $0x139] sm:$0xff]
      %v5415 = vld [vmem:[%s5081 + $0x141] sm:$0xff]
      %v5416 = vld [vmem:[%s5081 + $0x151] sm:$0xff]
      %v5417 = vld [vmem:[%s5081 + $0x159] sm:$0xff]
      %v5418 = vld [vmem:[%s5081 + $0x169] sm:$0xff]
      %v5419 = vld [vmem:[%s5081 + $0x171] sm:$0xff]
      %s5420 = scalar_lea.vmem %s3, 896
      %v5421 = vld [vmem:[%s5420] sm:$0xff]
      %v5422 = vld [vmem:[%s5420 + $0x8] sm:$0xff]
      %v5423 = vld [vmem:[%s5420 + $0x10] sm:$0xff]
      %v5424 = vld [vmem:[%s5420 + $0x18] sm:$0xff]
      %v5425 = vld [vmem:[%s5420 + $0x20] sm:$0xff]
      %v5426 = vld [vmem:[%s5420 + $0x28] sm:$0xff]
      %v5427 = vld [vmem:[%s5420 + $0x30] sm:$0xff]
      %v5428 = vld [vmem:[%s5420 + $0x38] sm:$0xff]
      %v5429 = vld [vmem:[%s5420 + $0x40] sm:$0xff]
      %v5430 = vld [vmem:[%s5420 + $0x48] sm:$0xff]
      %v5431 = vld [vmem:[%s5420 + $0x50] sm:$0xff]
      %v5432 = vld [vmem:[%s5420 + $0x58] sm:$0xff]
      %v5433 = vld [vmem:[%s5420 + $0x60] sm:$0xff]
      %v5434 = vld [vmem:[%s5420 + $0x68] sm:$0xff]
      %v5435 = vld [vmem:[%s5420 + $0x70] sm:$0xff]
      %v5436 = vld [vmem:[%s5420 + $0x78] sm:$0xff]
      %5437 = vmatprep.subr.mxu0 0.0
      %5438 = vmatpush1.msra.mxu0 %v5436
      %5439 = vmatprep.subr.mxu0 0.0
      %5440 = vmatpush1.msra.mxu0 %v5435
      %5441 = vmatprep.subr.mxu0 0.0
      %5442 = vmatpush1.msra.mxu0 %v5434
      %5443 = vmatprep.subr.mxu0 0.0
      %5444 = vmatpush1.msra.mxu0 %v5433
      %5445 = vmatprep.subr.mxu0 0.0
      %5446 = vmatpush1.msra.mxu0 %v5432
      %5447 = vmatprep.subr.mxu0 0.0
      %5448 = vmatpush1.msra.mxu0 %v5431
      %5449 = vmatprep.subr.mxu0 0.0
      %5450 = vmatpush1.msra.mxu0 %v5430
      %5451 = vmatprep.subr.mxu0 0.0
      %5452 = vmatpush1.msra.mxu0 %v5429
      %5453 = vmatprep.subr.mxu0 0.0
      %5454 = vmatpush1.msra.mxu0 %v5428
      %5455 = vmatprep.subr.mxu0 0.0
      %5456 = vmatpush1.msra.mxu0 %v5427
      %5457 = vmatprep.subr.mxu0 0.0
      %5458 = vmatpush1.msra.mxu0 %v5426
      %5459 = vmatprep.subr.mxu0 0.0
      %5460 = vmatpush1.msra.mxu0 %v5425
      %5461 = vmatprep.subr.mxu0 0.0
      %5462 = vmatpush1.msra.mxu0 %v5424
      %5463 = vmatprep.subr.mxu0 0.0
      %5464 = vmatpush1.msra.mxu0 %v5423
      %5465 = vmatprep.subr.mxu0 0.0
      %5466 = vmatpush1.msra.mxu0 %v5422
      %5467 = vmatprep.subr.mxu0 0.0
      %5468 = vmatpush1.msra.mxu0 %v5421
      %5469 = vmatprep.subr.mxu0 0.0
      %5470 = vmatpush2.msra.mxu0 0.0
      %5471 = vmatprep.subr.mxu0 0.0
      %5472 = vmatpush2.msra.mxu0 0.0
      %5473 = vmatprep.subr.mxu0 0.0
      %5474 = vmatpush2.msra.mxu0 0.0
      %5475 = vmatprep.subr.mxu0 0.0
      %5476 = vmatpush2.msra.mxu0 0.0
      %5477 = vmatprep.subr.mxu0 0.0
      %5478 = vmatpush2.msra.mxu0 0.0
      %5479 = vmatprep.subr.mxu0 0.0
      %5480 = vmatpush2.msra.mxu0 0.0
      %5481 = vmatprep.subr.mxu0 0.0
      %5482 = vmatpush2.msra.mxu0 0.0
      %5483 = vmatprep.subr.mxu0 0.0
      %5484 = vmatpush2.msra.mxu0 0.0
      %5485 = vmatprep.subr.mxu0 0.0
      %5486 = vmatpush2.msra.mxu0 0.0
      %5487 = vmatprep.subr.mxu0 0.0
      %5488 = vmatpush2.msra.mxu0 0.0
      %5489 = vmatprep.subr.mxu0 0.0
      %5490 = vmatpush2.msra.mxu0 0.0
      %5491 = vmatprep.subr.mxu0 0.0
      %5492 = vmatpush2.msra.mxu0 0.0
      %5493 = vmatprep.subr.mxu0 0.0
      %5494 = vmatpush2.msra.mxu0 0.0
      %5495 = vmatprep.subr.mxu0 0.0
      %5496 = vmatpush2.msra.mxu0 0.0
      %5497 = vmatprep.subr.mxu0 0.0
      %5498 = vmatpush2.msra.mxu0 0.0
      %5499 = vmatprep.subr.mxu0 0.0
      %5500 = vmatpush2.msra.mxu0 0.0
      %5501 = vmatprep.mubr.f32.mxu0 0.0
      %5502 = vmatmul.mubr.f32.gmra.mxu0 %v5388
      %v5503 = vpop.f32.mrf.mxu0
      %v5504 = vadd.f32 0.0, %v5503
      %v5505 = vpop.f32.mrf.mxu0
      %5506 = vmatprep.mubr.f32.mxu0 0.0
      %5507 = vmatmul.mubr.f32.gmra.mxu0 %v5389
      %v5508 = vpop.f32.mrf.mxu0
      %v5509 = vadd.f32 0.0, %v5508
      %v5510 = vpop.f32.mrf.mxu0
      %5511 = vmatprep.mubr.f32.mxu0 0.0
      %5512 = vmatmul.mubr.f32.gmra.mxu0 %v5390
      %v5513 = vpop.f32.mrf.mxu0
      %v5514 = vadd.f32 0.0, %v5513
      %v5515 = vpop.f32.mrf.mxu0
      %5516 = vmatprep.mubr.f32.mxu0 0.0
      %5517 = vmatmul.mubr.f32.gmra.mxu0 %v5391
      %v5518 = vpop.f32.mrf.mxu0
      %v5519 = vadd.f32 0.0, %v5518
      %v5520 = vpop.f32.mrf.mxu0
      %5521 = vmatprep.mubr.f32.mxu0 0.0
      %5522 = vmatmul.mubr.f32.gmra.mxu0 %v5392
      %v5523 = vpop.f32.mrf.mxu0
      %v5524 = vadd.f32 0.0, %v5523
      %v5525 = vpop.f32.mrf.mxu0
      %5526 = vmatprep.mubr.f32.mxu0 0.0
      %5527 = vmatmul.mubr.f32.gmra.mxu0 %v5393
      %v5528 = vpop.f32.mrf.mxu0
      %v5529 = vadd.f32 0.0, %v5528
      %v5530 = vpop.f32.mrf.mxu0
      %5531 = vmatprep.mubr.f32.mxu0 0.0
      %5532 = vmatmul.mubr.f32.gmra.mxu0 %v5394
      %v5533 = vpop.f32.mrf.mxu0
      %v5534 = vadd.f32 0.0, %v5533
      %v5535 = vpop.f32.mrf.mxu0
      %5536 = vmatprep.mubr.f32.mxu0 0.0
      %5537 = vmatmul.mubr.f32.gmra.mxu0 %v5395
      %v5538 = vpop.f32.mrf.mxu0
      %v5539 = vadd.f32 0.0, %v5538
      %v5540 = vpop.f32.mrf.mxu0
      %5541 = vmatprep.mubr.f32.mxu0 0.0
      %5542 = vmatmul.mubr.f32.gmra.mxu0 %v5396
      %v5543 = vpop.f32.mrf.mxu0
      %v5544 = vadd.f32 0.0, %v5543
      %v5545 = vpop.f32.mrf.mxu0
      %5546 = vmatprep.mubr.f32.mxu0 0.0
      %5547 = vmatmul.mubr.f32.gmra.mxu0 %v5397
      %v5548 = vpop.f32.mrf.mxu0
      %v5549 = vadd.f32 0.0, %v5548
      %v5550 = vpop.f32.mrf.mxu0
      %5551 = vmatprep.mubr.f32.mxu0 0.0
      %5552 = vmatmul.mubr.f32.gmra.mxu0 %v5398
      %v5553 = vpop.f32.mrf.mxu0
      %v5554 = vadd.f32 0.0, %v5553
      %v5555 = vpop.f32.mrf.mxu0
      %5556 = vmatprep.mubr.f32.mxu0 0.0
      %5557 = vmatmul.mubr.f32.gmra.mxu0 %v5399
      %v5558 = vpop.f32.mrf.mxu0
      %v5559 = vadd.f32 0.0, %v5558
      %v5560 = vpop.f32.mrf.mxu0
      %5561 = vmatprep.mubr.f32.mxu0 0.0
      %5562 = vmatmul.mubr.f32.gmra.mxu0 %v5400
      %v5563 = vpop.f32.mrf.mxu0
      %v5564 = vadd.f32 0.0, %v5563
      %v5565 = vpop.f32.mrf.mxu0
      %5566 = vmatprep.mubr.f32.mxu0 0.0
      %5567 = vmatmul.mubr.f32.gmra.mxu0 %v5401
      %v5568 = vpop.f32.mrf.mxu0
      %v5569 = vadd.f32 0.0, %v5568
      %v5570 = vpop.f32.mrf.mxu0
      %5571 = vmatprep.mubr.f32.mxu0 0.0
      %5572 = vmatmul.mubr.f32.gmra.mxu0 %v5402
      %v5573 = vpop.f32.mrf.mxu0
      %v5574 = vadd.f32 0.0, %v5573
      %v5575 = vpop.f32.mrf.mxu0
      %5576 = vmatprep.mubr.f32.mxu0 0.0
      %5577 = vmatmul.mubr.f32.gmra.mxu0 %v5403
      %v5578 = vpop.f32.mrf.mxu0
      %v5579 = vadd.f32 0.0, %v5578
      %v5580 = vpop.f32.mrf.mxu0
      %5581 = vmatprep.mubr.f32.mxu0 0.0
      %5582 = vmatmul.mubr.f32.gmra.mxu0 %v5404
      %v5583 = vpop.f32.mrf.mxu0
      %v5584 = vadd.f32 0.0, %v5583
      %v5585 = vpop.f32.mrf.mxu0
      %5586 = vmatprep.mubr.f32.mxu0 0.0
      %5587 = vmatmul.mubr.f32.gmra.mxu0 %v5405
      %v5588 = vpop.f32.mrf.mxu0
      %v5589 = vadd.f32 0.0, %v5588
      %v5590 = vpop.f32.mrf.mxu0
      %5591 = vmatprep.mubr.f32.mxu0 0.0
      %5592 = vmatmul.mubr.f32.gmra.mxu0 %v5406
      %v5593 = vpop.f32.mrf.mxu0
      %v5594 = vadd.f32 0.0, %v5593
      %v5595 = vpop.f32.mrf.mxu0
      %5596 = vmatprep.mubr.f32.mxu0 0.0
      %5597 = vmatmul.mubr.f32.gmra.mxu0 %v5407
      %v5598 = vpop.f32.mrf.mxu0
      %v5599 = vadd.f32 0.0, %v5598
      %v5600 = vpop.f32.mrf.mxu0
      %5601 = vmatprep.mubr.f32.mxu0 0.0
      %5602 = vmatmul.mubr.f32.gmra.mxu0 %v5408
      %v5603 = vpop.f32.mrf.mxu0
      %v5604 = vadd.f32 0.0, %v5603
      %v5605 = vpop.f32.mrf.mxu0
      %5606 = vmatprep.mubr.f32.mxu0 0.0
      %5607 = vmatmul.mubr.f32.gmra.mxu0 %v5409
      %v5608 = vpop.f32.mrf.mxu0
      %v5609 = vadd.f32 0.0, %v5608
      %v5610 = vpop.f32.mrf.mxu0
      %5611 = vmatprep.mubr.f32.mxu0 0.0
      %5612 = vmatmul.mubr.f32.gmra.mxu0 %v5410
      %v5613 = vpop.f32.mrf.mxu0
      %v5614 = vadd.f32 0.0, %v5613
      %v5615 = vpop.f32.mrf.mxu0
      %5616 = vmatprep.mubr.f32.mxu0 0.0
      %5617 = vmatmul.mubr.f32.gmra.mxu0 %v5411
      %v5618 = vpop.f32.mrf.mxu0
      %v5619 = vadd.f32 0.0, %v5618
      %v5620 = vpop.f32.mrf.mxu0
      %5621 = vmatprep.mubr.f32.mxu0 0.0
      %5622 = vmatmul.mubr.f32.gmra.mxu0 %v5412
      %v5623 = vpop.f32.mrf.mxu0
      %v5624 = vadd.f32 0.0, %v5623
      %v5625 = vpop.f32.mrf.mxu0
      %5626 = vmatprep.mubr.f32.mxu0 0.0
      %5627 = vmatmul.mubr.f32.gmra.mxu0 %v5413
      %v5628 = vpop.f32.mrf.mxu0
      %v5629 = vadd.f32 0.0, %v5628
      %v5630 = vpop.f32.mrf.mxu0
      %5631 = vmatprep.mubr.f32.mxu0 0.0
      %5632 = vmatmul.mubr.f32.gmra.mxu0 %v5414
      %v5633 = vpop.f32.mrf.mxu0
      %v5634 = vadd.f32 0.0, %v5633
      %v5635 = vpop.f32.mrf.mxu0
      %5636 = vmatprep.mubr.f32.mxu0 0.0
      %5637 = vmatmul.mubr.f32.gmra.mxu0 %v5415
      %v5638 = vpop.f32.mrf.mxu0
      %v5639 = vadd.f32 0.0, %v5638
      %v5640 = vpop.f32.mrf.mxu0
      %5641 = vmatprep.mubr.f32.mxu0 0.0
      %5642 = vmatmul.mubr.f32.gmra.mxu0 %v5416
      %v5643 = vpop.f32.mrf.mxu0
      %v5644 = vadd.f32 0.0, %v5643
      %v5645 = vpop.f32.mrf.mxu0
      %5646 = vmatprep.mubr.f32.mxu0 0.0
      %5647 = vmatmul.mubr.f32.gmra.mxu0 %v5417
      %v5648 = vpop.f32.mrf.mxu0
      %v5649 = vadd.f32 0.0, %v5648
      %v5650 = vpop.f32.mrf.mxu0
      %5651 = vmatprep.mubr.f32.mxu0 0.0
      %5652 = vmatmul.mubr.f32.gmra.mxu0 %v5418
      %v5653 = vpop.f32.mrf.mxu0
      %v5654 = vadd.f32 0.0, %v5653
      %v5655 = vpop.f32.mrf.mxu0
      %5656 = vmatprep.mubr.f32.mxu0 0.0
      %5657 = vmatmul.mubr.f32.gmra.mxu0 %v5419
      %v5658 = vpop.f32.mrf.mxu0
      %v5659 = vadd.f32 0.0, %v5658
      %v5660 = vpop.f32.mrf.mxu0
      %5661 = vdwg.mxu0
      %v5662 = vadd.f32 %v5356, %v5504
      %v5663 = vadd.f32 %v5357, %v5509
      %v5664 = vadd.f32 %v5358, %v5514
      %v5665 = vadd.f32 %v5359, %v5519
      %v5666 = vadd.f32 %v5360, %v5524
      %v5667 = vadd.f32 %v5361, %v5529
      %v5668 = vadd.f32 %v5362, %v5534
      %v5669 = vadd.f32 %v5363, %v5539
      %v5670 = vadd.f32 %v5364, %v5544
      %v5671 = vadd.f32 %v5365, %v5549
      %v5672 = vadd.f32 %v5366, %v5554
      %v5673 = vadd.f32 %v5367, %v5559
      %v5674 = vadd.f32 %v5368, %v5564
      %v5675 = vadd.f32 %v5369, %v5569
      %v5676 = vadd.f32 %v5370, %v5574
      %v5677 = vadd.f32 %v5371, %v5579
      %v5678 = vadd.f32 %v5372, %v5584
      %v5679 = vadd.f32 %v5373, %v5589
      %v5680 = vadd.f32 %v5374, %v5594
      %v5681 = vadd.f32 %v5375, %v5599
      %v5682 = vadd.f32 %v5376, %v5604
      %v5683 = vadd.f32 %v5377, %v5609
      %v5684 = vadd.f32 %v5378, %v5614
      %v5685 = vadd.f32 %v5379, %v5619
      %v5686 = vadd.f32 %v5380, %v5624
      %v5687 = vadd.f32 %v5381, %v5629
      %v5688 = vadd.f32 %v5382, %v5634
      %v5689 = vadd.f32 %v5383, %v5639
      %v5690 = vadd.f32 %v5384, %v5644
      %v5691 = vadd.f32 %v5385, %v5649
      %v5692 = vadd.f32 %v5386, %v5654
      %v5693 = vadd.f32 %v5387, %v5659
      %v5694 = vld [vmem:[%s5081 + $0x2] sm:$0xff]
      %v5695 = vld [vmem:[%s5081 + $0xa] sm:$0xff]
      %v5696 = vld [vmem:[%s5081 + $0x1a] sm:$0xff]
      %v5697 = vld [vmem:[%s5081 + $0x22] sm:$0xff]
      %v5698 = vld [vmem:[%s5081 + $0x32] sm:$0xff]
      %v5699 = vld [vmem:[%s5081 + $0x3a] sm:$0xff]
      %v5700 = vld [vmem:[%s5081 + $0x4a] sm:$0xff]
      %v5701 = vld [vmem:[%s5081 + $0x52] sm:$0xff]
      %v5702 = vld [vmem:[%s5081 + $0x62] sm:$0xff]
      %v5703 = vld [vmem:[%s5081 + $0x6a] sm:$0xff]
      %v5704 = vld [vmem:[%s5081 + $0x7a] sm:$0xff]
      %v5705 = vld [vmem:[%s5081 + $0x82] sm:$0xff]
      %v5706 = vld [vmem:[%s5081 + $0x92] sm:$0xff]
      %v5707 = vld [vmem:[%s5081 + $0x9a] sm:$0xff]
      %v5708 = vld [vmem:[%s5081 + $0xaa] sm:$0xff]
      %v5709 = vld [vmem:[%s5081 + $0xb2] sm:$0xff]
      %v5710 = vld [vmem:[%s5081 + $0xc2] sm:$0xff]
      %v5711 = vld [vmem:[%s5081 + $0xca] sm:$0xff]
      %v5712 = vld [vmem:[%s5081 + $0xda] sm:$0xff]
      %v5713 = vld [vmem:[%s5081 + $0xe2] sm:$0xff]
      %v5714 = vld [vmem:[%s5081 + $0xf2] sm:$0xff]
      %v5715 = vld [vmem:[%s5081 + $0xfa] sm:$0xff]
      %v5716 = vld [vmem:[%s5081 + $0x10a] sm:$0xff]
      %v5717 = vld [vmem:[%s5081 + $0x112] sm:$0xff]
      %v5718 = vld [vmem:[%s5081 + $0x122] sm:$0xff]
      %v5719 = vld [vmem:[%s5081 + $0x12a] sm:$0xff]
      %v5720 = vld [vmem:[%s5081 + $0x13a] sm:$0xff]
      %v5721 = vld [vmem:[%s5081 + $0x142] sm:$0xff]
      %v5722 = vld [vmem:[%s5081 + $0x152] sm:$0xff]
      %v5723 = vld [vmem:[%s5081 + $0x15a] sm:$0xff]
      %v5724 = vld [vmem:[%s5081 + $0x16a] sm:$0xff]
      %v5725 = vld [vmem:[%s5081 + $0x172] sm:$0xff]
      %s5726 = scalar_lea.vmem %s3, 1024
      %v5727 = vld [vmem:[%s5726] sm:$0xff]
      %v5728 = vld [vmem:[%s5726 + $0x8] sm:$0xff]
      %v5729 = vld [vmem:[%s5726 + $0x10] sm:$0xff]
      %v5730 = vld [vmem:[%s5726 + $0x18] sm:$0xff]
      %v5731 = vld [vmem:[%s5726 + $0x20] sm:$0xff]
      %v5732 = vld [vmem:[%s5726 + $0x28] sm:$0xff]
      %v5733 = vld [vmem:[%s5726 + $0x30] sm:$0xff]
      %v5734 = vld [vmem:[%s5726 + $0x38] sm:$0xff]
      %v5735 = vld [vmem:[%s5726 + $0x40] sm:$0xff]
      %v5736 = vld [vmem:[%s5726 + $0x48] sm:$0xff]
      %v5737 = vld [vmem:[%s5726 + $0x50] sm:$0xff]
      %v5738 = vld [vmem:[%s5726 + $0x58] sm:$0xff]
      %v5739 = vld [vmem:[%s5726 + $0x60] sm:$0xff]
      %v5740 = vld [vmem:[%s5726 + $0x68] sm:$0xff]
      %v5741 = vld [vmem:[%s5726 + $0x70] sm:$0xff]
      %v5742 = vld [vmem:[%s5726 + $0x78] sm:$0xff]
      %5743 = vmatprep.subr.mxu0 0.0
      %5744 = vmatpush1.msra.mxu0 %v5742
      %5745 = vmatprep.subr.mxu0 0.0
      %5746 = vmatpush1.msra.mxu0 %v5741
      %5747 = vmatprep.subr.mxu0 0.0
      %5748 = vmatpush1.msra.mxu0 %v5740
      %5749 = vmatprep.subr.mxu0 0.0
      %5750 = vmatpush1.msra.mxu0 %v5739
      %5751 = vmatprep.subr.mxu0 0.0
      %5752 = vmatpush1.msra.mxu0 %v5738
      %5753 = vmatprep.subr.mxu0 0.0
      %5754 = vmatpush1.msra.mxu0 %v5737
      %5755 = vmatprep.subr.mxu0 0.0
      %5756 = vmatpush1.msra.mxu0 %v5736
      %5757 = vmatprep.subr.mxu0 0.0
      %5758 = vmatpush1.msra.mxu0 %v5735
      %5759 = vmatprep.subr.mxu0 0.0
      %5760 = vmatpush1.msra.mxu0 %v5734
      %5761 = vmatprep.subr.mxu0 0.0
      %5762 = vmatpush1.msra.mxu0 %v5733
      %5763 = vmatprep.subr.mxu0 0.0
      %5764 = vmatpush1.msra.mxu0 %v5732
      %5765 = vmatprep.subr.mxu0 0.0
      %5766 = vmatpush1.msra.mxu0 %v5731
      %5767 = vmatprep.subr.mxu0 0.0
      %5768 = vmatpush1.msra.mxu0 %v5730
      %5769 = vmatprep.subr.mxu0 0.0
      %5770 = vmatpush1.msra.mxu0 %v5729
      %5771 = vmatprep.subr.mxu0 0.0
      %5772 = vmatpush1.msra.mxu0 %v5728
      %5773 = vmatprep.subr.mxu0 0.0
      %5774 = vmatpush1.msra.mxu0 %v5727
      %5775 = vmatprep.subr.mxu0 0.0
      %5776 = vmatpush2.msra.mxu0 0.0
      %5777 = vmatprep.subr.mxu0 0.0
      %5778 = vmatpush2.msra.mxu0 0.0
      %5779 = vmatprep.subr.mxu0 0.0
      %5780 = vmatpush2.msra.mxu0 0.0
      %5781 = vmatprep.subr.mxu0 0.0
      %5782 = vmatpush2.msra.mxu0 0.0
      %5783 = vmatprep.subr.mxu0 0.0
      %5784 = vmatpush2.msra.mxu0 0.0
      %5785 = vmatprep.subr.mxu0 0.0
      %5786 = vmatpush2.msra.mxu0 0.0
      %5787 = vmatprep.subr.mxu0 0.0
      %5788 = vmatpush2.msra.mxu0 0.0
      %5789 = vmatprep.subr.mxu0 0.0
      %5790 = vmatpush2.msra.mxu0 0.0
      %5791 = vmatprep.subr.mxu0 0.0
      %5792 = vmatpush2.msra.mxu0 0.0
      %5793 = vmatprep.subr.mxu0 0.0
      %5794 = vmatpush2.msra.mxu0 0.0
      %5795 = vmatprep.subr.mxu0 0.0
      %5796 = vmatpush2.msra.mxu0 0.0
      %5797 = vmatprep.subr.mxu0 0.0
      %5798 = vmatpush2.msra.mxu0 0.0
      %5799 = vmatprep.subr.mxu0 0.0
      %5800 = vmatpush2.msra.mxu0 0.0
      %5801 = vmatprep.subr.mxu0 0.0
      %5802 = vmatpush2.msra.mxu0 0.0
      %5803 = vmatprep.subr.mxu0 0.0
      %5804 = vmatpush2.msra.mxu0 0.0
      %5805 = vmatprep.subr.mxu0 0.0
      %5806 = vmatpush2.msra.mxu0 0.0
      %5807 = vmatprep.mubr.f32.mxu0 0.0
      %5808 = vmatmul.mubr.f32.gmra.mxu0 %v5694
      %v5809 = vpop.f32.mrf.mxu0
      %v5810 = vadd.f32 0.0, %v5809
      %v5811 = vpop.f32.mrf.mxu0
      %5812 = vmatprep.mubr.f32.mxu0 0.0
      %5813 = vmatmul.mubr.f32.gmra.mxu0 %v5695
      %v5814 = vpop.f32.mrf.mxu0
      %v5815 = vadd.f32 0.0, %v5814
      %v5816 = vpop.f32.mrf.mxu0
      %5817 = vmatprep.mubr.f32.mxu0 0.0
      %5818 = vmatmul.mubr.f32.gmra.mxu0 %v5696
      %v5819 = vpop.f32.mrf.mxu0
      %v5820 = vadd.f32 0.0, %v5819
      %v5821 = vpop.f32.mrf.mxu0
      %5822 = vmatprep.mubr.f32.mxu0 0.0
      %5823 = vmatmul.mubr.f32.gmra.mxu0 %v5697
      %v5824 = vpop.f32.mrf.mxu0
      %v5825 = vadd.f32 0.0, %v5824
      %v5826 = vpop.f32.mrf.mxu0
      %5827 = vmatprep.mubr.f32.mxu0 0.0
      %5828 = vmatmul.mubr.f32.gmra.mxu0 %v5698
      %v5829 = vpop.f32.mrf.mxu0
      %v5830 = vadd.f32 0.0, %v5829
      %v5831 = vpop.f32.mrf.mxu0
      %5832 = vmatprep.mubr.f32.mxu0 0.0
      %5833 = vmatmul.mubr.f32.gmra.mxu0 %v5699
      %v5834 = vpop.f32.mrf.mxu0
      %v5835 = vadd.f32 0.0, %v5834
      %v5836 = vpop.f32.mrf.mxu0
      %5837 = vmatprep.mubr.f32.mxu0 0.0
      %5838 = vmatmul.mubr.f32.gmra.mxu0 %v5700
      %v5839 = vpop.f32.mrf.mxu0
      %v5840 = vadd.f32 0.0, %v5839
      %v5841 = vpop.f32.mrf.mxu0
      %5842 = vmatprep.mubr.f32.mxu0 0.0
      %5843 = vmatmul.mubr.f32.gmra.mxu0 %v5701
      %v5844 = vpop.f32.mrf.mxu0
      %v5845 = vadd.f32 0.0, %v5844
      %v5846 = vpop.f32.mrf.mxu0
      %5847 = vmatprep.mubr.f32.mxu0 0.0
      %5848 = vmatmul.mubr.f32.gmra.mxu0 %v5702
      %v5849 = vpop.f32.mrf.mxu0
      %v5850 = vadd.f32 0.0, %v5849
      %v5851 = vpop.f32.mrf.mxu0
      %5852 = vmatprep.mubr.f32.mxu0 0.0
      %5853 = vmatmul.mubr.f32.gmra.mxu0 %v5703
      %v5854 = vpop.f32.mrf.mxu0
      %v5855 = vadd.f32 0.0, %v5854
      %v5856 = vpop.f32.mrf.mxu0
      %5857 = vmatprep.mubr.f32.mxu0 0.0
      %5858 = vmatmul.mubr.f32.gmra.mxu0 %v5704
      %v5859 = vpop.f32.mrf.mxu0
      %v5860 = vadd.f32 0.0, %v5859
      %v5861 = vpop.f32.mrf.mxu0
      %5862 = vmatprep.mubr.f32.mxu0 0.0
      %5863 = vmatmul.mubr.f32.gmra.mxu0 %v5705
      %v5864 = vpop.f32.mrf.mxu0
      %v5865 = vadd.f32 0.0, %v5864
      %v5866 = vpop.f32.mrf.mxu0
      %5867 = vmatprep.mubr.f32.mxu0 0.0
      %5868 = vmatmul.mubr.f32.gmra.mxu0 %v5706
      %v5869 = vpop.f32.mrf.mxu0
      %v5870 = vadd.f32 0.0, %v5869
      %v5871 = vpop.f32.mrf.mxu0
      %5872 = vmatprep.mubr.f32.mxu0 0.0
      %5873 = vmatmul.mubr.f32.gmra.mxu0 %v5707
      %v5874 = vpop.f32.mrf.mxu0
      %v5875 = vadd.f32 0.0, %v5874
      %v5876 = vpop.f32.mrf.mxu0
      %5877 = vmatprep.mubr.f32.mxu0 0.0
      %5878 = vmatmul.mubr.f32.gmra.mxu0 %v5708
      %v5879 = vpop.f32.mrf.mxu0
      %v5880 = vadd.f32 0.0, %v5879
      %v5881 = vpop.f32.mrf.mxu0
      %5882 = vmatprep.mubr.f32.mxu0 0.0
      %5883 = vmatmul.mubr.f32.gmra.mxu0 %v5709
      %v5884 = vpop.f32.mrf.mxu0
      %v5885 = vadd.f32 0.0, %v5884
      %v5886 = vpop.f32.mrf.mxu0
      %5887 = vmatprep.mubr.f32.mxu0 0.0
      %5888 = vmatmul.mubr.f32.gmra.mxu0 %v5710
      %v5889 = vpop.f32.mrf.mxu0
      %v5890 = vadd.f32 0.0, %v5889
      %v5891 = vpop.f32.mrf.mxu0
      %5892 = vmatprep.mubr.f32.mxu0 0.0
      %5893 = vmatmul.mubr.f32.gmra.mxu0 %v5711
      %v5894 = vpop.f32.mrf.mxu0
      %v5895 = vadd.f32 0.0, %v5894
      %v5896 = vpop.f32.mrf.mxu0
      %5897 = vmatprep.mubr.f32.mxu0 0.0
      %5898 = vmatmul.mubr.f32.gmra.mxu0 %v5712
      %v5899 = vpop.f32.mrf.mxu0
      %v5900 = vadd.f32 0.0, %v5899
      %v5901 = vpop.f32.mrf.mxu0
      %5902 = vmatprep.mubr.f32.mxu0 0.0
      %5903 = vmatmul.mubr.f32.gmra.mxu0 %v5713
      %v5904 = vpop.f32.mrf.mxu0
      %v5905 = vadd.f32 0.0, %v5904
      %v5906 = vpop.f32.mrf.mxu0
      %5907 = vmatprep.mubr.f32.mxu0 0.0
      %5908 = vmatmul.mubr.f32.gmra.mxu0 %v5714
      %v5909 = vpop.f32.mrf.mxu0
      %v5910 = vadd.f32 0.0, %v5909
      %v5911 = vpop.f32.mrf.mxu0
      %5912 = vmatprep.mubr.f32.mxu0 0.0
      %5913 = vmatmul.mubr.f32.gmra.mxu0 %v5715
      %v5914 = vpop.f32.mrf.mxu0
      %v5915 = vadd.f32 0.0, %v5914
      %v5916 = vpop.f32.mrf.mxu0
      %5917 = vmatprep.mubr.f32.mxu0 0.0
      %5918 = vmatmul.mubr.f32.gmra.mxu0 %v5716
      %v5919 = vpop.f32.mrf.mxu0
      %v5920 = vadd.f32 0.0, %v5919
      %v5921 = vpop.f32.mrf.mxu0
      %5922 = vmatprep.mubr.f32.mxu0 0.0
      %5923 = vmatmul.mubr.f32.gmra.mxu0 %v5717
      %v5924 = vpop.f32.mrf.mxu0
      %v5925 = vadd.f32 0.0, %v5924
      %v5926 = vpop.f32.mrf.mxu0
      %5927 = vmatprep.mubr.f32.mxu0 0.0
      %5928 = vmatmul.mubr.f32.gmra.mxu0 %v5718
      %v5929 = vpop.f32.mrf.mxu0
      %v5930 = vadd.f32 0.0, %v5929
      %v5931 = vpop.f32.mrf.mxu0
      %5932 = vmatprep.mubr.f32.mxu0 0.0
      %5933 = vmatmul.mubr.f32.gmra.mxu0 %v5719
      %v5934 = vpop.f32.mrf.mxu0
      %v5935 = vadd.f32 0.0, %v5934
      %v5936 = vpop.f32.mrf.mxu0
      %5937 = vmatprep.mubr.f32.mxu0 0.0
      %5938 = vmatmul.mubr.f32.gmra.mxu0 %v5720
      %v5939 = vpop.f32.mrf.mxu0
      %v5940 = vadd.f32 0.0, %v5939
      %v5941 = vpop.f32.mrf.mxu0
      %5942 = vmatprep.mubr.f32.mxu0 0.0
      %5943 = vmatmul.mubr.f32.gmra.mxu0 %v5721
      %v5944 = vpop.f32.mrf.mxu0
      %v5945 = vadd.f32 0.0, %v5944
      %v5946 = vpop.f32.mrf.mxu0
      %5947 = vmatprep.mubr.f32.mxu0 0.0
      %5948 = vmatmul.mubr.f32.gmra.mxu0 %v5722
      %v5949 = vpop.f32.mrf.mxu0
      %v5950 = vadd.f32 0.0, %v5949
      %v5951 = vpop.f32.mrf.mxu0
      %5952 = vmatprep.mubr.f32.mxu0 0.0
      %5953 = vmatmul.mubr.f32.gmra.mxu0 %v5723
      %v5954 = vpop.f32.mrf.mxu0
      %v5955 = vadd.f32 0.0, %v5954
      %v5956 = vpop.f32.mrf.mxu0
      %5957 = vmatprep.mubr.f32.mxu0 0.0
      %5958 = vmatmul.mubr.f32.gmra.mxu0 %v5724
      %v5959 = vpop.f32.mrf.mxu0
      %v5960 = vadd.f32 0.0, %v5959
      %v5961 = vpop.f32.mrf.mxu0
      %5962 = vmatprep.mubr.f32.mxu0 0.0
      %5963 = vmatmul.mubr.f32.gmra.mxu0 %v5725
      %v5964 = vpop.f32.mrf.mxu0
      %v5965 = vadd.f32 0.0, %v5964
      %v5966 = vpop.f32.mrf.mxu0
      %5967 = vdwg.mxu0
      %v5968 = vadd.f32 %v5662, %v5810
      %v5969 = vadd.f32 %v5663, %v5815
      %v5970 = vadd.f32 %v5664, %v5820
      %v5971 = vadd.f32 %v5665, %v5825
      %v5972 = vadd.f32 %v5666, %v5830
      %v5973 = vadd.f32 %v5667, %v5835
      %v5974 = vadd.f32 %v5668, %v5840
      %v5975 = vadd.f32 %v5669, %v5845
      %v5976 = vadd.f32 %v5670, %v5850
      %v5977 = vadd.f32 %v5671, %v5855
      %v5978 = vadd.f32 %v5672, %v5860
      %v5979 = vadd.f32 %v5673, %v5865
      %v5980 = vadd.f32 %v5674, %v5870
      %v5981 = vadd.f32 %v5675, %v5875
      %v5982 = vadd.f32 %v5676, %v5880
      %v5983 = vadd.f32 %v5677, %v5885
      %v5984 = vadd.f32 %v5678, %v5890
      %v5985 = vadd.f32 %v5679, %v5895
      %v5986 = vadd.f32 %v5680, %v5900
      %v5987 = vadd.f32 %v5681, %v5905
      %v5988 = vadd.f32 %v5682, %v5910
      %v5989 = vadd.f32 %v5683, %v5915
      %v5990 = vadd.f32 %v5684, %v5920
      %v5991 = vadd.f32 %v5685, %v5925
      %v5992 = vadd.f32 %v5686, %v5930
      %v5993 = vadd.f32 %v5687, %v5935
      %v5994 = vadd.f32 %v5688, %v5940
      %v5995 = vadd.f32 %v5689, %v5945
      %v5996 = vadd.f32 %v5690, %v5950
      %v5997 = vadd.f32 %v5691, %v5955
      %v5998 = vadd.f32 %v5692, %v5960
      %v5999 = vadd.f32 %v5693, %v5965
      %v6000 = vld [vmem:[%s4] sm:$0x1]
      %v6002 = vlaneseq
      %v6003 = vshrl.u32 %v6002, 7
      %v6004 = vsub.s32 0, %v6003
      %v6005 = vrot.slane %v6000, %v6004
      %v6007 = vadd.f32 %v5968, %v6005
      %v6008 = vadd.f32 %v5969, %v6005
      %v6009 = vadd.f32 %v5970, %v6005
      %v6010 = vadd.f32 %v5971, %v6005
      %v6011 = vadd.f32 %v5972, %v6005
      %v6012 = vadd.f32 %v5973, %v6005
      %v6013 = vadd.f32 %v5974, %v6005
      %v6014 = vadd.f32 %v5975, %v6005
      %v6015 = vadd.f32 %v5976, %v6005
      %v6016 = vadd.f32 %v5977, %v6005
      %v6017 = vadd.f32 %v5978, %v6005
      %v6018 = vadd.f32 %v5979, %v6005
      %v6019 = vadd.f32 %v5980, %v6005
      %v6020 = vadd.f32 %v5981, %v6005
      %v6021 = vadd.f32 %v5982, %v6005
      %v6022 = vadd.f32 %v5983, %v6005
      %v6023 = vadd.f32 %v5984, %v6005
      %v6024 = vadd.f32 %v5985, %v6005
      %v6025 = vadd.f32 %v5986, %v6005
      %v6026 = vadd.f32 %v5987, %v6005
      %v6027 = vadd.f32 %v5988, %v6005
      %v6028 = vadd.f32 %v5989, %v6005
      %v6029 = vadd.f32 %v5990, %v6005
      %v6030 = vadd.f32 %v5991, %v6005
      %v6031 = vadd.f32 %v5992, %v6005
      %v6032 = vadd.f32 %v5993, %v6005
      %v6033 = vadd.f32 %v5994, %v6005
      %v6034 = vadd.f32 %v5995, %v6005
      %v6035 = vadd.f32 %v5996, %v6005
      %v6036 = vadd.f32 %v5997, %v6005
      %v6037 = vadd.f32 %v5998, %v6005
      %v6038 = vadd.f32 %v5999, %v6005
      %v6039 = vadd.f32 %v6007, %v6008
      %v6040 = vadd.f32 %v6039, %v6009
      %v6041 = vadd.f32 %v6040, %v6010
      %v6042 = vadd.f32 %v6041, %v6011
      %v6043 = vadd.f32 %v6042, %v6012
      %v6044 = vadd.f32 %v6043, %v6013
      %v6045 = vadd.f32 %v6044, %v6014
      %v6046 = vadd.f32 %v6045, %v6015
      %v6047 = vadd.f32 %v6046, %v6016
      %v6048 = vadd.f32 %v6047, %v6017
      %v6049 = vadd.f32 %v6048, %v6018
      %v6050 = vadd.f32 %v6049, %v6019
      %v6051 = vadd.f32 %v6050, %v6020
      %v6052 = vadd.f32 %v6051, %v6021
      %v6053 = vadd.f32 %v6052, %v6022
      %v6054 = vadd.f32 %v6053, %v6023
      %v6055 = vadd.f32 %v6054, %v6024
      %v6056 = vadd.f32 %v6055, %v6025
      %v6057 = vadd.f32 %v6056, %v6026
      %v6058 = vadd.f32 %v6057, %v6027
      %v6059 = vadd.f32 %v6058, %v6028
      %v6060 = vadd.f32 %v6059, %v6029
      %v6061 = vadd.f32 %v6060, %v6030
      %v6062 = vadd.f32 %v6061, %v6031
      %v6063 = vadd.f32 %v6062, %v6032
      %v6064 = vadd.f32 %v6063, %v6033
      %v6065 = vadd.f32 %v6064, %v6034
      %v6066 = vadd.f32 %v6065, %v6035
      %v6067 = vadd.f32 %v6066, %v6036
      %v6068 = vadd.f32 %v6067, %v6037
      %v6069 = vadd.f32 %v6068, %v6038
      %v6070 = vrot.slane %v6069, 4
      %v6071 = vadd.f32 %v6069, %v6070
      %v6072 = vrot.slane %v6071, 2
      %v6073 = vadd.f32 %v6071, %v6072
      %v6074 = vrot.slane %v6073, 1
      %v6075 = vadd.f32 %v6073, %v6074
      %v6076 = vrcp.pop 256.0
      %v6077 = vmul.f32 %v6075, %v6076
      %v6078 = vld [vmem:[%s5] sm:$0xff]
      %v6079 = vld [vmem:[%s5 + $0x8] sm:$0xff]
      %v6080 = vld [vmem:[%s5 + $0x10] sm:$0xff]
      %v6081 = vld [vmem:[%s5 + $0x18] sm:$0xff]
      %v6082 = vld [vmem:[%s5 + $0x20] sm:$0xff]
      %v6083 = vld [vmem:[%s5 + $0x28] sm:$0xff]
      %v6084 = vld [vmem:[%s5 + $0x30] sm:$0xff]
      %v6085 = vld [vmem:[%s5 + $0x38] sm:$0xff]
      %v6086 = vld [vmem:[%s5 + $0x40] sm:$0xff]
      %v6087 = vld [vmem:[%s5 + $0x48] sm:$0xff]
      %v6088 = vld [vmem:[%s5 + $0x50] sm:$0xff]
      %v6089 = vld [vmem:[%s5 + $0x58] sm:$0xff]
      %v6090 = vld [vmem:[%s5 + $0x60] sm:$0xff]
      %v6091 = vld [vmem:[%s5 + $0x68] sm:$0xff]
      %v6092 = vld [vmem:[%s5 + $0x70] sm:$0xff]
      %v6093 = vld [vmem:[%s5 + $0x78] sm:$0xff]
      %v6094 = vld [vmem:[%s6] sm:$0x1]
      %6095 = vmatprep.subr.mxu0 0.0
      %6096 = vmatpush1.msra.mxu0 %v6093
      %6097 = vmatprep.subr.mxu0 0.0
      %6098 = vmatpush1.msra.mxu0 %v6092
      %6099 = vmatprep.subr.mxu0 0.0
      %6100 = vmatpush1.msra.mxu0 %v6091
      %6101 = vmatprep.subr.mxu0 0.0
      %6102 = vmatpush1.msra.mxu0 %v6090
      %6103 = vmatprep.subr.mxu0 0.0
      %6104 = vmatpush1.msra.mxu0 %v6089
      %6105 = vmatprep.subr.mxu0 0.0
      %6106 = vmatpush1.msra.mxu0 %v6088
      %6107 = vmatprep.subr.mxu0 0.0
      %6108 = vmatpush1.msra.mxu0 %v6087
      %6109 = vmatprep.subr.mxu0 0.0
      %6110 = vmatpush1.msra.mxu0 %v6086
      %6111 = vmatprep.subr.mxu0 0.0
      %6112 = vmatpush1.msra.mxu0 %v6085
      %6113 = vmatprep.subr.mxu0 0.0
      %6114 = vmatpush1.msra.mxu0 %v6084
      %6115 = vmatprep.subr.mxu0 0.0
      %6116 = vmatpush1.msra.mxu0 %v6083
      %6117 = vmatprep.subr.mxu0 0.0
      %6118 = vmatpush1.msra.mxu0 %v6082
      %6119 = vmatprep.subr.mxu0 0.0
      %6120 = vmatpush1.msra.mxu0 %v6081
      %6121 = vmatprep.subr.mxu0 0.0
      %6122 = vmatpush1.msra.mxu0 %v6080
      %6123 = vmatprep.subr.mxu0 0.0
      %6124 = vmatpush1.msra.mxu0 %v6079
      %6125 = vmatprep.subr.mxu0 0.0
      %6126 = vmatpush1.msra.mxu0 %v6078
      %6127 = vmatprep.subr.mxu0 0.0
      %6128 = vmatpush2.msra.mxu0 0.0
      %6129 = vmatprep.subr.mxu0 0.0
      %6130 = vmatpush2.msra.mxu0 0.0
      %6131 = vmatprep.subr.mxu0 0.0
      %6132 = vmatpush2.msra.mxu0 0.0
      %6133 = vmatprep.subr.mxu0 0.0
      %6134 = vmatpush2.msra.mxu0 0.0
      %6135 = vmatprep.subr.mxu0 0.0
      %6136 = vmatpush2.msra.mxu0 0.0
      %6137 = vmatprep.subr.mxu0 0.0
      %6138 = vmatpush2.msra.mxu0 0.0
      %6139 = vmatprep.subr.mxu0 0.0
      %6140 = vmatpush2.msra.mxu0 0.0
      %6141 = vmatprep.subr.mxu0 0.0
      %6142 = vmatpush2.msra.mxu0 0.0
      %6143 = vmatprep.subr.mxu0 0.0
      %6144 = vmatpush2.msra.mxu0 0.0
      %6145 = vmatprep.subr.mxu0 0.0
      %6146 = vmatpush2.msra.mxu0 0.0
      %6147 = vmatprep.subr.mxu0 0.0
      %6148 = vmatpush2.msra.mxu0 0.0
      %6149 = vmatprep.subr.mxu0 0.0
      %6150 = vmatpush2.msra.mxu0 0.0
      %6151 = vmatprep.subr.mxu0 0.0
      %6152 = vmatpush2.msra.mxu0 0.0
      %6153 = vmatprep.subr.mxu0 0.0
      %6154 = vmatpush2.msra.mxu0 0.0
      %6155 = vmatprep.subr.mxu0 0.0
      %6156 = vmatpush2.msra.mxu0 0.0
      %6157 = vmatprep.subr.mxu0 0.0
      %6158 = vmatpush2.msra.mxu0 0.0
      %6159 = vmatprep.mubr.f32.mxu0 0.0
      %6160 = vmatmul.mubr.f32.gmra.mxu0 %v6077
      %v6161 = vpop.f32.mrf.mxu0
      %v6162 = vadd.f32 %v6094, %v6161
      %v6163 = vpop.f32.mrf.mxu0
      %6164 = vdwg.mxu0
      %v6165 = vmax.f32 %v6162, 0.0
      %v6166 = vld [vmem:[%s7] sm:$0xff]
      %v6167 = vld [vmem:[%s7 + $0x8] sm:$0xff]
      %v6168 = vld [vmem:[%s7 + $0x10] sm:$0xff]
      %v6169 = vld [vmem:[%s7 + $0x18] sm:$0xff]
      %v6170 = vld [vmem:[%s7 + $0x20] sm:$0xff]
      %v6171 = vld [vmem:[%s7 + $0x28] sm:$0xff]
      %v6172 = vld [vmem:[%s7 + $0x30] sm:$0xff]
      %v6173 = vld [vmem:[%s7 + $0x38] sm:$0xff]
      %v6174 = vld [vmem:[%s7 + $0x40] sm:$0xff]
      %v6175 = vld [vmem:[%s7 + $0x48] sm:$0xff]
      %v6176 = vld [vmem:[%s7 + $0x50] sm:$0xff]
      %v6177 = vld [vmem:[%s7 + $0x58] sm:$0xff]
      %v6178 = vld [vmem:[%s7 + $0x60] sm:$0xff]
      %v6179 = vld [vmem:[%s7 + $0x68] sm:$0xff]
      %v6180 = vld [vmem:[%s7 + $0x70] sm:$0xff]
      %v6181 = vld [vmem:[%s7 + $0x78] sm:$0xff]
      %v6182 = vld [vmem:[%s8] sm:$0x1]
      %6183 = vmatprep.subr.mxu0 0.0
      %6184 = vmatpush1.msra.mxu0 %v6181
      %6185 = vmatprep.subr.mxu0 0.0
      %6186 = vmatpush1.msra.mxu0 %v6180
      %6187 = vmatprep.subr.mxu0 0.0
      %6188 = vmatpush1.msra.mxu0 %v6179
      %6189 = vmatprep.subr.mxu0 0.0
      %6190 = vmatpush1.msra.mxu0 %v6178
      %6191 = vmatprep.subr.mxu0 0.0
      %6192 = vmatpush1.msra.mxu0 %v6177
      %6193 = vmatprep.subr.mxu0 0.0
      %6194 = vmatpush1.msra.mxu0 %v6176
      %6195 = vmatprep.subr.mxu0 0.0
      %6196 = vmatpush1.msra.mxu0 %v6175
      %6197 = vmatprep.subr.mxu0 0.0
      %6198 = vmatpush1.msra.mxu0 %v6174
      %6199 = vmatprep.subr.mxu0 0.0
      %6200 = vmatpush1.msra.mxu0 %v6173
      %6201 = vmatprep.subr.mxu0 0.0
      %6202 = vmatpush1.msra.mxu0 %v6172
      %6203 = vmatprep.subr.mxu0 0.0
      %6204 = vmatpush1.msra.mxu0 %v6171
      %6205 = vmatprep.subr.mxu0 0.0
      %6206 = vmatpush1.msra.mxu0 %v6170
      %6207 = vmatprep.subr.mxu0 0.0
      %6208 = vmatpush1.msra.mxu0 %v6169
      %6209 = vmatprep.subr.mxu0 0.0
      %6210 = vmatpush1.msra.mxu0 %v6168
      %6211 = vmatprep.subr.mxu0 0.0
      %6212 = vmatpush1.msra.mxu0 %v6167
      %6213 = vmatprep.subr.mxu0 0.0
      %6214 = vmatpush1.msra.mxu0 %v6166
      %6215 = vmatprep.subr.mxu0 0.0
      %6216 = vmatpush2.msra.mxu0 0.0
      %6217 = vmatprep.subr.mxu0 0.0
      %6218 = vmatpush2.msra.mxu0 0.0
      %6219 = vmatprep.subr.mxu0 0.0
      %6220 = vmatpush2.msra.mxu0 0.0
      %6221 = vmatprep.subr.mxu0 0.0
      %6222 = vmatpush2.msra.mxu0 0.0
      %6223 = vmatprep.subr.mxu0 0.0
      %6224 = vmatpush2.msra.mxu0 0.0
      %6225 = vmatprep.subr.mxu0 0.0
      %6226 = vmatpush2.msra.mxu0 0.0
      %6227 = vmatprep.subr.mxu0 0.0
      %6228 = vmatpush2.msra.mxu0 0.0
      %6229 = vmatprep.subr.mxu0 0.0
      %6230 = vmatpush2.msra.mxu0 0.0
      %6231 = vmatprep.subr.mxu0 0.0
      %6232 = vmatpush2.msra.mxu0 0.0
      %6233 = vmatprep.subr.mxu0 0.0
      %6234 = vmatpush2.msra.mxu0 0.0
      %6235 = vmatprep.subr.mxu0 0.0
      %6236 = vmatpush2.msra.mxu0 0.0
      %6237 = vmatprep.subr.mxu0 0.0
      %6238 = vmatpush2.msra.mxu0 0.0
      %6239 = vmatprep.subr.mxu0 0.0
      %6240 = vmatpush2.msra.mxu0 0.0
      %6241 = vmatprep.subr.mxu0 0.0
      %6242 = vmatpush2.msra.mxu0 0.0
      %6243 = vmatprep.subr.mxu0 0.0
      %6244 = vmatpush2.msra.mxu0 0.0
      %6245 = vmatprep.subr.mxu0 0.0
      %6246 = vmatpush2.msra.mxu0 0.0
      %6247 = vmatprep.mubr.f32.mxu0 0.0
      %6248 = vmatmul.mubr.f32.gmra.mxu0 %v6165
      %v6249 = vpop.f32.mrf.mxu0
      %v6250 = vadd.f32 %v6182, %v6249
      %v6251 = vpop.f32.mrf.mxu0
      %6252 = vdwg.mxu0
      %v6253 = vsub.f32 0.0, %v6250
      %v6254 = vmul.f32 %v6253, 1.442695
      %v6255 = vpow.pop %v6254
      %v6256 = vadd.f32 %v6255, 1.0
      %v6257 = vrcp.pop %v6256
      %v6258 = vmul.f32 1.0, %v6257
      %v6259 = vlaneseq
      %v6260 = vshrl.u32 %v6259, 7
      %v6261 = vsub.s32 0, %v6260
      %v6262 = vrot.slane %v6258, %v6261
      %v6263 = vmul.f32 %v6007, %v6262
      %v6264 = vmul.f32 %v6008, %v6262
      %v6265 = vmul.f32 %v6009, %v6262
      %v6266 = vmul.f32 %v6010, %v6262
      %v6267 = vmul.f32 %v6011, %v6262
      %v6268 = vmul.f32 %v6012, %v6262
      %v6269 = vmul.f32 %v6013, %v6262
      %v6270 = vmul.f32 %v6014, %v6262
      %v6271 = vmul.f32 %v6015, %v6262
      %v6272 = vmul.f32 %v6016, %v6262
      %v6273 = vmul.f32 %v6017, %v6262
      %v6274 = vmul.f32 %v6018, %v6262
      %v6275 = vmul.f32 %v6019, %v6262
      %v6276 = vmul.f32 %v6020, %v6262
      %v6277 = vmul.f32 %v6021, %v6262
      %v6278 = vmul.f32 %v6022, %v6262
      %v6279 = vmul.f32 %v6023, %v6262
      %v6280 = vmul.f32 %v6024, %v6262
      %v6281 = vmul.f32 %v6025, %v6262
      %v6282 = vmul.f32 %v6026, %v6262
      %v6283 = vmul.f32 %v6027, %v6262
      %v6284 = vmul.f32 %v6028, %v6262
      %v6285 = vmul.f32 %v6029, %v6262
      %v6286 = vmul.f32 %v6030, %v6262
      %v6287 = vmul.f32 %v6031, %v6262
      %v6288 = vmul.f32 %v6032, %v6262
      %v6289 = vmul.f32 %v6033, %v6262
      %v6290 = vmul.f32 %v6034, %v6262
      %v6291 = vmul.f32 %v6035, %v6262
      %v6292 = vmul.f32 %v6036, %v6262
      %v6293 = vmul.f32 %v6037, %v6262
      %v6294 = vmul.f32 %v6038, %v6262
      %6295 = vst [vmem:[%s332] sm:$0xff] %v6263
      %6296 = vst [vmem:[%s332 + $0x8] sm:$0xff] %v6264
      %6297 = vst [vmem:[%s332 + $0x10] sm:$0xff] %v6265
      %6298 = vst [vmem:[%s332 + $0x18] sm:$0xff] %v6266
      %6299 = vst [vmem:[%s332 + $0x20] sm:$0xff] %v6267
      %6300 = vst [vmem:[%s332 + $0x28] sm:$0xff] %v6268
      %6301 = vst [vmem:[%s332 + $0x30] sm:$0xff] %v6269
      %6302 = vst [vmem:[%s332 + $0x38] sm:$0xff] %v6270
      %6303 = vst [vmem:[%s332 + $0x40] sm:$0xff] %v6271
      %6304 = vst [vmem:[%s332 + $0x48] sm:$0xff] %v6272
      %6305 = vst [vmem:[%s332 + $0x50] sm:$0xff] %v6273
      %6306 = vst [vmem:[%s332 + $0x58] sm:$0xff] %v6274
      %6307 = vst [vmem:[%s332 + $0x60] sm:$0xff] %v6275
      %6308 = vst [vmem:[%s332 + $0x68] sm:$0xff] %v6276
      %6309 = vst [vmem:[%s332 + $0x70] sm:$0xff] %v6277
      %6310 = vst [vmem:[%s332 + $0x78] sm:$0xff] %v6278
      %6311 = vst [vmem:[%s332 + $0x80] sm:$0xff] %v6279
      %6312 = vst [vmem:[%s332 + $0x88] sm:$0xff] %v6280
      %6313 = vst [vmem:[%s332 + $0x90] sm:$0xff] %v6281
      %6314 = vst [vmem:[%s332 + $0x98] sm:$0xff] %v6282
      %6315 = vst [vmem:[%s332 + $0xa0] sm:$0xff] %v6283
      %6316 = vst [vmem:[%s332 + $0xa8] sm:$0xff] %v6284
      %6317 = vst [vmem:[%s332 + $0xb0] sm:$0xff] %v6285
      %6318 = vst [vmem:[%s332 + $0xb8] sm:$0xff] %v6286
      %6319 = vst [vmem:[%s332 + $0xc0] sm:$0xff] %v6287
      %6320 = vst [vmem:[%s332 + $0xc8] sm:$0xff] %v6288
      %6321 = vst [vmem:[%s332 + $0xd0] sm:$0xff] %v6289
      %6322 = vst [vmem:[%s332 + $0xd8] sm:$0xff] %v6290
      %6323 = vst [vmem:[%s332 + $0xe0] sm:$0xff] %v6291
      %6324 = vst [vmem:[%s332 + $0xe8] sm:$0xff] %v6292
      %6325 = vst [vmem:[%s332 + $0xf0] sm:$0xff] %v6293
      %6326 = vst [vmem:[%s332 + $0xf8] sm:$0xff] %v6294
      %p6327 = scmp.lt.s32.totalorder %s20, 1
      %s6328 = scalar_select %p6327, %s20, 1
      %s6329 = smul.addr %s6328, 32
      %s6330 = smul.addr %s6329, 8
      %s6331 = scalar_lea.vmem %s9, %s6330
      // Predicated region
      $region57: #{cab_pallas.1} parent=55 // pred_check
        %p6332 = pneg %p232
      $region58: #{cab_pallas.1} parent=55 // pred_check_branch
        %6334 = sbr.rel (%p6332) target = $region60
      $region59: #{cab_pallas.1} parent=55 // pred_region
        _
      $region60: #{cab_pallas.1} parent=55 // pred_fallthru
        _
    $region56: #{cab_pallas.1} parent=5 // pred_fallthru
      _
    %p6335 = scmp.le.s32.totalorder 2, %s15
    // Predicated region
    $region61: #{cab_pallas.1} parent=5 // pred_check
      %p6336 = pneg %p6335
    $region62: #{cab_pallas.1} parent=5 // pred_check_branch
      %6338 = sbr.rel (%p6336) target = $region64
    $region63: #{cab_pallas.1} parent=5 // pred_region
      %s6339 = ssub.s32 %s15, 2
      // Predicated region
      $region65: #{cab_pallas.1} parent=63 // pred_check
        %p6340 = pneg %p238
      $region66: #{cab_pallas.1} parent=63 // pred_check_branch
        %6342 = sbr.rel (%p6340) target = $region68
      $region67: #{cab_pallas.1} parent=63 // pred_region
        %p6343 = scmp.lt.s32.totalorder %s21, 1
        %s6344 = scalar_select %p6343, %s21, 1
        %s6345 = smul.addr %s6344, 32
        %s6346 = smul.addr %s6345, 8
        %s6347 = scalar_lea.vmem %s9, %s6346
      $region68: #{cab_pallas.1} parent=63 // pred_fallthru
        _
    $region64: #{cab_pallas.1} parent=5 // pred_fallthru
      _
  $region6: #{cab_pallas.1} parent=0 // loop_footer
    %s19 = sadd.s32 1, %s15
  $region7: #{cab_pallas.1} parent=0 // loop_footer_branch
    %14 = sbr.rel target = $region3
  $region8: #{cab_pallas.1} parent=0 // loop_exit
    _

</llo_original>
